<compile_context>
chip_gen: v7x
topology: tpu7x:2x2x1
jax: 0.10.0
libtpu: 0.0.40
codegen_flags: <defaults>
</compile_context>

<pallas_src>
import functools
import math

import jax
import jax.numpy as jnp
from jax.experimental import pallas as pl
from jax.experimental.pallas import tpu as pltpu


def _attention_kernel(qx_ref, kvx_ref, mask_ref, pair_ref,
                      wqg_ref, wkv_ref, bg_ref, wo_ref, bo_ref,
                      out_ref, *, no_heads, c_hidden, batch_tile,
                      q_len, kv_len, approx_recip):
    H, D, Bt, Q, K = no_heads, c_hidden, batch_tile, q_len, kv_len
    HD = H * D

    # Fused Q|G and K|V projections: bf16 MXU operands, f32 accumulation.
    # The 1/sqrt(c_hidden) query scale is folded into the Wq columns of wqg.
    qg = jnp.dot(qx_ref[...], wqg_ref[...],
                 preferred_element_type=jnp.float32)            # (Bt*Q, 2HD)
    kv = jnp.dot(kvx_ref[...], wkv_ref[...],
                 preferred_element_type=jnp.float32)            # (Bt*K, 2HD)

    # Gate stays f32 (v5e has no bf16 VPU/EUP).
    g = jax.nn.sigmoid(qg[:, HD:] + bg_ref[...])                # (Bt*Q, HD)

    # bf16 copies feeding the attention matmuls.  HD == 128 here so these
    # column splits are lane-aligned; other configs still work, just slower.
    q3 = qg[:, :HD].astype(jnp.bfloat16).reshape(Bt, Q, HD)
    k3 = kv[:, :HD].astype(jnp.bfloat16).reshape(Bt, K, HD)
    v3 = kv[:, HD:].astype(jnp.bfloat16).reshape(Bt, K, HD)

    # Combined additive bias, computed ONCE per grid step (broadcast hoisted
    # out of the head loop; JAX does not CSE broadcast_in_dim).
    bias = mask_ref[...].reshape(Bt, 1, 1, K) + pair_ref[...]   # (Bt, H, Q, K)

    # Per-head attention.  H is small & static -> unrolled.  Scores and PV are
    # leading-batch 3-D dot_generals contracting on the trailing D axis.
    # TODO(synk): a head-leading relayout of q/k/v would remove the per-head
    # 32-lane slices, but needs a cross-lane repack whose Mosaic lowering is
    # less predictable at these tiny dims; kept as simple static slices.
    head_out = []
    for h in range(H):
        sl = slice(h * D, (h + 1) * D)
        s = jnp.einsum("bqd,bkd->bqk", q3[:, :, sl], k3[:, :, sl],
                       preferred_element_type=jnp.float32)      # (Bt, Q, K)
        s = s + bias[:, h]
        s = s - jnp.max(s, axis=-1, keepdims=True)
        p = jnp.exp(s)
        denom = jnp.sum(p, axis=-1, keepdims=True)
        if approx_recip:
            p = p * pl.reciprocal(denom, approx=True)           # EUP slot
        else:
            p = p / denom
        oh = jnp.einsum("bqk,bkd->bqd", p.astype(jnp.bfloat16), v3[:, :, sl],
                        preferred_element_type=jnp.float32)     # (Bt, Q, D)
        head_out.append(oh.reshape(Bt * Q, D))

    # Gate all heads at once, then ONE full-depth (HD) output projection
    # instead of H accumulated 32-deep matmuls.
    o = jnp.concatenate(head_out, axis=-1) * g                  # (Bt*Q, HD) f32
    out_ref[...] = jnp.dot(o.astype(jnp.bfloat16), wo_ref[...],
                           preferred_element_type=jnp.float32) + bo_ref[...]


def _vmem_limit_bytes():
    """Generation-aware VMEM budget (<= ~48 MiB on v7x, <= ~96 MiB on v5e/v6e)."""
    phys = None
    try:
        phys = int(pltpu.get_tpu_info().vmem_capacity_bytes)
    except Exception:
        phys = None
    if not phys or phys <= 0:
        phys = 64 * 2**20          # conservative fallback: v7x per-TC VMEM
    return int(min(max(phys - 16 * 2**20, 32 * 2**20), 96 * 2**20))


def _per_batch_elem_vmem_bytes(Q, K, C_q, C_k, H, D):
    """Per-batch-element VMEM footprint: blocked I/O (double-buffered) plus
    in-kernel intermediates (qg/kv, bf16 q/k/v, gate, combined bias, scores,
    concatenated head outputs)."""
    HD = H * D
    blocked = 2 * (Q * C_q + K * C_k) + 4 * K + 4 * Q * C_q
    inter = (4 * (Q + K) * 2 * HD          # qg, kv (f32)
             + 2 * (Q + 2 * K) * HD        # bf16 q/k/v copies
             + 4 * Q * HD                  # gate (f32)
             + 4 * H * Q * K               # combined bias
             + 8 * Q * K                   # live scores / probabilities
             + 6 * Q * HD)                 # head outputs f32 + bf16 copy
    return 2 * blocked + inter


def _pick_batch_tile(B, Q, K, C_q, C_k, H, D, vmem_budget, target_rows=1024):
    """Largest batch tile reaching ~target_rows rows, capped by VMEM, keeping
    at least 2 grid steps (v7x dual-TC sharding).  Non-divisor B is handled by
    padding in the wrapper, so Bt need not divide B."""
    per_b = max(1, _per_batch_elem_vmem_bytes(Q, K, C_q, C_k, H, D))
    by_rows = max(1, target_rows // max(Q, 1))
    by_vmem = max(1, vmem_budget // per_b)
    bt = max(1, min(B, by_rows, by_vmem))
    if B >= 2:
        bt = min(bt, max(1, pl.cdiv(B, 2)))
    return bt


def attention_forward(q_x, kv_x, biases, params, *, no_heads, c_hidden,
                      approx_softmax_recip=True):
    B, Q, C_q = q_x.shape
    _, K, C_k = kv_x.shape
    H, D = no_heads, c_hidden
    HD = H * D
    scale = 1.0 / math.sqrt(D)

    # ---- glue (tiny; never materializes a dense [B,H,Q,K] bias) -------------
    mask_bias = jnp.zeros((B, 1, 1, K), jnp.float32)
    pair_bias = jnp.zeros((1, H, Q, K), jnp.float32)
    for bias in (biases or []):
        bs = bias.shape
        if len(bs) == 4 and bs[-3] == 1 and bs[-2] == 1:    # [B or 1, 1, 1, K]
            mask_bias = mask_bias + bias.astype(jnp.float32)
        elif len(bs) == 4 and bs[0] == 1:                   # [1, H?, Q?, K]
            pair_bias = pair_bias + bias.astype(jnp.float32)
        else:
            # TODO(synk): biases varying jointly in batch AND head/query dims
            # would need a streamed [B,H,Q,K] input; not needed for OpenFold.
            raise NotImplementedError(f"unsupported bias shape {bs}")

    # Fused bf16 weights (full MXU N-width per matmul); the query scale is
    # folded into Wq BEFORE the bf16 cast.  Biases stay f32.
    wqg = jnp.concatenate([params["wq"] * scale, params["wg"]],
                          axis=1).astype(jnp.bfloat16)          # (C_q, 2HD)
    wkv = jnp.concatenate([params["wk"], params["wv"]],
                          axis=1).astype(jnp.bfloat16)          # (C_k, 2HD)
    wo = params["wo"].astype(jnp.bfloat16)                      # (HD, C_q)
    bg = params["bg"].reshape(1, HD).astype(jnp.float32)
    bo = params["bo"].reshape(1, C_q).astype(jnp.float32)

    # ---- batch tiling (VMEM- and generation-aware) ---------------------------
    vmem_limit = _vmem_limit_bytes()
    Bt = _pick_batch_tile(B, Q, K, C_q, C_k, H, D,
                          vmem_budget=(2 * vmem_limit) // 5)
    G = pl.cdiv(B, Bt)
    B_pad = G * Bt
    if B_pad != B:                          # ragged batch: pad, slice output
        pad = B_pad - B
        q_x = jnp.pad(q_x, ((0, pad), (0, 0), (0, 0)))
        kv_x = jnp.pad(kv_x, ((0, pad), (0, 0), (0, 0)))
        mask_bias = jnp.pad(mask_bias, ((0, pad), (0, 0), (0, 0), (0, 0)))

    # Wrapper-side flattening (free layout plumbing): 2-D row blocks keep the
    # in-kernel tiles (8,128)-friendly and make the output stores lane-dense.
    qx2 = q_x.reshape(B_pad * Q, C_q).astype(jnp.bfloat16)
    kvx2 = kv_x.reshape(B_pad * K, C_k).astype(jnp.bfloat16)

    kernel = functools.partial(
        _attention_kernel, no_heads=H, c_hidden=D, batch_tile=Bt,
        q_len=Q, kv_len=K, approx_recip=approx_softmax_recip)

    in_specs = [
        pl.BlockSpec((Bt * Q, C_q), lambda b: (b, 0)),          # q_x rows (bf16)
        pl.BlockSpec((Bt * K, C_k), lambda b: (b, 0)),          # kv_x rows (bf16)
        pl.BlockSpec((Bt, 1, 1, K), lambda b: (b, 0, 0, 0)),    # mask bias (f32)
        pl.BlockSpec((1, H, Q, K), lambda b: (0, 0, 0, 0)),     # pair bias (resident)
        pl.BlockSpec((C_q, 2 * HD), lambda b: (0, 0)),          # Wq|Wg (bf16)
        pl.BlockSpec((C_k, 2 * HD), lambda b: (0, 0)),          # Wk|Wv (bf16)
        pl.BlockSpec((1, HD), lambda b: (0, 0)),                # bg (f32)
        pl.BlockSpec((HD, C_q), lambda b: (0, 0)),              # Wo (bf16)
        pl.BlockSpec((1, C_q), lambda b: (0, 0)),               # bo (f32)
    ]
    out_spec = pl.BlockSpec((Bt * Q, C_q), lambda b: (b, 0))

    grid_spec = pltpu.PrefetchScalarGridSpec(
        num_scalar_prefetch=0,
        grid=(G,),
        in_specs=in_specs,
        out_specs=out_spec,
    )

    out2 = pl.pallas_call(
        kernel,
        out_shape=jax.ShapeDtypeStruct((B_pad * Q, C_q), jnp.float32),
        grid_spec=grid_spec,
        compiler_params=pltpu.CompilerParams(
            dimension_semantics=("parallel",),
            vmem_limit_bytes=vmem_limit),
    )(qx2, kvx2, mask_bias, pair_bias, wqg, wkv, bg, wo, bo)

    return out2.reshape(B_pad, Q, C_q)[:B]


def attention_ref(q_x, kv_x, biases, params, *, no_heads, c_hidden,
                  matmul_dtype=None):
    """Pure-JAX reference mirroring the torch forward pass.  With
    matmul_dtype=jnp.bfloat16 it mirrors the kernel's matmul-operand casts
    (f32 accumulation), matching the module's own bf16 execution path."""
    H, D = no_heads, c_hidden
    B, Q, _ = q_x.shape
    K = kv_x.shape[1]
    scale = 1.0 / math.sqrt(D)

    def cast(x):
        return x if matmul_dtype is None else x.astype(matmul_dtype)

    wq = cast(params["wq"] * scale)        # scale folded before the cast
    wk = cast(params["wk"])
    wv = cast(params["wv"])
    wg = cast(params["wg"])
    wo = cast(params["wo"])
    qx_c, kvx_c = cast(q_x), cast(kv_x)

    q = jnp.dot(qx_c, wq, preferred_element_type=jnp.float32)
    k = jnp.dot(kvx_c, wk, preferred_element_type=jnp.float32)
    v = jnp.dot(kvx_c, wv, preferred_element_type=jnp.float32)
    g = jax.nn.sigmoid(jnp.dot(qx_c, wg, preferred_element_type=jnp.float32)
                       + params["bg"])

    qh = cast(q).reshape(B, Q, H, D).transpose(0, 2, 1, 3)
    kh = cast(k).reshape(B, K, H, D).transpose(0, 2, 1, 3)
    vh = cast(v).reshape(B, K, H, D).transpose(0, 2, 1, 3)
    a = jnp.einsum("bhqd,bhkd->bhqk", qh, kh,
                   preferred_element_type=jnp.float32)
    for b in (biases or []):
        a = a + b
    a = jax.nn.softmax(a, axis=-1)
    o = jnp.einsum("bhqk,bhkd->bhqd", cast(a), vh,
                   preferred_element_type=jnp.float32).transpose(0, 2, 1, 3)
    o = o.reshape(B, Q, H * D) * g
    return jnp.dot(cast(o), wo, preferred_element_type=jnp.float32) + params["bo"]


if __name__ == "__main__":
    # Shapes consistent with the module: [*, Q, C_q] queries, [*, K, C_k] keys.
    # B is large enough that the batch tiling (Bt=16 -> 2 parallel grid steps)
    # is exercised; total data is still tiny.
    B, Q, K = 32, 16, 16
    C_q, C_k = 32, 24          # c_v == c_k since forward applies linear_v to kv_x
    H, D = 4, 32               # no_heads, c_hidden

    key = jax.random.PRNGKey(0)
    ks = jax.random.split(key, 10)

    # Deterministic synthetic parameters (module shapes; not a checkpoint).
    # NOTE: faithful "final"/"gating" inits would zero the output, so random
    # deterministic values are used to exercise the compute path.
    params = {
        "wq": 0.1 * jax.random.normal(ks[0], (C_q, H * D), jnp.float32),
        "wk": 0.1 * jax.random.normal(ks[1], (C_k, H * D), jnp.float32),
        "wv": 0.1 * jax.random.normal(ks[2], (C_k, H * D), jnp.float32),
        "wg": 0.1 * jax.random.normal(ks[3], (C_q, H * D), jnp.float32),
        "bg": 0.1 * jax.random.normal(ks[4], (1, H * D), jnp.float32),
        "wo": 0.1 * jax.random.normal(ks[5], (H * D, C_q), jnp.float32),
        "bo": 0.1 * jax.random.normal(ks[6], (1, C_q), jnp.float32),
    }

    q_x = jax.random.normal(ks[7], (B, Q, C_q), jnp.float32)
    kv_x = jax.random.normal(ks[8], (B, K, C_k), jnp.float32)

    # Two biases broadcasting to [B, H, Q, K]: a per-key mask bias and a pair bias.
    bkeys = jax.random.split(ks[9], 2)
    bias_mask = jax.random.normal(bkeys[0], (B, 1, 1, K), jnp.float32)
    bias_pair = jax.random.normal(bkeys[1], (1, H, Q, K), jnp.float32)
    biases = [bias_mask, bias_pair]

    out = attention_forward(q_x, kv_x, biases, params, no_heads=H, c_hidden=D)
    out = jax.block_until_ready(out)
    assert out.shape == (B, Q, C_q)

    # Tight check vs. a bf16-emulating reference (mirrors the kernel's matmul
    # casts); residual is the approximate softmax reciprocal + add ordering.
    ref_b = attention_ref(q_x, kv_x, biases, params, no_heads=H, c_hidden=D,
                          matmul_dtype=jnp.bfloat16)
    err_b = float(jnp.max(jnp.abs(out - ref_b)))
    assert jnp.allclose(out, ref_b, atol=1e-2, rtol=1e-2), err_b

    # Semantic check vs. the full-f32 reference; wider tolerance covers the
    # intentional bf16 MXU operands (accumulation stays f32).
    ref = attention_ref(q_x, kv_x, biases, params, no_heads=H, c_hidden=D)
    err = float(jnp.max(jnp.abs(out - ref)))
    assert jnp.allclose(out, ref, atol=5e-2, rtol=5e-2), err

    print("KERNEL_OK")
</pallas_src>

<mosaic_0001>
module attributes {stable_mosaic.version = 11 : i64} {
  func.func @_attention_kernel(%arg0: i32, %arg1: memref<256x32xbf16, #tpu.memory_space<vmem>>, %arg2: memref<256x24xbf16, #tpu.memory_space<vmem>>, %arg3: memref<16x1x1x16xf32, #tpu.memory_space<vmem>>, %arg4: memref<1x4x16x16xf32, #tpu.memory_space<vmem>>, %arg5: memref<32x256xbf16, #tpu.memory_space<vmem>>, %arg6: memref<24x256xbf16, #tpu.memory_space<vmem>>, %arg7: memref<1x128xf32, #tpu.memory_space<vmem>>, %arg8: memref<128x32xbf16, #tpu.memory_space<vmem>>, %arg9: memref<1x32xf32, #tpu.memory_space<vmem>>, %arg10: memref<256x32xf32, #tpu.memory_space<vmem>>) attributes {dimension_semantics = [#tpu.dimension_semantics<parallel>], iteration_bounds = array<i64: 2>, scalar_prefetch = 0 : i64, scratch_operands = 0 : i64, tpu.core_type = #tpu.core_type<tc>, window_params = [{transform_indices = @transform_0, window_bounds = array<i64: 256, 32>}, {transform_indices = @transform_1, window_bounds = array<i64: 256, 24>}, {transform_indices = @transform_2, window_bounds = array<i64: 16, 1, 1, 16>}, {pipeline_mode = #tpu.pipeline_mode<synchronous>, transform_indices = @transform_3, window_bounds = array<i64: 1, 4, 16, 16>}, {pipeline_mode = #tpu.pipeline_mode<synchronous>, transform_indices = @transform_4, window_bounds = array<i64: 32, 256>}, {pipeline_mode = #tpu.pipeline_mode<synchronous>, transform_indices = @transform_5, window_bounds = array<i64: 24, 256>}, {pipeline_mode = #tpu.pipeline_mode<synchronous>, transform_indices = @transform_6, window_bounds = array<i64: 1, 128>}, {pipeline_mode = #tpu.pipeline_mode<synchronous>, transform_indices = @transform_7, window_bounds = array<i64: 128, 32>}, {pipeline_mode = #tpu.pipeline_mode<synchronous>, transform_indices = @transform_8, window_bounds = array<i64: 1, 32>}, {transform_indices = @transform_9, window_bounds = array<i64: 256, 32>}]} {
    %c0 = arith.constant 0 : index
    %c0_0 = arith.constant 0 : index
    %0 = vector.load %arg1[%c0, %c0_0] : memref<256x32xbf16, #tpu.memory_space<vmem>>, vector<256x32xbf16>
    %c0_1 = arith.constant 0 : index
    %c0_2 = arith.constant 0 : index
    %1 = vector.load %arg5[%c0_1, %c0_2] : memref<32x256xbf16, #tpu.memory_space<vmem>>, vector<32x256xbf16>
    %cst = arith.constant dense<0.000000e+00> : vector<256x256xf32>
    %2 = tpu.matmul %0, %1, %cst {dimension_numbers = #tpu.dot_dimension_numbers<[1], [0], [0], [1], [0, 0, 1, 1], [], []>} : vector<256x32xbf16>, vector<32x256xbf16>, vector<256x256xf32> -> vector<256x256xf32>
    %c0_3 = arith.constant 0 : index
    %c0_4 = arith.constant 0 : index
    %3 = vector.load %arg2[%c0_3, %c0_4] : memref<256x24xbf16, #tpu.memory_space<vmem>>, vector<256x24xbf16>
    %c0_5 = arith.constant 0 : index
    %c0_6 = arith.constant 0 : index
    %4 = vector.load %arg6[%c0_5, %c0_6] : memref<24x256xbf16, #tpu.memory_space<vmem>>, vector<24x256xbf16>
    %cst_7 = arith.constant dense<0.000000e+00> : vector<256x256xf32>
    %5 = tpu.matmul %3, %4, %cst_7 {dimension_numbers = #tpu.dot_dimension_numbers<[1], [0], [0], [1], [0, 0, 1, 1], [], []>} : vector<256x24xbf16>, vector<24x256xbf16>, vector<256x256xf32> -> vector<256x256xf32>
    %6 = vector.extract_strided_slice %2 {offsets = [0, 128], sizes = [256, 128], strides = [1, 1]} : vector<256x256xf32> to vector<256x128xf32>
    %c0_8 = arith.constant 0 : index
    %c0_9 = arith.constant 0 : index
    %7 = vector.load %arg7[%c0_8, %c0_9] : memref<1x128xf32, #tpu.memory_space<vmem>>, vector<1x128xf32>
    %8 = vector.broadcast %7 : vector<1x128xf32> to vector<256x128xf32>
    %9 = arith.addf %6, %8 : vector<256x128xf32>
    %10 = arith.negf %9 : vector<256x128xf32>
    %11 = math.exp %10 : vector<256x128xf32>
    %cst_10 = arith.constant 1.000000e+00 : f32
    %12 = vector.broadcast %cst_10 : f32 to vector<256x128xf32>
    %13 = arith.addf %12, %11 : vector<256x128xf32>
    %14 = arith.divf %12, %13 : vector<256x128xf32>
    %15 = vector.extract_strided_slice %2 {offsets = [0, 0], sizes = [256, 128], strides = [1, 1]} : vector<256x256xf32> to vector<256x128xf32>
    %16 = arith.truncf %15 : vector<256x128xf32> to vector<256x128xbf16>
    %17 = vector.shape_cast %16 : vector<256x128xbf16> to vector<16x16x128xbf16>
    %18 = vector.extract_strided_slice %5 {offsets = [0, 0], sizes = [256, 128], strides = [1, 1]} : vector<256x256xf32> to vector<256x128xf32>
    %19 = arith.truncf %18 : vector<256x128xf32> to vector<256x128xbf16>
    %20 = vector.shape_cast %19 : vector<256x128xbf16> to vector<16x16x128xbf16>
    %21 = vector.extract_strided_slice %5 {offsets = [0, 128], sizes = [256, 128], strides = [1, 1]} : vector<256x256xf32> to vector<256x128xf32>
    %22 = arith.truncf %21 : vector<256x128xf32> to vector<256x128xbf16>
    %23 = vector.shape_cast %22 : vector<256x128xbf16> to vector<16x16x128xbf16>
    %c0_11 = arith.constant 0 : index
    %c0_12 = arith.constant 0 : index
    %c0_13 = arith.constant 0 : index
    %c0_14 = arith.constant 0 : index
    %24 = vector.load %arg3[%c0_11, %c0_12, %c0_13, %c0_14] : memref<16x1x1x16xf32, #tpu.memory_space<vmem>>, vector<16x1x1x16xf32>
    %c0_15 = arith.constant 0 : index
    %c0_16 = arith.constant 0 : index
    %c0_17 = arith.constant 0 : index
    %c0_18 = arith.constant 0 : index
    %25 = vector.load %arg4[%c0_15, %c0_16, %c0_17, %c0_18] : memref<1x4x16x16xf32, #tpu.memory_space<vmem>>, vector<1x4x16x16xf32>
    %26 = vector.broadcast %24 : vector<16x1x1x16xf32> to vector<16x4x16x16xf32>
    %27 = vector.broadcast %25 : vector<1x4x16x16xf32> to vector<16x4x16x16xf32>
    %28 = arith.addf %26, %27 : vector<16x4x16x16xf32>
    %29 = vector.extract_strided_slice %17 {offsets = [0, 0, 0], sizes = [16, 16, 32], strides = [1, 1, 1]} : vector<16x16x128xbf16> to vector<16x16x32xbf16>
    %30 = vector.extract_strided_slice %20 {offsets = [0, 0, 0], sizes = [16, 16, 32], strides = [1, 1, 1]} : vector<16x16x128xbf16> to vector<16x16x32xbf16>
    "tpu.trace_start"() <{level = 10 : i32, message = "bqd,bkd->bqk"}> : () -> ()
    %cst_19 = arith.constant dense<0.000000e+00> : vector<16x16x16xf32>
    %31 = tpu.matmul %29, %30, %cst_19 {dimension_numbers = #tpu.dot_dimension_numbers<[2], [2], [1], [1], [0, 0, 0, 1, 1, 1], [0], [0]>} : vector<16x16x32xbf16>, vector<16x16x32xbf16>, vector<16x16x16xf32> -> vector<16x16x16xf32>
    "tpu.trace_stop"() : () -> ()
    %32 = vector.extract_strided_slice %28 {offsets = [0, 0, 0, 0], sizes = [16, 1, 16, 16], strides = [1, 1, 1, 1]} : vector<16x4x16x16xf32> to vector<16x1x16x16xf32>
    %33 = vector.shape_cast %32 : vector<16x1x16x16xf32> to vector<16x16x16xf32>
    %34 = arith.addf %31, %33 : vector<16x16x16xf32>
    %cst_20 = arith.constant dense<0xFF800000> : vector<16x16xf32>
    %35 = vector.multi_reduction <maximumf>, %34, %cst_20 [2] : vector<16x16x16xf32> to vector<16x16xf32>
    %36 = vector.shape_cast %35 : vector<16x16xf32> to vector<16x16x1xf32>
    %37 = vector.broadcast %36 : vector<16x16x1xf32> to vector<16x16x16xf32>
    %38 = arith.subf %34, %37 : vector<16x16x16xf32>
    %39 = math.exp %38 : vector<16x16x16xf32>
    %cst_21 = arith.constant dense<0.000000e+00> : vector<16x16xf32>
    %40 = vector.multi_reduction <add>, %39, %cst_21 [2] : vector<16x16x16xf32> to vector<16x16xf32>
    %41 = vector.shape_cast %40 : vector<16x16xf32> to vector<16x16x1xf32>
    %42 = tpu.reciprocal %41 {approx = true} : vector<16x16x1xf32> -> vector<16x16x1xf32>
    %43 = vector.broadcast %42 : vector<16x16x1xf32> to vector<16x16x16xf32>
    %44 = arith.mulf %39, %43 : vector<16x16x16xf32>
    %45 = arith.truncf %44 : vector<16x16x16xf32> to vector<16x16x16xbf16>
    %46 = vector.extract_strided_slice %23 {offsets = [0, 0, 0], sizes = [16, 16, 32], strides = [1, 1, 1]} : vector<16x16x128xbf16> to vector<16x16x32xbf16>
    "tpu.trace_start"() <{level = 10 : i32, message = "bqk,bkd->bqd"}> : () -> ()
    %cst_22 = arith.constant dense<0.000000e+00> : vector<16x16x32xf32>
    %47 = tpu.matmul %45, %46, %cst_22 {dimension_numbers = #tpu.dot_dimension_numbers<[2], [1], [1], [2], [0, 0, 0, 1, 1, 2], [0], [0]>} : vector<16x16x16xbf16>, vector<16x16x32xbf16>, vector<16x16x32xf32> -> vector<16x16x32xf32>
    "tpu.trace_stop"() : () -> ()
    %48 = vector.shape_cast %47 : vector<16x16x32xf32> to vector<256x32xf32>
    %49 = vector.extract_strided_slice %17 {offsets = [0, 0, 32], sizes = [16, 16, 32], strides = [1, 1, 1]} : vector<16x16x128xbf16> to vector<16x16x32xbf16>
    %50 = vector.extract_strided_slice %20 {offsets = [0, 0, 32], sizes = [16, 16, 32], strides = [1, 1, 1]} : vector<16x16x128xbf16> to vector<16x16x32xbf16>
    "tpu.trace_start"() <{level = 10 : i32, message = "bqd,bkd->bqk"}> : () -> ()
    %cst_23 = arith.constant dense<0.000000e+00> : vector<16x16x16xf32>
    %51 = tpu.matmul %49, %50, %cst_23 {dimension_numbers = #tpu.dot_dimension_numbers<[2], [2], [1], [1], [0, 0, 0, 1, 1, 1], [0], [0]>} : vector<16x16x32xbf16>, vector<16x16x32xbf16>, vector<16x16x16xf32> -> vector<16x16x16xf32>
    "tpu.trace_stop"() : () -> ()
    %52 = vector.extract_strided_slice %28 {offsets = [0, 1, 0, 0], sizes = [16, 1, 16, 16], strides = [1, 1, 1, 1]} : vector<16x4x16x16xf32> to vector<16x1x16x16xf32>
    %53 = vector.shape_cast %52 : vector<16x1x16x16xf32> to vector<16x16x16xf32>
    %54 = arith.addf %51, %53 : vector<16x16x16xf32>
    %cst_24 = arith.constant dense<0xFF800000> : vector<16x16xf32>
    %55 = vector.multi_reduction <maximumf>, %54, %cst_24 [2] : vector<16x16x16xf32> to vector<16x16xf32>
    %56 = vector.shape_cast %55 : vector<16x16xf32> to vector<16x16x1xf32>
    %57 = vector.broadcast %56 : vector<16x16x1xf32> to vector<16x16x16xf32>
    %58 = arith.subf %54, %57 : vector<16x16x16xf32>
    %59 = math.exp %58 : vector<16x16x16xf32>
    %cst_25 = arith.constant dense<0.000000e+00> : vector<16x16xf32>
    %60 = vector.multi_reduction <add>, %59, %cst_25 [2] : vector<16x16x16xf32> to vector<16x16xf32>
    %61 = vector.shape_cast %60 : vector<16x16xf32> to vector<16x16x1xf32>
    %62 = tpu.reciprocal %61 {approx = true} : vector<16x16x1xf32> -> vector<16x16x1xf32>
    %63 = vector.broadcast %62 : vector<16x16x1xf32> to vector<16x16x16xf32>
    %64 = arith.mulf %59, %63 : vector<16x16x16xf32>
    %65 = arith.truncf %64 : vector<16x16x16xf32> to vector<16x16x16xbf16>
    %66 = vector.extract_strided_slice %23 {offsets = [0, 0, 32], sizes = [16, 16, 32], strides = [1, 1, 1]} : vector<16x16x128xbf16> to vector<16x16x32xbf16>
    "tpu.trace_start"() <{level = 10 : i32, message = "bqk,bkd->bqd"}> : () -> ()
    %cst_26 = arith.constant dense<0.000000e+00> : vector<16x16x32xf32>
    %67 = tpu.matmul %65, %66, %cst_26 {dimension_numbers = #tpu.dot_dimension_numbers<[2], [1], [1], [2], [0, 0, 0, 1, 1, 2], [0], [0]>} : vector<16x16x16xbf16>, vector<16x16x32xbf16>, vector<16x16x32xf32> -> vector<16x16x32xf32>
    "tpu.trace_stop"() : () -> ()
    %68 = vector.shape_cast %67 : vector<16x16x32xf32> to vector<256x32xf32>
    %69 = vector.extract_strided_slice %17 {offsets = [0, 0, 64], sizes = [16, 16, 32], strides = [1, 1, 1]} : vector<16x16x128xbf16> to vector<16x16x32xbf16>
    %70 = vector.extract_strided_slice %20 {offsets = [0, 0, 64], sizes = [16, 16, 32], strides = [1, 1, 1]} : vector<16x16x128xbf16> to vector<16x16x32xbf16>
    "tpu.trace_start"() <{level = 10 : i32, message = "bqd,bkd->bqk"}> : () -> ()
    %cst_27 = arith.constant dense<0.000000e+00> : vector<16x16x16xf32>
    %71 = tpu.matmul %69, %70, %cst_27 {dimension_numbers = #tpu.dot_dimension_numbers<[2], [2], [1], [1], [0, 0, 0, 1, 1, 1], [0], [0]>} : vector<16x16x32xbf16>, vector<16x16x32xbf16>, vector<16x16x16xf32> -> vector<16x16x16xf32>
    "tpu.trace_stop"() : () -> ()
    %72 = vector.extract_strided_slice %28 {offsets = [0, 2, 0, 0], sizes = [16, 1, 16, 16], strides = [1, 1, 1, 1]} : vector<16x4x16x16xf32> to vector<16x1x16x16xf32>
    %73 = vector.shape_cast %72 : vector<16x1x16x16xf32> to vector<16x16x16xf32>
    %74 = arith.addf %71, %73 : vector<16x16x16xf32>
    %cst_28 = arith.constant dense<0xFF800000> : vector<16x16xf32>
    %75 = vector.multi_reduction <maximumf>, %74, %cst_28 [2] : vector<16x16x16xf32> to vector<16x16xf32>
    %76 = vector.shape_cast %75 : vector<16x16xf32> to vector<16x16x1xf32>
    %77 = vector.broadcast %76 : vector<16x16x1xf32> to vector<16x16x16xf32>
    %78 = arith.subf %74, %77 : vector<16x16x16xf32>
    %79 = math.exp %78 : vector<16x16x16xf32>
    %cst_29 = arith.constant dense<0.000000e+00> : vector<16x16xf32>
    %80 = vector.multi_reduction <add>, %79, %cst_29 [2] : vector<16x16x16xf32> to vector<16x16xf32>
    %81 = vector.shape_cast %80 : vector<16x16xf32> to vector<16x16x1xf32>
    %82 = tpu.reciprocal %81 {approx = true} : vector<16x16x1xf32> -> vector<16x16x1xf32>
    %83 = vector.broadcast %82 : vector<16x16x1xf32> to vector<16x16x16xf32>
    %84 = arith.mulf %79, %83 : vector<16x16x16xf32>
    %85 = arith.truncf %84 : vector<16x16x16xf32> to vector<16x16x16xbf16>
    %86 = vector.extract_strided_slice %23 {offsets = [0, 0, 64], sizes = [16, 16, 32], strides = [1, 1, 1]} : vector<16x16x128xbf16> to vector<16x16x32xbf16>
    "tpu.trace_start"() <{level = 10 : i32, message = "bqk,bkd->bqd"}> : () -> ()
    %cst_30 = arith.constant dense<0.000000e+00> : vector<16x16x32xf32>
    %87 = tpu.matmul %85, %86, %cst_30 {dimension_numbers = #tpu.dot_dimension_numbers<[2], [1], [1], [2], [0, 0, 0, 1, 1, 2], [0], [0]>} : vector<16x16x16xbf16>, vector<16x16x32xbf16>, vector<16x16x32xf32> -> vector<16x16x32xf32>
    "tpu.trace_stop"() : () -> ()
    %88 = vector.shape_cast %87 : vector<16x16x32xf32> to vector<256x32xf32>
    %89 = vector.extract_strided_slice %17 {offsets = [0, 0, 96], sizes = [16, 16, 32], strides = [1, 1, 1]} : vector<16x16x128xbf16> to vector<16x16x32xbf16>
    %90 = vector.extract_strided_slice %20 {offsets = [0, 0, 96], sizes = [16, 16, 32], strides = [1, 1, 1]} : vector<16x16x128xbf16> to vector<16x16x32xbf16>
    "tpu.trace_start"() <{level = 10 : i32, message = "bqd,bkd->bqk"}> : () -> ()
    %cst_31 = arith.constant dense<0.000000e+00> : vector<16x16x16xf32>
    %91 = tpu.matmul %89, %90, %cst_31 {dimension_numbers = #tpu.dot_dimension_numbers<[2], [2], [1], [1], [0, 0, 0, 1, 1, 1], [0], [0]>} : vector<16x16x32xbf16>, vector<16x16x32xbf16>, vector<16x16x16xf32> -> vector<16x16x16xf32>
    "tpu.trace_stop"() : () -> ()
    %92 = vector.extract_strided_slice %28 {offsets = [0, 3, 0, 0], sizes = [16, 1, 16, 16], strides = [1, 1, 1, 1]} : vector<16x4x16x16xf32> to vector<16x1x16x16xf32>
    %93 = vector.shape_cast %92 : vector<16x1x16x16xf32> to vector<16x16x16xf32>
    %94 = arith.addf %91, %93 : vector<16x16x16xf32>
    %cst_32 = arith.constant dense<0xFF800000> : vector<16x16xf32>
    %95 = vector.multi_reduction <maximumf>, %94, %cst_32 [2] : vector<16x16x16xf32> to vector<16x16xf32>
    %96 = vector.shape_cast %95 : vector<16x16xf32> to vector<16x16x1xf32>
    %97 = vector.broadcast %96 : vector<16x16x1xf32> to vector<16x16x16xf32>
    %98 = arith.subf %94, %97 : vector<16x16x16xf32>
    %99 = math.exp %98 : vector<16x16x16xf32>
    %cst_33 = arith.constant dense<0.000000e+00> : vector<16x16xf32>
    %100 = vector.multi_reduction <add>, %99, %cst_33 [2] : vector<16x16x16xf32> to vector<16x16xf32>
    %101 = vector.shape_cast %100 : vector<16x16xf32> to vector<16x16x1xf32>
    %102 = tpu.reciprocal %101 {approx = true} : vector<16x16x1xf32> -> vector<16x16x1xf32>
    %103 = vector.broadcast %102 : vector<16x16x1xf32> to vector<16x16x16xf32>
    %104 = arith.mulf %99, %103 : vector<16x16x16xf32>
    %105 = arith.truncf %104 : vector<16x16x16xf32> to vector<16x16x16xbf16>
    %106 = vector.extract_strided_slice %23 {offsets = [0, 0, 96], sizes = [16, 16, 32], strides = [1, 1, 1]} : vector<16x16x128xbf16> to vector<16x16x32xbf16>
    "tpu.trace_start"() <{level = 10 : i32, message = "bqk,bkd->bqd"}> : () -> ()
    %cst_34 = arith.constant dense<0.000000e+00> : vector<16x16x32xf32>
    %107 = tpu.matmul %105, %106, %cst_34 {dimension_numbers = #tpu.dot_dimension_numbers<[2], [1], [1], [2], [0, 0, 0, 1, 1, 2], [0], [0]>} : vector<16x16x16xbf16>, vector<16x16x32xbf16>, vector<16x16x32xf32> -> vector<16x16x32xf32>
    "tpu.trace_stop"() : () -> ()
    %108 = vector.shape_cast %107 : vector<16x16x32xf32> to vector<256x32xf32>
    %109 = tpu.concatenate %48, %68, %88, %108 in 1 : vector<256x32xf32>, vector<256x32xf32>, vector<256x32xf32>, vector<256x32xf32> -> vector<256x128xf32>
    %110 = arith.mulf %109, %14 : vector<256x128xf32>
    %111 = arith.truncf %110 : vector<256x128xf32> to vector<256x128xbf16>
    %c0_35 = arith.constant 0 : index
    %c0_36 = arith.constant 0 : index
    %112 = vector.load %arg8[%c0_35, %c0_36] : memref<128x32xbf16, #tpu.memory_space<vmem>>, vector<128x32xbf16>
    %cst_37 = arith.constant dense<0.000000e+00> : vector<256x32xf32>
    %113 = tpu.matmul %111, %112, %cst_37 {dimension_numbers = #tpu.dot_dimension_numbers<[1], [0], [0], [1], [0, 0, 1, 1], [], []>} : vector<256x128xbf16>, vector<128x32xbf16>, vector<256x32xf32> -> vector<256x32xf32>
    %c0_38 = arith.constant 0 : index
    %c0_39 = arith.constant 0 : index
    %114 = vector.load %arg9[%c0_38, %c0_39] : memref<1x32xf32, #tpu.memory_space<vmem>>, vector<1x32xf32>
    %115 = vector.broadcast %114 : vector<1x32xf32> to vector<256x32xf32>
    %116 = arith.addf %113, %115 : vector<256x32xf32>
    %c0_40 = arith.constant 0 : index
    %c0_41 = arith.constant 0 : index
    %117 = vector.load %arg10[%c0_40, %c0_41] : memref<256x32xf32, #tpu.memory_space<vmem>>, vector<256x32xf32>
    tpu.vector_store %arg10[%c0_40, %c0_41], %116 {strides = array<i32>} : memref<256x32xf32, #tpu.memory_space<vmem>>, vector<256x32xf32>,
    return
  }
  func.func @transform_0(%arg0: i32) -> (i32, i32) {
    %c0_i32 = arith.constant 0 : i32
    %c0_i32_0 = arith.constant 0 : i32
    return %arg0, %c0_i32 : i32, i32
  }
  func.func @transform_1(%arg0: i32) -> (i32, i32) {
    %c0_i32 = arith.constant 0 : i32
    %c0_i32_0 = arith.constant 0 : i32
    return %arg0, %c0_i32 : i32, i32
  }
  func.func @transform_2(%arg0: i32) -> (i32, i32, i32, i32) {
    %c0_i32 = arith.constant 0 : i32
    %c0_i32_0 = arith.constant 0 : i32
    %c0_i32_1 = arith.constant 0 : i32
    %c0_i32_2 = arith.constant 0 : i32
    return %arg0, %c0_i32, %c0_i32_0, %c0_i32_1 : i32, i32, i32, i32
  }
  func.func @transform_3(%arg0: i32) -> (i32, i32, i32, i32) {
    %c0_i32 = arith.constant 0 : i32
    %c0_i32_0 = arith.constant 0 : i32
    %c0_i32_1 = arith.constant 0 : i32
    %c0_i32_2 = arith.constant 0 : i32
    %c0_i32_3 = arith.constant 0 : i32
    return %c0_i32, %c0_i32_0, %c0_i32_1, %c0_i32_2 : i32, i32, i32, i32
  }
  func.func @transform_4(%arg0: i32) -> (i32, i32) {
    %c0_i32 = arith.constant 0 : i32
    %c0_i32_0 = arith.constant 0 : i32
    %c0_i32_1 = arith.constant 0 : i32
    return %c0_i32, %c0_i32_0 : i32, i32
  }
  func.func @transform_5(%arg0: i32) -> (i32, i32) {
    %c0_i32 = arith.constant 0 : i32
    %c0_i32_0 = arith.constant 0 : i32
    %c0_i32_1 = arith.constant 0 : i32
    return %c0_i32, %c0_i32_0 : i32, i32
  }
  func.func @transform_6(%arg0: i32) -> (i32, i32) {
    %c0_i32 = arith.constant 0 : i32
    %c0_i32_0 = arith.constant 0 : i32
    %c0_i32_1 = arith.constant 0 : i32
    return %c0_i32, %c0_i32_0 : i32, i32
  }
  func.func @transform_7(%arg0: i32) -> (i32, i32) {
    %c0_i32 = arith.constant 0 : i32
    %c0_i32_0 = arith.constant 0 : i32
    %c0_i32_1 = arith.constant 0 : i32
    return %c0_i32, %c0_i32_0 : i32, i32
  }
  func.func @transform_8(%arg0: i32) -> (i32, i32) {
    %c0_i32 = arith.constant 0 : i32
    %c0_i32_0 = arith.constant 0 : i32
    %c0_i32_1 = arith.constant 0 : i32
    return %c0_i32, %c0_i32_0 : i32, i32
  }
  func.func @transform_9(%arg0: i32) -> (i32, i32) {
    %c0_i32 = arith.constant 0 : i32
    %c0_i32_0 = arith.constant 0 : i32
    return %arg0, %c0_i32 : i32, i32
  }
}

</mosaic_0001>

<llo_original>
// kernel: tpu_custom_call.1
$region0: #{tpu_custom_call.1}
  #allocation0 [shape = 'u32[]', space=smem, size = 0x4, offset = 0x4, fixed_abs, tag = 'smem constant byte address 0x4 - core index']
  #allocation1 [shape = 'u32[144,128]{1,0:T(1,128)}', space=vmem, size = 0x12000, scoped, tag = 'internal scratch']
  %s0 = inlined_call_operand.vmem [shape: bf16[512,32], index: 0, kind: input, shape index: {}]
  %s1 = inlined_call_operand.vmem [shape: bf16[512,24], index: 1, kind: input, shape index: {}]
  %s2 = inlined_call_operand.vmem [shape: f32[32,1,1,16], index: 2, kind: input, shape index: {}]
  %s3 = inlined_call_operand.vmem [shape: f32[1,4,16,16], index: 3, kind: input, shape index: {}]
  %s4 = inlined_call_operand.vmem [shape: bf16[32,256], index: 4, kind: input, shape index: {}]
  %s5 = inlined_call_operand.vmem [shape: bf16[24,256], index: 5, kind: input, shape index: {}]
  %s6 = inlined_call_operand.vmem [shape: f32[1,128], index: 6, kind: input, shape index: {}]
  %s7 = inlined_call_operand.vmem [shape: bf16[128,32], index: 7, kind: input, shape index: {}]
  %s8 = inlined_call_operand.vmem [shape: f32[1,32], index: 8, kind: input, shape index: {}]
  %s9 = inlined_call_operand.vmem [shape: f32[512,32], index: 9, kind: output, shape index: {}]
  %s10 = sld [smem:[#allocation0]]
  $region69: #{tpu_custom_call.1} parent=0
    _
  %s12 = ssub.s32 1, %s10
  %s13 = scalar_select 0, %s12, %s10
  loop: start=0, step=1, limit=4
  $region2: #{tpu_custom_call.1} parent=0 // loop_pre_header
    _
  $region3: #{tpu_custom_call.1} parent=0 // loop_header
    %s15 = sphi 0, %s19
    %p16 = scmp.ge.s32.totalorder %s15, 4
    %s25 = sphi 0, %s27
    %s28 = sphi 0, %s25
    %s29 = sphi 0, %s28
    %s45 = sphi 0, %s29
    %s51 = sphi 0, %s53
    %s54 = sphi 0, %s51
    %s55 = sphi 0, %s54
    %s71 = sphi 0, %s55
    %s77 = sphi 0, %s79
    %s80 = sphi 0, %s77
    %s81 = sphi 0, %s80
    %s97 = sphi 0, %s81
    %s101 = sphi 0, %s101
    %s103 = sphi 0, %s101
    %s104 = sphi 0, %s103
    %s118 = sphi 0, %s104
    %s122 = sphi 0, %s122
    %s124 = sphi 0, %s122
    %s125 = sphi 0, %s124
    %s139 = sphi 0, %s125
    %s143 = sphi 0, %s143
    %s145 = sphi 0, %s143
    %s146 = sphi 0, %s145
    %s160 = sphi 0, %s146
    %s164 = sphi 0, %s164
    %s166 = sphi 0, %s164
    %s167 = sphi 0, %s166
    %s181 = sphi 0, %s167
    %s185 = sphi 0, %s185
    %s187 = sphi 0, %s185
    %s188 = sphi 0, %s187
    %s202 = sphi 0, %s188
    %s206 = sphi 0, %s206
    %s208 = sphi 0, %s206
    %s209 = sphi 0, %s208
    %s223 = sphi 0, %s209
    %s229 = sphi 0, %s231
    %s232 = sphi 0, %s229
    %s233 = sphi 0, %s232
    %s249 = sphi 0, %s233
  $region4: #{tpu_custom_call.1} parent=0 // loop_header_branch
    %18 = sbr.rel (%p16) target = $region8
  $region5: #{tpu_custom_call.1} parent=0 // loop_body
    %s20 = ssub.s32 %s15, 1
    %s21 = ssub.s32 %s15, 2
    %s22 = sadd.s32 %s15, 1
    %s23 = ssub.s32 %s15, %s22
    %p24 = scmp.eq.s32.totalorder %s23, 0
    %s26 = sadd.s32 %s25, 1
    %s27 = scalar_select %p24, %s25, %s26
    %p30 = pneg %p24
    %p31 = scmp.eq.s32.totalorder %s15, 1
    %p32 = por %p30, %p31
    %p33 = scmp.ne.s32.totalorder %s25, %s28
    %p34 = scmp.eq.s32.totalorder %s15, 0
    %p35 = por %p33, %p34
    %p36 = scmp.ne.s32.totalorder %s25, %s28
    %p37 = scmp.eq.s32.totalorder %s20, 1
    %p38 = por %p36, %p37
    %p39 = scmp.ne.s32.totalorder %s28, %s29
    %p40 = scmp.eq.s32.totalorder %s20, 0
    %p41 = por %p39, %p40
    %p42 = scmp.ne.s32.totalorder %s28, %s29
    %p43 = scmp.eq.s32.totalorder %s21, 1
    %p44 = por %p42, %p43
    %p46 = scmp.ne.s32.totalorder %s29, %s45
    %p47 = scmp.eq.s32.totalorder %s21, 0
    %p48 = por %p46, %p47
    %s49 = ssub.s32 %s15, %s22
    %p50 = scmp.eq.s32.totalorder %s49, 0
    %s52 = sadd.s32 %s51, 1
    %s53 = scalar_select %p50, %s51, %s52
    %p56 = pneg %p50
    %p57 = scmp.eq.s32.totalorder %s15, 1
    %p58 = por %p56, %p57
    %p59 = scmp.ne.s32.totalorder %s51, %s54
    %p60 = scmp.eq.s32.totalorder %s15, 0
    %p61 = por %p59, %p60
    %p62 = scmp.ne.s32.totalorder %s51, %s54
    %p63 = scmp.eq.s32.totalorder %s20, 1
    %p64 = por %p62, %p63
    %p65 = scmp.ne.s32.totalorder %s54, %s55
    %p66 = scmp.eq.s32.totalorder %s20, 0
    %p67 = por %p65, %p66
    %p68 = scmp.ne.s32.totalorder %s54, %s55
    %p69 = scmp.eq.s32.totalorder %s21, 1
    %p70 = por %p68, %p69
    %p72 = scmp.ne.s32.totalorder %s55, %s71
    %p73 = scmp.eq.s32.totalorder %s21, 0
    %p74 = por %p72, %p73
    %s75 = ssub.s32 %s15, %s22
    %p76 = scmp.eq.s32.totalorder %s75, 0
    %s78 = sadd.s32 %s77, 1
    %s79 = scalar_select %p76, %s77, %s78
    %p82 = pneg %p76
    %p83 = scmp.eq.s32.totalorder %s15, 1
    %p84 = por %p82, %p83
    %p85 = scmp.ne.s32.totalorder %s77, %s80
    %p86 = scmp.eq.s32.totalorder %s15, 0
    %p87 = por %p85, %p86
    %p88 = scmp.ne.s32.totalorder %s77, %s80
    %p89 = scmp.eq.s32.totalorder %s20, 1
    %p90 = por %p88, %p89
    %p91 = scmp.ne.s32.totalorder %s80, %s81
    %p92 = scmp.eq.s32.totalorder %s20, 0
    %p93 = por %p91, %p92
    %p94 = scmp.ne.s32.totalorder %s80, %s81
    %p95 = scmp.eq.s32.totalorder %s21, 1
    %p96 = por %p94, %p95
    %p98 = scmp.ne.s32.totalorder %s81, %s97
    %p99 = scmp.eq.s32.totalorder %s21, 0
    %p100 = por %p98, %p99
    %s102 = sadd.s32 %s101, 1
    %p105 = scmp.eq.s32.totalorder %s15, 1
    %p106 = scmp.ne.s32.totalorder %s101, %s103
    %p107 = scmp.eq.s32.totalorder %s15, 0
    %p108 = por %p106, %p107
    %p109 = scmp.ne.s32.totalorder %s101, %s103
    %p110 = scmp.eq.s32.totalorder %s20, 1
    %p111 = por %p109, %p110
    %p112 = scmp.ne.s32.totalorder %s103, %s104
    %p113 = scmp.eq.s32.totalorder %s20, 0
    %p114 = por %p112, %p113
    %p115 = scmp.ne.s32.totalorder %s103, %s104
    %p116 = scmp.eq.s32.totalorder %s21, 1
    %p117 = por %p115, %p116
    %p119 = scmp.ne.s32.totalorder %s104, %s118
    %p120 = scmp.eq.s32.totalorder %s21, 0
    %p121 = por %p119, %p120
    %s123 = sadd.s32 %s122, 1
    %p126 = scmp.eq.s32.totalorder %s15, 1
    %p127 = scmp.ne.s32.totalorder %s122, %s124
    %p128 = scmp.eq.s32.totalorder %s15, 0
    %p129 = por %p127, %p128
    %p130 = scmp.ne.s32.totalorder %s122, %s124
    %p131 = scmp.eq.s32.totalorder %s20, 1
    %p132 = por %p130, %p131
    %p133 = scmp.ne.s32.totalorder %s124, %s125
    %p134 = scmp.eq.s32.totalorder %s20, 0
    %p135 = por %p133, %p134
    %p136 = scmp.ne.s32.totalorder %s124, %s125
    %p137 = scmp.eq.s32.totalorder %s21, 1
    %p138 = por %p136, %p137
    %p140 = scmp.ne.s32.totalorder %s125, %s139
    %p141 = scmp.eq.s32.totalorder %s21, 0
    %p142 = por %p140, %p141
    %s144 = sadd.s32 %s143, 1
    %p147 = scmp.eq.s32.totalorder %s15, 1
    %p148 = scmp.ne.s32.totalorder %s143, %s145
    %p149 = scmp.eq.s32.totalorder %s15, 0
    %p150 = por %p148, %p149
    %p151 = scmp.ne.s32.totalorder %s143, %s145
    %p152 = scmp.eq.s32.totalorder %s20, 1
    %p153 = por %p151, %p152
    %p154 = scmp.ne.s32.totalorder %s145, %s146
    %p155 = scmp.eq.s32.totalorder %s20, 0
    %p156 = por %p154, %p155
    %p157 = scmp.ne.s32.totalorder %s145, %s146
    %p158 = scmp.eq.s32.totalorder %s21, 1
    %p159 = por %p157, %p158
    %p161 = scmp.ne.s32.totalorder %s146, %s160
    %p162 = scmp.eq.s32.totalorder %s21, 0
    %p163 = por %p161, %p162
    %s165 = sadd.s32 %s164, 1
    %p168 = scmp.eq.s32.totalorder %s15, 1
    %p169 = scmp.ne.s32.totalorder %s164, %s166
    %p170 = scmp.eq.s32.totalorder %s15, 0
    %p171 = por %p169, %p170
    %p172 = scmp.ne.s32.totalorder %s164, %s166
    %p173 = scmp.eq.s32.totalorder %s20, 1
    %p174 = por %p172, %p173
    %p175 = scmp.ne.s32.totalorder %s166, %s167
    %p176 = scmp.eq.s32.totalorder %s20, 0
    %p177 = por %p175, %p176
    %p178 = scmp.ne.s32.totalorder %s166, %s167
    %p179 = scmp.eq.s32.totalorder %s21, 1
    %p180 = por %p178, %p179
    %p182 = scmp.ne.s32.totalorder %s167, %s181
    %p183 = scmp.eq.s32.totalorder %s21, 0
    %p184 = por %p182, %p183
    %s186 = sadd.s32 %s185, 1
    %p189 = scmp.eq.s32.totalorder %s15, 1
    %p190 = scmp.ne.s32.totalorder %s185, %s187
    %p191 = scmp.eq.s32.totalorder %s15, 0
    %p192 = por %p190, %p191
    %p193 = scmp.ne.s32.totalorder %s185, %s187
    %p194 = scmp.eq.s32.totalorder %s20, 1
    %p195 = por %p193, %p194
    %p196 = scmp.ne.s32.totalorder %s187, %s188
    %p197 = scmp.eq.s32.totalorder %s20, 0
    %p198 = por %p196, %p197
    %p199 = scmp.ne.s32.totalorder %s187, %s188
    %p200 = scmp.eq.s32.totalorder %s21, 1
    %p201 = por %p199, %p200
    %p203 = scmp.ne.s32.totalorder %s188, %s202
    %p204 = scmp.eq.s32.totalorder %s21, 0
    %p205 = por %p203, %p204
    %s207 = sadd.s32 %s206, 1
    %p210 = scmp.eq.s32.totalorder %s15, 1
    %p211 = scmp.ne.s32.totalorder %s206, %s208
    %p212 = scmp.eq.s32.totalorder %s15, 0
    %p213 = por %p211, %p212
    %p214 = scmp.ne.s32.totalorder %s206, %s208
    %p215 = scmp.eq.s32.totalorder %s20, 1
    %p216 = por %p214, %p215
    %p217 = scmp.ne.s32.totalorder %s208, %s209
    %p218 = scmp.eq.s32.totalorder %s20, 0
    %p219 = por %p217, %p218
    %p220 = scmp.ne.s32.totalorder %s208, %s209
    %p221 = scmp.eq.s32.totalorder %s21, 1
    %p222 = por %p220, %p221
    %p224 = scmp.ne.s32.totalorder %s209, %s223
    %p225 = scmp.eq.s32.totalorder %s21, 0
    %p226 = por %p224, %p225
    %s227 = ssub.s32 %s15, %s22
    %p228 = scmp.eq.s32.totalorder %s227, 0
    %s230 = sadd.s32 %s229, 1
    %s231 = scalar_select %p228, %s229, %s230
    %p234 = pneg %p228
    %p235 = scmp.eq.s32.totalorder %s15, 1
    %p236 = por %p234, %p235
    %p237 = scmp.ne.s32.totalorder %s229, %s232
    %p238 = scmp.eq.s32.totalorder %s15, 0
    %p239 = por %p237, %p238
    %p240 = scmp.ne.s32.totalorder %s229, %s232
    %p241 = scmp.eq.s32.totalorder %s20, 1
    %p242 = por %p240, %p241
    %p243 = scmp.ne.s32.totalorder %s232, %s233
    %p244 = scmp.eq.s32.totalorder %s20, 0
    %p245 = por %p243, %p244
    %p246 = scmp.ne.s32.totalorder %s232, %s233
    %p247 = scmp.eq.s32.totalorder %s21, 1
    %p248 = por %p246, %p247
    %p250 = scmp.ne.s32.totalorder %s233, %s249
    %p251 = scmp.eq.s32.totalorder %s21, 0
    %p252 = por %p250, %p251
    %p253 = scmp.le.s32.totalorder 1, %s15
    %p254 = scmp.lt.s32.totalorder %s15, 3
    %p255 = pnand %p253, %p254
    %p256 = pneg %p255
    // Predicated region
    $region9: #{tpu_custom_call.1} parent=5 // pred_check
      _
    $region10: #{tpu_custom_call.1} parent=5 // pred_check_branch
      %258 = sbr.rel (%p255) target = $region12
    $region11: #{tpu_custom_call.1} parent=5 // pred_region
      %s259 = ssub.s32 %s15, 1
      // Predicated region
      $region13: #{tpu_custom_call.1} parent=11 // pred_check
        %p260 = pneg %p114
      $region14: #{tpu_custom_call.1} parent=11 // pred_check_branch
        %262 = sbr.rel (%p260) target = $region16
      $region15: #{tpu_custom_call.1} parent=11 // pred_region
        _
      $region16: #{tpu_custom_call.1} parent=11 // pred_fallthru
        _
      // Predicated region
      $region17: #{tpu_custom_call.1} parent=11 // pred_check
        %p263 = pneg %p135
      $region18: #{tpu_custom_call.1} parent=11 // pred_check_branch
        %265 = sbr.rel (%p263) target = $region20
      $region19: #{tpu_custom_call.1} parent=11 // pred_region
        _
      $region20: #{tpu_custom_call.1} parent=11 // pred_fallthru
        _
      // Predicated region
      $region21: #{tpu_custom_call.1} parent=11 // pred_check
        %p266 = pneg %p156
      $region22: #{tpu_custom_call.1} parent=11 // pred_check_branch
        %268 = sbr.rel (%p266) target = $region24
      $region23: #{tpu_custom_call.1} parent=11 // pred_region
        _
      $region24: #{tpu_custom_call.1} parent=11 // pred_fallthru
        _
      // Predicated region
      $region25: #{tpu_custom_call.1} parent=11 // pred_check
        %p269 = pneg %p177
      $region26: #{tpu_custom_call.1} parent=11 // pred_check_branch
        %271 = sbr.rel (%p269) target = $region28
      $region27: #{tpu_custom_call.1} parent=11 // pred_region
        _
      $region28: #{tpu_custom_call.1} parent=11 // pred_fallthru
        _
      // Predicated region
      $region29: #{tpu_custom_call.1} parent=11 // pred_check
        %p272 = pneg %p198
      $region30: #{tpu_custom_call.1} parent=11 // pred_check_branch
        %274 = sbr.rel (%p272) target = $region32
      $region31: #{tpu_custom_call.1} parent=11 // pred_region
        _
      $region32: #{tpu_custom_call.1} parent=11 // pred_fallthru
        _
      // Predicated region
      $region33: #{tpu_custom_call.1} parent=11 // pred_check
        %p275 = pneg %p219
      $region34: #{tpu_custom_call.1} parent=11 // pred_check_branch
        %277 = sbr.rel (%p275) target = $region36
      $region35: #{tpu_custom_call.1} parent=11 // pred_region
        _
      $region36: #{tpu_custom_call.1} parent=11 // pred_fallthru
        _
    $region12: #{tpu_custom_call.1} parent=5 // pred_fallthru
      _
    %p278 = scmp.lt.s32.totalorder %s15, 2
    // Predicated region
    $region37: #{tpu_custom_call.1} parent=5 // pred_check
      %p279 = pneg %p278
    $region38: #{tpu_custom_call.1} parent=5 // pred_check_branch
      %281 = sbr.rel (%p279) target = $region40
    $region39: #{tpu_custom_call.1} parent=5 // pred_region
      // Predicated region
      $region41: #{tpu_custom_call.1} parent=39 // pred_check
        %p282 = pneg %p35
      $region42: #{tpu_custom_call.1} parent=39 // pred_check_branch
        %284 = sbr.rel (%p282) target = $region44
      $region43: #{tpu_custom_call.1} parent=39 // pred_region
        %s285 = smul.u32 32, %s15
        %p286 = scmp.lt.s32.totalorder %s285, 63
        %s287 = scalar_select %p286, %s285, 63
        %s288 = smul.addr %s287, 4
        %s289 = scalar_lea.vmem %s0, %s288
        %s290 = smul.u32 32, %s15
      $region44: #{tpu_custom_call.1} parent=39 // pred_fallthru
        _
      // Predicated region
      $region45: #{tpu_custom_call.1} parent=39 // pred_check
        %p291 = pneg %p61
      $region46: #{tpu_custom_call.1} parent=39 // pred_check_branch
        %293 = sbr.rel (%p291) target = $region48
      $region47: #{tpu_custom_call.1} parent=39 // pred_region
        %s294 = smul.u32 32, %s15
        %p295 = scmp.lt.s32.totalorder %s294, 63
        %s296 = scalar_select %p295, %s294, 63
        %s297 = smul.addr %s296, 4
        %s298 = scalar_lea.vmem %s1, %s297
        %s299 = smul.u32 32, %s15
      $region48: #{tpu_custom_call.1} parent=39 // pred_fallthru
        _
      // Predicated region
      $region49: #{tpu_custom_call.1} parent=39 // pred_check
        %p300 = pneg %p87
      $region50: #{tpu_custom_call.1} parent=39 // pred_check_branch
        %302 = sbr.rel (%p300) target = $region52
      $region51: #{tpu_custom_call.1} parent=39 // pred_region
        %s303 = smul.u32 16, %s15
        %p304 = scmp.lt.s32.totalorder %s303, 31
        %s305 = scalar_select %p304, %s303, 31
        %s306 = scalar_lea.vmem %s2, %s305
        %s307 = smul.u32 16, %s15
      $region52: #{tpu_custom_call.1} parent=39 // pred_fallthru
        _
    $region40: #{tpu_custom_call.1} parent=5 // pred_fallthru
      _
    %p308 = scmp.le.s32.totalorder 1, %s15
    %p309 = scmp.lt.s32.totalorder %s15, 3
    %p310 = pnand %p308, %p309
    %p311 = pneg %p310
    // Predicated region
    $region53: #{tpu_custom_call.1} parent=5 // pred_check
      _
    $region54: #{tpu_custom_call.1} parent=5 // pred_check_branch
      %313 = sbr.rel (%p310) target = $region56
    $region55: #{tpu_custom_call.1} parent=5 // pred_region
      %s314 = ssub.s32 %s15, 1
      %s315 = smul.u32 32, %s20
      %p316 = scmp.lt.s32.totalorder %s315, 63
      %s317 = scalar_select %p316, %s315, 63
      %s318 = smul.addr %s317, 4
      %s319 = scalar_lea.vmem %s0, %s318
      %p320 = pneg %p41
      %p321 = pneg %p38
      %s322 = smul.u32 32, %s20
      %p323 = scmp.lt.s32.totalorder %s322, 63
      %s324 = scalar_select %p323, %s322, 63
      %s325 = smul.addr %s324, 4
      %s326 = scalar_lea.vmem %s1, %s325
      %p327 = pneg %p67
      %p328 = pneg %p64
      %s329 = smul.u32 16, %s20
      %p330 = scmp.lt.s32.totalorder %s329, 31
      %s331 = scalar_select %p330, %s329, 31
      %s332 = scalar_lea.vmem %s2, %s331
      %p333 = pneg %p93
      %p334 = pneg %p90
      %p335 = pneg %p114
      %p336 = pneg %p111
      %p337 = pneg %p135
      %p338 = pneg %p132
      %p339 = pneg %p156
      %p340 = pneg %p153
      %p341 = pneg %p177
      %p342 = pneg %p174
      %p343 = pneg %p198
      %p344 = pneg %p195
      %p345 = pneg %p219
      %p346 = pneg %p216
      %p347 = pneg %p245
      %p348 = pneg %p242
      %s349 = smul.u32 32, %s20
      %p350 = scmp.lt.s32.totalorder %s349, 63
      %s351 = scalar_select %p350, %s349, 63
      %s352 = smul.addr %s351, 8
      %s353 = scalar_lea.vmem %s9, %s352
      %s354 = smul.u32 32, %s20
      %p355 = scmp.lt.s32.totalorder %s354, 63
      %s356 = scalar_select %p355, %s354, 63
      %s357 = smul.addr %s356, 4
      %s358 = scalar_lea.vmem %s0, %s357
      %s359 = smul.u32 32, %s20
      %s360 = smul.u32 32, %s20
      %p361 = scmp.lt.s32.totalorder %s360, 63
      %s362 = scalar_select %p361, %s360, 63
      %s363 = smul.addr %s362, 4
      %s364 = scalar_lea.vmem %s1, %s363
      %s365 = smul.u32 32, %s20
      %s366 = smul.u32 16, %s20
      %p367 = scmp.lt.s32.totalorder %s366, 31
      %s368 = scalar_select %p367, %s366, 31
      %s369 = scalar_lea.vmem %s2, %s368
      %s370 = smul.u32 16, %s20
      %s371 = smul.u32 32, %s20
      %p372 = scmp.lt.s32.totalorder %s371, 63
      %s373 = scalar_select %p372, %s371, 63
      %s374 = smul.addr %s373, 8
      %s375 = scalar_lea.vmem %s9, %s374
      %s376 = smul.u32 32, %s20
      %v378 = vld [vmem:[%s358] sm:$0xf]
      %v379 = vld [vmem:[%s358 + $0x4] sm:$0xf]
      %v380 = vld [vmem:[%s358 + $0x8] sm:$0xf]
      %v381 = vld [vmem:[%s358 + $0xc] sm:$0xf]
      %v382 = vld [vmem:[%s358 + $0x10] sm:$0xf]
      %v383 = vld [vmem:[%s358 + $0x14] sm:$0xf]
      %v384 = vld [vmem:[%s358 + $0x18] sm:$0xf]
      %v385 = vld [vmem:[%s358 + $0x1c] sm:$0xf]
      %v386 = vld [vmem:[%s358 + $0x20] sm:$0xf]
      %v387 = vld [vmem:[%s358 + $0x24] sm:$0xf]
      %v388 = vld [vmem:[%s358 + $0x28] sm:$0xf]
      %v389 = vld [vmem:[%s358 + $0x2c] sm:$0xf]
      %v390 = vld [vmem:[%s358 + $0x30] sm:$0xf]
      %v391 = vld [vmem:[%s358 + $0x34] sm:$0xf]
      %v392 = vld [vmem:[%s358 + $0x38] sm:$0xf]
      %v393 = vld [vmem:[%s358 + $0x3c] sm:$0xf]
      %v394 = vld [vmem:[%s358 + $0x40] sm:$0xf]
      %v395 = vld [vmem:[%s358 + $0x44] sm:$0xf]
      %v396 = vld [vmem:[%s358 + $0x48] sm:$0xf]
      %v397 = vld [vmem:[%s358 + $0x4c] sm:$0xf]
      %v398 = vld [vmem:[%s358 + $0x50] sm:$0xf]
      %v399 = vld [vmem:[%s358 + $0x54] sm:$0xf]
      %v400 = vld [vmem:[%s358 + $0x58] sm:$0xf]
      %v401 = vld [vmem:[%s358 + $0x5c] sm:$0xf]
      %v402 = vld [vmem:[%s358 + $0x60] sm:$0xf]
      %v403 = vld [vmem:[%s358 + $0x64] sm:$0xf]
      %v404 = vld [vmem:[%s358 + $0x68] sm:$0xf]
      %v405 = vld [vmem:[%s358 + $0x6c] sm:$0xf]
      %v406 = vld [vmem:[%s358 + $0x70] sm:$0xf]
      %v407 = vld [vmem:[%s358 + $0x74] sm:$0xf]
      %v408 = vld [vmem:[%s358 + $0x78] sm:$0xf]
      %v409 = vld [vmem:[%s358 + $0x7c] sm:$0xf]
      %v410 = vld [vmem:[%s4] sm:$0xff]
      %v411 = vld [vmem:[%s4 + $0x8] sm:$0xff]
      %v412 = vld [vmem:[%s4 + $0x10] sm:$0xff]
      %v413 = vld [vmem:[%s4 + $0x18] sm:$0xff]
      %v446 = vunpack.c.l.b16 %v378
      %v447 = vunpack.c.l.b16 %v379
      %v448 = vunpack.c.l.b16 %v380
      %v449 = vunpack.c.l.b16 %v381
      %v450 = vunpack.c.l.b16 %v382
      %v451 = vunpack.c.l.b16 %v383
      %v452 = vunpack.c.l.b16 %v384
      %v453 = vunpack.c.l.b16 %v385
      %v454 = vunpack.c.l.b16 %v386
      %v455 = vunpack.c.l.b16 %v387
      %v456 = vunpack.c.l.b16 %v388
      %v457 = vunpack.c.l.b16 %v389
      %v458 = vunpack.c.l.b16 %v390
      %v459 = vunpack.c.l.b16 %v391
      %v460 = vunpack.c.l.b16 %v392
      %v461 = vunpack.c.l.b16 %v393
      %v462 = vunpack.c.l.b16 %v394
      %v463 = vunpack.c.l.b16 %v395
      %v464 = vunpack.c.l.b16 %v396
      %v465 = vunpack.c.l.b16 %v397
      %v466 = vunpack.c.l.b16 %v398
      %v467 = vunpack.c.l.b16 %v399
      %v468 = vunpack.c.l.b16 %v400
      %v469 = vunpack.c.l.b16 %v401
      %v470 = vunpack.c.l.b16 %v402
      %v471 = vunpack.c.l.b16 %v403
      %v472 = vunpack.c.l.b16 %v404
      %v473 = vunpack.c.l.b16 %v405
      %v474 = vunpack.c.l.b16 %v406
      %v475 = vunpack.c.l.b16 %v407
      %v476 = vunpack.c.l.b16 %v408
      %v477 = vunpack.c.l.b16 %v409
      %v478 = vpack.c.b16 %v447, %v446
      %v479 = vpack.c.b16 %v449, %v448
      %v480 = vpack.c.b16 %v451, %v450
      %v481 = vpack.c.b16 %v453, %v452
      %v482 = vpack.c.b16 %v455, %v454
      %v483 = vpack.c.b16 %v457, %v456
      %v484 = vpack.c.b16 %v459, %v458
      %v485 = vpack.c.b16 %v461, %v460
      %v486 = vpack.c.b16 %v463, %v462
      %v487 = vpack.c.b16 %v465, %v464
      %v488 = vpack.c.b16 %v467, %v466
      %v489 = vpack.c.b16 %v469, %v468
      %v490 = vpack.c.b16 %v471, %v470
      %v491 = vpack.c.b16 %v473, %v472
      %v492 = vpack.c.b16 %v475, %v474
      %v493 = vpack.c.b16 %v477, %v476
      %v498 = vunpack.c.l.b16 %v410
      %v499 = vunpack.c.h.b16 %v410
      %v500 = vunpack.c.l.b16 %v411
      %v501 = vunpack.c.h.b16 %v411
      %v502 = vunpack.c.l.b16 %v412
      %v503 = vunpack.c.h.b16 %v412
      %v504 = vunpack.c.l.b16 %v413
      %v505 = vunpack.c.h.b16 %v413
      %v506 = vpack.c.b16 %v500, %v498
      %v507 = vpack.c.b16 %v501, %v499
      %v508 = vpack.c.b16 %v504, %v502
      %v509 = vpack.c.b16 %v505, %v503
      %vm514 = vcmask 261120
      %v516 = vsel %vm514, %v478, 0
      %v519 = vsel %vm514, %v479, 0
      %v522 = vsel %vm514, %v480, 0
      %v525 = vsel %vm514, %v481, 0
      %v528 = vsel %vm514, %v482, 0
      %v531 = vsel %vm514, %v483, 0
      %v534 = vsel %vm514, %v484, 0
      %v537 = vsel %vm514, %v485, 0
      %v540 = vsel %vm514, %v486, 0
      %v543 = vsel %vm514, %v487, 0
      %v546 = vsel %vm514, %v488, 0
      %v549 = vsel %vm514, %v489, 0
      %v552 = vsel %vm514, %v490, 0
      %v555 = vsel %vm514, %v491, 0
      %v558 = vsel %vm514, %v492, 0
      %v561 = vsel %vm514, %v493, 0
      %563 = vmatprep.subr.bf16.mxu0 %v507
      %564 = vmatpush1.bf16.msra.mxu0 %v506
      %565 = vmatprep.subr.bf16.mxu0 %v509
      %566 = vmatpush1.bf16.msra.mxu0 %v508
      %567 = vmatprep.subr.bf16.mxu0 0
      %568 = vmatpush1.bf16.msra.mxu0 0
      %569 = vmatprep.subr.bf16.mxu0 0
      %570 = vmatpush1.bf16.msra.mxu0 0
      %571 = vmatprep.subr.bf16.mxu0 0
      %572 = vmatpush1.bf16.msra.mxu0 0
      %573 = vmatprep.subr.bf16.mxu0 0
      %574 = vmatpush1.bf16.msra.mxu0 0
      %575 = vmatprep.subr.bf16.mxu0 0
      %576 = vmatpush1.bf16.msra.mxu0 0
      %577 = vmatprep.subr.bf16.mxu0 0
      %578 = vmatpush1.bf16.msra.mxu0 0
      %579 = vmatprep.subr.bf16.mxu0 0
      %580 = vmatpush1.bf16.msra.mxu0 0
      %581 = vmatprep.subr.bf16.mxu0 0
      %582 = vmatpush1.bf16.msra.mxu0 0
      %583 = vmatprep.subr.bf16.mxu0 0
      %584 = vmatpush1.bf16.msra.mxu0 0
      %585 = vmatprep.subr.bf16.mxu0 0
      %586 = vmatpush1.bf16.msra.mxu0 0
      %587 = vmatprep.subr.bf16.mxu0 0
      %588 = vmatpush1.bf16.msra.mxu0 0
      %589 = vmatprep.subr.bf16.mxu0 0
      %590 = vmatpush1.bf16.msra.mxu0 0
      %591 = vmatprep.subr.bf16.mxu0 0
      %592 = vmatpush1.bf16.msra.mxu0 0
      %593 = vmatprep.subr.bf16.mxu0 0
      %594 = vmatpush1.bf16.msra.mxu0 0
      %595 = vmatprep.mubr.bf16.mxu0 0
      %596 = vmatmul.mubr.bf16.gmra.mrb[0].mxu0 %v516
      %v597 = vpop.f32.mrb[0].mxu0
      %v598 = vadd.f32 0.0, %v597
      %v599 = vpop.f32.mrb[0].mxu0
      %v600 = vadd.f32 0.0, %v599
      %v601 = vpop.f32.mrb[0].mxu0
      %v602 = vadd.f32 0.0, %v601
      %v603 = vpop.f32.mrb[0].mxu0
      %v604 = vadd.f32 0.0, %v603
      %605 = vmatprep.mubr.bf16.mxu0 0
      %606 = vmatmul.mubr.bf16.gmra.mrb[0].mxu0 %v519
      %v607 = vpop.f32.mrb[0].mxu0
      %v608 = vadd.f32 0.0, %v607
      %v609 = vpop.f32.mrb[0].mxu0
      %v610 = vadd.f32 0.0, %v609
      %v611 = vpop.f32.mrb[0].mxu0
      %v612 = vadd.f32 0.0, %v611
      %v613 = vpop.f32.mrb[0].mxu0
      %v614 = vadd.f32 0.0, %v613
      %615 = vmatprep.mubr.bf16.mxu0 0
      %616 = vmatmul.mubr.bf16.gmra.mrb[0].mxu0 %v522
      %v617 = vpop.f32.mrb[0].mxu0
      %v618 = vadd.f32 0.0, %v617
      %v619 = vpop.f32.mrb[0].mxu0
      %v620 = vadd.f32 0.0, %v619
      %v621 = vpop.f32.mrb[0].mxu0
      %v622 = vadd.f32 0.0, %v621
      %v623 = vpop.f32.mrb[0].mxu0
      %v624 = vadd.f32 0.0, %v623
      %625 = vmatprep.mubr.bf16.mxu0 0
      %626 = vmatmul.mubr.bf16.gmra.mrb[0].mxu0 %v525
      %v627 = vpop.f32.mrb[0].mxu0
      %v628 = vadd.f32 0.0, %v627
      %v629 = vpop.f32.mrb[0].mxu0
      %v630 = vadd.f32 0.0, %v629
      %v631 = vpop.f32.mrb[0].mxu0
      %v632 = vadd.f32 0.0, %v631
      %v633 = vpop.f32.mrb[0].mxu0
      %v634 = vadd.f32 0.0, %v633
      %635 = vmatprep.mubr.bf16.mxu0 0
      %636 = vmatmul.mubr.bf16.gmra.mrb[0].mxu0 %v528
      %v637 = vpop.f32.mrb[0].mxu0
      %v638 = vadd.f32 0.0, %v637
      %v639 = vpop.f32.mrb[0].mxu0
      %v640 = vadd.f32 0.0, %v639
      %v641 = vpop.f32.mrb[0].mxu0
      %v642 = vadd.f32 0.0, %v641
      %v643 = vpop.f32.mrb[0].mxu0
      %v644 = vadd.f32 0.0, %v643
      %645 = vmatprep.mubr.bf16.mxu0 0
      %646 = vmatmul.mubr.bf16.gmra.mrb[0].mxu0 %v531
      %v647 = vpop.f32.mrb[0].mxu0
      %v648 = vadd.f32 0.0, %v647
      %v649 = vpop.f32.mrb[0].mxu0
      %v650 = vadd.f32 0.0, %v649
      %v651 = vpop.f32.mrb[0].mxu0
      %v652 = vadd.f32 0.0, %v651
      %v653 = vpop.f32.mrb[0].mxu0
      %v654 = vadd.f32 0.0, %v653
      %655 = vmatprep.mubr.bf16.mxu0 0
      %656 = vmatmul.mubr.bf16.gmra.mrb[0].mxu0 %v534
      %v657 = vpop.f32.mrb[0].mxu0
      %v658 = vadd.f32 0.0, %v657
      %v659 = vpop.f32.mrb[0].mxu0
      %v660 = vadd.f32 0.0, %v659
      %v661 = vpop.f32.mrb[0].mxu0
      %v662 = vadd.f32 0.0, %v661
      %v663 = vpop.f32.mrb[0].mxu0
      %v664 = vadd.f32 0.0, %v663
      %665 = vmatprep.mubr.bf16.mxu0 0
      %666 = vmatmul.mubr.bf16.gmra.mrb[0].mxu0 %v537
      %v667 = vpop.f32.mrb[0].mxu0
      %v668 = vadd.f32 0.0, %v667
      %v669 = vpop.f32.mrb[0].mxu0
      %v670 = vadd.f32 0.0, %v669
      %v671 = vpop.f32.mrb[0].mxu0
      %v672 = vadd.f32 0.0, %v671
      %v673 = vpop.f32.mrb[0].mxu0
      %v674 = vadd.f32 0.0, %v673
      %675 = vmatprep.mubr.bf16.mxu0 0
      %676 = vmatmul.mubr.bf16.gmra.mrb[0].mxu0 %v540
      %v677 = vpop.f32.mrb[0].mxu0
      %v678 = vadd.f32 0.0, %v677
      %v679 = vpop.f32.mrb[0].mxu0
      %v680 = vadd.f32 0.0, %v679
      %v681 = vpop.f32.mrb[0].mxu0
      %v682 = vadd.f32 0.0, %v681
      %v683 = vpop.f32.mrb[0].mxu0
      %v684 = vadd.f32 0.0, %v683
      %685 = vmatprep.mubr.bf16.mxu0 0
      %686 = vmatmul.mubr.bf16.gmra.mrb[0].mxu0 %v543
      %v687 = vpop.f32.mrb[0].mxu0
      %v688 = vadd.f32 0.0, %v687
      %v689 = vpop.f32.mrb[0].mxu0
      %v690 = vadd.f32 0.0, %v689
      %v691 = vpop.f32.mrb[0].mxu0
      %v692 = vadd.f32 0.0, %v691
      %v693 = vpop.f32.mrb[0].mxu0
      %v694 = vadd.f32 0.0, %v693
      %695 = vmatprep.mubr.bf16.mxu0 0
      %696 = vmatmul.mubr.bf16.gmra.mrb[0].mxu0 %v546
      %v697 = vpop.f32.mrb[0].mxu0
      %v698 = vadd.f32 0.0, %v697
      %v699 = vpop.f32.mrb[0].mxu0
      %v700 = vadd.f32 0.0, %v699
      %v701 = vpop.f32.mrb[0].mxu0
      %v702 = vadd.f32 0.0, %v701
      %v703 = vpop.f32.mrb[0].mxu0
      %v704 = vadd.f32 0.0, %v703
      %705 = vmatprep.mubr.bf16.mxu0 0
      %706 = vmatmul.mubr.bf16.gmra.mrb[0].mxu0 %v549
      %v707 = vpop.f32.mrb[0].mxu0
      %v708 = vadd.f32 0.0, %v707
      %v709 = vpop.f32.mrb[0].mxu0
      %v710 = vadd.f32 0.0, %v709
      %v711 = vpop.f32.mrb[0].mxu0
      %v712 = vadd.f32 0.0, %v711
      %v713 = vpop.f32.mrb[0].mxu0
      %v714 = vadd.f32 0.0, %v713
      %715 = vmatprep.mubr.bf16.mxu0 0
      %716 = vmatmul.mubr.bf16.gmra.mrb[0].mxu0 %v552
      %v717 = vpop.f32.mrb[0].mxu0
      %v718 = vadd.f32 0.0, %v717
      %v719 = vpop.f32.mrb[0].mxu0
      %v720 = vadd.f32 0.0, %v719
      %v721 = vpop.f32.mrb[0].mxu0
      %v722 = vadd.f32 0.0, %v721
      %v723 = vpop.f32.mrb[0].mxu0
      %v724 = vadd.f32 0.0, %v723
      %725 = vmatprep.mubr.bf16.mxu0 0
      %726 = vmatmul.mubr.bf16.gmra.mrb[0].mxu0 %v555
      %v727 = vpop.f32.mrb[0].mxu0
      %v728 = vadd.f32 0.0, %v727
      %v729 = vpop.f32.mrb[0].mxu0
      %v730 = vadd.f32 0.0, %v729
      %v731 = vpop.f32.mrb[0].mxu0
      %v732 = vadd.f32 0.0, %v731
      %v733 = vpop.f32.mrb[0].mxu0
      %v734 = vadd.f32 0.0, %v733
      %735 = vmatprep.mubr.bf16.mxu0 0
      %736 = vmatmul.mubr.bf16.gmra.mrb[0].mxu0 %v558
      %v737 = vpop.f32.mrb[0].mxu0
      %v738 = vadd.f32 0.0, %v737
      %v739 = vpop.f32.mrb[0].mxu0
      %v740 = vadd.f32 0.0, %v739
      %v741 = vpop.f32.mrb[0].mxu0
      %v742 = vadd.f32 0.0, %v741
      %v743 = vpop.f32.mrb[0].mxu0
      %v744 = vadd.f32 0.0, %v743
      %745 = vmatprep.mubr.bf16.mxu0 0
      %746 = vmatmul.mubr.bf16.gmra.mrb[0].mxu0 %v561
      %v747 = vpop.f32.mrb[0].mxu0
      %v748 = vadd.f32 0.0, %v747
      %v749 = vpop.f32.mrb[0].mxu0
      %v750 = vadd.f32 0.0, %v749
      %v751 = vpop.f32.mrb[0].mxu0
      %v752 = vadd.f32 0.0, %v751
      %v753 = vpop.f32.mrb[0].mxu0
      %v754 = vadd.f32 0.0, %v753
      %755 = vdwg.mxu0
      %v756 = vld [vmem:[%s364] sm:$0xf]
      %v757 = vld [vmem:[%s364 + $0x4] sm:$0xf]
      %v758 = vld [vmem:[%s364 + $0x8] sm:$0xf]
      %v759 = vld [vmem:[%s364 + $0xc] sm:$0xf]
      %v760 = vld [vmem:[%s364 + $0x10] sm:$0xf]
      %v761 = vld [vmem:[%s364 + $0x14] sm:$0xf]
      %v762 = vld [vmem:[%s364 + $0x18] sm:$0xf]
      %v763 = vld [vmem:[%s364 + $0x1c] sm:$0xf]
      %v764 = vld [vmem:[%s364 + $0x20] sm:$0xf]
      %v765 = vld [vmem:[%s364 + $0x24] sm:$0xf]
      %v766 = vld [vmem:[%s364 + $0x28] sm:$0xf]
      %v767 = vld [vmem:[%s364 + $0x2c] sm:$0xf]
      %v768 = vld [vmem:[%s364 + $0x30] sm:$0xf]
      %v769 = vld [vmem:[%s364 + $0x34] sm:$0xf]
      %v770 = vld [vmem:[%s364 + $0x38] sm:$0xf]
      %v771 = vld [vmem:[%s364 + $0x3c] sm:$0xf]
      %v772 = vld [vmem:[%s364 + $0x40] sm:$0xf]
      %v773 = vld [vmem:[%s364 + $0x44] sm:$0xf]
      %v774 = vld [vmem:[%s364 + $0x48] sm:$0xf]
      %v775 = vld [vmem:[%s364 + $0x4c] sm:$0xf]
      %v776 = vld [vmem:[%s364 + $0x50] sm:$0xf]
      %v777 = vld [vmem:[%s364 + $0x54] sm:$0xf]
      %v778 = vld [vmem:[%s364 + $0x58] sm:$0xf]
      %v779 = vld [vmem:[%s364 + $0x5c] sm:$0xf]
      %v780 = vld [vmem:[%s364 + $0x60] sm:$0xf]
      %v781 = vld [vmem:[%s364 + $0x64] sm:$0xf]
      %v782 = vld [vmem:[%s364 + $0x68] sm:$0xf]
      %v783 = vld [vmem:[%s364 + $0x6c] sm:$0xf]
      %v784 = vld [vmem:[%s364 + $0x70] sm:$0xf]
      %v785 = vld [vmem:[%s364 + $0x74] sm:$0xf]
      %v786 = vld [vmem:[%s364 + $0x78] sm:$0xf]
      %v787 = vld [vmem:[%s364 + $0x7c] sm:$0xf]
      %v788 = vld [vmem:[%s5] sm:$0xff]
      %v789 = vld [vmem:[%s5 + $0x8] sm:$0xff]
      %v790 = vld [vmem:[%s5 + $0x10] sm:$0xff]
      %v823 = vunpack.c.l.b16 %v756
      %v824 = vunpack.c.l.b16 %v757
      %v825 = vunpack.c.l.b16 %v758
      %v826 = vunpack.c.l.b16 %v759
      %v827 = vunpack.c.l.b16 %v760
      %v828 = vunpack.c.l.b16 %v761
      %v829 = vunpack.c.l.b16 %v762
      %v830 = vunpack.c.l.b16 %v763
      %v831 = vunpack.c.l.b16 %v764
      %v832 = vunpack.c.l.b16 %v765
      %v833 = vunpack.c.l.b16 %v766
      %v834 = vunpack.c.l.b16 %v767
      %v835 = vunpack.c.l.b16 %v768
      %v836 = vunpack.c.l.b16 %v769
      %v837 = vunpack.c.l.b16 %v770
      %v838 = vunpack.c.l.b16 %v771
      %v839 = vunpack.c.l.b16 %v772
      %v840 = vunpack.c.l.b16 %v773
      %v841 = vunpack.c.l.b16 %v774
      %v842 = vunpack.c.l.b16 %v775
      %v843 = vunpack.c.l.b16 %v776
      %v844 = vunpack.c.l.b16 %v777
      %v845 = vunpack.c.l.b16 %v778
      %v846 = vunpack.c.l.b16 %v779
      %v847 = vunpack.c.l.b16 %v780
      %v848 = vunpack.c.l.b16 %v781
      %v849 = vunpack.c.l.b16 %v782
      %v850 = vunpack.c.l.b16 %v783
      %v851 = vunpack.c.l.b16 %v784
      %v852 = vunpack.c.l.b16 %v785
      %v853 = vunpack.c.l.b16 %v786
      %v854 = vunpack.c.l.b16 %v787
      %v855 = vpack.c.b16 %v824, %v823
      %v856 = vpack.c.b16 %v826, %v825
      %v857 = vpack.c.b16 %v828, %v827
      %v858 = vpack.c.b16 %v830, %v829
      %v859 = vpack.c.b16 %v832, %v831
      %v860 = vpack.c.b16 %v834, %v833
      %v861 = vpack.c.b16 %v836, %v835
      %v862 = vpack.c.b16 %v838, %v837
      %v863 = vpack.c.b16 %v840, %v839
      %v864 = vpack.c.b16 %v842, %v841
      %v865 = vpack.c.b16 %v844, %v843
      %v866 = vpack.c.b16 %v846, %v845
      %v867 = vpack.c.b16 %v848, %v847
      %v868 = vpack.c.b16 %v850, %v849
      %v869 = vpack.c.b16 %v852, %v851
      %v870 = vpack.c.b16 %v854, %v853
      %v874 = vunpack.c.l.b16 %v788
      %v875 = vunpack.c.h.b16 %v788
      %v876 = vunpack.c.l.b16 %v789
      %v877 = vunpack.c.h.b16 %v789
      %v878 = vunpack.c.l.b16 %v790
      %v879 = vunpack.c.h.b16 %v790
      %v880 = vpack.c.b16 %v876, %v874
      %v881 = vpack.c.b16 %v877, %v875
      %v882 = vpack.c.b16 %v878, %v878
      %v883 = vpack.c.b16 %v879, %v879
      %vm886 = vcmask 195584
      %v888 = vsel %vm886, %v855, 0
      %v891 = vsel %vm886, %v856, 0
      %v894 = vsel %vm886, %v857, 0
      %v897 = vsel %vm886, %v858, 0
      %v900 = vsel %vm886, %v859, 0
      %v903 = vsel %vm886, %v860, 0
      %v906 = vsel %vm886, %v861, 0
      %v909 = vsel %vm886, %v862, 0
      %v912 = vsel %vm886, %v863, 0
      %v915 = vsel %vm886, %v864, 0
      %v918 = vsel %vm886, %v865, 0
      %v921 = vsel %vm886, %v866, 0
      %v924 = vsel %vm886, %v867, 0
      %v927 = vsel %vm886, %v868, 0
      %v930 = vsel %vm886, %v869, 0
      %v933 = vsel %vm886, %v870, 0
      %vm935 = vcmask 1043456
      %v937 = vsel %vm935, %v882, 0
      %v940 = vsel %vm935, %v883, 0
      %942 = vmatprep.subr.bf16.mxu0 %v881
      %943 = vmatpush1.bf16.msra.mxu0 %v880
      %944 = vmatprep.subr.bf16.mxu0 %v940
      %945 = vmatpush1.bf16.msra.mxu0 %v937
      %946 = vmatprep.subr.bf16.mxu0 0
      %947 = vmatpush1.bf16.msra.mxu0 0
      %948 = vmatprep.subr.bf16.mxu0 0
      %949 = vmatpush1.bf16.msra.mxu0 0
      %950 = vmatprep.subr.bf16.mxu0 0
      %951 = vmatpush1.bf16.msra.mxu0 0
      %952 = vmatprep.subr.bf16.mxu0 0
      %953 = vmatpush1.bf16.msra.mxu0 0
      %954 = vmatprep.subr.bf16.mxu0 0
      %955 = vmatpush1.bf16.msra.mxu0 0
      %956 = vmatprep.subr.bf16.mxu0 0
      %957 = vmatpush1.bf16.msra.mxu0 0
      %958 = vmatprep.subr.bf16.mxu0 0
      %959 = vmatpush1.bf16.msra.mxu0 0
      %960 = vmatprep.subr.bf16.mxu0 0
      %961 = vmatpush1.bf16.msra.mxu0 0
      %962 = vmatprep.subr.bf16.mxu0 0
      %963 = vmatpush1.bf16.msra.mxu0 0
      %964 = vmatprep.subr.bf16.mxu0 0
      %965 = vmatpush1.bf16.msra.mxu0 0
      %966 = vmatprep.subr.bf16.mxu0 0
      %967 = vmatpush1.bf16.msra.mxu0 0
      %968 = vmatprep.subr.bf16.mxu0 0
      %969 = vmatpush1.bf16.msra.mxu0 0
      %970 = vmatprep.subr.bf16.mxu0 0
      %971 = vmatpush1.bf16.msra.mxu0 0
      %972 = vmatprep.subr.bf16.mxu0 0
      %973 = vmatpush1.bf16.msra.mxu0 0
      %974 = vmatprep.mubr.bf16.mxu0 0
      %975 = vmatmul.mubr.bf16.gmra.mrb[0].mxu0 %v888
      %v976 = vpop.f32.mrb[0].mxu0
      %v977 = vadd.f32 0.0, %v976
      %v978 = vpop.f32.mrb[0].mxu0
      %v979 = vadd.f32 0.0, %v978
      %v980 = vpop.f32.mrb[0].mxu0
      %v981 = vadd.f32 0.0, %v980
      %v982 = vpop.f32.mrb[0].mxu0
      %v983 = vadd.f32 0.0, %v982
      %984 = vmatprep.mubr.bf16.mxu0 0
      %985 = vmatmul.mubr.bf16.gmra.mrb[0].mxu0 %v891
      %v986 = vpop.f32.mrb[0].mxu0
      %v987 = vadd.f32 0.0, %v986
      %v988 = vpop.f32.mrb[0].mxu0
      %v989 = vadd.f32 0.0, %v988
      %v990 = vpop.f32.mrb[0].mxu0
      %v991 = vadd.f32 0.0, %v990
      %v992 = vpop.f32.mrb[0].mxu0
      %v993 = vadd.f32 0.0, %v992
      %994 = vmatprep.mubr.bf16.mxu0 0
      %995 = vmatmul.mubr.bf16.gmra.mrb[0].mxu0 %v894
      %v996 = vpop.f32.mrb[0].mxu0
      %v997 = vadd.f32 0.0, %v996
      %v998 = vpop.f32.mrb[0].mxu0
      %v999 = vadd.f32 0.0, %v998
      %v1000 = vpop.f32.mrb[0].mxu0
      %v1001 = vadd.f32 0.0, %v1000
      %v1002 = vpop.f32.mrb[0].mxu0
      %v1003 = vadd.f32 0.0, %v1002
      %1004 = vmatprep.mubr.bf16.mxu0 0
      %1005 = vmatmul.mubr.bf16.gmra.mrb[0].mxu0 %v897
      %v1006 = vpop.f32.mrb[0].mxu0
      %v1007 = vadd.f32 0.0, %v1006
      %v1008 = vpop.f32.mrb[0].mxu0
      %v1009 = vadd.f32 0.0, %v1008
      %v1010 = vpop.f32.mrb[0].mxu0
      %v1011 = vadd.f32 0.0, %v1010
      %v1012 = vpop.f32.mrb[0].mxu0
      %v1013 = vadd.f32 0.0, %v1012
      %1014 = vmatprep.mubr.bf16.mxu0 0
      %1015 = vmatmul.mubr.bf16.gmra.mrb[0].mxu0 %v900
      %v1016 = vpop.f32.mrb[0].mxu0
      %v1017 = vadd.f32 0.0, %v1016
      %v1018 = vpop.f32.mrb[0].mxu0
      %v1019 = vadd.f32 0.0, %v1018
      %v1020 = vpop.f32.mrb[0].mxu0
      %v1021 = vadd.f32 0.0, %v1020
      %v1022 = vpop.f32.mrb[0].mxu0
      %v1023 = vadd.f32 0.0, %v1022
      %1024 = vmatprep.mubr.bf16.mxu0 0
      %1025 = vmatmul.mubr.bf16.gmra.mrb[0].mxu0 %v903
      %v1026 = vpop.f32.mrb[0].mxu0
      %v1027 = vadd.f32 0.0, %v1026
      %v1028 = vpop.f32.mrb[0].mxu0
      %v1029 = vadd.f32 0.0, %v1028
      %v1030 = vpop.f32.mrb[0].mxu0
      %v1031 = vadd.f32 0.0, %v1030
      %v1032 = vpop.f32.mrb[0].mxu0
      %v1033 = vadd.f32 0.0, %v1032
      %1034 = vmatprep.mubr.bf16.mxu0 0
      %1035 = vmatmul.mubr.bf16.gmra.mrb[0].mxu0 %v906
      %v1036 = vpop.f32.mrb[0].mxu0
      %v1037 = vadd.f32 0.0, %v1036
      %v1038 = vpop.f32.mrb[0].mxu0
      %v1039 = vadd.f32 0.0, %v1038
      %v1040 = vpop.f32.mrb[0].mxu0
      %v1041 = vadd.f32 0.0, %v1040
      %v1042 = vpop.f32.mrb[0].mxu0
      %v1043 = vadd.f32 0.0, %v1042
      %1044 = vmatprep.mubr.bf16.mxu0 0
      %1045 = vmatmul.mubr.bf16.gmra.mrb[0].mxu0 %v909
      %v1046 = vpop.f32.mrb[0].mxu0
      %v1047 = vadd.f32 0.0, %v1046
      %v1048 = vpop.f32.mrb[0].mxu0
      %v1049 = vadd.f32 0.0, %v1048
      %v1050 = vpop.f32.mrb[0].mxu0
      %v1051 = vadd.f32 0.0, %v1050
      %v1052 = vpop.f32.mrb[0].mxu0
      %v1053 = vadd.f32 0.0, %v1052
      %1054 = vmatprep.mubr.bf16.mxu0 0
      %1055 = vmatmul.mubr.bf16.gmra.mrb[0].mxu0 %v912
      %v1056 = vpop.f32.mrb[0].mxu0
      %v1057 = vadd.f32 0.0, %v1056
      %v1058 = vpop.f32.mrb[0].mxu0
      %v1059 = vadd.f32 0.0, %v1058
      %v1060 = vpop.f32.mrb[0].mxu0
      %v1061 = vadd.f32 0.0, %v1060
      %v1062 = vpop.f32.mrb[0].mxu0
      %v1063 = vadd.f32 0.0, %v1062
      %1064 = vmatprep.mubr.bf16.mxu0 0
      %1065 = vmatmul.mubr.bf16.gmra.mrb[0].mxu0 %v915
      %v1066 = vpop.f32.mrb[0].mxu0
      %v1067 = vadd.f32 0.0, %v1066
      %v1068 = vpop.f32.mrb[0].mxu0
      %v1069 = vadd.f32 0.0, %v1068
      %v1070 = vpop.f32.mrb[0].mxu0
      %v1071 = vadd.f32 0.0, %v1070
      %v1072 = vpop.f32.mrb[0].mxu0
      %v1073 = vadd.f32 0.0, %v1072
      %1074 = vmatprep.mubr.bf16.mxu0 0
      %1075 = vmatmul.mubr.bf16.gmra.mrb[0].mxu0 %v918
      %v1076 = vpop.f32.mrb[0].mxu0
      %v1077 = vadd.f32 0.0, %v1076
      %v1078 = vpop.f32.mrb[0].mxu0
      %v1079 = vadd.f32 0.0, %v1078
      %v1080 = vpop.f32.mrb[0].mxu0
      %v1081 = vadd.f32 0.0, %v1080
      %v1082 = vpop.f32.mrb[0].mxu0
      %v1083 = vadd.f32 0.0, %v1082
      %1084 = vmatprep.mubr.bf16.mxu0 0
      %1085 = vmatmul.mubr.bf16.gmra.mrb[0].mxu0 %v921
      %v1086 = vpop.f32.mrb[0].mxu0
      %v1087 = vadd.f32 0.0, %v1086
      %v1088 = vpop.f32.mrb[0].mxu0
      %v1089 = vadd.f32 0.0, %v1088
      %v1090 = vpop.f32.mrb[0].mxu0
      %v1091 = vadd.f32 0.0, %v1090
      %v1092 = vpop.f32.mrb[0].mxu0
      %v1093 = vadd.f32 0.0, %v1092
      %1094 = vmatprep.mubr.bf16.mxu0 0
      %1095 = vmatmul.mubr.bf16.gmra.mrb[0].mxu0 %v924
      %v1096 = vpop.f32.mrb[0].mxu0
      %v1097 = vadd.f32 0.0, %v1096
      %v1098 = vpop.f32.mrb[0].mxu0
      %v1099 = vadd.f32 0.0, %v1098
      %v1100 = vpop.f32.mrb[0].mxu0
      %v1101 = vadd.f32 0.0, %v1100
      %v1102 = vpop.f32.mrb[0].mxu0
      %v1103 = vadd.f32 0.0, %v1102
      %1104 = vmatprep.mubr.bf16.mxu0 0
      %1105 = vmatmul.mubr.bf16.gmra.mrb[0].mxu0 %v927
      %v1106 = vpop.f32.mrb[0].mxu0
      %v1107 = vadd.f32 0.0, %v1106
      %v1108 = vpop.f32.mrb[0].mxu0
      %v1109 = vadd.f32 0.0, %v1108
      %v1110 = vpop.f32.mrb[0].mxu0
      %v1111 = vadd.f32 0.0, %v1110
      %v1112 = vpop.f32.mrb[0].mxu0
      %v1113 = vadd.f32 0.0, %v1112
      %1114 = vmatprep.mubr.bf16.mxu0 0
      %1115 = vmatmul.mubr.bf16.gmra.mrb[0].mxu0 %v930
      %v1116 = vpop.f32.mrb[0].mxu0
      %v1117 = vadd.f32 0.0, %v1116
      %v1118 = vpop.f32.mrb[0].mxu0
      %v1119 = vadd.f32 0.0, %v1118
      %v1120 = vpop.f32.mrb[0].mxu0
      %v1121 = vadd.f32 0.0, %v1120
      %v1122 = vpop.f32.mrb[0].mxu0
      %v1123 = vadd.f32 0.0, %v1122
      %1124 = vmatprep.mubr.bf16.mxu0 0
      %1125 = vmatmul.mubr.bf16.gmra.mrb[0].mxu0 %v933
      %v1126 = vpop.f32.mrb[0].mxu0
      %v1127 = vadd.f32 0.0, %v1126
      %v1128 = vpop.f32.mrb[0].mxu0
      %v1129 = vadd.f32 0.0, %v1128
      %v1130 = vpop.f32.mrb[0].mxu0
      %v1131 = vadd.f32 0.0, %v1130
      %v1132 = vpop.f32.mrb[0].mxu0
      %v1133 = vadd.f32 0.0, %v1132
      %1134 = vdwg.mxu0
      %v1135 = vld [vmem:[%s6] sm:$0x1]
      %v1137 = vlaneseq
      %v1138 = vshrl.u32 %v1137, 7
      %v1139 = vsub.s32 0, %v1138
      %v1140 = vrot.slane %v1135, %v1139
      %v1142 = vadd.f32 %v600, %v1140
      %v1143 = vadd.f32 %v604, %v1140
      %v1144 = vadd.f32 %v610, %v1140
      %v1145 = vadd.f32 %v614, %v1140
      %v1146 = vadd.f32 %v620, %v1140
      %v1147 = vadd.f32 %v624, %v1140
      %v1148 = vadd.f32 %v630, %v1140
      %v1149 = vadd.f32 %v634, %v1140
      %v1150 = vadd.f32 %v640, %v1140
      %v1151 = vadd.f32 %v644, %v1140
      %v1152 = vadd.f32 %v650, %v1140
      %v1153 = vadd.f32 %v654, %v1140
      %v1154 = vadd.f32 %v660, %v1140
      %v1155 = vadd.f32 %v664, %v1140
      %v1156 = vadd.f32 %v670, %v1140
      %v1157 = vadd.f32 %v674, %v1140
      %v1158 = vadd.f32 %v680, %v1140
      %v1159 = vadd.f32 %v684, %v1140
      %v1160 = vadd.f32 %v690, %v1140
      %v1161 = vadd.f32 %v694, %v1140
      %v1162 = vadd.f32 %v700, %v1140
      %v1163 = vadd.f32 %v704, %v1140
      %v1164 = vadd.f32 %v710, %v1140
      %v1165 = vadd.f32 %v714, %v1140
      %v1166 = vadd.f32 %v720, %v1140
      %v1167 = vadd.f32 %v724, %v1140
      %v1168 = vadd.f32 %v730, %v1140
      %v1169 = vadd.f32 %v734, %v1140
      %v1170 = vadd.f32 %v740, %v1140
      %v1171 = vadd.f32 %v744, %v1140
      %v1172 = vadd.f32 %v750, %v1140
      %v1173 = vadd.f32 %v754, %v1140
      %v1174 = vxor.u32 %v1142, 2147483648
      %v1175 = vxor.u32 %v1143, 2147483648
      %v1176 = vxor.u32 %v1144, 2147483648
      %v1177 = vxor.u32 %v1145, 2147483648
      %v1178 = vxor.u32 %v1146, 2147483648
      %v1179 = vxor.u32 %v1147, 2147483648
      %v1180 = vxor.u32 %v1148, 2147483648
      %v1181 = vxor.u32 %v1149, 2147483648
      %v1182 = vxor.u32 %v1150, 2147483648
      %v1183 = vxor.u32 %v1151, 2147483648
      %v1184 = vxor.u32 %v1152, 2147483648
      %v1185 = vxor.u32 %v1153, 2147483648
      %v1186 = vxor.u32 %v1154, 2147483648
      %v1187 = vxor.u32 %v1155, 2147483648
      %v1188 = vxor.u32 %v1156, 2147483648
      %v1189 = vxor.u32 %v1157, 2147483648
      %v1190 = vxor.u32 %v1158, 2147483648
      %v1191 = vxor.u32 %v1159, 2147483648
      %v1192 = vxor.u32 %v1160, 2147483648
      %v1193 = vxor.u32 %v1161, 2147483648
      %v1194 = vxor.u32 %v1162, 2147483648
      %v1195 = vxor.u32 %v1163, 2147483648
      %v1196 = vxor.u32 %v1164, 2147483648
      %v1197 = vxor.u32 %v1165, 2147483648
      %v1198 = vxor.u32 %v1166, 2147483648
      %v1199 = vxor.u32 %v1167, 2147483648
      %v1200 = vxor.u32 %v1168, 2147483648
      %v1201 = vxor.u32 %v1169, 2147483648
      %v1202 = vxor.u32 %v1170, 2147483648
      %v1203 = vxor.u32 %v1171, 2147483648
      %v1204 = vxor.u32 %v1172, 2147483648
      %v1205 = vxor.u32 %v1173, 2147483648
      %v1206 = vmul.f32 %v1174, 1.442695
      %v1207 = vpow.pop %v1206
      %v1208 = vmul.f32 %v1175, 1.442695
      %v1209 = vpow.pop %v1208
      %v1210 = vmul.f32 %v1176, 1.442695
      %v1211 = vpow.pop %v1210
      %v1212 = vmul.f32 %v1177, 1.442695
      %v1213 = vpow.pop %v1212
      %v1214 = vmul.f32 %v1178, 1.442695
      %v1215 = vpow.pop %v1214
      %v1216 = vmul.f32 %v1179, 1.442695
      %v1217 = vpow.pop %v1216
      %v1218 = vmul.f32 %v1180, 1.442695
      %v1219 = vpow.pop %v1218
      %v1220 = vmul.f32 %v1181, 1.442695
      %v1221 = vpow.pop %v1220
      %v1222 = vmul.f32 %v1182, 1.442695
      %v1223 = vpow.pop %v1222
      %v1224 = vmul.f32 %v1183, 1.442695
      %v1225 = vpow.pop %v1224
      %v1226 = vmul.f32 %v1184, 1.442695
      %v1227 = vpow.pop %v1226
      %v1228 = vmul.f32 %v1185, 1.442695
      %v1229 = vpow.pop %v1228
      %v1230 = vmul.f32 %v1186, 1.442695
      %v1231 = vpow.pop %v1230
      %v1232 = vmul.f32 %v1187, 1.442695
      %v1233 = vpow.pop %v1232
      %v1234 = vmul.f32 %v1188, 1.442695
      %v1235 = vpow.pop %v1234
      %v1236 = vmul.f32 %v1189, 1.442695
      %v1237 = vpow.pop %v1236
      %v1238 = vmul.f32 %v1190, 1.442695
      %v1239 = vpow.pop %v1238
      %v1240 = vmul.f32 %v1191, 1.442695
      %v1241 = vpow.pop %v1240
      %v1242 = vmul.f32 %v1192, 1.442695
      %v1243 = vpow.pop %v1242
      %v1244 = vmul.f32 %v1193, 1.442695
      %v1245 = vpow.pop %v1244
      %v1246 = vmul.f32 %v1194, 1.442695
      %v1247 = vpow.pop %v1246
      %v1248 = vmul.f32 %v1195, 1.442695
      %v1249 = vpow.pop %v1248
      %v1250 = vmul.f32 %v1196, 1.442695
      %v1251 = vpow.pop %v1250
      %v1252 = vmul.f32 %v1197, 1.442695
      %v1253 = vpow.pop %v1252
      %v1254 = vmul.f32 %v1198, 1.442695
      %v1255 = vpow.pop %v1254
      %v1256 = vmul.f32 %v1199, 1.442695
      %v1257 = vpow.pop %v1256
      %v1258 = vmul.f32 %v1200, 1.442695
      %v1259 = vpow.pop %v1258
      %v1260 = vmul.f32 %v1201, 1.442695
      %v1261 = vpow.pop %v1260
      %v1262 = vmul.f32 %v1202, 1.442695
      %v1263 = vpow.pop %v1262
      %v1264 = vmul.f32 %v1203, 1.442695
      %v1265 = vpow.pop %v1264
      %v1266 = vmul.f32 %v1204, 1.442695
      %v1267 = vpow.pop %v1266
      %v1268 = vmul.f32 %v1205, 1.442695
      %v1269 = vpow.pop %v1268
      %v1270 = vadd.f32 %v1207, 1.0
      %v1271 = vadd.f32 %v1209, 1.0
      %v1272 = vadd.f32 %v1211, 1.0
      %v1273 = vadd.f32 %v1213, 1.0
      %v1274 = vadd.f32 %v1215, 1.0
      %v1275 = vadd.f32 %v1217, 1.0
      %v1276 = vadd.f32 %v1219, 1.0
      %v1277 = vadd.f32 %v1221, 1.0
      %v1278 = vadd.f32 %v1223, 1.0
      %v1279 = vadd.f32 %v1225, 1.0
      %v1280 = vadd.f32 %v1227, 1.0
      %v1281 = vadd.f32 %v1229, 1.0
      %v1282 = vadd.f32 %v1231, 1.0
      %v1283 = vadd.f32 %v1233, 1.0
      %v1284 = vadd.f32 %v1235, 1.0
      %v1285 = vadd.f32 %v1237, 1.0
      %v1286 = vadd.f32 %v1239, 1.0
      %v1287 = vadd.f32 %v1241, 1.0
      %v1288 = vadd.f32 %v1243, 1.0
      %v1289 = vadd.f32 %v1245, 1.0
      %v1290 = vadd.f32 %v1247, 1.0
      %v1291 = vadd.f32 %v1249, 1.0
      %v1292 = vadd.f32 %v1251, 1.0
      %v1293 = vadd.f32 %v1253, 1.0
      %v1294 = vadd.f32 %v1255, 1.0
      %v1295 = vadd.f32 %v1257, 1.0
      %v1296 = vadd.f32 %v1259, 1.0
      %v1297 = vadd.f32 %v1261, 1.0
      %v1298 = vadd.f32 %v1263, 1.0
      %v1299 = vadd.f32 %v1265, 1.0
      %v1300 = vadd.f32 %v1267, 1.0
      %v1301 = vadd.f32 %v1269, 1.0
      %v1302 = vrcp.pop %v1270
      %v1303 = vmul.f32 1.0, %v1302
      %v1304 = vrcp.pop %v1271
      %v1305 = vmul.f32 1.0, %v1304
      %v1306 = vrcp.pop %v1272
      %v1307 = vmul.f32 1.0, %v1306
      %v1308 = vrcp.pop %v1273
      %v1309 = vmul.f32 1.0, %v1308
      %v1310 = vrcp.pop %v1274
      %v1311 = vmul.f32 1.0, %v1310
      %v1312 = vrcp.pop %v1275
      %v1313 = vmul.f32 1.0, %v1312
      %v1314 = vrcp.pop %v1276
      %v1315 = vmul.f32 1.0, %v1314
      %v1316 = vrcp.pop %v1277
      %v1317 = vmul.f32 1.0, %v1316
      %v1318 = vrcp.pop %v1278
      %v1319 = vmul.f32 1.0, %v1318
      %v1320 = vrcp.pop %v1279
      %v1321 = vmul.f32 1.0, %v1320
      %v1322 = vrcp.pop %v1280
      %v1323 = vmul.f32 1.0, %v1322
      %v1324 = vrcp.pop %v1281
      %v1325 = vmul.f32 1.0, %v1324
      %v1326 = vrcp.pop %v1282
      %v1327 = vmul.f32 1.0, %v1326
      %v1328 = vrcp.pop %v1283
      %v1329 = vmul.f32 1.0, %v1328
      %v1330 = vrcp.pop %v1284
      %v1331 = vmul.f32 1.0, %v1330
      %v1332 = vrcp.pop %v1285
      %v1333 = vmul.f32 1.0, %v1332
      %v1334 = vrcp.pop %v1286
      %v1335 = vmul.f32 1.0, %v1334
      %v1336 = vrcp.pop %v1287
      %v1337 = vmul.f32 1.0, %v1336
      %v1338 = vrcp.pop %v1288
      %v1339 = vmul.f32 1.0, %v1338
      %v1340 = vrcp.pop %v1289
      %v1341 = vmul.f32 1.0, %v1340
      %v1342 = vrcp.pop %v1290
      %v1343 = vmul.f32 1.0, %v1342
      %v1344 = vrcp.pop %v1291
      %v1345 = vmul.f32 1.0, %v1344
      %v1346 = vrcp.pop %v1292
      %v1347 = vmul.f32 1.0, %v1346
      %v1348 = vrcp.pop %v1293
      %v1349 = vmul.f32 1.0, %v1348
      %v1350 = vrcp.pop %v1294
      %v1351 = vmul.f32 1.0, %v1350
      %v1352 = vrcp.pop %v1295
      %v1353 = vmul.f32 1.0, %v1352
      %v1354 = vrcp.pop %v1296
      %v1355 = vmul.f32 1.0, %v1354
      %v1356 = vrcp.pop %v1297
      %v1357 = vmul.f32 1.0, %v1356
      %v1358 = vrcp.pop %v1298
      %v1359 = vmul.f32 1.0, %v1358
      %v1360 = vrcp.pop %v1299
      %v1361 = vmul.f32 1.0, %v1360
      %v1362 = vrcp.pop %v1300
      %v1363 = vmul.f32 1.0, %v1362
      %v1364 = vrcp.pop %v1301
      %v1365 = vmul.f32 1.0, %v1364
      %v1366 = vpack.c.bf16 %v602, %v598
      %v1367 = vpack.c.bf16 %v612, %v608
      %v1368 = vpack.c.bf16 %v622, %v618
      %v1369 = vpack.c.bf16 %v632, %v628
      %v1370 = vpack.c.bf16 %v642, %v638
      %v1371 = vpack.c.bf16 %v652, %v648
      %v1372 = vpack.c.bf16 %v662, %v658
      %v1373 = vpack.c.bf16 %v672, %v668
      %v1374 = vpack.c.bf16 %v682, %v678
      %v1375 = vpack.c.bf16 %v692, %v688
      %v1376 = vpack.c.bf16 %v702, %v698
      %v1377 = vpack.c.bf16 %v712, %v708
      %v1378 = vpack.c.bf16 %v722, %v718
      %v1379 = vpack.c.bf16 %v732, %v728
      %v1380 = vpack.c.bf16 %v742, %v738
      %v1381 = vpack.c.bf16 %v752, %v748
      %v1382 = vpack.c.bf16 %v981, %v977
      %v1383 = vpack.c.bf16 %v991, %v987
      %v1384 = vpack.c.bf16 %v1001, %v997
      %v1385 = vpack.c.bf16 %v1011, %v1007
      %v1386 = vpack.c.bf16 %v1021, %v1017
      %v1387 = vpack.c.bf16 %v1031, %v1027
      %v1388 = vpack.c.bf16 %v1041, %v1037
      %v1389 = vpack.c.bf16 %v1051, %v1047
      %v1390 = vpack.c.bf16 %v1061, %v1057
      %v1391 = vpack.c.bf16 %v1071, %v1067
      %v1392 = vpack.c.bf16 %v1081, %v1077
      %v1393 = vpack.c.bf16 %v1091, %v1087
      %v1394 = vpack.c.bf16 %v1101, %v1097
      %v1395 = vpack.c.bf16 %v1111, %v1107
      %v1396 = vpack.c.bf16 %v1121, %v1117
      %v1397 = vpack.c.bf16 %v1131, %v1127
      %v1398 = vpack.c.bf16 %v983, %v979
      %v1399 = vpack.c.bf16 %v993, %v989
      %v1400 = vpack.c.bf16 %v1003, %v999
      %v1401 = vpack.c.bf16 %v1013, %v1009
      %v1402 = vpack.c.bf16 %v1023, %v1019
      %v1403 = vpack.c.bf16 %v1033, %v1029
      %v1404 = vpack.c.bf16 %v1043, %v1039
      %v1405 = vpack.c.bf16 %v1053, %v1049
      %v1406 = vpack.c.bf16 %v1063, %v1059
      %v1407 = vpack.c.bf16 %v1073, %v1069
      %v1408 = vpack.c.bf16 %v1083, %v1079
      %v1409 = vpack.c.bf16 %v1093, %v1089
      %v1410 = vpack.c.bf16 %v1103, %v1099
      %v1411 = vpack.c.bf16 %v1113, %v1109
      %v1412 = vpack.c.bf16 %v1123, %v1119
      %v1413 = vpack.c.bf16 %v1133, %v1129
      %v1414 = vld [vmem:[%s369] sm:$0x1]
      %v1415 = vld [vmem:[%s369 + $0x1] sm:$0x1]
      %v1416 = vld [vmem:[%s369 + $0x2] sm:$0x1]
      %v1417 = vld [vmem:[%s369 + $0x3] sm:$0x1]
      %v1418 = vld [vmem:[%s369 + $0x4] sm:$0x1]
      %v1419 = vld [vmem:[%s369 + $0x5] sm:$0x1]
      %v1420 = vld [vmem:[%s369 + $0x6] sm:$0x1]
      %v1421 = vld [vmem:[%s369 + $0x7] sm:$0x1]
      %v1422 = vld [vmem:[%s369 + $0x8] sm:$0x1]
      %v1423 = vld [vmem:[%s369 + $0x9] sm:$0x1]
      %v1424 = vld [vmem:[%s369 + $0xa] sm:$0x1]
      %v1425 = vld [vmem:[%s369 + $0xb] sm:$0x1]
      %v1426 = vld [vmem:[%s369 + $0xc] sm:$0x1]
      %v1427 = vld [vmem:[%s369 + $0xd] sm:$0x1]
      %v1428 = vld [vmem:[%s369 + $0xe] sm:$0x1]
      %v1429 = vld [vmem:[%s369 + $0xf] sm:$0x1]
      %v1430 = vld [vmem:[%s3] sm:$0xff]
      %v1431 = vld [vmem:[%s3 + $0x8] sm:$0xff]
      %v1432 = vld [vmem:[%s3 + $0x10] sm:$0xff]
      %v1433 = vld [vmem:[%s3 + $0x18] sm:$0xff]
      %v1434 = vld [vmem:[%s3 + $0x20] sm:$0xff]
      %v1435 = vld [vmem:[%s3 + $0x28] sm:$0xff]
      %v1436 = vld [vmem:[%s3 + $0x30] sm:$0xff]
      %v1437 = vld [vmem:[%s3 + $0x38] sm:$0xff]
      %v1454 = vlaneseq
      %v1455 = vshrl.u32 %v1454, 7
      %v1456 = vsub.s32 0, %v1455
      %v1457 = vrot.slane %v1414, %v1456
      %v1458 = vlaneseq
      %v1459 = vshrl.u32 %v1458, 7
      %v1460 = vsub.s32 0, %v1459
      %v1461 = vrot.slane %v1415, %v1460
      %v1462 = vlaneseq
      %v1463 = vshrl.u32 %v1462, 7
      %v1464 = vsub.s32 0, %v1463
      %v1465 = vrot.slane %v1416, %v1464
      %v1466 = vlaneseq
      %v1467 = vshrl.u32 %v1466, 7
      %v1468 = vsub.s32 0, %v1467
      %v1469 = vrot.slane %v1417, %v1468
      %v1470 = vlaneseq
      %v1471 = vshrl.u32 %v1470, 7
      %v1472 = vsub.s32 0, %v1471
      %v1473 = vrot.slane %v1418, %v1472
      %v1474 = vlaneseq
      %v1475 = vshrl.u32 %v1474, 7
      %v1476 = vsub.s32 0, %v1475
      %v1477 = vrot.slane %v1419, %v1476
      %v1478 = vlaneseq
      %v1479 = vshrl.u32 %v1478, 7
      %v1480 = vsub.s32 0, %v1479
      %v1481 = vrot.slane %v1420, %v1480
      %v1482 = vlaneseq
      %v1483 = vshrl.u32 %v1482, 7
      %v1484 = vsub.s32 0, %v1483
      %v1485 = vrot.slane %v1421, %v1484
      %v1486 = vlaneseq
      %v1487 = vshrl.u32 %v1486, 7
      %v1488 = vsub.s32 0, %v1487
      %v1489 = vrot.slane %v1422, %v1488
      %v1490 = vlaneseq
      %v1491 = vshrl.u32 %v1490, 7
      %v1492 = vsub.s32 0, %v1491
      %v1493 = vrot.slane %v1423, %v1492
      %v1494 = vlaneseq
      %v1495 = vshrl.u32 %v1494, 7
      %v1496 = vsub.s32 0, %v1495
      %v1497 = vrot.slane %v1424, %v1496
      %v1498 = vlaneseq
      %v1499 = vshrl.u32 %v1498, 7
      %v1500 = vsub.s32 0, %v1499
      %v1501 = vrot.slane %v1425, %v1500
      %v1502 = vlaneseq
      %v1503 = vshrl.u32 %v1502, 7
      %v1504 = vsub.s32 0, %v1503
      %v1505 = vrot.slane %v1426, %v1504
      %v1506 = vlaneseq
      %v1507 = vshrl.u32 %v1506, 7
      %v1508 = vsub.s32 0, %v1507
      %v1509 = vrot.slane %v1427, %v1508
      %v1510 = vlaneseq
      %v1511 = vshrl.u32 %v1510, 7
      %v1512 = vsub.s32 0, %v1511
      %v1513 = vrot.slane %v1428, %v1512
      %v1514 = vlaneseq
      %v1515 = vshrl.u32 %v1514, 7
      %v1516 = vsub.s32 0, %v1515
      %v1517 = vrot.slane %v1429, %v1516
      %v1534 = vadd.f32 %v1457, %v1430
      %v1535 = vadd.f32 %v1457, %v1431
      %v1536 = vadd.f32 %v1457, %v1432
      %v1537 = vadd.f32 %v1457, %v1433
      %v1538 = vadd.f32 %v1457, %v1434
      %v1539 = vadd.f32 %v1457, %v1435
      %v1540 = vadd.f32 %v1457, %v1436
      %v1541 = vadd.f32 %v1457, %v1437
      %v1542 = vadd.f32 %v1461, %v1430
      %v1543 = vadd.f32 %v1461, %v1431
      %v1544 = vadd.f32 %v1461, %v1432
      %v1545 = vadd.f32 %v1461, %v1433
      %v1546 = vadd.f32 %v1461, %v1434
      %v1547 = vadd.f32 %v1461, %v1435
      %v1548 = vadd.f32 %v1461, %v1436
      %v1549 = vadd.f32 %v1461, %v1437
      %v1550 = vadd.f32 %v1465, %v1430
      %v1551 = vadd.f32 %v1465, %v1431
      %v1552 = vadd.f32 %v1465, %v1432
      %v1553 = vadd.f32 %v1465, %v1433
      %v1554 = vadd.f32 %v1465, %v1434
      %v1555 = vadd.f32 %v1465, %v1435
      %v1556 = vadd.f32 %v1465, %v1436
      %v1557 = vadd.f32 %v1465, %v1437
      %v1558 = vadd.f32 %v1469, %v1430
      %v1559 = vadd.f32 %v1469, %v1431
      %v1560 = vadd.f32 %v1469, %v1432
      %v1561 = vadd.f32 %v1469, %v1433
      %v1562 = vadd.f32 %v1469, %v1434
      %v1563 = vadd.f32 %v1469, %v1435
      %v1564 = vadd.f32 %v1469, %v1436
      %v1565 = vadd.f32 %v1469, %v1437
      %v1566 = vadd.f32 %v1473, %v1430
      %v1567 = vadd.f32 %v1473, %v1431
      %v1568 = vadd.f32 %v1473, %v1432
      %v1569 = vadd.f32 %v1473, %v1433
      %v1570 = vadd.f32 %v1473, %v1434
      %v1571 = vadd.f32 %v1473, %v1435
      %v1572 = vadd.f32 %v1473, %v1436
      %v1573 = vadd.f32 %v1473, %v1437
      %v1574 = vadd.f32 %v1477, %v1430
      %v1575 = vadd.f32 %v1477, %v1431
      %v1576 = vadd.f32 %v1477, %v1432
      %v1577 = vadd.f32 %v1477, %v1433
      %v1578 = vadd.f32 %v1477, %v1434
      %v1579 = vadd.f32 %v1477, %v1435
      %v1580 = vadd.f32 %v1477, %v1436
      %v1581 = vadd.f32 %v1477, %v1437
      %v1582 = vadd.f32 %v1481, %v1430
      %v1583 = vadd.f32 %v1481, %v1431
      %v1584 = vadd.f32 %v1481, %v1432
      %v1585 = vadd.f32 %v1481, %v1433
      %v1586 = vadd.f32 %v1481, %v1434
      %v1587 = vadd.f32 %v1481, %v1435
      %v1588 = vadd.f32 %v1481, %v1436
      %v1589 = vadd.f32 %v1481, %v1437
      %v1590 = vadd.f32 %v1485, %v1430
      %v1591 = vadd.f32 %v1485, %v1431
      %v1592 = vadd.f32 %v1485, %v1432
      %v1593 = vadd.f32 %v1485, %v1433
      %v1594 = vadd.f32 %v1485, %v1434
      %v1595 = vadd.f32 %v1485, %v1435
      %v1596 = vadd.f32 %v1485, %v1436
      %v1597 = vadd.f32 %v1485, %v1437
      %v1598 = vadd.f32 %v1489, %v1430
      %v1599 = vadd.f32 %v1489, %v1431
      %v1600 = vadd.f32 %v1489, %v1432
      %v1601 = vadd.f32 %v1489, %v1433
      %v1602 = vadd.f32 %v1489, %v1434
      %v1603 = vadd.f32 %v1489, %v1435
      %v1604 = vadd.f32 %v1489, %v1436
      %v1605 = vadd.f32 %v1489, %v1437
      %v1606 = vadd.f32 %v1493, %v1430
      %v1607 = vadd.f32 %v1493, %v1431
      %v1608 = vadd.f32 %v1493, %v1432
      %v1609 = vadd.f32 %v1493, %v1433
      %v1610 = vadd.f32 %v1493, %v1434
      %v1611 = vadd.f32 %v1493, %v1435
      %v1612 = vadd.f32 %v1493, %v1436
      %v1613 = vadd.f32 %v1493, %v1437
      %v1614 = vadd.f32 %v1497, %v1430
      %v1615 = vadd.f32 %v1497, %v1431
      %v1616 = vadd.f32 %v1497, %v1432
      %v1617 = vadd.f32 %v1497, %v1433
      %v1618 = vadd.f32 %v1497, %v1434
      %v1619 = vadd.f32 %v1497, %v1435
      %v1620 = vadd.f32 %v1497, %v1436
      %v1621 = vadd.f32 %v1497, %v1437
      %v1622 = vadd.f32 %v1501, %v1430
      %v1623 = vadd.f32 %v1501, %v1431
      %v1624 = vadd.f32 %v1501, %v1432
      %v1625 = vadd.f32 %v1501, %v1433
      %v1626 = vadd.f32 %v1501, %v1434
      %v1627 = vadd.f32 %v1501, %v1435
      %v1628 = vadd.f32 %v1501, %v1436
      %v1629 = vadd.f32 %v1501, %v1437
      %v1630 = vadd.f32 %v1505, %v1430
      %v1631 = vadd.f32 %v1505, %v1431
      %v1632 = vadd.f32 %v1505, %v1432
      %v1633 = vadd.f32 %v1505, %v1433
      %v1634 = vadd.f32 %v1505, %v1434
      %v1635 = vadd.f32 %v1505, %v1435
      %v1636 = vadd.f32 %v1505, %v1436
      %v1637 = vadd.f32 %v1505, %v1437
      %v1638 = vadd.f32 %v1509, %v1430
      %v1639 = vadd.f32 %v1509, %v1431
      %v1640 = vadd.f32 %v1509, %v1432
      %v1641 = vadd.f32 %v1509, %v1433
      %v1642 = vadd.f32 %v1509, %v1434
      %v1643 = vadd.f32 %v1509, %v1435
      %v1644 = vadd.f32 %v1509, %v1436
      %v1645 = vadd.f32 %v1509, %v1437
      %v1646 = vadd.f32 %v1513, %v1430
      %v1647 = vadd.f32 %v1513, %v1431
      %v1648 = vadd.f32 %v1513, %v1432
      %v1649 = vadd.f32 %v1513, %v1433
      %v1650 = vadd.f32 %v1513, %v1434
      %v1651 = vadd.f32 %v1513, %v1435
      %v1652 = vadd.f32 %v1513, %v1436
      %v1653 = vadd.f32 %v1513, %v1437
      %v1654 = vadd.f32 %v1517, %v1430
      %v1655 = vadd.f32 %v1517, %v1431
      %v1656 = vadd.f32 %v1517, %v1432
      %v1657 = vadd.f32 %v1517, %v1433
      %v1658 = vadd.f32 %v1517, %v1434
      %v1659 = vadd.f32 %v1517, %v1435
      %v1660 = vadd.f32 %v1517, %v1436
      %v1661 = vadd.f32 %v1517, %v1437
      %v1663 = vsel %vm514, %v1366, 0
      %v1666 = vsel %vm514, %v1382, 0
      %1668 = vmatprep.subr.bf16.mxu0 0
      %1669 = vmatpush1.bf16.xpose.msra.mxu0 %v1666
      %1670 = vmatprep.subr.bf16.mxu0 0
      %1671 = vmatpush1.bf16.xpose.msra.mxu0 0
      %1672 = vmatprep.subr.bf16.mxu0 0
      %1673 = vmatpush1.bf16.xpose.msra.mxu0 0
      %1674 = vmatprep.subr.bf16.mxu0 0
      %1675 = vmatpush1.bf16.xpose.msra.mxu0 0
      %1676 = vmatprep.subr.bf16.mxu0 0
      %1677 = vmatpush1.bf16.xpose.msra.mxu0 0
      %1678 = vmatprep.subr.bf16.mxu0 0
      %1679 = vmatpush1.bf16.xpose.msra.mxu0 0
      %1680 = vmatprep.subr.bf16.mxu0 0
      %1681 = vmatpush1.bf16.xpose.msra.mxu0 0
      %1682 = vmatprep.subr.bf16.mxu0 0
      %1683 = vmatpush1.bf16.xpose.msra.mxu0 0
      %1684 = vmatprep.subr.bf16.mxu0 0
      %1685 = vmatpush1.bf16.xpose.msra.mxu0 0
      %1686 = vmatprep.subr.bf16.mxu0 0
      %1687 = vmatpush1.bf16.xpose.msra.mxu0 0
      %1688 = vmatprep.subr.bf16.mxu0 0
      %1689 = vmatpush1.bf16.xpose.msra.mxu0 0
      %1690 = vmatprep.subr.bf16.mxu0 0
      %1691 = vmatpush1.bf16.xpose.msra.mxu0 0
      %1692 = vmatprep.subr.bf16.mxu0 0
      %1693 = vmatpush1.bf16.xpose.msra.mxu0 0
      %1694 = vmatprep.subr.bf16.mxu0 0
      %1695 = vmatpush1.bf16.xpose.msra.mxu0 0
      %1696 = vmatprep.subr.bf16.mxu0 0
      %1697 = vmatpush1.bf16.xpose.msra.mxu0 0
      %1698 = vmatprep.subr.bf16.mxu0 0
      %1699 = vmatpush1.bf16.xpose.msra.mxu0 0
      %1700 = vmatprep.mubr.bf16.mxu0 0
      %1701 = vmatmul.mubr.bf16.gmra.mrb[0].mxu0 %v1663
      %v1702 = vpop.f32.mrb[0].mxu0
      %v1703 = vadd.f32 %v1534, %v1702
      %v1704 = vpop.f32.mrb[0].mxu0
      %v1705 = vpop.f32.mrb[0].mxu0
      %v1706 = vadd.f32 %v1535, %v1705
      %v1707 = vpop.f32.mrb[0].mxu0
      %1708 = vdwg.mxu0
      %v1710 = vsel %vm514, %v1367, 0
      %v1713 = vsel %vm514, %v1383, 0
      %1715 = vmatprep.subr.bf16.mxu0 0
      %1716 = vmatpush1.bf16.xpose.msra.mxu0 %v1713
      %1717 = vmatprep.subr.bf16.mxu0 0
      %1718 = vmatpush1.bf16.xpose.msra.mxu0 0
      %1719 = vmatprep.subr.bf16.mxu0 0
      %1720 = vmatpush1.bf16.xpose.msra.mxu0 0
      %1721 = vmatprep.subr.bf16.mxu0 0
      %1722 = vmatpush1.bf16.xpose.msra.mxu0 0
      %1723 = vmatprep.subr.bf16.mxu0 0
      %1724 = vmatpush1.bf16.xpose.msra.mxu0 0
      %1725 = vmatprep.subr.bf16.mxu0 0
      %1726 = vmatpush1.bf16.xpose.msra.mxu0 0
      %1727 = vmatprep.subr.bf16.mxu0 0
      %1728 = vmatpush1.bf16.xpose.msra.mxu0 0
      %1729 = vmatprep.subr.bf16.mxu0 0
      %1730 = vmatpush1.bf16.xpose.msra.mxu0 0
      %1731 = vmatprep.subr.bf16.mxu0 0
      %1732 = vmatpush1.bf16.xpose.msra.mxu0 0
      %1733 = vmatprep.subr.bf16.mxu0 0
      %1734 = vmatpush1.bf16.xpose.msra.mxu0 0
      %1735 = vmatprep.subr.bf16.mxu0 0
      %1736 = vmatpush1.bf16.xpose.msra.mxu0 0
      %1737 = vmatprep.subr.bf16.mxu0 0
      %1738 = vmatpush1.bf16.xpose.msra.mxu0 0
      %1739 = vmatprep.subr.bf16.mxu0 0
      %1740 = vmatpush1.bf16.xpose.msra.mxu0 0
      %1741 = vmatprep.subr.bf16.mxu0 0
      %1742 = vmatpush1.bf16.xpose.msra.mxu0 0
      %1743 = vmatprep.subr.bf16.mxu0 0
      %1744 = vmatpush1.bf16.xpose.msra.mxu0 0
      %1745 = vmatprep.subr.bf16.mxu0 0
      %1746 = vmatpush1.bf16.xpose.msra.mxu0 0
      %1747 = vmatprep.mubr.bf16.mxu0 0
      %1748 = vmatmul.mubr.bf16.gmra.mrb[0].mxu0 %v1710
      %v1749 = vpop.f32.mrb[0].mxu0
      %v1750 = vadd.f32 %v1542, %v1749
      %v1751 = vpop.f32.mrb[0].mxu0
      %v1752 = vpop.f32.mrb[0].mxu0
      %v1753 = vadd.f32 %v1543, %v1752
      %v1754 = vpop.f32.mrb[0].mxu0
      %1755 = vdwg.mxu0
      %v1757 = vsel %vm514, %v1368, 0
      %v1760 = vsel %vm514, %v1384, 0
      %1762 = vmatprep.subr.bf16.mxu0 0
      %1763 = vmatpush1.bf16.xpose.msra.mxu0 %v1760
      %1764 = vmatprep.subr.bf16.mxu0 0
      %1765 = vmatpush1.bf16.xpose.msra.mxu0 0
      %1766 = vmatprep.subr.bf16.mxu0 0
      %1767 = vmatpush1.bf16.xpose.msra.mxu0 0
      %1768 = vmatprep.subr.bf16.mxu0 0
      %1769 = vmatpush1.bf16.xpose.msra.mxu0 0
      %1770 = vmatprep.subr.bf16.mxu0 0
      %1771 = vmatpush1.bf16.xpose.msra.mxu0 0
      %1772 = vmatprep.subr.bf16.mxu0 0
      %1773 = vmatpush1.bf16.xpose.msra.mxu0 0
      %1774 = vmatprep.subr.bf16.mxu0 0
      %1775 = vmatpush1.bf16.xpose.msra.mxu0 0
      %1776 = vmatprep.subr.bf16.mxu0 0
      %1777 = vmatpush1.bf16.xpose.msra.mxu0 0
      %1778 = vmatprep.subr.bf16.mxu0 0
      %1779 = vmatpush1.bf16.xpose.msra.mxu0 0
      %1780 = vmatprep.subr.bf16.mxu0 0
      %1781 = vmatpush1.bf16.xpose.msra.mxu0 0
      %1782 = vmatprep.subr.bf16.mxu0 0
      %1783 = vmatpush1.bf16.xpose.msra.mxu0 0
      %1784 = vmatprep.subr.bf16.mxu0 0
      %1785 = vmatpush1.bf16.xpose.msra.mxu0 0
      %1786 = vmatprep.subr.bf16.mxu0 0
      %1787 = vmatpush1.bf16.xpose.msra.mxu0 0
      %1788 = vmatprep.subr.bf16.mxu0 0
      %1789 = vmatpush1.bf16.xpose.msra.mxu0 0
      %1790 = vmatprep.subr.bf16.mxu0 0
      %1791 = vmatpush1.bf16.xpose.msra.mxu0 0
      %1792 = vmatprep.subr.bf16.mxu0 0
      %1793 = vmatpush1.bf16.xpose.msra.mxu0 0
      %1794 = vmatprep.mubr.bf16.mxu0 0
      %1795 = vmatmul.mubr.bf16.gmra.mrb[0].mxu0 %v1757
      %v1796 = vpop.f32.mrb[0].mxu0
      %v1797 = vadd.f32 %v1550, %v1796
      %v1798 = vpop.f32.mrb[0].mxu0
      %v1799 = vpop.f32.mrb[0].mxu0
      %v1800 = vadd.f32 %v1551, %v1799
      %v1801 = vpop.f32.mrb[0].mxu0
      %1802 = vdwg.mxu0
      %v1804 = vsel %vm514, %v1369, 0
      %v1807 = vsel %vm514, %v1385, 0
      %1809 = vmatprep.subr.bf16.mxu0 0
      %1810 = vmatpush1.bf16.xpose.msra.mxu0 %v1807
      %1811 = vmatprep.subr.bf16.mxu0 0
      %1812 = vmatpush1.bf16.xpose.msra.mxu0 0
      %1813 = vmatprep.subr.bf16.mxu0 0
      %1814 = vmatpush1.bf16.xpose.msra.mxu0 0
      %1815 = vmatprep.subr.bf16.mxu0 0
      %1816 = vmatpush1.bf16.xpose.msra.mxu0 0
      %1817 = vmatprep.subr.bf16.mxu0 0
      %1818 = vmatpush1.bf16.xpose.msra.mxu0 0
      %1819 = vmatprep.subr.bf16.mxu0 0
      %1820 = vmatpush1.bf16.xpose.msra.mxu0 0
      %1821 = vmatprep.subr.bf16.mxu0 0
      %1822 = vmatpush1.bf16.xpose.msra.mxu0 0
      %1823 = vmatprep.subr.bf16.mxu0 0
      %1824 = vmatpush1.bf16.xpose.msra.mxu0 0
      %1825 = vmatprep.subr.bf16.mxu0 0
      %1826 = vmatpush1.bf16.xpose.msra.mxu0 0
      %1827 = vmatprep.subr.bf16.mxu0 0
      %1828 = vmatpush1.bf16.xpose.msra.mxu0 0
      %1829 = vmatprep.subr.bf16.mxu0 0
      %1830 = vmatpush1.bf16.xpose.msra.mxu0 0
      %1831 = vmatprep.subr.bf16.mxu0 0
      %1832 = vmatpush1.bf16.xpose.msra.mxu0 0
      %1833 = vmatprep.subr.bf16.mxu0 0
      %1834 = vmatpush1.bf16.xpose.msra.mxu0 0
      %1835 = vmatprep.subr.bf16.mxu0 0
      %1836 = vmatpush1.bf16.xpose.msra.mxu0 0
      %1837 = vmatprep.subr.bf16.mxu0 0
      %1838 = vmatpush1.bf16.xpose.msra.mxu0 0
      %1839 = vmatprep.subr.bf16.mxu0 0
      %1840 = vmatpush1.bf16.xpose.msra.mxu0 0
      %1841 = vmatprep.mubr.bf16.mxu0 0
      %1842 = vmatmul.mubr.bf16.gmra.mrb[0].mxu0 %v1804
      %v1843 = vpop.f32.mrb[0].mxu0
      %v1844 = vadd.f32 %v1558, %v1843
      %v1845 = vpop.f32.mrb[0].mxu0
      %v1846 = vpop.f32.mrb[0].mxu0
      %v1847 = vadd.f32 %v1559, %v1846
      %v1848 = vpop.f32.mrb[0].mxu0
      %1849 = vdwg.mxu0
      %v1851 = vsel %vm514, %v1370, 0
      %v1854 = vsel %vm514, %v1386, 0
      %1856 = vmatprep.subr.bf16.mxu0 0
      %1857 = vmatpush1.bf16.xpose.msra.mxu0 %v1854
      %1858 = vmatprep.subr.bf16.mxu0 0
      %1859 = vmatpush1.bf16.xpose.msra.mxu0 0
      %1860 = vmatprep.subr.bf16.mxu0 0
      %1861 = vmatpush1.bf16.xpose.msra.mxu0 0
      %1862 = vmatprep.subr.bf16.mxu0 0
      %1863 = vmatpush1.bf16.xpose.msra.mxu0 0
      %1864 = vmatprep.subr.bf16.mxu0 0
      %1865 = vmatpush1.bf16.xpose.msra.mxu0 0
      %1866 = vmatprep.subr.bf16.mxu0 0
      %1867 = vmatpush1.bf16.xpose.msra.mxu0 0
      %1868 = vmatprep.subr.bf16.mxu0 0
      %1869 = vmatpush1.bf16.xpose.msra.mxu0 0
      %1870 = vmatprep.subr.bf16.mxu0 0
      %1871 = vmatpush1.bf16.xpose.msra.mxu0 0
      %1872 = vmatprep.subr.bf16.mxu0 0
      %1873 = vmatpush1.bf16.xpose.msra.mxu0 0
      %1874 = vmatprep.subr.bf16.mxu0 0
      %1875 = vmatpush1.bf16.xpose.msra.mxu0 0
      %1876 = vmatprep.subr.bf16.mxu0 0
      %1877 = vmatpush1.bf16.xpose.msra.mxu0 0
      %1878 = vmatprep.subr.bf16.mxu0 0
      %1879 = vmatpush1.bf16.xpose.msra.mxu0 0
      %1880 = vmatprep.subr.bf16.mxu0 0
      %1881 = vmatpush1.bf16.xpose.msra.mxu0 0
      %1882 = vmatprep.subr.bf16.mxu0 0
      %1883 = vmatpush1.bf16.xpose.msra.mxu0 0
      %1884 = vmatprep.subr.bf16.mxu0 0
      %1885 = vmatpush1.bf16.xpose.msra.mxu0 0
      %1886 = vmatprep.subr.bf16.mxu0 0
      %1887 = vmatpush1.bf16.xpose.msra.mxu0 0
      %1888 = vmatprep.mubr.bf16.mxu0 0
      %1889 = vmatmul.mubr.bf16.gmra.mrb[0].mxu0 %v1851
      %v1890 = vpop.f32.mrb[0].mxu0
      %v1891 = vadd.f32 %v1566, %v1890
      %v1892 = vpop.f32.mrb[0].mxu0
      %v1893 = vpop.f32.mrb[0].mxu0
      %v1894 = vadd.f32 %v1567, %v1893
      %v1895 = vpop.f32.mrb[0].mxu0
      %1896 = vdwg.mxu0
      %v1898 = vsel %vm514, %v1371, 0
      %v1901 = vsel %vm514, %v1387, 0
      %1903 = vmatprep.subr.bf16.mxu0 0
      %1904 = vmatpush1.bf16.xpose.msra.mxu0 %v1901
      %1905 = vmatprep.subr.bf16.mxu0 0
      %1906 = vmatpush1.bf16.xpose.msra.mxu0 0
      %1907 = vmatprep.subr.bf16.mxu0 0
      %1908 = vmatpush1.bf16.xpose.msra.mxu0 0
      %1909 = vmatprep.subr.bf16.mxu0 0
      %1910 = vmatpush1.bf16.xpose.msra.mxu0 0
      %1911 = vmatprep.subr.bf16.mxu0 0
      %1912 = vmatpush1.bf16.xpose.msra.mxu0 0
      %1913 = vmatprep.subr.bf16.mxu0 0
      %1914 = vmatpush1.bf16.xpose.msra.mxu0 0
      %1915 = vmatprep.subr.bf16.mxu0 0
      %1916 = vmatpush1.bf16.xpose.msra.mxu0 0
      %1917 = vmatprep.subr.bf16.mxu0 0
      %1918 = vmatpush1.bf16.xpose.msra.mxu0 0
      %1919 = vmatprep.subr.bf16.mxu0 0
      %1920 = vmatpush1.bf16.xpose.msra.mxu0 0
      %1921 = vmatprep.subr.bf16.mxu0 0
      %1922 = vmatpush1.bf16.xpose.msra.mxu0 0
      %1923 = vmatprep.subr.bf16.mxu0 0
      %1924 = vmatpush1.bf16.xpose.msra.mxu0 0
      %1925 = vmatprep.subr.bf16.mxu0 0
      %1926 = vmatpush1.bf16.xpose.msra.mxu0 0
      %1927 = vmatprep.subr.bf16.mxu0 0
      %1928 = vmatpush1.bf16.xpose.msra.mxu0 0
      %1929 = vmatprep.subr.bf16.mxu0 0
      %1930 = vmatpush1.bf16.xpose.msra.mxu0 0
      %1931 = vmatprep.subr.bf16.mxu0 0
      %1932 = vmatpush1.bf16.xpose.msra.mxu0 0
      %1933 = vmatprep.subr.bf16.mxu0 0
      %1934 = vmatpush1.bf16.xpose.msra.mxu0 0
      %1935 = vmatprep.mubr.bf16.mxu0 0
      %1936 = vmatmul.mubr.bf16.gmra.mrb[0].mxu0 %v1898
      %v1937 = vpop.f32.mrb[0].mxu0
      %v1938 = vadd.f32 %v1574, %v1937
      %v1939 = vpop.f32.mrb[0].mxu0
      %v1940 = vpop.f32.mrb[0].mxu0
      %v1941 = vadd.f32 %v1575, %v1940
      %v1942 = vpop.f32.mrb[0].mxu0
      %1943 = vdwg.mxu0
      %v1945 = vsel %vm514, %v1372, 0
      %v1948 = vsel %vm514, %v1388, 0
      %1950 = vmatprep.subr.bf16.mxu0 0
      %1951 = vmatpush1.bf16.xpose.msra.mxu0 %v1948
      %1952 = vmatprep.subr.bf16.mxu0 0
      %1953 = vmatpush1.bf16.xpose.msra.mxu0 0
      %1954 = vmatprep.subr.bf16.mxu0 0
      %1955 = vmatpush1.bf16.xpose.msra.mxu0 0
      %1956 = vmatprep.subr.bf16.mxu0 0
      %1957 = vmatpush1.bf16.xpose.msra.mxu0 0
      %1958 = vmatprep.subr.bf16.mxu0 0
      %1959 = vmatpush1.bf16.xpose.msra.mxu0 0
      %1960 = vmatprep.subr.bf16.mxu0 0
      %1961 = vmatpush1.bf16.xpose.msra.mxu0 0
      %1962 = vmatprep.subr.bf16.mxu0 0
      %1963 = vmatpush1.bf16.xpose.msra.mxu0 0
      %1964 = vmatprep.subr.bf16.mxu0 0
      %1965 = vmatpush1.bf16.xpose.msra.mxu0 0
      %1966 = vmatprep.subr.bf16.mxu0 0
      %1967 = vmatpush1.bf16.xpose.msra.mxu0 0
      %1968 = vmatprep.subr.bf16.mxu0 0
      %1969 = vmatpush1.bf16.xpose.msra.mxu0 0
      %1970 = vmatprep.subr.bf16.mxu0 0
      %1971 = vmatpush1.bf16.xpose.msra.mxu0 0
      %1972 = vmatprep.subr.bf16.mxu0 0
      %1973 = vmatpush1.bf16.xpose.msra.mxu0 0
      %1974 = vmatprep.subr.bf16.mxu0 0
      %1975 = vmatpush1.bf16.xpose.msra.mxu0 0
      %1976 = vmatprep.subr.bf16.mxu0 0
      %1977 = vmatpush1.bf16.xpose.msra.mxu0 0
      %1978 = vmatprep.subr.bf16.mxu0 0
      %1979 = vmatpush1.bf16.xpose.msra.mxu0 0
      %1980 = vmatprep.subr.bf16.mxu0 0
      %1981 = vmatpush1.bf16.xpose.msra.mxu0 0
      %1982 = vmatprep.mubr.bf16.mxu0 0
      %1983 = vmatmul.mubr.bf16.gmra.mrb[0].mxu0 %v1945
      %v1984 = vpop.f32.mrb[0].mxu0
      %v1985 = vadd.f32 %v1582, %v1984
      %v1986 = vpop.f32.mrb[0].mxu0
      %v1987 = vpop.f32.mrb[0].mxu0
      %v1988 = vadd.f32 %v1583, %v1987
      %v1989 = vpop.f32.mrb[0].mxu0
      %1990 = vdwg.mxu0
      %v1992 = vsel %vm514, %v1373, 0
      %v1995 = vsel %vm514, %v1389, 0
      %1997 = vmatprep.subr.bf16.mxu0 0
      %1998 = vmatpush1.bf16.xpose.msra.mxu0 %v1995
      %1999 = vmatprep.subr.bf16.mxu0 0
      %2000 = vmatpush1.bf16.xpose.msra.mxu0 0
      %2001 = vmatprep.subr.bf16.mxu0 0
      %2002 = vmatpush1.bf16.xpose.msra.mxu0 0
      %2003 = vmatprep.subr.bf16.mxu0 0
      %2004 = vmatpush1.bf16.xpose.msra.mxu0 0
      %2005 = vmatprep.subr.bf16.mxu0 0
      %2006 = vmatpush1.bf16.xpose.msra.mxu0 0
      %2007 = vmatprep.subr.bf16.mxu0 0
      %2008 = vmatpush1.bf16.xpose.msra.mxu0 0
      %2009 = vmatprep.subr.bf16.mxu0 0
      %2010 = vmatpush1.bf16.xpose.msra.mxu0 0
      %2011 = vmatprep.subr.bf16.mxu0 0
      %2012 = vmatpush1.bf16.xpose.msra.mxu0 0
      %2013 = vmatprep.subr.bf16.mxu0 0
      %2014 = vmatpush1.bf16.xpose.msra.mxu0 0
      %2015 = vmatprep.subr.bf16.mxu0 0
      %2016 = vmatpush1.bf16.xpose.msra.mxu0 0
      %2017 = vmatprep.subr.bf16.mxu0 0
      %2018 = vmatpush1.bf16.xpose.msra.mxu0 0
      %2019 = vmatprep.subr.bf16.mxu0 0
      %2020 = vmatpush1.bf16.xpose.msra.mxu0 0
      %2021 = vmatprep.subr.bf16.mxu0 0
      %2022 = vmatpush1.bf16.xpose.msra.mxu0 0
      %2023 = vmatprep.subr.bf16.mxu0 0
      %2024 = vmatpush1.bf16.xpose.msra.mxu0 0
      %2025 = vmatprep.subr.bf16.mxu0 0
      %2026 = vmatpush1.bf16.xpose.msra.mxu0 0
      %2027 = vmatprep.subr.bf16.mxu0 0
      %2028 = vmatpush1.bf16.xpose.msra.mxu0 0
      %2029 = vmatprep.mubr.bf16.mxu0 0
      %2030 = vmatmul.mubr.bf16.gmra.mrb[0].mxu0 %v1992
      %v2031 = vpop.f32.mrb[0].mxu0
      %v2032 = vadd.f32 %v1590, %v2031
      %v2033 = vpop.f32.mrb[0].mxu0
      %v2034 = vpop.f32.mrb[0].mxu0
      %v2035 = vadd.f32 %v1591, %v2034
      %v2036 = vpop.f32.mrb[0].mxu0
      %2037 = vdwg.mxu0
      %v2039 = vsel %vm514, %v1374, 0
      %v2042 = vsel %vm514, %v1390, 0
      %2044 = vmatprep.subr.bf16.mxu0 0
      %2045 = vmatpush1.bf16.xpose.msra.mxu0 %v2042
      %2046 = vmatprep.subr.bf16.mxu0 0
      %2047 = vmatpush1.bf16.xpose.msra.mxu0 0
      %2048 = vmatprep.subr.bf16.mxu0 0
      %2049 = vmatpush1.bf16.xpose.msra.mxu0 0
      %2050 = vmatprep.subr.bf16.mxu0 0
      %2051 = vmatpush1.bf16.xpose.msra.mxu0 0
      %2052 = vmatprep.subr.bf16.mxu0 0
      %2053 = vmatpush1.bf16.xpose.msra.mxu0 0
      %2054 = vmatprep.subr.bf16.mxu0 0
      %2055 = vmatpush1.bf16.xpose.msra.mxu0 0
      %2056 = vmatprep.subr.bf16.mxu0 0
      %2057 = vmatpush1.bf16.xpose.msra.mxu0 0
      %2058 = vmatprep.subr.bf16.mxu0 0
      %2059 = vmatpush1.bf16.xpose.msra.mxu0 0
      %2060 = vmatprep.subr.bf16.mxu0 0
      %2061 = vmatpush1.bf16.xpose.msra.mxu0 0
      %2062 = vmatprep.subr.bf16.mxu0 0
      %2063 = vmatpush1.bf16.xpose.msra.mxu0 0
      %2064 = vmatprep.subr.bf16.mxu0 0
      %2065 = vmatpush1.bf16.xpose.msra.mxu0 0
      %2066 = vmatprep.subr.bf16.mxu0 0
      %2067 = vmatpush1.bf16.xpose.msra.mxu0 0
      %2068 = vmatprep.subr.bf16.mxu0 0
      %2069 = vmatpush1.bf16.xpose.msra.mxu0 0
      %2070 = vmatprep.subr.bf16.mxu0 0
      %2071 = vmatpush1.bf16.xpose.msra.mxu0 0
      %2072 = vmatprep.subr.bf16.mxu0 0
      %2073 = vmatpush1.bf16.xpose.msra.mxu0 0
      %2074 = vmatprep.subr.bf16.mxu0 0
      %2075 = vmatpush1.bf16.xpose.msra.mxu0 0
      %2076 = vmatprep.mubr.bf16.mxu0 0
      %2077 = vmatmul.mubr.bf16.gmra.mrb[0].mxu0 %v2039
      %v2078 = vpop.f32.mrb[0].mxu0
      %v2079 = vadd.f32 %v1598, %v2078
      %v2080 = vpop.f32.mrb[0].mxu0
      %v2081 = vpop.f32.mrb[0].mxu0
      %v2082 = vadd.f32 %v1599, %v2081
      %v2083 = vpop.f32.mrb[0].mxu0
      %2084 = vdwg.mxu0
      %v2086 = vsel %vm514, %v1375, 0
      %v2089 = vsel %vm514, %v1391, 0
      %2091 = vmatprep.subr.bf16.mxu0 0
      %2092 = vmatpush1.bf16.xpose.msra.mxu0 %v2089
      %2093 = vmatprep.subr.bf16.mxu0 0
      %2094 = vmatpush1.bf16.xpose.msra.mxu0 0
      %2095 = vmatprep.subr.bf16.mxu0 0
      %2096 = vmatpush1.bf16.xpose.msra.mxu0 0
      %2097 = vmatprep.subr.bf16.mxu0 0
      %2098 = vmatpush1.bf16.xpose.msra.mxu0 0
      %2099 = vmatprep.subr.bf16.mxu0 0
      %2100 = vmatpush1.bf16.xpose.msra.mxu0 0
      %2101 = vmatprep.subr.bf16.mxu0 0
      %2102 = vmatpush1.bf16.xpose.msra.mxu0 0
      %2103 = vmatprep.subr.bf16.mxu0 0
      %2104 = vmatpush1.bf16.xpose.msra.mxu0 0
      %2105 = vmatprep.subr.bf16.mxu0 0
      %2106 = vmatpush1.bf16.xpose.msra.mxu0 0
      %2107 = vmatprep.subr.bf16.mxu0 0
      %2108 = vmatpush1.bf16.xpose.msra.mxu0 0
      %2109 = vmatprep.subr.bf16.mxu0 0
      %2110 = vmatpush1.bf16.xpose.msra.mxu0 0
      %2111 = vmatprep.subr.bf16.mxu0 0
      %2112 = vmatpush1.bf16.xpose.msra.mxu0 0
      %2113 = vmatprep.subr.bf16.mxu0 0
      %2114 = vmatpush1.bf16.xpose.msra.mxu0 0
      %2115 = vmatprep.subr.bf16.mxu0 0
      %2116 = vmatpush1.bf16.xpose.msra.mxu0 0
      %2117 = vmatprep.subr.bf16.mxu0 0
      %2118 = vmatpush1.bf16.xpose.msra.mxu0 0
      %2119 = vmatprep.subr.bf16.mxu0 0
      %2120 = vmatpush1.bf16.xpose.msra.mxu0 0
      %2121 = vmatprep.subr.bf16.mxu0 0
      %2122 = vmatpush1.bf16.xpose.msra.mxu0 0
      %2123 = vmatprep.mubr.bf16.mxu0 0
      %2124 = vmatmul.mubr.bf16.gmra.mrb[0].mxu0 %v2086
      %v2125 = vpop.f32.mrb[0].mxu0
      %v2126 = vadd.f32 %v1606, %v2125
      %v2127 = vpop.f32.mrb[0].mxu0
      %v2128 = vpop.f32.mrb[0].mxu0
      %v2129 = vadd.f32 %v1607, %v2128
      %v2130 = vpop.f32.mrb[0].mxu0
      %2131 = vdwg.mxu0
      %v2133 = vsel %vm514, %v1376, 0
      %v2136 = vsel %vm514, %v1392, 0
      %2138 = vmatprep.subr.bf16.mxu0 0
      %2139 = vmatpush1.bf16.xpose.msra.mxu0 %v2136
      %2140 = vmatprep.subr.bf16.mxu0 0
      %2141 = vmatpush1.bf16.xpose.msra.mxu0 0
      %2142 = vmatprep.subr.bf16.mxu0 0
      %2143 = vmatpush1.bf16.xpose.msra.mxu0 0
      %2144 = vmatprep.subr.bf16.mxu0 0
      %2145 = vmatpush1.bf16.xpose.msra.mxu0 0
      %2146 = vmatprep.subr.bf16.mxu0 0
      %2147 = vmatpush1.bf16.xpose.msra.mxu0 0
      %2148 = vmatprep.subr.bf16.mxu0 0
      %2149 = vmatpush1.bf16.xpose.msra.mxu0 0
      %2150 = vmatprep.subr.bf16.mxu0 0
      %2151 = vmatpush1.bf16.xpose.msra.mxu0 0
      %2152 = vmatprep.subr.bf16.mxu0 0
      %2153 = vmatpush1.bf16.xpose.msra.mxu0 0
      %2154 = vmatprep.subr.bf16.mxu0 0
      %2155 = vmatpush1.bf16.xpose.msra.mxu0 0
      %2156 = vmatprep.subr.bf16.mxu0 0
      %2157 = vmatpush1.bf16.xpose.msra.mxu0 0
      %2158 = vmatprep.subr.bf16.mxu0 0
      %2159 = vmatpush1.bf16.xpose.msra.mxu0 0
      %2160 = vmatprep.subr.bf16.mxu0 0
      %2161 = vmatpush1.bf16.xpose.msra.mxu0 0
      %2162 = vmatprep.subr.bf16.mxu0 0
      %2163 = vmatpush1.bf16.xpose.msra.mxu0 0
      %2164 = vmatprep.subr.bf16.mxu0 0
      %2165 = vmatpush1.bf16.xpose.msra.mxu0 0
      %2166 = vmatprep.subr.bf16.mxu0 0
      %2167 = vmatpush1.bf16.xpose.msra.mxu0 0
      %2168 = vmatprep.subr.bf16.mxu0 0
      %2169 = vmatpush1.bf16.xpose.msra.mxu0 0
      %2170 = vmatprep.mubr.bf16.mxu0 0
      %2171 = vmatmul.mubr.bf16.gmra.mrb[0].mxu0 %v2133
      %v2172 = vpop.f32.mrb[0].mxu0
      %v2173 = vadd.f32 %v1614, %v2172
      %v2174 = vpop.f32.mrb[0].mxu0
      %v2175 = vpop.f32.mrb[0].mxu0
      %v2176 = vadd.f32 %v1615, %v2175
      %v2177 = vpop.f32.mrb[0].mxu0
      %2178 = vdwg.mxu0
      %v2180 = vsel %vm514, %v1377, 0
      %v2183 = vsel %vm514, %v1393, 0
      %2185 = vmatprep.subr.bf16.mxu0 0
      %2186 = vmatpush1.bf16.xpose.msra.mxu0 %v2183
      %2187 = vmatprep.subr.bf16.mxu0 0
      %2188 = vmatpush1.bf16.xpose.msra.mxu0 0
      %2189 = vmatprep.subr.bf16.mxu0 0
      %2190 = vmatpush1.bf16.xpose.msra.mxu0 0
      %2191 = vmatprep.subr.bf16.mxu0 0
      %2192 = vmatpush1.bf16.xpose.msra.mxu0 0
      %2193 = vmatprep.subr.bf16.mxu0 0
      %2194 = vmatpush1.bf16.xpose.msra.mxu0 0
      %2195 = vmatprep.subr.bf16.mxu0 0
      %2196 = vmatpush1.bf16.xpose.msra.mxu0 0
      %2197 = vmatprep.subr.bf16.mxu0 0
      %2198 = vmatpush1.bf16.xpose.msra.mxu0 0
      %2199 = vmatprep.subr.bf16.mxu0 0
      %2200 = vmatpush1.bf16.xpose.msra.mxu0 0
      %2201 = vmatprep.subr.bf16.mxu0 0
      %2202 = vmatpush1.bf16.xpose.msra.mxu0 0
      %2203 = vmatprep.subr.bf16.mxu0 0
      %2204 = vmatpush1.bf16.xpose.msra.mxu0 0
      %2205 = vmatprep.subr.bf16.mxu0 0
      %2206 = vmatpush1.bf16.xpose.msra.mxu0 0
      %2207 = vmatprep.subr.bf16.mxu0 0
      %2208 = vmatpush1.bf16.xpose.msra.mxu0 0
      %2209 = vmatprep.subr.bf16.mxu0 0
      %2210 = vmatpush1.bf16.xpose.msra.mxu0 0
      %2211 = vmatprep.subr.bf16.mxu0 0
      %2212 = vmatpush1.bf16.xpose.msra.mxu0 0
      %2213 = vmatprep.subr.bf16.mxu0 0
      %2214 = vmatpush1.bf16.xpose.msra.mxu0 0
      %2215 = vmatprep.subr.bf16.mxu0 0
      %2216 = vmatpush1.bf16.xpose.msra.mxu0 0
      %2217 = vmatprep.mubr.bf16.mxu0 0
      %2218 = vmatmul.mubr.bf16.gmra.mrb[0].mxu0 %v2180
      %v2219 = vpop.f32.mrb[0].mxu0
      %v2220 = vadd.f32 %v1622, %v2219
      %v2221 = vpop.f32.mrb[0].mxu0
      %v2222 = vpop.f32.mrb[0].mxu0
      %v2223 = vadd.f32 %v1623, %v2222
      %v2224 = vpop.f32.mrb[0].mxu0
      %2225 = vdwg.mxu0
      %v2227 = vsel %vm514, %v1378, 0
      %v2230 = vsel %vm514, %v1394, 0
      %2232 = vmatprep.subr.bf16.mxu0 0
      %2233 = vmatpush1.bf16.xpose.msra.mxu0 %v2230
      %2234 = vmatprep.subr.bf16.mxu0 0
      %2235 = vmatpush1.bf16.xpose.msra.mxu0 0
      %2236 = vmatprep.subr.bf16.mxu0 0
      %2237 = vmatpush1.bf16.xpose.msra.mxu0 0
      %2238 = vmatprep.subr.bf16.mxu0 0
      %2239 = vmatpush1.bf16.xpose.msra.mxu0 0
      %2240 = vmatprep.subr.bf16.mxu0 0
      %2241 = vmatpush1.bf16.xpose.msra.mxu0 0
      %2242 = vmatprep.subr.bf16.mxu0 0
      %2243 = vmatpush1.bf16.xpose.msra.mxu0 0
      %2244 = vmatprep.subr.bf16.mxu0 0
      %2245 = vmatpush1.bf16.xpose.msra.mxu0 0
      %2246 = vmatprep.subr.bf16.mxu0 0
      %2247 = vmatpush1.bf16.xpose.msra.mxu0 0
      %2248 = vmatprep.subr.bf16.mxu0 0
      %2249 = vmatpush1.bf16.xpose.msra.mxu0 0
      %2250 = vmatprep.subr.bf16.mxu0 0
      %2251 = vmatpush1.bf16.xpose.msra.mxu0 0
      %2252 = vmatprep.subr.bf16.mxu0 0
      %2253 = vmatpush1.bf16.xpose.msra.mxu0 0
      %2254 = vmatprep.subr.bf16.mxu0 0
      %2255 = vmatpush1.bf16.xpose.msra.mxu0 0
      %2256 = vmatprep.subr.bf16.mxu0 0
      %2257 = vmatpush1.bf16.xpose.msra.mxu0 0
      %2258 = vmatprep.subr.bf16.mxu0 0
      %2259 = vmatpush1.bf16.xpose.msra.mxu0 0
      %2260 = vmatprep.subr.bf16.mxu0 0
      %2261 = vmatpush1.bf16.xpose.msra.mxu0 0
      %2262 = vmatprep.subr.bf16.mxu0 0
      %2263 = vmatpush1.bf16.xpose.msra.mxu0 0
      %2264 = vmatprep.mubr.bf16.mxu0 0
      %2265 = vmatmul.mubr.bf16.gmra.mrb[0].mxu0 %v2227
      %v2266 = vpop.f32.mrb[0].mxu0
      %v2267 = vadd.f32 %v1630, %v2266
      %v2268 = vpop.f32.mrb[0].mxu0
      %v2269 = vpop.f32.mrb[0].mxu0
      %v2270 = vadd.f32 %v1631, %v2269
      %v2271 = vpop.f32.mrb[0].mxu0
      %2272 = vdwg.mxu0
      %v2274 = vsel %vm514, %v1379, 0
      %v2277 = vsel %vm514, %v1395, 0
      %2279 = vmatprep.subr.bf16.mxu0 0
      %2280 = vmatpush1.bf16.xpose.msra.mxu0 %v2277
      %2281 = vmatprep.subr.bf16.mxu0 0
      %2282 = vmatpush1.bf16.xpose.msra.mxu0 0
      %2283 = vmatprep.subr.bf16.mxu0 0
      %2284 = vmatpush1.bf16.xpose.msra.mxu0 0
      %2285 = vmatprep.subr.bf16.mxu0 0
      %2286 = vmatpush1.bf16.xpose.msra.mxu0 0
      %2287 = vmatprep.subr.bf16.mxu0 0
      %2288 = vmatpush1.bf16.xpose.msra.mxu0 0
      %2289 = vmatprep.subr.bf16.mxu0 0
      %2290 = vmatpush1.bf16.xpose.msra.mxu0 0
      %2291 = vmatprep.subr.bf16.mxu0 0
      %2292 = vmatpush1.bf16.xpose.msra.mxu0 0
      %2293 = vmatprep.subr.bf16.mxu0 0
      %2294 = vmatpush1.bf16.xpose.msra.mxu0 0
      %2295 = vmatprep.subr.bf16.mxu0 0
      %2296 = vmatpush1.bf16.xpose.msra.mxu0 0
      %2297 = vmatprep.subr.bf16.mxu0 0
      %2298 = vmatpush1.bf16.xpose.msra.mxu0 0
      %2299 = vmatprep.subr.bf16.mxu0 0
      %2300 = vmatpush1.bf16.xpose.msra.mxu0 0
      %2301 = vmatprep.subr.bf16.mxu0 0
      %2302 = vmatpush1.bf16.xpose.msra.mxu0 0
      %2303 = vmatprep.subr.bf16.mxu0 0
      %2304 = vmatpush1.bf16.xpose.msra.mxu0 0
      %2305 = vmatprep.subr.bf16.mxu0 0
      %2306 = vmatpush1.bf16.xpose.msra.mxu0 0
      %2307 = vmatprep.subr.bf16.mxu0 0
      %2308 = vmatpush1.bf16.xpose.msra.mxu0 0
      %2309 = vmatprep.subr.bf16.mxu0 0
      %2310 = vmatpush1.bf16.xpose.msra.mxu0 0
      %2311 = vmatprep.mubr.bf16.mxu0 0
      %2312 = vmatmul.mubr.bf16.gmra.mrb[0].mxu0 %v2274
      %v2313 = vpop.f32.mrb[0].mxu0
      %v2314 = vadd.f32 %v1638, %v2313
      %v2315 = vpop.f32.mrb[0].mxu0
      %v2316 = vpop.f32.mrb[0].mxu0
      %v2317 = vadd.f32 %v1639, %v2316
      %v2318 = vpop.f32.mrb[0].mxu0
      %2319 = vdwg.mxu0
      %v2321 = vsel %vm514, %v1380, 0
      %v2324 = vsel %vm514, %v1396, 0
      %2326 = vmatprep.subr.bf16.mxu0 0
      %2327 = vmatpush1.bf16.xpose.msra.mxu0 %v2324
      %2328 = vmatprep.subr.bf16.mxu0 0
      %2329 = vmatpush1.bf16.xpose.msra.mxu0 0
      %2330 = vmatprep.subr.bf16.mxu0 0
      %2331 = vmatpush1.bf16.xpose.msra.mxu0 0
      %2332 = vmatprep.subr.bf16.mxu0 0
      %2333 = vmatpush1.bf16.xpose.msra.mxu0 0
      %2334 = vmatprep.subr.bf16.mxu0 0
      %2335 = vmatpush1.bf16.xpose.msra.mxu0 0
      %2336 = vmatprep.subr.bf16.mxu0 0
      %2337 = vmatpush1.bf16.xpose.msra.mxu0 0
      %2338 = vmatprep.subr.bf16.mxu0 0
      %2339 = vmatpush1.bf16.xpose.msra.mxu0 0
      %2340 = vmatprep.subr.bf16.mxu0 0
      %2341 = vmatpush1.bf16.xpose.msra.mxu0 0
      %2342 = vmatprep.subr.bf16.mxu0 0
      %2343 = vmatpush1.bf16.xpose.msra.mxu0 0
      %2344 = vmatprep.subr.bf16.mxu0 0
      %2345 = vmatpush1.bf16.xpose.msra.mxu0 0
      %2346 = vmatprep.subr.bf16.mxu0 0
      %2347 = vmatpush1.bf16.xpose.msra.mxu0 0
      %2348 = vmatprep.subr.bf16.mxu0 0
      %2349 = vmatpush1.bf16.xpose.msra.mxu0 0
      %2350 = vmatprep.subr.bf16.mxu0 0
      %2351 = vmatpush1.bf16.xpose.msra.mxu0 0
      %2352 = vmatprep.subr.bf16.mxu0 0
      %2353 = vmatpush1.bf16.xpose.msra.mxu0 0
      %2354 = vmatprep.subr.bf16.mxu0 0
      %2355 = vmatpush1.bf16.xpose.msra.mxu0 0
      %2356 = vmatprep.subr.bf16.mxu0 0
      %2357 = vmatpush1.bf16.xpose.msra.mxu0 0
      %2358 = vmatprep.mubr.bf16.mxu0 0
      %2359 = vmatmul.mubr.bf16.gmra.mrb[0].mxu0 %v2321
      %v2360 = vpop.f32.mrb[0].mxu0
      %v2361 = vadd.f32 %v1646, %v2360
      %v2362 = vpop.f32.mrb[0].mxu0
      %v2363 = vpop.f32.mrb[0].mxu0
      %v2364 = vadd.f32 %v1647, %v2363
      %v2365 = vpop.f32.mrb[0].mxu0
      %2366 = vdwg.mxu0
      %v2368 = vsel %vm514, %v1381, 0
      %v2371 = vsel %vm514, %v1397, 0
      %2373 = vmatprep.subr.bf16.mxu0 0
      %2374 = vmatpush1.bf16.xpose.msra.mxu0 %v2371
      %2375 = vmatprep.subr.bf16.mxu0 0
      %2376 = vmatpush1.bf16.xpose.msra.mxu0 0
      %2377 = vmatprep.subr.bf16.mxu0 0
      %2378 = vmatpush1.bf16.xpose.msra.mxu0 0
      %2379 = vmatprep.subr.bf16.mxu0 0
      %2380 = vmatpush1.bf16.xpose.msra.mxu0 0
      %2381 = vmatprep.subr.bf16.mxu0 0
      %2382 = vmatpush1.bf16.xpose.msra.mxu0 0
      %2383 = vmatprep.subr.bf16.mxu0 0
      %2384 = vmatpush1.bf16.xpose.msra.mxu0 0
      %2385 = vmatprep.subr.bf16.mxu0 0
      %2386 = vmatpush1.bf16.xpose.msra.mxu0 0
      %2387 = vmatprep.subr.bf16.mxu0 0
      %2388 = vmatpush1.bf16.xpose.msra.mxu0 0
      %2389 = vmatprep.subr.bf16.mxu0 0
      %2390 = vmatpush1.bf16.xpose.msra.mxu0 0
      %2391 = vmatprep.subr.bf16.mxu0 0
      %2392 = vmatpush1.bf16.xpose.msra.mxu0 0
      %2393 = vmatprep.subr.bf16.mxu0 0
      %2394 = vmatpush1.bf16.xpose.msra.mxu0 0
      %2395 = vmatprep.subr.bf16.mxu0 0
      %2396 = vmatpush1.bf16.xpose.msra.mxu0 0
      %2397 = vmatprep.subr.bf16.mxu0 0
      %2398 = vmatpush1.bf16.xpose.msra.mxu0 0
      %2399 = vmatprep.subr.bf16.mxu0 0
      %2400 = vmatpush1.bf16.xpose.msra.mxu0 0
      %2401 = vmatprep.subr.bf16.mxu0 0
      %2402 = vmatpush1.bf16.xpose.msra.mxu0 0
      %2403 = vmatprep.subr.bf16.mxu0 0
      %2404 = vmatpush1.bf16.xpose.msra.mxu0 0
      %2405 = vmatprep.mubr.bf16.mxu0 0
      %2406 = vmatmul.mubr.bf16.gmra.mrb[0].mxu0 %v2368
      %v2407 = vpop.f32.mrb[0].mxu0
      %v2408 = vadd.f32 %v1654, %v2407
      %v2409 = vpop.f32.mrb[0].mxu0
      %v2410 = vpop.f32.mrb[0].mxu0
      %v2411 = vadd.f32 %v1655, %v2410
      %v2412 = vpop.f32.mrb[0].mxu0
      %2413 = vdwg.mxu0
      %vm2414 = vcmask 130048
      %v2415 = vsel %vm2414, %v1703, -inf
      %2416 = vmax.xlane.f32.xlu0 %v2415
      %v2417 = vpop.xlane.xlu0 %2416
      %v2418 = vsel %vm2414, %v1706, -inf
      %2419 = vmax.xlane.f32.xlu0 %v2418
      %v2420 = vpop.xlane.xlu0 %2419
      %v2421 = vsel %vm2414, %v1750, -inf
      %2422 = vmax.xlane.f32.xlu0 %v2421
      %v2423 = vpop.xlane.xlu0 %2422
      %v2424 = vsel %vm2414, %v1753, -inf
      %2425 = vmax.xlane.f32.xlu0 %v2424
      %v2426 = vpop.xlane.xlu0 %2425
      %v2427 = vsel %vm2414, %v1797, -inf
      %2428 = vmax.xlane.f32.xlu0 %v2427
      %v2429 = vpop.xlane.xlu0 %2428
      %v2430 = vsel %vm2414, %v1800, -inf
      %2431 = vmax.xlane.f32.xlu0 %v2430
      %v2432 = vpop.xlane.xlu0 %2431
      %v2433 = vsel %vm2414, %v1844, -inf
      %2434 = vmax.xlane.f32.xlu0 %v2433
      %v2435 = vpop.xlane.xlu0 %2434
      %v2436 = vsel %vm2414, %v1847, -inf
      %2437 = vmax.xlane.f32.xlu0 %v2436
      %v2438 = vpop.xlane.xlu0 %2437
      %v2439 = vsel %vm2414, %v1891, -inf
      %2440 = vmax.xlane.f32.xlu0 %v2439
      %v2441 = vpop.xlane.xlu0 %2440
      %v2442 = vsel %vm2414, %v1894, -inf
      %2443 = vmax.xlane.f32.xlu0 %v2442
      %v2444 = vpop.xlane.xlu0 %2443
      %v2445 = vsel %vm2414, %v1938, -inf
      %2446 = vmax.xlane.f32.xlu0 %v2445
      %v2447 = vpop.xlane.xlu0 %2446
      %v2448 = vsel %vm2414, %v1941, -inf
      %2449 = vmax.xlane.f32.xlu0 %v2448
      %v2450 = vpop.xlane.xlu0 %2449
      %v2451 = vsel %vm2414, %v1985, -inf
      %2452 = vmax.xlane.f32.xlu0 %v2451
      %v2453 = vpop.xlane.xlu0 %2452
      %v2454 = vsel %vm2414, %v1988, -inf
      %2455 = vmax.xlane.f32.xlu0 %v2454
      %v2456 = vpop.xlane.xlu0 %2455
      %v2457 = vsel %vm2414, %v2032, -inf
      %2458 = vmax.xlane.f32.xlu0 %v2457
      %v2459 = vpop.xlane.xlu0 %2458
      %v2460 = vsel %vm2414, %v2035, -inf
      %2461 = vmax.xlane.f32.xlu0 %v2460
      %v2462 = vpop.xlane.xlu0 %2461
      %v2463 = vsel %vm2414, %v2079, -inf
      %2464 = vmax.xlane.f32.xlu0 %v2463
      %v2465 = vpop.xlane.xlu0 %2464
      %v2466 = vsel %vm2414, %v2082, -inf
      %2467 = vmax.xlane.f32.xlu0 %v2466
      %v2468 = vpop.xlane.xlu0 %2467
      %v2469 = vsel %vm2414, %v2126, -inf
      %2470 = vmax.xlane.f32.xlu0 %v2469
      %v2471 = vpop.xlane.xlu0 %2470
      %v2472 = vsel %vm2414, %v2129, -inf
      %2473 = vmax.xlane.f32.xlu0 %v2472
      %v2474 = vpop.xlane.xlu0 %2473
      %v2475 = vsel %vm2414, %v2173, -inf
      %2476 = vmax.xlane.f32.xlu0 %v2475
      %v2477 = vpop.xlane.xlu0 %2476
      %v2478 = vsel %vm2414, %v2176, -inf
      %2479 = vmax.xlane.f32.xlu0 %v2478
      %v2480 = vpop.xlane.xlu0 %2479
      %v2481 = vsel %vm2414, %v2220, -inf
      %2482 = vmax.xlane.f32.xlu0 %v2481
      %v2483 = vpop.xlane.xlu0 %2482
      %v2484 = vsel %vm2414, %v2223, -inf
      %2485 = vmax.xlane.f32.xlu0 %v2484
      %v2486 = vpop.xlane.xlu0 %2485
      %v2487 = vsel %vm2414, %v2267, -inf
      %2488 = vmax.xlane.f32.xlu0 %v2487
      %v2489 = vpop.xlane.xlu0 %2488
      %v2490 = vsel %vm2414, %v2270, -inf
      %2491 = vmax.xlane.f32.xlu0 %v2490
      %v2492 = vpop.xlane.xlu0 %2491
      %v2493 = vsel %vm2414, %v2314, -inf
      %2494 = vmax.xlane.f32.xlu0 %v2493
      %v2495 = vpop.xlane.xlu0 %2494
      %v2496 = vsel %vm2414, %v2317, -inf
      %2497 = vmax.xlane.f32.xlu0 %v2496
      %v2498 = vpop.xlane.xlu0 %2497
      %v2499 = vsel %vm2414, %v2361, -inf
      %2500 = vmax.xlane.f32.xlu0 %v2499
      %v2501 = vpop.xlane.xlu0 %2500
      %v2502 = vsel %vm2414, %v2364, -inf
      %2503 = vmax.xlane.f32.xlu0 %v2502
      %v2504 = vpop.xlane.xlu0 %2503
      %v2505 = vsel %vm2414, %v2408, -inf
      %2506 = vmax.xlane.f32.xlu0 %v2505
      %v2507 = vpop.xlane.xlu0 %2506
      %v2508 = vsel %vm2414, %v2411, -inf
      %2509 = vmax.xlane.f32.xlu0 %v2508
      %v2510 = vpop.xlane.xlu0 %2509
      %v2511 = vsub.f32 %v1703, %v2417
      %v2512 = vsub.f32 %v1706, %v2420
      %v2513 = vsub.f32 %v1750, %v2423
      %v2514 = vsub.f32 %v1753, %v2426
      %v2515 = vsub.f32 %v1797, %v2429
      %v2516 = vsub.f32 %v1800, %v2432
      %v2517 = vsub.f32 %v1844, %v2435
      %v2518 = vsub.f32 %v1847, %v2438
      %v2519 = vsub.f32 %v1891, %v2441
      %v2520 = vsub.f32 %v1894, %v2444
      %v2521 = vsub.f32 %v1938, %v2447
      %v2522 = vsub.f32 %v1941, %v2450
      %v2523 = vsub.f32 %v1985, %v2453
      %v2524 = vsub.f32 %v1988, %v2456
      %v2525 = vsub.f32 %v2032, %v2459
      %v2526 = vsub.f32 %v2035, %v2462
      %v2527 = vsub.f32 %v2079, %v2465
      %v2528 = vsub.f32 %v2082, %v2468
      %v2529 = vsub.f32 %v2126, %v2471
      %v2530 = vsub.f32 %v2129, %v2474
      %v2531 = vsub.f32 %v2173, %v2477
      %v2532 = vsub.f32 %v2176, %v2480
      %v2533 = vsub.f32 %v2220, %v2483
      %v2534 = vsub.f32 %v2223, %v2486
      %v2535 = vsub.f32 %v2267, %v2489
      %v2536 = vsub.f32 %v2270, %v2492
      %v2537 = vsub.f32 %v2314, %v2495
      %v2538 = vsub.f32 %v2317, %v2498
      %v2539 = vsub.f32 %v2361, %v2501
      %v2540 = vsub.f32 %v2364, %v2504
      %v2541 = vsub.f32 %v2408, %v2507
      %v2542 = vsub.f32 %v2411, %v2510
      %v2543 = vmul.f32 %v2511, 1.442695
      %v2544 = vpow.pop %v2543
      %v2545 = vmul.f32 %v2512, 1.442695
      %v2546 = vpow.pop %v2545
      %v2547 = vmul.f32 %v2513, 1.442695
      %v2548 = vpow.pop %v2547
      %v2549 = vmul.f32 %v2514, 1.442695
      %v2550 = vpow.pop %v2549
      %v2551 = vmul.f32 %v2515, 1.442695
      %v2552 = vpow.pop %v2551
      %v2553 = vmul.f32 %v2516, 1.442695
      %v2554 = vpow.pop %v2553
      %v2555 = vmul.f32 %v2517, 1.442695
      %v2556 = vpow.pop %v2555
      %v2557 = vmul.f32 %v2518, 1.442695
      %v2558 = vpow.pop %v2557
      %v2559 = vmul.f32 %v2519, 1.442695
      %v2560 = vpow.pop %v2559
      %v2561 = vmul.f32 %v2520, 1.442695
      %v2562 = vpow.pop %v2561
      %v2563 = vmul.f32 %v2521, 1.442695
      %v2564 = vpow.pop %v2563
      %v2565 = vmul.f32 %v2522, 1.442695
      %v2566 = vpow.pop %v2565
      %v2567 = vmul.f32 %v2523, 1.442695
      %v2568 = vpow.pop %v2567
      %v2569 = vmul.f32 %v2524, 1.442695
      %v2570 = vpow.pop %v2569
      %v2571 = vmul.f32 %v2525, 1.442695
      %v2572 = vpow.pop %v2571
      %v2573 = vmul.f32 %v2526, 1.442695
      %v2574 = vpow.pop %v2573
      %v2575 = vmul.f32 %v2527, 1.442695
      %v2576 = vpow.pop %v2575
      %v2577 = vmul.f32 %v2528, 1.442695
      %v2578 = vpow.pop %v2577
      %v2579 = vmul.f32 %v2529, 1.442695
      %v2580 = vpow.pop %v2579
      %v2581 = vmul.f32 %v2530, 1.442695
      %v2582 = vpow.pop %v2581
      %v2583 = vmul.f32 %v2531, 1.442695
      %v2584 = vpow.pop %v2583
      %v2585 = vmul.f32 %v2532, 1.442695
      %v2586 = vpow.pop %v2585
      %v2587 = vmul.f32 %v2533, 1.442695
      %v2588 = vpow.pop %v2587
      %v2589 = vmul.f32 %v2534, 1.442695
      %v2590 = vpow.pop %v2589
      %v2591 = vmul.f32 %v2535, 1.442695
      %v2592 = vpow.pop %v2591
      %v2593 = vmul.f32 %v2536, 1.442695
      %v2594 = vpow.pop %v2593
      %v2595 = vmul.f32 %v2537, 1.442695
      %v2596 = vpow.pop %v2595
      %v2597 = vmul.f32 %v2538, 1.442695
      %v2598 = vpow.pop %v2597
      %v2599 = vmul.f32 %v2539, 1.442695
      %v2600 = vpow.pop %v2599
      %v2601 = vmul.f32 %v2540, 1.442695
      %v2602 = vpow.pop %v2601
      %v2603 = vmul.f32 %v2541, 1.442695
      %v2604 = vpow.pop %v2603
      %v2605 = vmul.f32 %v2542, 1.442695
      %v2606 = vpow.pop %v2605
      %v2607 = vsel %vm2414, %v2544, 0.0
      %2608 = vadd.xlane.f32.xlu0 %v2607
      %v2609 = vpop.xlane.xlu0 %2608
      %v2610 = vsel %vm2414, %v2546, 0.0
      %2611 = vadd.xlane.f32.xlu0 %v2610
      %v2612 = vpop.xlane.xlu0 %2611
      %v2613 = vsel %vm2414, %v2548, 0.0
      %2614 = vadd.xlane.f32.xlu0 %v2613
      %v2615 = vpop.xlane.xlu0 %2614
      %v2616 = vsel %vm2414, %v2550, 0.0
      %2617 = vadd.xlane.f32.xlu0 %v2616
      %v2618 = vpop.xlane.xlu0 %2617
      %v2619 = vsel %vm2414, %v2552, 0.0
      %2620 = vadd.xlane.f32.xlu0 %v2619
      %v2621 = vpop.xlane.xlu0 %2620
      %v2622 = vsel %vm2414, %v2554, 0.0
      %2623 = vadd.xlane.f32.xlu0 %v2622
      %v2624 = vpop.xlane.xlu0 %2623
      %v2625 = vsel %vm2414, %v2556, 0.0
      %2626 = vadd.xlane.f32.xlu0 %v2625
      %v2627 = vpop.xlane.xlu0 %2626
      %v2628 = vsel %vm2414, %v2558, 0.0
      %2629 = vadd.xlane.f32.xlu0 %v2628
      %v2630 = vpop.xlane.xlu0 %2629
      %v2631 = vsel %vm2414, %v2560, 0.0
      %2632 = vadd.xlane.f32.xlu0 %v2631
      %v2633 = vpop.xlane.xlu0 %2632
      %v2634 = vsel %vm2414, %v2562, 0.0
      %2635 = vadd.xlane.f32.xlu0 %v2634
      %v2636 = vpop.xlane.xlu0 %2635
      %v2637 = vsel %vm2414, %v2564, 0.0
      %2638 = vadd.xlane.f32.xlu0 %v2637
      %v2639 = vpop.xlane.xlu0 %2638
      %v2640 = vsel %vm2414, %v2566, 0.0
      %2641 = vadd.xlane.f32.xlu0 %v2640
      %v2642 = vpop.xlane.xlu0 %2641
      %v2643 = vsel %vm2414, %v2568, 0.0
      %2644 = vadd.xlane.f32.xlu0 %v2643
      %v2645 = vpop.xlane.xlu0 %2644
      %v2646 = vsel %vm2414, %v2570, 0.0
      %2647 = vadd.xlane.f32.xlu0 %v2646
      %v2648 = vpop.xlane.xlu0 %2647
      %v2649 = vsel %vm2414, %v2572, 0.0
      %2650 = vadd.xlane.f32.xlu0 %v2649
      %v2651 = vpop.xlane.xlu0 %2650
      %v2652 = vsel %vm2414, %v2574, 0.0
      %2653 = vadd.xlane.f32.xlu0 %v2652
      %v2654 = vpop.xlane.xlu0 %2653
      %v2655 = vsel %vm2414, %v2576, 0.0
      %2656 = vadd.xlane.f32.xlu0 %v2655
      %v2657 = vpop.xlane.xlu0 %2656
      %v2658 = vsel %vm2414, %v2578, 0.0
      %2659 = vadd.xlane.f32.xlu0 %v2658
      %v2660 = vpop.xlane.xlu0 %2659
      %v2661 = vsel %vm2414, %v2580, 0.0
      %2662 = vadd.xlane.f32.xlu0 %v2661
      %v2663 = vpop.xlane.xlu0 %2662
      %v2664 = vsel %vm2414, %v2582, 0.0
      %2665 = vadd.xlane.f32.xlu0 %v2664
      %v2666 = vpop.xlane.xlu0 %2665
      %v2667 = vsel %vm2414, %v2584, 0.0
      %2668 = vadd.xlane.f32.xlu0 %v2667
      %v2669 = vpop.xlane.xlu0 %2668
      %v2670 = vsel %vm2414, %v2586, 0.0
      %2671 = vadd.xlane.f32.xlu0 %v2670
      %v2672 = vpop.xlane.xlu0 %2671
      %v2673 = vsel %vm2414, %v2588, 0.0
      %2674 = vadd.xlane.f32.xlu0 %v2673
      %v2675 = vpop.xlane.xlu0 %2674
      %v2676 = vsel %vm2414, %v2590, 0.0
      %2677 = vadd.xlane.f32.xlu0 %v2676
      %v2678 = vpop.xlane.xlu0 %2677
      %v2679 = vsel %vm2414, %v2592, 0.0
      %2680 = vadd.xlane.f32.xlu0 %v2679
      %v2681 = vpop.xlane.xlu0 %2680
      %v2682 = vsel %vm2414, %v2594, 0.0
      %2683 = vadd.xlane.f32.xlu0 %v2682
      %v2684 = vpop.xlane.xlu0 %2683
      %v2685 = vsel %vm2414, %v2596, 0.0
      %2686 = vadd.xlane.f32.xlu0 %v2685
      %v2687 = vpop.xlane.xlu0 %2686
      %v2688 = vsel %vm2414, %v2598, 0.0
      %2689 = vadd.xlane.f32.xlu0 %v2688
      %v2690 = vpop.xlane.xlu0 %2689
      %v2691 = vsel %vm2414, %v2600, 0.0
      %2692 = vadd.xlane.f32.xlu0 %v2691
      %v2693 = vpop.xlane.xlu0 %2692
      %v2694 = vsel %vm2414, %v2602, 0.0
      %2695 = vadd.xlane.f32.xlu0 %v2694
      %v2696 = vpop.xlane.xlu0 %2695
      %v2697 = vsel %vm2414, %v2604, 0.0
      %2698 = vadd.xlane.f32.xlu0 %v2697
      %v2699 = vpop.xlane.xlu0 %2698
      %v2700 = vsel %vm2414, %v2606, 0.0
      %2701 = vadd.xlane.f32.xlu0 %v2700
      %v2702 = vpop.xlane.xlu0 %2701
      %v2703 = vrcp.pop %v2609
      %v2704 = vrcp.pop %v2612
      %v2705 = vrcp.pop %v2615
      %v2706 = vrcp.pop %v2618
      %v2707 = vrcp.pop %v2621
      %v2708 = vrcp.pop %v2624
      %v2709 = vrcp.pop %v2627
      %v2710 = vrcp.pop %v2630
      %v2711 = vrcp.pop %v2633
      %v2712 = vrcp.pop %v2636
      %v2713 = vrcp.pop %v2639
      %v2714 = vrcp.pop %v2642
      %v2715 = vrcp.pop %v2645
      %v2716 = vrcp.pop %v2648
      %v2717 = vrcp.pop %v2651
      %v2718 = vrcp.pop %v2654
      %v2719 = vrcp.pop %v2657
      %v2720 = vrcp.pop %v2660
      %v2721 = vrcp.pop %v2663
      %v2722 = vrcp.pop %v2666
      %v2723 = vrcp.pop %v2669
      %v2724 = vrcp.pop %v2672
      %v2725 = vrcp.pop %v2675
      %v2726 = vrcp.pop %v2678
      %v2727 = vrcp.pop %v2681
      %v2728 = vrcp.pop %v2684
      %v2729 = vrcp.pop %v2687
      %v2730 = vrcp.pop %v2690
      %v2731 = vrcp.pop %v2693
      %v2732 = vrcp.pop %v2696
      %v2733 = vrcp.pop %v2699
      %v2734 = vrcp.pop %v2702
      %v2735 = vmul.f32 %v2544, %v2703
      %v2736 = vmul.f32 %v2546, %v2704
      %v2737 = vmul.f32 %v2548, %v2705
      %v2738 = vmul.f32 %v2550, %v2706
      %v2739 = vmul.f32 %v2552, %v2707
      %v2740 = vmul.f32 %v2554, %v2708
      %v2741 = vmul.f32 %v2556, %v2709
      %v2742 = vmul.f32 %v2558, %v2710
      %v2743 = vmul.f32 %v2560, %v2711
      %v2744 = vmul.f32 %v2562, %v2712
      %v2745 = vmul.f32 %v2564, %v2713
      %v2746 = vmul.f32 %v2566, %v2714
      %v2747 = vmul.f32 %v2568, %v2715
      %v2748 = vmul.f32 %v2570, %v2716
      %v2749 = vmul.f32 %v2572, %v2717
      %v2750 = vmul.f32 %v2574, %v2718
      %v2751 = vmul.f32 %v2576, %v2719
      %v2752 = vmul.f32 %v2578, %v2720
      %v2753 = vmul.f32 %v2580, %v2721
      %v2754 = vmul.f32 %v2582, %v2722
      %v2755 = vmul.f32 %v2584, %v2723
      %v2756 = vmul.f32 %v2586, %v2724
      %v2757 = vmul.f32 %v2588, %v2725
      %v2758 = vmul.f32 %v2590, %v2726
      %v2759 = vmul.f32 %v2592, %v2727
      %v2760 = vmul.f32 %v2594, %v2728
      %v2761 = vmul.f32 %v2596, %v2729
      %v2762 = vmul.f32 %v2598, %v2730
      %v2763 = vmul.f32 %v2600, %v2731
      %v2764 = vmul.f32 %v2602, %v2732
      %v2765 = vmul.f32 %v2604, %v2733
      %v2766 = vmul.f32 %v2606, %v2734
      %v2767 = vpack.c.bf16 %v2736, %v2735
      %v2768 = vpack.c.bf16 %v2738, %v2737
      %v2769 = vpack.c.bf16 %v2740, %v2739
      %v2770 = vpack.c.bf16 %v2742, %v2741
      %v2771 = vpack.c.bf16 %v2744, %v2743
      %v2772 = vpack.c.bf16 %v2746, %v2745
      %v2773 = vpack.c.bf16 %v2748, %v2747
      %v2774 = vpack.c.bf16 %v2750, %v2749
      %v2775 = vpack.c.bf16 %v2752, %v2751
      %v2776 = vpack.c.bf16 %v2754, %v2753
      %v2777 = vpack.c.bf16 %v2756, %v2755
      %v2778 = vpack.c.bf16 %v2758, %v2757
      %v2779 = vpack.c.bf16 %v2760, %v2759
      %v2780 = vpack.c.bf16 %v2762, %v2761
      %v2781 = vpack.c.bf16 %v2764, %v2763
      %v2782 = vpack.c.bf16 %v2766, %v2765
      %v2784 = vsel %vm2414, %v2767, 0
      %2786 = vmatprep.subr.bf16.mxu0 0
      %2787 = vmatpush1.bf16.msra.mxu0 %v1398
      %2788 = vmatprep.subr.bf16.mxu0 0
      %2789 = vmatpush1.bf16.msra.mxu0 0
      %2790 = vmatprep.subr.bf16.mxu0 0
      %2791 = vmatpush1.bf16.msra.mxu0 0
      %2792 = vmatprep.subr.bf16.mxu0 0
      %2793 = vmatpush1.bf16.msra.mxu0 0
      %2794 = vmatprep.subr.bf16.mxu0 0
      %2795 = vmatpush1.bf16.msra.mxu0 0
      %2796 = vmatprep.subr.bf16.mxu0 0
      %2797 = vmatpush1.bf16.msra.mxu0 0
      %2798 = vmatprep.subr.bf16.mxu0 0
      %2799 = vmatpush1.bf16.msra.mxu0 0
      %2800 = vmatprep.subr.bf16.mxu0 0
      %2801 = vmatpush1.bf16.msra.mxu0 0
      %2802 = vmatprep.subr.bf16.mxu0 0
      %2803 = vmatpush1.bf16.msra.mxu0 0
      %2804 = vmatprep.subr.bf16.mxu0 0
      %2805 = vmatpush1.bf16.msra.mxu0 0
      %2806 = vmatprep.subr.bf16.mxu0 0
      %2807 = vmatpush1.bf16.msra.mxu0 0
      %2808 = vmatprep.subr.bf16.mxu0 0
      %2809 = vmatpush1.bf16.msra.mxu0 0
      %2810 = vmatprep.subr.bf16.mxu0 0
      %2811 = vmatpush1.bf16.msra.mxu0 0
      %2812 = vmatprep.subr.bf16.mxu0 0
      %2813 = vmatpush1.bf16.msra.mxu0 0
      %2814 = vmatprep.subr.bf16.mxu0 0
      %2815 = vmatpush1.bf16.msra.mxu0 0
      %2816 = vmatprep.subr.bf16.mxu0 0
      %2817 = vmatpush1.bf16.msra.mxu0 0
      %2818 = vmatprep.mubr.bf16.mxu0 0
      %2819 = vmatmul.mubr.bf16.gmra.mrb[0].mxu0 %v2784
      %v2820 = vpop.f32.mrb[0].mxu0
      %v2821 = vadd.f32 0.0, %v2820
      %v2822 = vpop.f32.mrb[0].mxu0
      %v2823 = vpop.f32.mrb[0].mxu0
      %v2824 = vadd.f32 0.0, %v2823
      %v2825 = vpop.f32.mrb[0].mxu0
      %2826 = vdwg.mxu0
      %v2828 = vsel %vm2414, %v2768, 0
      %2830 = vmatprep.subr.bf16.mxu0 0
      %2831 = vmatpush1.bf16.msra.mxu0 %v1399
      %2832 = vmatprep.subr.bf16.mxu0 0
      %2833 = vmatpush1.bf16.msra.mxu0 0
      %2834 = vmatprep.subr.bf16.mxu0 0
      %2835 = vmatpush1.bf16.msra.mxu0 0
      %2836 = vmatprep.subr.bf16.mxu0 0
      %2837 = vmatpush1.bf16.msra.mxu0 0
      %2838 = vmatprep.subr.bf16.mxu0 0
      %2839 = vmatpush1.bf16.msra.mxu0 0
      %2840 = vmatprep.subr.bf16.mxu0 0
      %2841 = vmatpush1.bf16.msra.mxu0 0
      %2842 = vmatprep.subr.bf16.mxu0 0
      %2843 = vmatpush1.bf16.msra.mxu0 0
      %2844 = vmatprep.subr.bf16.mxu0 0
      %2845 = vmatpush1.bf16.msra.mxu0 0
      %2846 = vmatprep.subr.bf16.mxu0 0
      %2847 = vmatpush1.bf16.msra.mxu0 0
      %2848 = vmatprep.subr.bf16.mxu0 0
      %2849 = vmatpush1.bf16.msra.mxu0 0
      %2850 = vmatprep.subr.bf16.mxu0 0
      %2851 = vmatpush1.bf16.msra.mxu0 0
      %2852 = vmatprep.subr.bf16.mxu0 0
      %2853 = vmatpush1.bf16.msra.mxu0 0
      %2854 = vmatprep.subr.bf16.mxu0 0
      %2855 = vmatpush1.bf16.msra.mxu0 0
      %2856 = vmatprep.subr.bf16.mxu0 0
      %2857 = vmatpush1.bf16.msra.mxu0 0
      %2858 = vmatprep.subr.bf16.mxu0 0
      %2859 = vmatpush1.bf16.msra.mxu0 0
      %2860 = vmatprep.subr.bf16.mxu0 0
      %2861 = vmatpush1.bf16.msra.mxu0 0
      %2862 = vmatprep.mubr.bf16.mxu0 0
      %2863 = vmatmul.mubr.bf16.gmra.mrb[0].mxu0 %v2828
      %v2864 = vpop.f32.mrb[0].mxu0
      %v2865 = vadd.f32 0.0, %v2864
      %v2866 = vpop.f32.mrb[0].mxu0
      %v2867 = vpop.f32.mrb[0].mxu0
      %v2868 = vadd.f32 0.0, %v2867
      %v2869 = vpop.f32.mrb[0].mxu0
      %2870 = vdwg.mxu0
      %v2872 = vsel %vm2414, %v2769, 0
      %2874 = vmatprep.subr.bf16.mxu0 0
      %2875 = vmatpush1.bf16.msra.mxu0 %v1400
      %2876 = vmatprep.subr.bf16.mxu0 0
      %2877 = vmatpush1.bf16.msra.mxu0 0
      %2878 = vmatprep.subr.bf16.mxu0 0
      %2879 = vmatpush1.bf16.msra.mxu0 0
      %2880 = vmatprep.subr.bf16.mxu0 0
      %2881 = vmatpush1.bf16.msra.mxu0 0
      %2882 = vmatprep.subr.bf16.mxu0 0
      %2883 = vmatpush1.bf16.msra.mxu0 0
      %2884 = vmatprep.subr.bf16.mxu0 0
      %2885 = vmatpush1.bf16.msra.mxu0 0
      %2886 = vmatprep.subr.bf16.mxu0 0
      %2887 = vmatpush1.bf16.msra.mxu0 0
      %2888 = vmatprep.subr.bf16.mxu0 0
      %2889 = vmatpush1.bf16.msra.mxu0 0
      %2890 = vmatprep.subr.bf16.mxu0 0
      %2891 = vmatpush1.bf16.msra.mxu0 0
      %2892 = vmatprep.subr.bf16.mxu0 0
      %2893 = vmatpush1.bf16.msra.mxu0 0
      %2894 = vmatprep.subr.bf16.mxu0 0
      %2895 = vmatpush1.bf16.msra.mxu0 0
      %2896 = vmatprep.subr.bf16.mxu0 0
      %2897 = vmatpush1.bf16.msra.mxu0 0
      %2898 = vmatprep.subr.bf16.mxu0 0
      %2899 = vmatpush1.bf16.msra.mxu0 0
      %2900 = vmatprep.subr.bf16.mxu0 0
      %2901 = vmatpush1.bf16.msra.mxu0 0
      %2902 = vmatprep.subr.bf16.mxu0 0
      %2903 = vmatpush1.bf16.msra.mxu0 0
      %2904 = vmatprep.subr.bf16.mxu0 0
      %2905 = vmatpush1.bf16.msra.mxu0 0
      %2906 = vmatprep.mubr.bf16.mxu0 0
      %2907 = vmatmul.mubr.bf16.gmra.mrb[0].mxu0 %v2872
      %v2908 = vpop.f32.mrb[0].mxu0
      %v2909 = vadd.f32 0.0, %v2908
      %v2910 = vpop.f32.mrb[0].mxu0
      %v2911 = vpop.f32.mrb[0].mxu0
      %v2912 = vadd.f32 0.0, %v2911
      %v2913 = vpop.f32.mrb[0].mxu0
      %2914 = vdwg.mxu0
      %v2916 = vsel %vm2414, %v2770, 0
      %2918 = vmatprep.subr.bf16.mxu0 0
      %2919 = vmatpush1.bf16.msra.mxu0 %v1401
      %2920 = vmatprep.subr.bf16.mxu0 0
      %2921 = vmatpush1.bf16.msra.mxu0 0
      %2922 = vmatprep.subr.bf16.mxu0 0
      %2923 = vmatpush1.bf16.msra.mxu0 0
      %2924 = vmatprep.subr.bf16.mxu0 0
      %2925 = vmatpush1.bf16.msra.mxu0 0
      %2926 = vmatprep.subr.bf16.mxu0 0
      %2927 = vmatpush1.bf16.msra.mxu0 0
      %2928 = vmatprep.subr.bf16.mxu0 0
      %2929 = vmatpush1.bf16.msra.mxu0 0
      %2930 = vmatprep.subr.bf16.mxu0 0
      %2931 = vmatpush1.bf16.msra.mxu0 0
      %2932 = vmatprep.subr.bf16.mxu0 0
      %2933 = vmatpush1.bf16.msra.mxu0 0
      %2934 = vmatprep.subr.bf16.mxu0 0
      %2935 = vmatpush1.bf16.msra.mxu0 0
      %2936 = vmatprep.subr.bf16.mxu0 0
      %2937 = vmatpush1.bf16.msra.mxu0 0
      %2938 = vmatprep.subr.bf16.mxu0 0
      %2939 = vmatpush1.bf16.msra.mxu0 0
      %2940 = vmatprep.subr.bf16.mxu0 0
      %2941 = vmatpush1.bf16.msra.mxu0 0
      %2942 = vmatprep.subr.bf16.mxu0 0
      %2943 = vmatpush1.bf16.msra.mxu0 0
      %2944 = vmatprep.subr.bf16.mxu0 0
      %2945 = vmatpush1.bf16.msra.mxu0 0
      %2946 = vmatprep.subr.bf16.mxu0 0
      %2947 = vmatpush1.bf16.msra.mxu0 0
      %2948 = vmatprep.subr.bf16.mxu0 0
      %2949 = vmatpush1.bf16.msra.mxu0 0
      %2950 = vmatprep.mubr.bf16.mxu0 0
      %2951 = vmatmul.mubr.bf16.gmra.mrb[0].mxu0 %v2916
      %v2952 = vpop.f32.mrb[0].mxu0
      %v2953 = vadd.f32 0.0, %v2952
      %v2954 = vpop.f32.mrb[0].mxu0
      %v2955 = vpop.f32.mrb[0].mxu0
      %v2956 = vadd.f32 0.0, %v2955
      %v2957 = vpop.f32.mrb[0].mxu0
      %2958 = vdwg.mxu0
      %v2960 = vsel %vm2414, %v2771, 0
      %2962 = vmatprep.subr.bf16.mxu0 0
      %2963 = vmatpush1.bf16.msra.mxu0 %v1402
      %2964 = vmatprep.subr.bf16.mxu0 0
      %2965 = vmatpush1.bf16.msra.mxu0 0
      %2966 = vmatprep.subr.bf16.mxu0 0
      %2967 = vmatpush1.bf16.msra.mxu0 0
      %2968 = vmatprep.subr.bf16.mxu0 0
      %2969 = vmatpush1.bf16.msra.mxu0 0
      %2970 = vmatprep.subr.bf16.mxu0 0
      %2971 = vmatpush1.bf16.msra.mxu0 0
      %2972 = vmatprep.subr.bf16.mxu0 0
      %2973 = vmatpush1.bf16.msra.mxu0 0
      %2974 = vmatprep.subr.bf16.mxu0 0
      %2975 = vmatpush1.bf16.msra.mxu0 0
      %2976 = vmatprep.subr.bf16.mxu0 0
      %2977 = vmatpush1.bf16.msra.mxu0 0
      %2978 = vmatprep.subr.bf16.mxu0 0
      %2979 = vmatpush1.bf16.msra.mxu0 0
      %2980 = vmatprep.subr.bf16.mxu0 0
      %2981 = vmatpush1.bf16.msra.mxu0 0
      %2982 = vmatprep.subr.bf16.mxu0 0
      %2983 = vmatpush1.bf16.msra.mxu0 0
      %2984 = vmatprep.subr.bf16.mxu0 0
      %2985 = vmatpush1.bf16.msra.mxu0 0
      %2986 = vmatprep.subr.bf16.mxu0 0
      %2987 = vmatpush1.bf16.msra.mxu0 0
      %2988 = vmatprep.subr.bf16.mxu0 0
      %2989 = vmatpush1.bf16.msra.mxu0 0
      %2990 = vmatprep.subr.bf16.mxu0 0
      %2991 = vmatpush1.bf16.msra.mxu0 0
      %2992 = vmatprep.subr.bf16.mxu0 0
      %2993 = vmatpush1.bf16.msra.mxu0 0
      %2994 = vmatprep.mubr.bf16.mxu0 0
      %2995 = vmatmul.mubr.bf16.gmra.mrb[0].mxu0 %v2960
      %v2996 = vpop.f32.mrb[0].mxu0
      %v2997 = vadd.f32 0.0, %v2996
      %v2998 = vpop.f32.mrb[0].mxu0
      %v2999 = vpop.f32.mrb[0].mxu0
      %v3000 = vadd.f32 0.0, %v2999
      %v3001 = vpop.f32.mrb[0].mxu0
      %3002 = vdwg.mxu0
      %v3004 = vsel %vm2414, %v2772, 0
      %3006 = vmatprep.subr.bf16.mxu0 0
      %3007 = vmatpush1.bf16.msra.mxu0 %v1403
      %3008 = vmatprep.subr.bf16.mxu0 0
      %3009 = vmatpush1.bf16.msra.mxu0 0
      %3010 = vmatprep.subr.bf16.mxu0 0
      %3011 = vmatpush1.bf16.msra.mxu0 0
      %3012 = vmatprep.subr.bf16.mxu0 0
      %3013 = vmatpush1.bf16.msra.mxu0 0
      %3014 = vmatprep.subr.bf16.mxu0 0
      %3015 = vmatpush1.bf16.msra.mxu0 0
      %3016 = vmatprep.subr.bf16.mxu0 0
      %3017 = vmatpush1.bf16.msra.mxu0 0
      %3018 = vmatprep.subr.bf16.mxu0 0
      %3019 = vmatpush1.bf16.msra.mxu0 0
      %3020 = vmatprep.subr.bf16.mxu0 0
      %3021 = vmatpush1.bf16.msra.mxu0 0
      %3022 = vmatprep.subr.bf16.mxu0 0
      %3023 = vmatpush1.bf16.msra.mxu0 0
      %3024 = vmatprep.subr.bf16.mxu0 0
      %3025 = vmatpush1.bf16.msra.mxu0 0
      %3026 = vmatprep.subr.bf16.mxu0 0
      %3027 = vmatpush1.bf16.msra.mxu0 0
      %3028 = vmatprep.subr.bf16.mxu0 0
      %3029 = vmatpush1.bf16.msra.mxu0 0
      %3030 = vmatprep.subr.bf16.mxu0 0
      %3031 = vmatpush1.bf16.msra.mxu0 0
      %3032 = vmatprep.subr.bf16.mxu0 0
      %3033 = vmatpush1.bf16.msra.mxu0 0
      %3034 = vmatprep.subr.bf16.mxu0 0
      %3035 = vmatpush1.bf16.msra.mxu0 0
      %3036 = vmatprep.subr.bf16.mxu0 0
      %3037 = vmatpush1.bf16.msra.mxu0 0
      %3038 = vmatprep.mubr.bf16.mxu0 0
      %3039 = vmatmul.mubr.bf16.gmra.mrb[0].mxu0 %v3004
      %v3040 = vpop.f32.mrb[0].mxu0
      %v3041 = vadd.f32 0.0, %v3040
      %v3042 = vpop.f32.mrb[0].mxu0
      %v3043 = vpop.f32.mrb[0].mxu0
      %v3044 = vadd.f32 0.0, %v3043
      %v3045 = vpop.f32.mrb[0].mxu0
      %3046 = vdwg.mxu0
      %v3048 = vsel %vm2414, %v2773, 0
      %3050 = vmatprep.subr.bf16.mxu0 0
      %3051 = vmatpush1.bf16.msra.mxu0 %v1404
      %3052 = vmatprep.subr.bf16.mxu0 0
      %3053 = vmatpush1.bf16.msra.mxu0 0
      %3054 = vmatprep.subr.bf16.mxu0 0
      %3055 = vmatpush1.bf16.msra.mxu0 0
      %3056 = vmatprep.subr.bf16.mxu0 0
      %3057 = vmatpush1.bf16.msra.mxu0 0
      %3058 = vmatprep.subr.bf16.mxu0 0
      %3059 = vmatpush1.bf16.msra.mxu0 0
      %3060 = vmatprep.subr.bf16.mxu0 0
      %3061 = vmatpush1.bf16.msra.mxu0 0
      %3062 = vmatprep.subr.bf16.mxu0 0
      %3063 = vmatpush1.bf16.msra.mxu0 0
      %3064 = vmatprep.subr.bf16.mxu0 0
      %3065 = vmatpush1.bf16.msra.mxu0 0
      %3066 = vmatprep.subr.bf16.mxu0 0
      %3067 = vmatpush1.bf16.msra.mxu0 0
      %3068 = vmatprep.subr.bf16.mxu0 0
      %3069 = vmatpush1.bf16.msra.mxu0 0
      %3070 = vmatprep.subr.bf16.mxu0 0
      %3071 = vmatpush1.bf16.msra.mxu0 0
      %3072 = vmatprep.subr.bf16.mxu0 0
      %3073 = vmatpush1.bf16.msra.mxu0 0
      %3074 = vmatprep.subr.bf16.mxu0 0
      %3075 = vmatpush1.bf16.msra.mxu0 0
      %3076 = vmatprep.subr.bf16.mxu0 0
      %3077 = vmatpush1.bf16.msra.mxu0 0
      %3078 = vmatprep.subr.bf16.mxu0 0
      %3079 = vmatpush1.bf16.msra.mxu0 0
      %3080 = vmatprep.subr.bf16.mxu0 0
      %3081 = vmatpush1.bf16.msra.mxu0 0
      %3082 = vmatprep.mubr.bf16.mxu0 0
      %3083 = vmatmul.mubr.bf16.gmra.mrb[0].mxu0 %v3048
      %v3084 = vpop.f32.mrb[0].mxu0
      %v3085 = vadd.f32 0.0, %v3084
      %v3086 = vpop.f32.mrb[0].mxu0
      %v3087 = vpop.f32.mrb[0].mxu0
      %v3088 = vadd.f32 0.0, %v3087
      %v3089 = vpop.f32.mrb[0].mxu0
      %3090 = vdwg.mxu0
      %v3092 = vsel %vm2414, %v2774, 0
      %3094 = vmatprep.subr.bf16.mxu0 0
      %3095 = vmatpush1.bf16.msra.mxu0 %v1405
      %3096 = vmatprep.subr.bf16.mxu0 0
      %3097 = vmatpush1.bf16.msra.mxu0 0
      %3098 = vmatprep.subr.bf16.mxu0 0
      %3099 = vmatpush1.bf16.msra.mxu0 0
      %3100 = vmatprep.subr.bf16.mxu0 0
      %3101 = vmatpush1.bf16.msra.mxu0 0
      %3102 = vmatprep.subr.bf16.mxu0 0
      %3103 = vmatpush1.bf16.msra.mxu0 0
      %3104 = vmatprep.subr.bf16.mxu0 0
      %3105 = vmatpush1.bf16.msra.mxu0 0
      %3106 = vmatprep.subr.bf16.mxu0 0
      %3107 = vmatpush1.bf16.msra.mxu0 0
      %3108 = vmatprep.subr.bf16.mxu0 0
      %3109 = vmatpush1.bf16.msra.mxu0 0
      %3110 = vmatprep.subr.bf16.mxu0 0
      %3111 = vmatpush1.bf16.msra.mxu0 0
      %3112 = vmatprep.subr.bf16.mxu0 0
      %3113 = vmatpush1.bf16.msra.mxu0 0
      %3114 = vmatprep.subr.bf16.mxu0 0
      %3115 = vmatpush1.bf16.msra.mxu0 0
      %3116 = vmatprep.subr.bf16.mxu0 0
      %3117 = vmatpush1.bf16.msra.mxu0 0
      %3118 = vmatprep.subr.bf16.mxu0 0
      %3119 = vmatpush1.bf16.msra.mxu0 0
      %3120 = vmatprep.subr.bf16.mxu0 0
      %3121 = vmatpush1.bf16.msra.mxu0 0
      %3122 = vmatprep.subr.bf16.mxu0 0
      %3123 = vmatpush1.bf16.msra.mxu0 0
      %3124 = vmatprep.subr.bf16.mxu0 0
      %3125 = vmatpush1.bf16.msra.mxu0 0
      %3126 = vmatprep.mubr.bf16.mxu0 0
      %3127 = vmatmul.mubr.bf16.gmra.mrb[0].mxu0 %v3092
      %v3128 = vpop.f32.mrb[0].mxu0
      %v3129 = vadd.f32 0.0, %v3128
      %v3130 = vpop.f32.mrb[0].mxu0
      %v3131 = vpop.f32.mrb[0].mxu0
      %v3132 = vadd.f32 0.0, %v3131
      %v3133 = vpop.f32.mrb[0].mxu0
      %3134 = vdwg.mxu0
      %v3136 = vsel %vm2414, %v2775, 0
      %3138 = vmatprep.subr.bf16.mxu0 0
      %3139 = vmatpush1.bf16.msra.mxu0 %v1406
      %3140 = vmatprep.subr.bf16.mxu0 0
      %3141 = vmatpush1.bf16.msra.mxu0 0
      %3142 = vmatprep.subr.bf16.mxu0 0
      %3143 = vmatpush1.bf16.msra.mxu0 0
      %3144 = vmatprep.subr.bf16.mxu0 0
      %3145 = vmatpush1.bf16.msra.mxu0 0
      %3146 = vmatprep.subr.bf16.mxu0 0
      %3147 = vmatpush1.bf16.msra.mxu0 0
      %3148 = vmatprep.subr.bf16.mxu0 0
      %3149 = vmatpush1.bf16.msra.mxu0 0
      %3150 = vmatprep.subr.bf16.mxu0 0
      %3151 = vmatpush1.bf16.msra.mxu0 0
      %3152 = vmatprep.subr.bf16.mxu0 0
      %3153 = vmatpush1.bf16.msra.mxu0 0
      %3154 = vmatprep.subr.bf16.mxu0 0
      %3155 = vmatpush1.bf16.msra.mxu0 0
      %3156 = vmatprep.subr.bf16.mxu0 0
      %3157 = vmatpush1.bf16.msra.mxu0 0
      %3158 = vmatprep.subr.bf16.mxu0 0
      %3159 = vmatpush1.bf16.msra.mxu0 0
      %3160 = vmatprep.subr.bf16.mxu0 0
      %3161 = vmatpush1.bf16.msra.mxu0 0
      %3162 = vmatprep.subr.bf16.mxu0 0
      %3163 = vmatpush1.bf16.msra.mxu0 0
      %3164 = vmatprep.subr.bf16.mxu0 0
      %3165 = vmatpush1.bf16.msra.mxu0 0
      %3166 = vmatprep.subr.bf16.mxu0 0
      %3167 = vmatpush1.bf16.msra.mxu0 0
      %3168 = vmatprep.subr.bf16.mxu0 0
      %3169 = vmatpush1.bf16.msra.mxu0 0
      %3170 = vmatprep.mubr.bf16.mxu0 0
      %3171 = vmatmul.mubr.bf16.gmra.mrb[0].mxu0 %v3136
      %v3172 = vpop.f32.mrb[0].mxu0
      %v3173 = vadd.f32 0.0, %v3172
      %v3174 = vpop.f32.mrb[0].mxu0
      %v3175 = vpop.f32.mrb[0].mxu0
      %v3176 = vadd.f32 0.0, %v3175
      %v3177 = vpop.f32.mrb[0].mxu0
      %3178 = vdwg.mxu0
      %v3180 = vsel %vm2414, %v2776, 0
      %3182 = vmatprep.subr.bf16.mxu0 0
      %3183 = vmatpush1.bf16.msra.mxu0 %v1407
      %3184 = vmatprep.subr.bf16.mxu0 0
      %3185 = vmatpush1.bf16.msra.mxu0 0
      %3186 = vmatprep.subr.bf16.mxu0 0
      %3187 = vmatpush1.bf16.msra.mxu0 0
      %3188 = vmatprep.subr.bf16.mxu0 0
      %3189 = vmatpush1.bf16.msra.mxu0 0
      %3190 = vmatprep.subr.bf16.mxu0 0
      %3191 = vmatpush1.bf16.msra.mxu0 0
      %3192 = vmatprep.subr.bf16.mxu0 0
      %3193 = vmatpush1.bf16.msra.mxu0 0
      %3194 = vmatprep.subr.bf16.mxu0 0
      %3195 = vmatpush1.bf16.msra.mxu0 0
      %3196 = vmatprep.subr.bf16.mxu0 0
      %3197 = vmatpush1.bf16.msra.mxu0 0
      %3198 = vmatprep.subr.bf16.mxu0 0
      %3199 = vmatpush1.bf16.msra.mxu0 0
      %3200 = vmatprep.subr.bf16.mxu0 0
      %3201 = vmatpush1.bf16.msra.mxu0 0
      %3202 = vmatprep.subr.bf16.mxu0 0
      %3203 = vmatpush1.bf16.msra.mxu0 0
      %3204 = vmatprep.subr.bf16.mxu0 0
      %3205 = vmatpush1.bf16.msra.mxu0 0
      %3206 = vmatprep.subr.bf16.mxu0 0
      %3207 = vmatpush1.bf16.msra.mxu0 0
      %3208 = vmatprep.subr.bf16.mxu0 0
      %3209 = vmatpush1.bf16.msra.mxu0 0
      %3210 = vmatprep.subr.bf16.mxu0 0
      %3211 = vmatpush1.bf16.msra.mxu0 0
      %3212 = vmatprep.subr.bf16.mxu0 0
      %3213 = vmatpush1.bf16.msra.mxu0 0
      %3214 = vmatprep.mubr.bf16.mxu0 0
      %3215 = vmatmul.mubr.bf16.gmra.mrb[0].mxu0 %v3180
      %v3216 = vpop.f32.mrb[0].mxu0
      %v3217 = vadd.f32 0.0, %v3216
      %v3218 = vpop.f32.mrb[0].mxu0
      %v3219 = vpop.f32.mrb[0].mxu0
      %v3220 = vadd.f32 0.0, %v3219
      %v3221 = vpop.f32.mrb[0].mxu0
      %3222 = vdwg.mxu0
      %v3224 = vsel %vm2414, %v2777, 0
      %3226 = vmatprep.subr.bf16.mxu0 0
      %3227 = vmatpush1.bf16.msra.mxu0 %v1408
      %3228 = vmatprep.subr.bf16.mxu0 0
      %3229 = vmatpush1.bf16.msra.mxu0 0
      %3230 = vmatprep.subr.bf16.mxu0 0
      %3231 = vmatpush1.bf16.msra.mxu0 0
      %3232 = vmatprep.subr.bf16.mxu0 0
      %3233 = vmatpush1.bf16.msra.mxu0 0
      %3234 = vmatprep.subr.bf16.mxu0 0
      %3235 = vmatpush1.bf16.msra.mxu0 0
      %3236 = vmatprep.subr.bf16.mxu0 0
      %3237 = vmatpush1.bf16.msra.mxu0 0
      %3238 = vmatprep.subr.bf16.mxu0 0
      %3239 = vmatpush1.bf16.msra.mxu0 0
      %3240 = vmatprep.subr.bf16.mxu0 0
      %3241 = vmatpush1.bf16.msra.mxu0 0
      %3242 = vmatprep.subr.bf16.mxu0 0
      %3243 = vmatpush1.bf16.msra.mxu0 0
      %3244 = vmatprep.subr.bf16.mxu0 0
      %3245 = vmatpush1.bf16.msra.mxu0 0
      %3246 = vmatprep.subr.bf16.mxu0 0
      %3247 = vmatpush1.bf16.msra.mxu0 0
      %3248 = vmatprep.subr.bf16.mxu0 0
      %3249 = vmatpush1.bf16.msra.mxu0 0
      %3250 = vmatprep.subr.bf16.mxu0 0
      %3251 = vmatpush1.bf16.msra.mxu0 0
      %3252 = vmatprep.subr.bf16.mxu0 0
      %3253 = vmatpush1.bf16.msra.mxu0 0
      %3254 = vmatprep.subr.bf16.mxu0 0
      %3255 = vmatpush1.bf16.msra.mxu0 0
      %3256 = vmatprep.subr.bf16.mxu0 0
      %3257 = vmatpush1.bf16.msra.mxu0 0
      %3258 = vmatprep.mubr.bf16.mxu0 0
      %3259 = vmatmul.mubr.bf16.gmra.mrb[0].mxu0 %v3224
      %v3260 = vpop.f32.mrb[0].mxu0
      %v3261 = vadd.f32 0.0, %v3260
      %v3262 = vpop.f32.mrb[0].mxu0
      %v3263 = vpop.f32.mrb[0].mxu0
      %v3264 = vadd.f32 0.0, %v3263
      %v3265 = vpop.f32.mrb[0].mxu0
      %3266 = vdwg.mxu0
      %v3268 = vsel %vm2414, %v2778, 0
      %3270 = vmatprep.subr.bf16.mxu0 0
      %3271 = vmatpush1.bf16.msra.mxu0 %v1409
      %3272 = vmatprep.subr.bf16.mxu0 0
      %3273 = vmatpush1.bf16.msra.mxu0 0
      %3274 = vmatprep.subr.bf16.mxu0 0
      %3275 = vmatpush1.bf16.msra.mxu0 0
      %3276 = vmatprep.subr.bf16.mxu0 0
      %3277 = vmatpush1.bf16.msra.mxu0 0
      %3278 = vmatprep.subr.bf16.mxu0 0
      %3279 = vmatpush1.bf16.msra.mxu0 0
      %3280 = vmatprep.subr.bf16.mxu0 0
      %3281 = vmatpush1.bf16.msra.mxu0 0
      %3282 = vmatprep.subr.bf16.mxu0 0
      %3283 = vmatpush1.bf16.msra.mxu0 0
      %3284 = vmatprep.subr.bf16.mxu0 0
      %3285 = vmatpush1.bf16.msra.mxu0 0
      %3286 = vmatprep.subr.bf16.mxu0 0
      %3287 = vmatpush1.bf16.msra.mxu0 0
      %3288 = vmatprep.subr.bf16.mxu0 0
      %3289 = vmatpush1.bf16.msra.mxu0 0
      %3290 = vmatprep.subr.bf16.mxu0 0
      %3291 = vmatpush1.bf16.msra.mxu0 0
      %3292 = vmatprep.subr.bf16.mxu0 0
      %3293 = vmatpush1.bf16.msra.mxu0 0
      %3294 = vmatprep.subr.bf16.mxu0 0
      %3295 = vmatpush1.bf16.msra.mxu0 0
      %3296 = vmatprep.subr.bf16.mxu0 0
      %3297 = vmatpush1.bf16.msra.mxu0 0
      %3298 = vmatprep.subr.bf16.mxu0 0
      %3299 = vmatpush1.bf16.msra.mxu0 0
      %3300 = vmatprep.subr.bf16.mxu0 0
      %3301 = vmatpush1.bf16.msra.mxu0 0
      %3302 = vmatprep.mubr.bf16.mxu0 0
      %3303 = vmatmul.mubr.bf16.gmra.mrb[0].mxu0 %v3268
      %v3304 = vpop.f32.mrb[0].mxu0
      %v3305 = vadd.f32 0.0, %v3304
      %v3306 = vpop.f32.mrb[0].mxu0
      %v3307 = vpop.f32.mrb[0].mxu0
      %v3308 = vadd.f32 0.0, %v3307
      %v3309 = vpop.f32.mrb[0].mxu0
      %3310 = vdwg.mxu0
      %v3312 = vsel %vm2414, %v2779, 0
      %3314 = vmatprep.subr.bf16.mxu0 0
      %3315 = vmatpush1.bf16.msra.mxu0 %v1410
      %3316 = vmatprep.subr.bf16.mxu0 0
      %3317 = vmatpush1.bf16.msra.mxu0 0
      %3318 = vmatprep.subr.bf16.mxu0 0
      %3319 = vmatpush1.bf16.msra.mxu0 0
      %3320 = vmatprep.subr.bf16.mxu0 0
      %3321 = vmatpush1.bf16.msra.mxu0 0
      %3322 = vmatprep.subr.bf16.mxu0 0
      %3323 = vmatpush1.bf16.msra.mxu0 0
      %3324 = vmatprep.subr.bf16.mxu0 0
      %3325 = vmatpush1.bf16.msra.mxu0 0
      %3326 = vmatprep.subr.bf16.mxu0 0
      %3327 = vmatpush1.bf16.msra.mxu0 0
      %3328 = vmatprep.subr.bf16.mxu0 0
      %3329 = vmatpush1.bf16.msra.mxu0 0
      %3330 = vmatprep.subr.bf16.mxu0 0
      %3331 = vmatpush1.bf16.msra.mxu0 0
      %3332 = vmatprep.subr.bf16.mxu0 0
      %3333 = vmatpush1.bf16.msra.mxu0 0
      %3334 = vmatprep.subr.bf16.mxu0 0
      %3335 = vmatpush1.bf16.msra.mxu0 0
      %3336 = vmatprep.subr.bf16.mxu0 0
      %3337 = vmatpush1.bf16.msra.mxu0 0
      %3338 = vmatprep.subr.bf16.mxu0 0
      %3339 = vmatpush1.bf16.msra.mxu0 0
      %3340 = vmatprep.subr.bf16.mxu0 0
      %3341 = vmatpush1.bf16.msra.mxu0 0
      %3342 = vmatprep.subr.bf16.mxu0 0
      %3343 = vmatpush1.bf16.msra.mxu0 0
      %3344 = vmatprep.subr.bf16.mxu0 0
      %3345 = vmatpush1.bf16.msra.mxu0 0
      %3346 = vmatprep.mubr.bf16.mxu0 0
      %3347 = vmatmul.mubr.bf16.gmra.mrb[0].mxu0 %v3312
      %v3348 = vpop.f32.mrb[0].mxu0
      %v3349 = vadd.f32 0.0, %v3348
      %v3350 = vpop.f32.mrb[0].mxu0
      %v3351 = vpop.f32.mrb[0].mxu0
      %v3352 = vadd.f32 0.0, %v3351
      %v3353 = vpop.f32.mrb[0].mxu0
      %3354 = vdwg.mxu0
      %v3356 = vsel %vm2414, %v2780, 0
      %3358 = vmatprep.subr.bf16.mxu0 0
      %3359 = vmatpush1.bf16.msra.mxu0 %v1411
      %3360 = vmatprep.subr.bf16.mxu0 0
      %3361 = vmatpush1.bf16.msra.mxu0 0
      %3362 = vmatprep.subr.bf16.mxu0 0
      %3363 = vmatpush1.bf16.msra.mxu0 0
      %3364 = vmatprep.subr.bf16.mxu0 0
      %3365 = vmatpush1.bf16.msra.mxu0 0
      %3366 = vmatprep.subr.bf16.mxu0 0
      %3367 = vmatpush1.bf16.msra.mxu0 0
      %3368 = vmatprep.subr.bf16.mxu0 0
      %3369 = vmatpush1.bf16.msra.mxu0 0
      %3370 = vmatprep.subr.bf16.mxu0 0
      %3371 = vmatpush1.bf16.msra.mxu0 0
      %3372 = vmatprep.subr.bf16.mxu0 0
      %3373 = vmatpush1.bf16.msra.mxu0 0
      %3374 = vmatprep.subr.bf16.mxu0 0
      %3375 = vmatpush1.bf16.msra.mxu0 0
      %3376 = vmatprep.subr.bf16.mxu0 0
      %3377 = vmatpush1.bf16.msra.mxu0 0
      %3378 = vmatprep.subr.bf16.mxu0 0
      %3379 = vmatpush1.bf16.msra.mxu0 0
      %3380 = vmatprep.subr.bf16.mxu0 0
      %3381 = vmatpush1.bf16.msra.mxu0 0
      %3382 = vmatprep.subr.bf16.mxu0 0
      %3383 = vmatpush1.bf16.msra.mxu0 0
      %3384 = vmatprep.subr.bf16.mxu0 0
      %3385 = vmatpush1.bf16.msra.mxu0 0
      %3386 = vmatprep.subr.bf16.mxu0 0
      %3387 = vmatpush1.bf16.msra.mxu0 0
      %3388 = vmatprep.subr.bf16.mxu0 0
      %3389 = vmatpush1.bf16.msra.mxu0 0
      %3390 = vmatprep.mubr.bf16.mxu0 0
      %3391 = vmatmul.mubr.bf16.gmra.mrb[0].mxu0 %v3356
      %v3392 = vpop.f32.mrb[0].mxu0
      %v3393 = vadd.f32 0.0, %v3392
      %v3394 = vpop.f32.mrb[0].mxu0
      %v3395 = vpop.f32.mrb[0].mxu0
      %v3396 = vadd.f32 0.0, %v3395
      %v3397 = vpop.f32.mrb[0].mxu0
      %3398 = vdwg.mxu0
      %v3400 = vsel %vm2414, %v2781, 0
      %3402 = vmatprep.subr.bf16.mxu0 0
      %3403 = vmatpush1.bf16.msra.mxu0 %v1412
      %3404 = vmatprep.subr.bf16.mxu0 0
      %3405 = vmatpush1.bf16.msra.mxu0 0
      %3406 = vmatprep.subr.bf16.mxu0 0
      %3407 = vmatpush1.bf16.msra.mxu0 0
      %3408 = vmatprep.subr.bf16.mxu0 0
      %3409 = vmatpush1.bf16.msra.mxu0 0
      %3410 = vmatprep.subr.bf16.mxu0 0
      %3411 = vmatpush1.bf16.msra.mxu0 0
      %3412 = vmatprep.subr.bf16.mxu0 0
      %3413 = vmatpush1.bf16.msra.mxu0 0
      %3414 = vmatprep.subr.bf16.mxu0 0
      %3415 = vmatpush1.bf16.msra.mxu0 0
      %3416 = vmatprep.subr.bf16.mxu0 0
      %3417 = vmatpush1.bf16.msra.mxu0 0
      %3418 = vmatprep.subr.bf16.mxu0 0
      %3419 = vmatpush1.bf16.msra.mxu0 0
      %3420 = vmatprep.subr.bf16.mxu0 0
      %3421 = vmatpush1.bf16.msra.mxu0 0
      %3422 = vmatprep.subr.bf16.mxu0 0
      %3423 = vmatpush1.bf16.msra.mxu0 0
      %3424 = vmatprep.subr.bf16.mxu0 0
      %3425 = vmatpush1.bf16.msra.mxu0 0
      %3426 = vmatprep.subr.bf16.mxu0 0
      %3427 = vmatpush1.bf16.msra.mxu0 0
      %3428 = vmatprep.subr.bf16.mxu0 0
      %3429 = vmatpush1.bf16.msra.mxu0 0
      %3430 = vmatprep.subr.bf16.mxu0 0
      %3431 = vmatpush1.bf16.msra.mxu0 0
      %3432 = vmatprep.subr.bf16.mxu0 0
      %3433 = vmatpush1.bf16.msra.mxu0 0
      %3434 = vmatprep.mubr.bf16.mxu0 0
      %3435 = vmatmul.mubr.bf16.gmra.mrb[0].mxu0 %v3400
      %v3436 = vpop.f32.mrb[0].mxu0
      %v3437 = vadd.f32 0.0, %v3436
      %v3438 = vpop.f32.mrb[0].mxu0
      %v3439 = vpop.f32.mrb[0].mxu0
      %v3440 = vadd.f32 0.0, %v3439
      %v3441 = vpop.f32.mrb[0].mxu0
      %3442 = vdwg.mxu0
      %v3444 = vsel %vm2414, %v2782, 0
      %3446 = vmatprep.subr.bf16.mxu0 0
      %3447 = vmatpush1.bf16.msra.mxu0 %v1413
      %3448 = vmatprep.subr.bf16.mxu0 0
      %3449 = vmatpush1.bf16.msra.mxu0 0
      %3450 = vmatprep.subr.bf16.mxu0 0
      %3451 = vmatpush1.bf16.msra.mxu0 0
      %3452 = vmatprep.subr.bf16.mxu0 0
      %3453 = vmatpush1.bf16.msra.mxu0 0
      %3454 = vmatprep.subr.bf16.mxu0 0
      %3455 = vmatpush1.bf16.msra.mxu0 0
      %3456 = vmatprep.subr.bf16.mxu0 0
      %3457 = vmatpush1.bf16.msra.mxu0 0
      %3458 = vmatprep.subr.bf16.mxu0 0
      %3459 = vmatpush1.bf16.msra.mxu0 0
      %3460 = vmatprep.subr.bf16.mxu0 0
      %3461 = vmatpush1.bf16.msra.mxu0 0
      %3462 = vmatprep.subr.bf16.mxu0 0
      %3463 = vmatpush1.bf16.msra.mxu0 0
      %3464 = vmatprep.subr.bf16.mxu0 0
      %3465 = vmatpush1.bf16.msra.mxu0 0
      %3466 = vmatprep.subr.bf16.mxu0 0
      %3467 = vmatpush1.bf16.msra.mxu0 0
      %3468 = vmatprep.subr.bf16.mxu0 0
      %3469 = vmatpush1.bf16.msra.mxu0 0
      %3470 = vmatprep.subr.bf16.mxu0 0
      %3471 = vmatpush1.bf16.msra.mxu0 0
      %3472 = vmatprep.subr.bf16.mxu0 0
      %3473 = vmatpush1.bf16.msra.mxu0 0
      %3474 = vmatprep.subr.bf16.mxu0 0
      %3475 = vmatpush1.bf16.msra.mxu0 0
      %3476 = vmatprep.subr.bf16.mxu0 0
      %3477 = vmatpush1.bf16.msra.mxu0 0
      %3478 = vmatprep.mubr.bf16.mxu0 0
      %3479 = vmatmul.mubr.bf16.gmra.mrb[0].mxu0 %v3444
      %v3480 = vpop.f32.mrb[0].mxu0
      %v3481 = vadd.f32 0.0, %v3480
      %v3482 = vpop.f32.mrb[0].mxu0
      %v3483 = vpop.f32.mrb[0].mxu0
      %v3484 = vadd.f32 0.0, %v3483
      %v3485 = vpop.f32.mrb[0].mxu0
      %3486 = vdwg.mxu0
      %3488 = vrot.lane.b32.xlu0 %v1366, 96
      %v3489 = vpop.permute.xlu0 %3488
      %3491 = vrot.lane.b32.xlu0 %v1382, 96
      %v3492 = vpop.permute.xlu0 %3491
      %v3494 = vsel %vm514, %v3489, 0
      %v3497 = vsel %vm514, %v3492, 0
      %3499 = vmatprep.subr.bf16.mxu0 0
      %3500 = vmatpush1.bf16.xpose.msra.mxu0 %v3497
      %3501 = vmatprep.subr.bf16.mxu0 0
      %3502 = vmatpush1.bf16.xpose.msra.mxu0 0
      %3503 = vmatprep.subr.bf16.mxu0 0
      %3504 = vmatpush1.bf16.xpose.msra.mxu0 0
      %3505 = vmatprep.subr.bf16.mxu0 0
      %3506 = vmatpush1.bf16.xpose.msra.mxu0 0
      %3507 = vmatprep.subr.bf16.mxu0 0
      %3508 = vmatpush1.bf16.xpose.msra.mxu0 0
      %3509 = vmatprep.subr.bf16.mxu0 0
      %3510 = vmatpush1.bf16.xpose.msra.mxu0 0
      %3511 = vmatprep.subr.bf16.mxu0 0
      %3512 = vmatpush1.bf16.xpose.msra.mxu0 0
      %3513 = vmatprep.subr.bf16.mxu0 0
      %3514 = vmatpush1.bf16.xpose.msra.mxu0 0
      %3515 = vmatprep.subr.bf16.mxu0 0
      %3516 = vmatpush1.bf16.xpose.msra.mxu0 0
      %3517 = vmatprep.subr.bf16.mxu0 0
      %3518 = vmatpush1.bf16.xpose.msra.mxu0 0
      %3519 = vmatprep.subr.bf16.mxu0 0
      %3520 = vmatpush1.bf16.xpose.msra.mxu0 0
      %3521 = vmatprep.subr.bf16.mxu0 0
      %3522 = vmatpush1.bf16.xpose.msra.mxu0 0
      %3523 = vmatprep.subr.bf16.mxu0 0
      %3524 = vmatpush1.bf16.xpose.msra.mxu0 0
      %3525 = vmatprep.subr.bf16.mxu0 0
      %3526 = vmatpush1.bf16.xpose.msra.mxu0 0
      %3527 = vmatprep.subr.bf16.mxu0 0
      %3528 = vmatpush1.bf16.xpose.msra.mxu0 0
      %3529 = vmatprep.subr.bf16.mxu0 0
      %3530 = vmatpush1.bf16.xpose.msra.mxu0 0
      %3531 = vmatprep.mubr.bf16.mxu0 0
      %3532 = vmatmul.mubr.bf16.gmra.mrb[0].mxu0 %v3494
      %v3533 = vpop.f32.mrb[0].mxu0
      %v3534 = vadd.f32 %v1536, %v3533
      %v3535 = vpop.f32.mrb[0].mxu0
      %v3536 = vpop.f32.mrb[0].mxu0
      %v3537 = vadd.f32 %v1537, %v3536
      %v3538 = vpop.f32.mrb[0].mxu0
      %3539 = vdwg.mxu0
      %3541 = vrot.lane.b32.xlu0 %v1367, 96
      %v3542 = vpop.permute.xlu0 %3541
      %3544 = vrot.lane.b32.xlu0 %v1383, 96
      %v3545 = vpop.permute.xlu0 %3544
      %v3547 = vsel %vm514, %v3542, 0
      %v3550 = vsel %vm514, %v3545, 0
      %3552 = vmatprep.subr.bf16.mxu0 0
      %3553 = vmatpush1.bf16.xpose.msra.mxu0 %v3550
      %3554 = vmatprep.subr.bf16.mxu0 0
      %3555 = vmatpush1.bf16.xpose.msra.mxu0 0
      %3556 = vmatprep.subr.bf16.mxu0 0
      %3557 = vmatpush1.bf16.xpose.msra.mxu0 0
      %3558 = vmatprep.subr.bf16.mxu0 0
      %3559 = vmatpush1.bf16.xpose.msra.mxu0 0
      %3560 = vmatprep.subr.bf16.mxu0 0
      %3561 = vmatpush1.bf16.xpose.msra.mxu0 0
      %3562 = vmatprep.subr.bf16.mxu0 0
      %3563 = vmatpush1.bf16.xpose.msra.mxu0 0
      %3564 = vmatprep.subr.bf16.mxu0 0
      %3565 = vmatpush1.bf16.xpose.msra.mxu0 0
      %3566 = vmatprep.subr.bf16.mxu0 0
      %3567 = vmatpush1.bf16.xpose.msra.mxu0 0
      %3568 = vmatprep.subr.bf16.mxu0 0
      %3569 = vmatpush1.bf16.xpose.msra.mxu0 0
      %3570 = vmatprep.subr.bf16.mxu0 0
      %3571 = vmatpush1.bf16.xpose.msra.mxu0 0
      %3572 = vmatprep.subr.bf16.mxu0 0
      %3573 = vmatpush1.bf16.xpose.msra.mxu0 0
      %3574 = vmatprep.subr.bf16.mxu0 0
      %3575 = vmatpush1.bf16.xpose.msra.mxu0 0
      %3576 = vmatprep.subr.bf16.mxu0 0
      %3577 = vmatpush1.bf16.xpose.msra.mxu0 0
      %3578 = vmatprep.subr.bf16.mxu0 0
      %3579 = vmatpush1.bf16.xpose.msra.mxu0 0
      %3580 = vmatprep.subr.bf16.mxu0 0
      %3581 = vmatpush1.bf16.xpose.msra.mxu0 0
      %3582 = vmatprep.subr.bf16.mxu0 0
      %3583 = vmatpush1.bf16.xpose.msra.mxu0 0
      %3584 = vmatprep.mubr.bf16.mxu0 0
      %3585 = vmatmul.mubr.bf16.gmra.mrb[0].mxu0 %v3547
      %v3586 = vpop.f32.mrb[0].mxu0
      %v3587 = vadd.f32 %v1544, %v3586
      %v3588 = vpop.f32.mrb[0].mxu0
      %v3589 = vpop.f32.mrb[0].mxu0
      %v3590 = vadd.f32 %v1545, %v3589
      %v3591 = vpop.f32.mrb[0].mxu0
      %3592 = vdwg.mxu0
      %3594 = vrot.lane.b32.xlu0 %v1368, 96
      %v3595 = vpop.permute.xlu0 %3594
      %3597 = vrot.lane.b32.xlu0 %v1384, 96
      %v3598 = vpop.permute.xlu0 %3597
      %v3600 = vsel %vm514, %v3595, 0
      %v3603 = vsel %vm514, %v3598, 0
      %3605 = vmatprep.subr.bf16.mxu0 0
      %3606 = vmatpush1.bf16.xpose.msra.mxu0 %v3603
      %3607 = vmatprep.subr.bf16.mxu0 0
      %3608 = vmatpush1.bf16.xpose.msra.mxu0 0
      %3609 = vmatprep.subr.bf16.mxu0 0
      %3610 = vmatpush1.bf16.xpose.msra.mxu0 0
      %3611 = vmatprep.subr.bf16.mxu0 0
      %3612 = vmatpush1.bf16.xpose.msra.mxu0 0
      %3613 = vmatprep.subr.bf16.mxu0 0
      %3614 = vmatpush1.bf16.xpose.msra.mxu0 0
      %3615 = vmatprep.subr.bf16.mxu0 0
      %3616 = vmatpush1.bf16.xpose.msra.mxu0 0
      %3617 = vmatprep.subr.bf16.mxu0 0
      %3618 = vmatpush1.bf16.xpose.msra.mxu0 0
      %3619 = vmatprep.subr.bf16.mxu0 0
      %3620 = vmatpush1.bf16.xpose.msra.mxu0 0
      %3621 = vmatprep.subr.bf16.mxu0 0
      %3622 = vmatpush1.bf16.xpose.msra.mxu0 0
      %3623 = vmatprep.subr.bf16.mxu0 0
      %3624 = vmatpush1.bf16.xpose.msra.mxu0 0
      %3625 = vmatprep.subr.bf16.mxu0 0
      %3626 = vmatpush1.bf16.xpose.msra.mxu0 0
      %3627 = vmatprep.subr.bf16.mxu0 0
      %3628 = vmatpush1.bf16.xpose.msra.mxu0 0
      %3629 = vmatprep.subr.bf16.mxu0 0
      %3630 = vmatpush1.bf16.xpose.msra.mxu0 0
      %3631 = vmatprep.subr.bf16.mxu0 0
      %3632 = vmatpush1.bf16.xpose.msra.mxu0 0
      %3633 = vmatprep.subr.bf16.mxu0 0
      %3634 = vmatpush1.bf16.xpose.msra.mxu0 0
      %3635 = vmatprep.subr.bf16.mxu0 0
      %3636 = vmatpush1.bf16.xpose.msra.mxu0 0
      %3637 = vmatprep.mubr.bf16.mxu0 0
      %3638 = vmatmul.mubr.bf16.gmra.mrb[0].mxu0 %v3600
      %v3639 = vpop.f32.mrb[0].mxu0
      %v3640 = vadd.f32 %v1552, %v3639
      %v3641 = vpop.f32.mrb[0].mxu0
      %v3642 = vpop.f32.mrb[0].mxu0
      %v3643 = vadd.f32 %v1553, %v3642
      %v3644 = vpop.f32.mrb[0].mxu0
      %3645 = vdwg.mxu0
      %3647 = vrot.lane.b32.xlu0 %v1369, 96
      %v3648 = vpop.permute.xlu0 %3647
      %3650 = vrot.lane.b32.xlu0 %v1385, 96
      %v3651 = vpop.permute.xlu0 %3650
      %v3653 = vsel %vm514, %v3648, 0
      %v3656 = vsel %vm514, %v3651, 0
      %3658 = vmatprep.subr.bf16.mxu0 0
      %3659 = vmatpush1.bf16.xpose.msra.mxu0 %v3656
      %3660 = vmatprep.subr.bf16.mxu0 0
      %3661 = vmatpush1.bf16.xpose.msra.mxu0 0
      %3662 = vmatprep.subr.bf16.mxu0 0
      %3663 = vmatpush1.bf16.xpose.msra.mxu0 0
      %3664 = vmatprep.subr.bf16.mxu0 0
      %3665 = vmatpush1.bf16.xpose.msra.mxu0 0
      %3666 = vmatprep.subr.bf16.mxu0 0
      %3667 = vmatpush1.bf16.xpose.msra.mxu0 0
      %3668 = vmatprep.subr.bf16.mxu0 0
      %3669 = vmatpush1.bf16.xpose.msra.mxu0 0
      %3670 = vmatprep.subr.bf16.mxu0 0
      %3671 = vmatpush1.bf16.xpose.msra.mxu0 0
      %3672 = vmatprep.subr.bf16.mxu0 0
      %3673 = vmatpush1.bf16.xpose.msra.mxu0 0
      %3674 = vmatprep.subr.bf16.mxu0 0
      %3675 = vmatpush1.bf16.xpose.msra.mxu0 0
      %3676 = vmatprep.subr.bf16.mxu0 0
      %3677 = vmatpush1.bf16.xpose.msra.mxu0 0
      %3678 = vmatprep.subr.bf16.mxu0 0
      %3679 = vmatpush1.bf16.xpose.msra.mxu0 0
      %3680 = vmatprep.subr.bf16.mxu0 0
      %3681 = vmatpush1.bf16.xpose.msra.mxu0 0
      %3682 = vmatprep.subr.bf16.mxu0 0
      %3683 = vmatpush1.bf16.xpose.msra.mxu0 0
      %3684 = vmatprep.subr.bf16.mxu0 0
      %3685 = vmatpush1.bf16.xpose.msra.mxu0 0
      %3686 = vmatprep.subr.bf16.mxu0 0
      %3687 = vmatpush1.bf16.xpose.msra.mxu0 0
      %3688 = vmatprep.subr.bf16.mxu0 0
      %3689 = vmatpush1.bf16.xpose.msra.mxu0 0
      %3690 = vmatprep.mubr.bf16.mxu0 0
      %3691 = vmatmul.mubr.bf16.gmra.mrb[0].mxu0 %v3653
      %v3692 = vpop.f32.mrb[0].mxu0
      %v3693 = vadd.f32 %v1560, %v3692
      %v3694 = vpop.f32.mrb[0].mxu0
      %v3695 = vpop.f32.mrb[0].mxu0
      %v3696 = vadd.f32 %v1561, %v3695
      %v3697 = vpop.f32.mrb[0].mxu0
      %3698 = vdwg.mxu0
      %3700 = vrot.lane.b32.xlu0 %v1370, 96
      %v3701 = vpop.permute.xlu0 %3700
      %3703 = vrot.lane.b32.xlu0 %v1386, 96
      %v3704 = vpop.permute.xlu0 %3703
      %v3706 = vsel %vm514, %v3701, 0
      %v3709 = vsel %vm514, %v3704, 0
      %3711 = vmatprep.subr.bf16.mxu0 0
      %3712 = vmatpush1.bf16.xpose.msra.mxu0 %v3709
      %3713 = vmatprep.subr.bf16.mxu0 0
      %3714 = vmatpush1.bf16.xpose.msra.mxu0 0
      %3715 = vmatprep.subr.bf16.mxu0 0
      %3716 = vmatpush1.bf16.xpose.msra.mxu0 0
      %3717 = vmatprep.subr.bf16.mxu0 0
      %3718 = vmatpush1.bf16.xpose.msra.mxu0 0
      %3719 = vmatprep.subr.bf16.mxu0 0
      %3720 = vmatpush1.bf16.xpose.msra.mxu0 0
      %3721 = vmatprep.subr.bf16.mxu0 0
      %3722 = vmatpush1.bf16.xpose.msra.mxu0 0
      %3723 = vmatprep.subr.bf16.mxu0 0
      %3724 = vmatpush1.bf16.xpose.msra.mxu0 0
      %3725 = vmatprep.subr.bf16.mxu0 0
      %3726 = vmatpush1.bf16.xpose.msra.mxu0 0
      %3727 = vmatprep.subr.bf16.mxu0 0
      %3728 = vmatpush1.bf16.xpose.msra.mxu0 0
      %3729 = vmatprep.subr.bf16.mxu0 0
      %3730 = vmatpush1.bf16.xpose.msra.mxu0 0
      %3731 = vmatprep.subr.bf16.mxu0 0
      %3732 = vmatpush1.bf16.xpose.msra.mxu0 0
      %3733 = vmatprep.subr.bf16.mxu0 0
      %3734 = vmatpush1.bf16.xpose.msra.mxu0 0
      %3735 = vmatprep.subr.bf16.mxu0 0
      %3736 = vmatpush1.bf16.xpose.msra.mxu0 0
      %3737 = vmatprep.subr.bf16.mxu0 0
      %3738 = vmatpush1.bf16.xpose.msra.mxu0 0
      %3739 = vmatprep.subr.bf16.mxu0 0
      %3740 = vmatpush1.bf16.xpose.msra.mxu0 0
      %3741 = vmatprep.subr.bf16.mxu0 0
      %3742 = vmatpush1.bf16.xpose.msra.mxu0 0
      %3743 = vmatprep.mubr.bf16.mxu0 0
      %3744 = vmatmul.mubr.bf16.gmra.mrb[0].mxu0 %v3706
      %v3745 = vpop.f32.mrb[0].mxu0
      %v3746 = vadd.f32 %v1568, %v3745
      %v3747 = vpop.f32.mrb[0].mxu0
      %v3748 = vpop.f32.mrb[0].mxu0
      %v3749 = vadd.f32 %v1569, %v3748
      %v3750 = vpop.f32.mrb[0].mxu0
      %3751 = vdwg.mxu0
      %3753 = vrot.lane.b32.xlu0 %v1371, 96
      %v3754 = vpop.permute.xlu0 %3753
      %3756 = vrot.lane.b32.xlu0 %v1387, 96
      %v3757 = vpop.permute.xlu0 %3756
      %v3759 = vsel %vm514, %v3754, 0
      %v3762 = vsel %vm514, %v3757, 0
      %3764 = vmatprep.subr.bf16.mxu0 0
      %3765 = vmatpush1.bf16.xpose.msra.mxu0 %v3762
      %3766 = vmatprep.subr.bf16.mxu0 0
      %3767 = vmatpush1.bf16.xpose.msra.mxu0 0
      %3768 = vmatprep.subr.bf16.mxu0 0
      %3769 = vmatpush1.bf16.xpose.msra.mxu0 0
      %3770 = vmatprep.subr.bf16.mxu0 0
      %3771 = vmatpush1.bf16.xpose.msra.mxu0 0
      %3772 = vmatprep.subr.bf16.mxu0 0
      %3773 = vmatpush1.bf16.xpose.msra.mxu0 0
      %3774 = vmatprep.subr.bf16.mxu0 0
      %3775 = vmatpush1.bf16.xpose.msra.mxu0 0
      %3776 = vmatprep.subr.bf16.mxu0 0
      %3777 = vmatpush1.bf16.xpose.msra.mxu0 0
      %3778 = vmatprep.subr.bf16.mxu0 0
      %3779 = vmatpush1.bf16.xpose.msra.mxu0 0
      %3780 = vmatprep.subr.bf16.mxu0 0
      %3781 = vmatpush1.bf16.xpose.msra.mxu0 0
      %3782 = vmatprep.subr.bf16.mxu0 0
      %3783 = vmatpush1.bf16.xpose.msra.mxu0 0
      %3784 = vmatprep.subr.bf16.mxu0 0
      %3785 = vmatpush1.bf16.xpose.msra.mxu0 0
      %3786 = vmatprep.subr.bf16.mxu0 0
      %3787 = vmatpush1.bf16.xpose.msra.mxu0 0
      %3788 = vmatprep.subr.bf16.mxu0 0
      %3789 = vmatpush1.bf16.xpose.msra.mxu0 0
      %3790 = vmatprep.subr.bf16.mxu0 0
      %3791 = vmatpush1.bf16.xpose.msra.mxu0 0
      %3792 = vmatprep.subr.bf16.mxu0 0
      %3793 = vmatpush1.bf16.xpose.msra.mxu0 0
      %3794 = vmatprep.subr.bf16.mxu0 0
      %3795 = vmatpush1.bf16.xpose.msra.mxu0 0
      %3796 = vmatprep.mubr.bf16.mxu0 0
      %3797 = vmatmul.mubr.bf16.gmra.mrb[0].mxu0 %v3759
      %v3798 = vpop.f32.mrb[0].mxu0
      %v3799 = vadd.f32 %v1576, %v3798
      %v3800 = vpop.f32.mrb[0].mxu0
      %v3801 = vpop.f32.mrb[0].mxu0
      %v3802 = vadd.f32 %v1577, %v3801
      %v3803 = vpop.f32.mrb[0].mxu0
      %3804 = vdwg.mxu0
      %3806 = vrot.lane.b32.xlu0 %v1372, 96
      %v3807 = vpop.permute.xlu0 %3806
      %3809 = vrot.lane.b32.xlu0 %v1388, 96
      %v3810 = vpop.permute.xlu0 %3809
      %v3812 = vsel %vm514, %v3807, 0
      %v3815 = vsel %vm514, %v3810, 0
      %3817 = vmatprep.subr.bf16.mxu0 0
      %3818 = vmatpush1.bf16.xpose.msra.mxu0 %v3815
      %3819 = vmatprep.subr.bf16.mxu0 0
      %3820 = vmatpush1.bf16.xpose.msra.mxu0 0
      %3821 = vmatprep.subr.bf16.mxu0 0
      %3822 = vmatpush1.bf16.xpose.msra.mxu0 0
      %3823 = vmatprep.subr.bf16.mxu0 0
      %3824 = vmatpush1.bf16.xpose.msra.mxu0 0
      %3825 = vmatprep.subr.bf16.mxu0 0
      %3826 = vmatpush1.bf16.xpose.msra.mxu0 0
      %3827 = vmatprep.subr.bf16.mxu0 0
      %3828 = vmatpush1.bf16.xpose.msra.mxu0 0
      %3829 = vmatprep.subr.bf16.mxu0 0
      %3830 = vmatpush1.bf16.xpose.msra.mxu0 0
      %3831 = vmatprep.subr.bf16.mxu0 0
      %3832 = vmatpush1.bf16.xpose.msra.mxu0 0
      %3833 = vmatprep.subr.bf16.mxu0 0
      %3834 = vmatpush1.bf16.xpose.msra.mxu0 0
      %3835 = vmatprep.subr.bf16.mxu0 0
      %3836 = vmatpush1.bf16.xpose.msra.mxu0 0
      %3837 = vmatprep.subr.bf16.mxu0 0
      %3838 = vmatpush1.bf16.xpose.msra.mxu0 0
      %3839 = vmatprep.subr.bf16.mxu0 0
      %3840 = vmatpush1.bf16.xpose.msra.mxu0 0
      %3841 = vmatprep.subr.bf16.mxu0 0
      %3842 = vmatpush1.bf16.xpose.msra.mxu0 0
      %3843 = vmatprep.subr.bf16.mxu0 0
      %3844 = vmatpush1.bf16.xpose.msra.mxu0 0
      %3845 = vmatprep.subr.bf16.mxu0 0
      %3846 = vmatpush1.bf16.xpose.msra.mxu0 0
      %3847 = vmatprep.subr.bf16.mxu0 0
      %3848 = vmatpush1.bf16.xpose.msra.mxu0 0
      %3849 = vmatprep.mubr.bf16.mxu0 0
      %3850 = vmatmul.mubr.bf16.gmra.mrb[0].mxu0 %v3812
      %v3851 = vpop.f32.mrb[0].mxu0
      %v3852 = vadd.f32 %v1584, %v3851
      %v3853 = vpop.f32.mrb[0].mxu0
      %v3854 = vpop.f32.mrb[0].mxu0
      %v3855 = vadd.f32 %v1585, %v3854
      %v3856 = vpop.f32.mrb[0].mxu0
      %3857 = vdwg.mxu0
      %3859 = vrot.lane.b32.xlu0 %v1373, 96
      %v3860 = vpop.permute.xlu0 %3859
      %3862 = vrot.lane.b32.xlu0 %v1389, 96
      %v3863 = vpop.permute.xlu0 %3862
      %v3865 = vsel %vm514, %v3860, 0
      %v3868 = vsel %vm514, %v3863, 0
      %3870 = vmatprep.subr.bf16.mxu0 0
      %3871 = vmatpush1.bf16.xpose.msra.mxu0 %v3868
      %3872 = vmatprep.subr.bf16.mxu0 0
      %3873 = vmatpush1.bf16.xpose.msra.mxu0 0
      %3874 = vmatprep.subr.bf16.mxu0 0
      %3875 = vmatpush1.bf16.xpose.msra.mxu0 0
      %3876 = vmatprep.subr.bf16.mxu0 0
      %3877 = vmatpush1.bf16.xpose.msra.mxu0 0
      %3878 = vmatprep.subr.bf16.mxu0 0
      %3879 = vmatpush1.bf16.xpose.msra.mxu0 0
      %3880 = vmatprep.subr.bf16.mxu0 0
      %3881 = vmatpush1.bf16.xpose.msra.mxu0 0
      %3882 = vmatprep.subr.bf16.mxu0 0
      %3883 = vmatpush1.bf16.xpose.msra.mxu0 0
      %3884 = vmatprep.subr.bf16.mxu0 0
      %3885 = vmatpush1.bf16.xpose.msra.mxu0 0
      %3886 = vmatprep.subr.bf16.mxu0 0
      %3887 = vmatpush1.bf16.xpose.msra.mxu0 0
      %3888 = vmatprep.subr.bf16.mxu0 0
      %3889 = vmatpush1.bf16.xpose.msra.mxu0 0
      %3890 = vmatprep.subr.bf16.mxu0 0
      %3891 = vmatpush1.bf16.xpose.msra.mxu0 0
      %3892 = vmatprep.subr.bf16.mxu0 0
      %3893 = vmatpush1.bf16.xpose.msra.mxu0 0
      %3894 = vmatprep.subr.bf16.mxu0 0
      %3895 = vmatpush1.bf16.xpose.msra.mxu0 0
      %3896 = vmatprep.subr.bf16.mxu0 0
      %3897 = vmatpush1.bf16.xpose.msra.mxu0 0
      %3898 = vmatprep.subr.bf16.mxu0 0
      %3899 = vmatpush1.bf16.xpose.msra.mxu0 0
      %3900 = vmatprep.subr.bf16.mxu0 0
      %3901 = vmatpush1.bf16.xpose.msra.mxu0 0
      %3902 = vmatprep.mubr.bf16.mxu0 0
      %3903 = vmatmul.mubr.bf16.gmra.mrb[0].mxu0 %v3865
      %v3904 = vpop.f32.mrb[0].mxu0
      %v3905 = vadd.f32 %v1592, %v3904
      %v3906 = vpop.f32.mrb[0].mxu0
      %v3907 = vpop.f32.mrb[0].mxu0
      %v3908 = vadd.f32 %v1593, %v3907
      %v3909 = vpop.f32.mrb[0].mxu0
      %3910 = vdwg.mxu0
      %3912 = vrot.lane.b32.xlu0 %v1374, 96
      %v3913 = vpop.permute.xlu0 %3912
      %3915 = vrot.lane.b32.xlu0 %v1390, 96
      %v3916 = vpop.permute.xlu0 %3915
      %v3918 = vsel %vm514, %v3913, 0
      %v3921 = vsel %vm514, %v3916, 0
      %3923 = vmatprep.subr.bf16.mxu0 0
      %3924 = vmatpush1.bf16.xpose.msra.mxu0 %v3921
      %3925 = vmatprep.subr.bf16.mxu0 0
      %3926 = vmatpush1.bf16.xpose.msra.mxu0 0
      %3927 = vmatprep.subr.bf16.mxu0 0
      %3928 = vmatpush1.bf16.xpose.msra.mxu0 0
      %3929 = vmatprep.subr.bf16.mxu0 0
      %3930 = vmatpush1.bf16.xpose.msra.mxu0 0
      %3931 = vmatprep.subr.bf16.mxu0 0
      %3932 = vmatpush1.bf16.xpose.msra.mxu0 0
      %3933 = vmatprep.subr.bf16.mxu0 0
      %3934 = vmatpush1.bf16.xpose.msra.mxu0 0
      %3935 = vmatprep.subr.bf16.mxu0 0
      %3936 = vmatpush1.bf16.xpose.msra.mxu0 0
      %3937 = vmatprep.subr.bf16.mxu0 0
      %3938 = vmatpush1.bf16.xpose.msra.mxu0 0
      %3939 = vmatprep.subr.bf16.mxu0 0
      %3940 = vmatpush1.bf16.xpose.msra.mxu0 0
      %3941 = vmatprep.subr.bf16.mxu0 0
      %3942 = vmatpush1.bf16.xpose.msra.mxu0 0
      %3943 = vmatprep.subr.bf16.mxu0 0
      %3944 = vmatpush1.bf16.xpose.msra.mxu0 0
      %3945 = vmatprep.subr.bf16.mxu0 0
      %3946 = vmatpush1.bf16.xpose.msra.mxu0 0
      %3947 = vmatprep.subr.bf16.mxu0 0
      %3948 = vmatpush1.bf16.xpose.msra.mxu0 0
      %3949 = vmatprep.subr.bf16.mxu0 0
      %3950 = vmatpush1.bf16.xpose.msra.mxu0 0
      %3951 = vmatprep.subr.bf16.mxu0 0
      %3952 = vmatpush1.bf16.xpose.msra.mxu0 0
      %3953 = vmatprep.subr.bf16.mxu0 0
      %3954 = vmatpush1.bf16.xpose.msra.mxu0 0
      %3955 = vmatprep.mubr.bf16.mxu0 0
      %3956 = vmatmul.mubr.bf16.gmra.mrb[0].mxu0 %v3918
      %v3957 = vpop.f32.mrb[0].mxu0
      %v3958 = vadd.f32 %v1600, %v3957
      %v3959 = vpop.f32.mrb[0].mxu0
      %v3960 = vpop.f32.mrb[0].mxu0
      %v3961 = vadd.f32 %v1601, %v3960
      %v3962 = vpop.f32.mrb[0].mxu0
      %3963 = vdwg.mxu0
      %3965 = vrot.lane.b32.xlu0 %v1375, 96
      %v3966 = vpop.permute.xlu0 %3965
      %3968 = vrot.lane.b32.xlu0 %v1391, 96
      %v3969 = vpop.permute.xlu0 %3968
      %v3971 = vsel %vm514, %v3966, 0
      %v3974 = vsel %vm514, %v3969, 0
      %3976 = vmatprep.subr.bf16.mxu0 0
      %3977 = vmatpush1.bf16.xpose.msra.mxu0 %v3974
      %3978 = vmatprep.subr.bf16.mxu0 0
      %3979 = vmatpush1.bf16.xpose.msra.mxu0 0
      %3980 = vmatprep.subr.bf16.mxu0 0
      %3981 = vmatpush1.bf16.xpose.msra.mxu0 0
      %3982 = vmatprep.subr.bf16.mxu0 0
      %3983 = vmatpush1.bf16.xpose.msra.mxu0 0
      %3984 = vmatprep.subr.bf16.mxu0 0
      %3985 = vmatpush1.bf16.xpose.msra.mxu0 0
      %3986 = vmatprep.subr.bf16.mxu0 0
      %3987 = vmatpush1.bf16.xpose.msra.mxu0 0
      %3988 = vmatprep.subr.bf16.mxu0 0
      %3989 = vmatpush1.bf16.xpose.msra.mxu0 0
      %3990 = vmatprep.subr.bf16.mxu0 0
      %3991 = vmatpush1.bf16.xpose.msra.mxu0 0
      %3992 = vmatprep.subr.bf16.mxu0 0
      %3993 = vmatpush1.bf16.xpose.msra.mxu0 0
      %3994 = vmatprep.subr.bf16.mxu0 0
      %3995 = vmatpush1.bf16.xpose.msra.mxu0 0
      %3996 = vmatprep.subr.bf16.mxu0 0
      %3997 = vmatpush1.bf16.xpose.msra.mxu0 0
      %3998 = vmatprep.subr.bf16.mxu0 0
      %3999 = vmatpush1.bf16.xpose.msra.mxu0 0
      %4000 = vmatprep.subr.bf16.mxu0 0
      %4001 = vmatpush1.bf16.xpose.msra.mxu0 0
      %4002 = vmatprep.subr.bf16.mxu0 0
      %4003 = vmatpush1.bf16.xpose.msra.mxu0 0
      %4004 = vmatprep.subr.bf16.mxu0 0
      %4005 = vmatpush1.bf16.xpose.msra.mxu0 0
      %4006 = vmatprep.subr.bf16.mxu0 0
      %4007 = vmatpush1.bf16.xpose.msra.mxu0 0
      %4008 = vmatprep.mubr.bf16.mxu0 0
      %4009 = vmatmul.mubr.bf16.gmra.mrb[0].mxu0 %v3971
      %v4010 = vpop.f32.mrb[0].mxu0
      %v4011 = vadd.f32 %v1608, %v4010
      %v4012 = vpop.f32.mrb[0].mxu0
      %v4013 = vpop.f32.mrb[0].mxu0
      %v4014 = vadd.f32 %v1609, %v4013
      %v4015 = vpop.f32.mrb[0].mxu0
      %4016 = vdwg.mxu0
      %4018 = vrot.lane.b32.xlu0 %v1376, 96
      %v4019 = vpop.permute.xlu0 %4018
      %4021 = vrot.lane.b32.xlu0 %v1392, 96
      %v4022 = vpop.permute.xlu0 %4021
      %v4024 = vsel %vm514, %v4019, 0
      %v4027 = vsel %vm514, %v4022, 0
      %4029 = vmatprep.subr.bf16.mxu0 0
      %4030 = vmatpush1.bf16.xpose.msra.mxu0 %v4027
      %4031 = vmatprep.subr.bf16.mxu0 0
      %4032 = vmatpush1.bf16.xpose.msra.mxu0 0
      %4033 = vmatprep.subr.bf16.mxu0 0
      %4034 = vmatpush1.bf16.xpose.msra.mxu0 0
      %4035 = vmatprep.subr.bf16.mxu0 0
      %4036 = vmatpush1.bf16.xpose.msra.mxu0 0
      %4037 = vmatprep.subr.bf16.mxu0 0
      %4038 = vmatpush1.bf16.xpose.msra.mxu0 0
      %4039 = vmatprep.subr.bf16.mxu0 0
      %4040 = vmatpush1.bf16.xpose.msra.mxu0 0
      %4041 = vmatprep.subr.bf16.mxu0 0
      %4042 = vmatpush1.bf16.xpose.msra.mxu0 0
      %4043 = vmatprep.subr.bf16.mxu0 0
      %4044 = vmatpush1.bf16.xpose.msra.mxu0 0
      %4045 = vmatprep.subr.bf16.mxu0 0
      %4046 = vmatpush1.bf16.xpose.msra.mxu0 0
      %4047 = vmatprep.subr.bf16.mxu0 0
      %4048 = vmatpush1.bf16.xpose.msra.mxu0 0
      %4049 = vmatprep.subr.bf16.mxu0 0
      %4050 = vmatpush1.bf16.xpose.msra.mxu0 0
      %4051 = vmatprep.subr.bf16.mxu0 0
      %4052 = vmatpush1.bf16.xpose.msra.mxu0 0
      %4053 = vmatprep.subr.bf16.mxu0 0
      %4054 = vmatpush1.bf16.xpose.msra.mxu0 0
      %4055 = vmatprep.subr.bf16.mxu0 0
      %4056 = vmatpush1.bf16.xpose.msra.mxu0 0
      %4057 = vmatprep.subr.bf16.mxu0 0
      %4058 = vmatpush1.bf16.xpose.msra.mxu0 0
      %4059 = vmatprep.subr.bf16.mxu0 0
      %4060 = vmatpush1.bf16.xpose.msra.mxu0 0
      %4061 = vmatprep.mubr.bf16.mxu0 0
      %4062 = vmatmul.mubr.bf16.gmra.mrb[0].mxu0 %v4024
      %v4063 = vpop.f32.mrb[0].mxu0
      %v4064 = vadd.f32 %v1616, %v4063
      %v4065 = vpop.f32.mrb[0].mxu0
      %v4066 = vpop.f32.mrb[0].mxu0
      %v4067 = vadd.f32 %v1617, %v4066
      %v4068 = vpop.f32.mrb[0].mxu0
      %4069 = vdwg.mxu0
      %4071 = vrot.lane.b32.xlu0 %v1377, 96
      %v4072 = vpop.permute.xlu0 %4071
      %4074 = vrot.lane.b32.xlu0 %v1393, 96
      %v4075 = vpop.permute.xlu0 %4074
      %v4077 = vsel %vm514, %v4072, 0
      %v4080 = vsel %vm514, %v4075, 0
      %4082 = vmatprep.subr.bf16.mxu0 0
      %4083 = vmatpush1.bf16.xpose.msra.mxu0 %v4080
      %4084 = vmatprep.subr.bf16.mxu0 0
      %4085 = vmatpush1.bf16.xpose.msra.mxu0 0
      %4086 = vmatprep.subr.bf16.mxu0 0
      %4087 = vmatpush1.bf16.xpose.msra.mxu0 0
      %4088 = vmatprep.subr.bf16.mxu0 0
      %4089 = vmatpush1.bf16.xpose.msra.mxu0 0
      %4090 = vmatprep.subr.bf16.mxu0 0
      %4091 = vmatpush1.bf16.xpose.msra.mxu0 0
      %4092 = vmatprep.subr.bf16.mxu0 0
      %4093 = vmatpush1.bf16.xpose.msra.mxu0 0
      %4094 = vmatprep.subr.bf16.mxu0 0
      %4095 = vmatpush1.bf16.xpose.msra.mxu0 0
      %4096 = vmatprep.subr.bf16.mxu0 0
      %4097 = vmatpush1.bf16.xpose.msra.mxu0 0
      %4098 = vmatprep.subr.bf16.mxu0 0
      %4099 = vmatpush1.bf16.xpose.msra.mxu0 0
      %4100 = vmatprep.subr.bf16.mxu0 0
      %4101 = vmatpush1.bf16.xpose.msra.mxu0 0
      %4102 = vmatprep.subr.bf16.mxu0 0
      %4103 = vmatpush1.bf16.xpose.msra.mxu0 0
      %4104 = vmatprep.subr.bf16.mxu0 0
      %4105 = vmatpush1.bf16.xpose.msra.mxu0 0
      %4106 = vmatprep.subr.bf16.mxu0 0
      %4107 = vmatpush1.bf16.xpose.msra.mxu0 0
      %4108 = vmatprep.subr.bf16.mxu0 0
      %4109 = vmatpush1.bf16.xpose.msra.mxu0 0
      %4110 = vmatprep.subr.bf16.mxu0 0
      %4111 = vmatpush1.bf16.xpose.msra.mxu0 0
      %4112 = vmatprep.subr.bf16.mxu0 0
      %4113 = vmatpush1.bf16.xpose.msra.mxu0 0
      %4114 = vmatprep.mubr.bf16.mxu0 0
      %4115 = vmatmul.mubr.bf16.gmra.mrb[0].mxu0 %v4077
      %v4116 = vpop.f32.mrb[0].mxu0
      %v4117 = vadd.f32 %v1624, %v4116
      %v4118 = vpop.f32.mrb[0].mxu0
      %v4119 = vpop.f32.mrb[0].mxu0
      %v4120 = vadd.f32 %v1625, %v4119
      %v4121 = vpop.f32.mrb[0].mxu0
      %4122 = vdwg.mxu0
      %4124 = vrot.lane.b32.xlu0 %v1378, 96
      %v4125 = vpop.permute.xlu0 %4124
      %4127 = vrot.lane.b32.xlu0 %v1394, 96
      %v4128 = vpop.permute.xlu0 %4127
      %v4130 = vsel %vm514, %v4125, 0
      %v4133 = vsel %vm514, %v4128, 0
      %4135 = vmatprep.subr.bf16.mxu0 0
      %4136 = vmatpush1.bf16.xpose.msra.mxu0 %v4133
      %4137 = vmatprep.subr.bf16.mxu0 0
      %4138 = vmatpush1.bf16.xpose.msra.mxu0 0
      %4139 = vmatprep.subr.bf16.mxu0 0
      %4140 = vmatpush1.bf16.xpose.msra.mxu0 0
      %4141 = vmatprep.subr.bf16.mxu0 0
      %4142 = vmatpush1.bf16.xpose.msra.mxu0 0
      %4143 = vmatprep.subr.bf16.mxu0 0
      %4144 = vmatpush1.bf16.xpose.msra.mxu0 0
      %4145 = vmatprep.subr.bf16.mxu0 0
      %4146 = vmatpush1.bf16.xpose.msra.mxu0 0
      %4147 = vmatprep.subr.bf16.mxu0 0
      %4148 = vmatpush1.bf16.xpose.msra.mxu0 0
      %4149 = vmatprep.subr.bf16.mxu0 0
      %4150 = vmatpush1.bf16.xpose.msra.mxu0 0
      %4151 = vmatprep.subr.bf16.mxu0 0
      %4152 = vmatpush1.bf16.xpose.msra.mxu0 0
      %4153 = vmatprep.subr.bf16.mxu0 0
      %4154 = vmatpush1.bf16.xpose.msra.mxu0 0
      %4155 = vmatprep.subr.bf16.mxu0 0
      %4156 = vmatpush1.bf16.xpose.msra.mxu0 0
      %4157 = vmatprep.subr.bf16.mxu0 0
      %4158 = vmatpush1.bf16.xpose.msra.mxu0 0
      %4159 = vmatprep.subr.bf16.mxu0 0
      %4160 = vmatpush1.bf16.xpose.msra.mxu0 0
      %4161 = vmatprep.subr.bf16.mxu0 0
      %4162 = vmatpush1.bf16.xpose.msra.mxu0 0
      %4163 = vmatprep.subr.bf16.mxu0 0
      %4164 = vmatpush1.bf16.xpose.msra.mxu0 0
      %4165 = vmatprep.subr.bf16.mxu0 0
      %4166 = vmatpush1.bf16.xpose.msra.mxu0 0
      %4167 = vmatprep.mubr.bf16.mxu0 0
      %4168 = vmatmul.mubr.bf16.gmra.mrb[0].mxu0 %v4130
      %v4169 = vpop.f32.mrb[0].mxu0
      %v4170 = vadd.f32 %v1632, %v4169
      %v4171 = vpop.f32.mrb[0].mxu0
      %v4172 = vpop.f32.mrb[0].mxu0
      %v4173 = vadd.f32 %v1633, %v4172
      %v4174 = vpop.f32.mrb[0].mxu0
      %4175 = vdwg.mxu0
      %4177 = vrot.lane.b32.xlu0 %v1379, 96
      %v4178 = vpop.permute.xlu0 %4177
      %4180 = vrot.lane.b32.xlu0 %v1395, 96
      %v4181 = vpop.permute.xlu0 %4180
      %v4183 = vsel %vm514, %v4178, 0
      %v4186 = vsel %vm514, %v4181, 0
      %4188 = vmatprep.subr.bf16.mxu0 0
      %4189 = vmatpush1.bf16.xpose.msra.mxu0 %v4186
      %4190 = vmatprep.subr.bf16.mxu0 0
      %4191 = vmatpush1.bf16.xpose.msra.mxu0 0
      %4192 = vmatprep.subr.bf16.mxu0 0
      %4193 = vmatpush1.bf16.xpose.msra.mxu0 0
      %4194 = vmatprep.subr.bf16.mxu0 0
      %4195 = vmatpush1.bf16.xpose.msra.mxu0 0
      %4196 = vmatprep.subr.bf16.mxu0 0
      %4197 = vmatpush1.bf16.xpose.msra.mxu0 0
      %4198 = vmatprep.subr.bf16.mxu0 0
      %4199 = vmatpush1.bf16.xpose.msra.mxu0 0
      %4200 = vmatprep.subr.bf16.mxu0 0
      %4201 = vmatpush1.bf16.xpose.msra.mxu0 0
      %4202 = vmatprep.subr.bf16.mxu0 0
      %4203 = vmatpush1.bf16.xpose.msra.mxu0 0
      %4204 = vmatprep.subr.bf16.mxu0 0
      %4205 = vmatpush1.bf16.xpose.msra.mxu0 0
      %4206 = vmatprep.subr.bf16.mxu0 0
      %4207 = vmatpush1.bf16.xpose.msra.mxu0 0
      %4208 = vmatprep.subr.bf16.mxu0 0
      %4209 = vmatpush1.bf16.xpose.msra.mxu0 0
      %4210 = vmatprep.subr.bf16.mxu0 0
      %4211 = vmatpush1.bf16.xpose.msra.mxu0 0
      %4212 = vmatprep.subr.bf16.mxu0 0
      %4213 = vmatpush1.bf16.xpose.msra.mxu0 0
      %4214 = vmatprep.subr.bf16.mxu0 0
      %4215 = vmatpush1.bf16.xpose.msra.mxu0 0
      %4216 = vmatprep.subr.bf16.mxu0 0
      %4217 = vmatpush1.bf16.xpose.msra.mxu0 0
      %4218 = vmatprep.subr.bf16.mxu0 0
      %4219 = vmatpush1.bf16.xpose.msra.mxu0 0
      %4220 = vmatprep.mubr.bf16.mxu0 0
      %4221 = vmatmul.mubr.bf16.gmra.mrb[0].mxu0 %v4183
      %v4222 = vpop.f32.mrb[0].mxu0
      %v4223 = vadd.f32 %v1640, %v4222
      %v4224 = vpop.f32.mrb[0].mxu0
      %v4225 = vpop.f32.mrb[0].mxu0
      %v4226 = vadd.f32 %v1641, %v4225
      %v4227 = vpop.f32.mrb[0].mxu0
      %4228 = vdwg.mxu0
      %4230 = vrot.lane.b32.xlu0 %v1380, 96
      %v4231 = vpop.permute.xlu0 %4230
      %4233 = vrot.lane.b32.xlu0 %v1396, 96
      %v4234 = vpop.permute.xlu0 %4233
      %v4236 = vsel %vm514, %v4231, 0
      %v4239 = vsel %vm514, %v4234, 0
      %4241 = vmatprep.subr.bf16.mxu0 0
      %4242 = vmatpush1.bf16.xpose.msra.mxu0 %v4239
      %4243 = vmatprep.subr.bf16.mxu0 0
      %4244 = vmatpush1.bf16.xpose.msra.mxu0 0
      %4245 = vmatprep.subr.bf16.mxu0 0
      %4246 = vmatpush1.bf16.xpose.msra.mxu0 0
      %4247 = vmatprep.subr.bf16.mxu0 0
      %4248 = vmatpush1.bf16.xpose.msra.mxu0 0
      %4249 = vmatprep.subr.bf16.mxu0 0
      %4250 = vmatpush1.bf16.xpose.msra.mxu0 0
      %4251 = vmatprep.subr.bf16.mxu0 0
      %4252 = vmatpush1.bf16.xpose.msra.mxu0 0
      %4253 = vmatprep.subr.bf16.mxu0 0
      %4254 = vmatpush1.bf16.xpose.msra.mxu0 0
      %4255 = vmatprep.subr.bf16.mxu0 0
      %4256 = vmatpush1.bf16.xpose.msra.mxu0 0
      %4257 = vmatprep.subr.bf16.mxu0 0
      %4258 = vmatpush1.bf16.xpose.msra.mxu0 0
      %4259 = vmatprep.subr.bf16.mxu0 0
      %4260 = vmatpush1.bf16.xpose.msra.mxu0 0
      %4261 = vmatprep.subr.bf16.mxu0 0
      %4262 = vmatpush1.bf16.xpose.msra.mxu0 0
      %4263 = vmatprep.subr.bf16.mxu0 0
      %4264 = vmatpush1.bf16.xpose.msra.mxu0 0
      %4265 = vmatprep.subr.bf16.mxu0 0
      %4266 = vmatpush1.bf16.xpose.msra.mxu0 0
      %4267 = vmatprep.subr.bf16.mxu0 0
      %4268 = vmatpush1.bf16.xpose.msra.mxu0 0
      %4269 = vmatprep.subr.bf16.mxu0 0
      %4270 = vmatpush1.bf16.xpose.msra.mxu0 0
      %4271 = vmatprep.subr.bf16.mxu0 0
      %4272 = vmatpush1.bf16.xpose.msra.mxu0 0
      %4273 = vmatprep.mubr.bf16.mxu0 0
      %4274 = vmatmul.mubr.bf16.gmra.mrb[0].mxu0 %v4236
      %v4275 = vpop.f32.mrb[0].mxu0
      %v4276 = vadd.f32 %v1648, %v4275
      %v4277 = vpop.f32.mrb[0].mxu0
      %v4278 = vpop.f32.mrb[0].mxu0
      %v4279 = vadd.f32 %v1649, %v4278
      %v4280 = vpop.f32.mrb[0].mxu0
      %4281 = vdwg.mxu0
      %4283 = vrot.lane.b32.xlu0 %v1381, 96
      %v4284 = vpop.permute.xlu0 %4283
      %4286 = vrot.lane.b32.xlu0 %v1397, 96
      %v4287 = vpop.permute.xlu0 %4286
      %v4289 = vsel %vm514, %v4284, 0
      %v4292 = vsel %vm514, %v4287, 0
      %4294 = vmatprep.subr.bf16.mxu0 0
      %4295 = vmatpush1.bf16.xpose.msra.mxu0 %v4292
      %4296 = vmatprep.subr.bf16.mxu0 0
      %4297 = vmatpush1.bf16.xpose.msra.mxu0 0
      %4298 = vmatprep.subr.bf16.mxu0 0
      %4299 = vmatpush1.bf16.xpose.msra.mxu0 0
      %4300 = vmatprep.subr.bf16.mxu0 0
      %4301 = vmatpush1.bf16.xpose.msra.mxu0 0
      %4302 = vmatprep.subr.bf16.mxu0 0
      %4303 = vmatpush1.bf16.xpose.msra.mxu0 0
      %4304 = vmatprep.subr.bf16.mxu0 0
      %4305 = vmatpush1.bf16.xpose.msra.mxu0 0
      %4306 = vmatprep.subr.bf16.mxu0 0
      %4307 = vmatpush1.bf16.xpose.msra.mxu0 0
      %4308 = vmatprep.subr.bf16.mxu0 0
      %4309 = vmatpush1.bf16.xpose.msra.mxu0 0
      %4310 = vmatprep.subr.bf16.mxu0 0
      %4311 = vmatpush1.bf16.xpose.msra.mxu0 0
      %4312 = vmatprep.subr.bf16.mxu0 0
      %4313 = vmatpush1.bf16.xpose.msra.mxu0 0
      %4314 = vmatprep.subr.bf16.mxu0 0
      %4315 = vmatpush1.bf16.xpose.msra.mxu0 0
      %4316 = vmatprep.subr.bf16.mxu0 0
      %4317 = vmatpush1.bf16.xpose.msra.mxu0 0
      %4318 = vmatprep.subr.bf16.mxu0 0
      %4319 = vmatpush1.bf16.xpose.msra.mxu0 0
      %4320 = vmatprep.subr.bf16.mxu0 0
      %4321 = vmatpush1.bf16.xpose.msra.mxu0 0
      %4322 = vmatprep.subr.bf16.mxu0 0
      %4323 = vmatpush1.bf16.xpose.msra.mxu0 0
      %4324 = vmatprep.subr.bf16.mxu0 0
      %4325 = vmatpush1.bf16.xpose.msra.mxu0 0
      %4326 = vmatprep.mubr.bf16.mxu0 0
      %4327 = vmatmul.mubr.bf16.gmra.mrb[0].mxu0 %v4289
      %v4328 = vpop.f32.mrb[0].mxu0
      %v4329 = vadd.f32 %v1656, %v4328
      %v4330 = vpop.f32.mrb[0].mxu0
      %v4331 = vpop.f32.mrb[0].mxu0
      %v4332 = vadd.f32 %v1657, %v4331
      %v4333 = vpop.f32.mrb[0].mxu0
      %4334 = vdwg.mxu0
      %v4335 = vsel %vm2414, %v3534, -inf
      %4336 = vmax.xlane.f32.xlu0 %v4335
      %v4337 = vpop.xlane.xlu0 %4336
      %v4338 = vsel %vm2414, %v3537, -inf
      %4339 = vmax.xlane.f32.xlu0 %v4338
      %v4340 = vpop.xlane.xlu0 %4339
      %v4341 = vsel %vm2414, %v3587, -inf
      %4342 = vmax.xlane.f32.xlu0 %v4341
      %v4343 = vpop.xlane.xlu0 %4342
      %v4344 = vsel %vm2414, %v3590, -inf
      %4345 = vmax.xlane.f32.xlu0 %v4344
      %v4346 = vpop.xlane.xlu0 %4345
      %v4347 = vsel %vm2414, %v3640, -inf
      %4348 = vmax.xlane.f32.xlu0 %v4347
      %v4349 = vpop.xlane.xlu0 %4348
      %v4350 = vsel %vm2414, %v3643, -inf
      %4351 = vmax.xlane.f32.xlu0 %v4350
      %v4352 = vpop.xlane.xlu0 %4351
      %v4353 = vsel %vm2414, %v3693, -inf
      %4354 = vmax.xlane.f32.xlu0 %v4353
      %v4355 = vpop.xlane.xlu0 %4354
      %v4356 = vsel %vm2414, %v3696, -inf
      %4357 = vmax.xlane.f32.xlu0 %v4356
      %v4358 = vpop.xlane.xlu0 %4357
      %v4359 = vsel %vm2414, %v3746, -inf
      %4360 = vmax.xlane.f32.xlu0 %v4359
      %v4361 = vpop.xlane.xlu0 %4360
      %v4362 = vsel %vm2414, %v3749, -inf
      %4363 = vmax.xlane.f32.xlu0 %v4362
      %v4364 = vpop.xlane.xlu0 %4363
      %v4365 = vsel %vm2414, %v3799, -inf
      %4366 = vmax.xlane.f32.xlu0 %v4365
      %v4367 = vpop.xlane.xlu0 %4366
      %v4368 = vsel %vm2414, %v3802, -inf
      %4369 = vmax.xlane.f32.xlu0 %v4368
      %v4370 = vpop.xlane.xlu0 %4369
      %v4371 = vsel %vm2414, %v3852, -inf
      %4372 = vmax.xlane.f32.xlu0 %v4371
      %v4373 = vpop.xlane.xlu0 %4372
      %v4374 = vsel %vm2414, %v3855, -inf
      %4375 = vmax.xlane.f32.xlu0 %v4374
      %v4376 = vpop.xlane.xlu0 %4375
      %v4377 = vsel %vm2414, %v3905, -inf
      %4378 = vmax.xlane.f32.xlu0 %v4377
      %v4379 = vpop.xlane.xlu0 %4378
      %v4380 = vsel %vm2414, %v3908, -inf
      %4381 = vmax.xlane.f32.xlu0 %v4380
      %v4382 = vpop.xlane.xlu0 %4381
      %v4383 = vsel %vm2414, %v3958, -inf
      %4384 = vmax.xlane.f32.xlu0 %v4383
      %v4385 = vpop.xlane.xlu0 %4384
      %v4386 = vsel %vm2414, %v3961, -inf
      %4387 = vmax.xlane.f32.xlu0 %v4386
      %v4388 = vpop.xlane.xlu0 %4387
      %v4389 = vsel %vm2414, %v4011, -inf
      %4390 = vmax.xlane.f32.xlu0 %v4389
      %v4391 = vpop.xlane.xlu0 %4390
      %v4392 = vsel %vm2414, %v4014, -inf
      %4393 = vmax.xlane.f32.xlu0 %v4392
      %v4394 = vpop.xlane.xlu0 %4393
      %v4395 = vsel %vm2414, %v4064, -inf
      %4396 = vmax.xlane.f32.xlu0 %v4395
      %v4397 = vpop.xlane.xlu0 %4396
      %v4398 = vsel %vm2414, %v4067, -inf
      %4399 = vmax.xlane.f32.xlu0 %v4398
      %v4400 = vpop.xlane.xlu0 %4399
      %v4401 = vsel %vm2414, %v4117, -inf
      %4402 = vmax.xlane.f32.xlu0 %v4401
      %v4403 = vpop.xlane.xlu0 %4402
      %v4404 = vsel %vm2414, %v4120, -inf
      %4405 = vmax.xlane.f32.xlu0 %v4404
      %v4406 = vpop.xlane.xlu0 %4405
      %v4407 = vsel %vm2414, %v4170, -inf
      %4408 = vmax.xlane.f32.xlu0 %v4407
      %v4409 = vpop.xlane.xlu0 %4408
      %v4410 = vsel %vm2414, %v4173, -inf
      %4411 = vmax.xlane.f32.xlu0 %v4410
      %v4412 = vpop.xlane.xlu0 %4411
      %v4413 = vsel %vm2414, %v4223, -inf
      %4414 = vmax.xlane.f32.xlu0 %v4413
      %v4415 = vpop.xlane.xlu0 %4414
      %v4416 = vsel %vm2414, %v4226, -inf
      %4417 = vmax.xlane.f32.xlu0 %v4416
      %v4418 = vpop.xlane.xlu0 %4417
      %v4419 = vsel %vm2414, %v4276, -inf
      %4420 = vmax.xlane.f32.xlu0 %v4419
      %v4421 = vpop.xlane.xlu0 %4420
      %v4422 = vsel %vm2414, %v4279, -inf
      %4423 = vmax.xlane.f32.xlu0 %v4422
      %v4424 = vpop.xlane.xlu0 %4423
      %v4425 = vsel %vm2414, %v4329, -inf
      %4426 = vmax.xlane.f32.xlu0 %v4425
      %v4427 = vpop.xlane.xlu0 %4426
      %v4428 = vsel %vm2414, %v4332, -inf
      %4429 = vmax.xlane.f32.xlu0 %v4428
      %v4430 = vpop.xlane.xlu0 %4429
      %v4431 = vsub.f32 %v3534, %v4337
      %v4432 = vsub.f32 %v3537, %v4340
      %v4433 = vsub.f32 %v3587, %v4343
      %v4434 = vsub.f32 %v3590, %v4346
      %v4435 = vsub.f32 %v3640, %v4349
      %v4436 = vsub.f32 %v3643, %v4352
      %v4437 = vsub.f32 %v3693, %v4355
      %v4438 = vsub.f32 %v3696, %v4358
      %v4439 = vsub.f32 %v3746, %v4361
      %v4440 = vsub.f32 %v3749, %v4364
      %v4441 = vsub.f32 %v3799, %v4367
      %v4442 = vsub.f32 %v3802, %v4370
      %v4443 = vsub.f32 %v3852, %v4373
      %v4444 = vsub.f32 %v3855, %v4376
      %v4445 = vsub.f32 %v3905, %v4379
      %v4446 = vsub.f32 %v3908, %v4382
      %v4447 = vsub.f32 %v3958, %v4385
      %v4448 = vsub.f32 %v3961, %v4388
      %v4449 = vsub.f32 %v4011, %v4391
      %v4450 = vsub.f32 %v4014, %v4394
      %v4451 = vsub.f32 %v4064, %v4397
      %v4452 = vsub.f32 %v4067, %v4400
      %v4453 = vsub.f32 %v4117, %v4403
      %v4454 = vsub.f32 %v4120, %v4406
      %v4455 = vsub.f32 %v4170, %v4409
      %v4456 = vsub.f32 %v4173, %v4412
      %v4457 = vsub.f32 %v4223, %v4415
      %v4458 = vsub.f32 %v4226, %v4418
      %v4459 = vsub.f32 %v4276, %v4421
      %v4460 = vsub.f32 %v4279, %v4424
      %v4461 = vsub.f32 %v4329, %v4427
      %v4462 = vsub.f32 %v4332, %v4430
      %v4463 = vmul.f32 %v4431, 1.442695
      %v4464 = vpow.pop %v4463
      %v4465 = vmul.f32 %v4432, 1.442695
      %v4466 = vpow.pop %v4465
      %v4467 = vmul.f32 %v4433, 1.442695
      %v4468 = vpow.pop %v4467
      %v4469 = vmul.f32 %v4434, 1.442695
      %v4470 = vpow.pop %v4469
      %v4471 = vmul.f32 %v4435, 1.442695
      %v4472 = vpow.pop %v4471
      %v4473 = vmul.f32 %v4436, 1.442695
      %v4474 = vpow.pop %v4473
      %v4475 = vmul.f32 %v4437, 1.442695
      %v4476 = vpow.pop %v4475
      %v4477 = vmul.f32 %v4438, 1.442695
      %v4478 = vpow.pop %v4477
      %v4479 = vmul.f32 %v4439, 1.442695
      %v4480 = vpow.pop %v4479
      %v4481 = vmul.f32 %v4440, 1.442695
      %v4482 = vpow.pop %v4481
      %v4483 = vmul.f32 %v4441, 1.442695
      %v4484 = vpow.pop %v4483
      %v4485 = vmul.f32 %v4442, 1.442695
      %v4486 = vpow.pop %v4485
      %v4487 = vmul.f32 %v4443, 1.442695
      %v4488 = vpow.pop %v4487
      %v4489 = vmul.f32 %v4444, 1.442695
      %v4490 = vpow.pop %v4489
      %v4491 = vmul.f32 %v4445, 1.442695
      %v4492 = vpow.pop %v4491
      %v4493 = vmul.f32 %v4446, 1.442695
      %v4494 = vpow.pop %v4493
      %v4495 = vmul.f32 %v4447, 1.442695
      %v4496 = vpow.pop %v4495
      %v4497 = vmul.f32 %v4448, 1.442695
      %v4498 = vpow.pop %v4497
      %v4499 = vmul.f32 %v4449, 1.442695
      %v4500 = vpow.pop %v4499
      %v4501 = vmul.f32 %v4450, 1.442695
      %v4502 = vpow.pop %v4501
      %v4503 = vmul.f32 %v4451, 1.442695
      %v4504 = vpow.pop %v4503
      %v4505 = vmul.f32 %v4452, 1.442695
      %v4506 = vpow.pop %v4505
      %v4507 = vmul.f32 %v4453, 1.442695
      %v4508 = vpow.pop %v4507
      %v4509 = vmul.f32 %v4454, 1.442695
      %v4510 = vpow.pop %v4509
      %v4511 = vmul.f32 %v4455, 1.442695
      %v4512 = vpow.pop %v4511
      %v4513 = vmul.f32 %v4456, 1.442695
      %v4514 = vpow.pop %v4513
      %v4515 = vmul.f32 %v4457, 1.442695
      %v4516 = vpow.pop %v4515
      %v4517 = vmul.f32 %v4458, 1.442695
      %v4518 = vpow.pop %v4517
      %v4519 = vmul.f32 %v4459, 1.442695
      %v4520 = vpow.pop %v4519
      %v4521 = vmul.f32 %v4460, 1.442695
      %v4522 = vpow.pop %v4521
      %v4523 = vmul.f32 %v4461, 1.442695
      %v4524 = vpow.pop %v4523
      %v4525 = vmul.f32 %v4462, 1.442695
      %v4526 = vpow.pop %v4525
      %v4527 = vsel %vm2414, %v4464, 0.0
      %4528 = vadd.xlane.f32.xlu0 %v4527
      %v4529 = vpop.xlane.xlu0 %4528
      %v4530 = vsel %vm2414, %v4466, 0.0
      %4531 = vadd.xlane.f32.xlu0 %v4530
      %v4532 = vpop.xlane.xlu0 %4531
      %v4533 = vsel %vm2414, %v4468, 0.0
      %4534 = vadd.xlane.f32.xlu0 %v4533
      %v4535 = vpop.xlane.xlu0 %4534
      %v4536 = vsel %vm2414, %v4470, 0.0
      %4537 = vadd.xlane.f32.xlu0 %v4536
      %v4538 = vpop.xlane.xlu0 %4537
      %v4539 = vsel %vm2414, %v4472, 0.0
      %4540 = vadd.xlane.f32.xlu0 %v4539
      %v4541 = vpop.xlane.xlu0 %4540
      %v4542 = vsel %vm2414, %v4474, 0.0
      %4543 = vadd.xlane.f32.xlu0 %v4542
      %v4544 = vpop.xlane.xlu0 %4543
      %v4545 = vsel %vm2414, %v4476, 0.0
      %4546 = vadd.xlane.f32.xlu0 %v4545
      %v4547 = vpop.xlane.xlu0 %4546
      %v4548 = vsel %vm2414, %v4478, 0.0
      %4549 = vadd.xlane.f32.xlu0 %v4548
      %v4550 = vpop.xlane.xlu0 %4549
      %v4551 = vsel %vm2414, %v4480, 0.0
      %4552 = vadd.xlane.f32.xlu0 %v4551
      %v4553 = vpop.xlane.xlu0 %4552
      %v4554 = vsel %vm2414, %v4482, 0.0
      %4555 = vadd.xlane.f32.xlu0 %v4554
      %v4556 = vpop.xlane.xlu0 %4555
      %v4557 = vsel %vm2414, %v4484, 0.0
      %4558 = vadd.xlane.f32.xlu0 %v4557
      %v4559 = vpop.xlane.xlu0 %4558
      %v4560 = vsel %vm2414, %v4486, 0.0
      %4561 = vadd.xlane.f32.xlu0 %v4560
      %v4562 = vpop.xlane.xlu0 %4561
      %v4563 = vsel %vm2414, %v4488, 0.0
      %4564 = vadd.xlane.f32.xlu0 %v4563
      %v4565 = vpop.xlane.xlu0 %4564
      %v4566 = vsel %vm2414, %v4490, 0.0
      %4567 = vadd.xlane.f32.xlu0 %v4566
      %v4568 = vpop.xlane.xlu0 %4567
      %v4569 = vsel %vm2414, %v4492, 0.0
      %4570 = vadd.xlane.f32.xlu0 %v4569
      %v4571 = vpop.xlane.xlu0 %4570
      %v4572 = vsel %vm2414, %v4494, 0.0
      %4573 = vadd.xlane.f32.xlu0 %v4572
      %v4574 = vpop.xlane.xlu0 %4573
      %v4575 = vsel %vm2414, %v4496, 0.0
      %4576 = vadd.xlane.f32.xlu0 %v4575
      %v4577 = vpop.xlane.xlu0 %4576
      %v4578 = vsel %vm2414, %v4498, 0.0
      %4579 = vadd.xlane.f32.xlu0 %v4578
      %v4580 = vpop.xlane.xlu0 %4579
      %v4581 = vsel %vm2414, %v4500, 0.0
      %4582 = vadd.xlane.f32.xlu0 %v4581
      %v4583 = vpop.xlane.xlu0 %4582
      %v4584 = vsel %vm2414, %v4502, 0.0
      %4585 = vadd.xlane.f32.xlu0 %v4584
      %v4586 = vpop.xlane.xlu0 %4585
      %v4587 = vsel %vm2414, %v4504, 0.0
      %4588 = vadd.xlane.f32.xlu0 %v4587
      %v4589 = vpop.xlane.xlu0 %4588
      %v4590 = vsel %vm2414, %v4506, 0.0
      %4591 = vadd.xlane.f32.xlu0 %v4590
      %v4592 = vpop.xlane.xlu0 %4591
      %v4593 = vsel %vm2414, %v4508, 0.0
      %4594 = vadd.xlane.f32.xlu0 %v4593
      %v4595 = vpop.xlane.xlu0 %4594
      %v4596 = vsel %vm2414, %v4510, 0.0
      %4597 = vadd.xlane.f32.xlu0 %v4596
      %v4598 = vpop.xlane.xlu0 %4597
      %v4599 = vsel %vm2414, %v4512, 0.0
      %4600 = vadd.xlane.f32.xlu0 %v4599
      %v4601 = vpop.xlane.xlu0 %4600
      %v4602 = vsel %vm2414, %v4514, 0.0
      %4603 = vadd.xlane.f32.xlu0 %v4602
      %v4604 = vpop.xlane.xlu0 %4603
      %v4605 = vsel %vm2414, %v4516, 0.0
      %4606 = vadd.xlane.f32.xlu0 %v4605
      %v4607 = vpop.xlane.xlu0 %4606
      %v4608 = vsel %vm2414, %v4518, 0.0
      %4609 = vadd.xlane.f32.xlu0 %v4608
      %v4610 = vpop.xlane.xlu0 %4609
      %v4611 = vsel %vm2414, %v4520, 0.0
      %4612 = vadd.xlane.f32.xlu0 %v4611
      %v4613 = vpop.xlane.xlu0 %4612
      %v4614 = vsel %vm2414, %v4522, 0.0
      %4615 = vadd.xlane.f32.xlu0 %v4614
      %v4616 = vpop.xlane.xlu0 %4615
      %v4617 = vsel %vm2414, %v4524, 0.0
      %4618 = vadd.xlane.f32.xlu0 %v4617
      %v4619 = vpop.xlane.xlu0 %4618
      %v4620 = vsel %vm2414, %v4526, 0.0
      %4621 = vadd.xlane.f32.xlu0 %v4620
      %v4622 = vpop.xlane.xlu0 %4621
      %v4623 = vrcp.pop %v4529
      %v4624 = vrcp.pop %v4532
      %v4625 = vrcp.pop %v4535
      %v4626 = vrcp.pop %v4538
      %v4627 = vrcp.pop %v4541
      %v4628 = vrcp.pop %v4544
      %v4629 = vrcp.pop %v4547
      %v4630 = vrcp.pop %v4550
      %v4631 = vrcp.pop %v4553
      %v4632 = vrcp.pop %v4556
      %v4633 = vrcp.pop %v4559
      %v4634 = vrcp.pop %v4562
      %v4635 = vrcp.pop %v4565
      %v4636 = vrcp.pop %v4568
      %v4637 = vrcp.pop %v4571
      %v4638 = vrcp.pop %v4574
      %v4639 = vrcp.pop %v4577
      %v4640 = vrcp.pop %v4580
      %v4641 = vrcp.pop %v4583
      %v4642 = vrcp.pop %v4586
      %v4643 = vrcp.pop %v4589
      %v4644 = vrcp.pop %v4592
      %v4645 = vrcp.pop %v4595
      %v4646 = vrcp.pop %v4598
      %v4647 = vrcp.pop %v4601
      %v4648 = vrcp.pop %v4604
      %v4649 = vrcp.pop %v4607
      %v4650 = vrcp.pop %v4610
      %v4651 = vrcp.pop %v4613
      %v4652 = vrcp.pop %v4616
      %v4653 = vrcp.pop %v4619
      %v4654 = vrcp.pop %v4622
      %v4655 = vmul.f32 %v4464, %v4623
      %v4656 = vmul.f32 %v4466, %v4624
      %v4657 = vmul.f32 %v4468, %v4625
      %v4658 = vmul.f32 %v4470, %v4626
      %v4659 = vmul.f32 %v4472, %v4627
      %v4660 = vmul.f32 %v4474, %v4628
      %v4661 = vmul.f32 %v4476, %v4629
      %v4662 = vmul.f32 %v4478, %v4630
      %v4663 = vmul.f32 %v4480, %v4631
      %v4664 = vmul.f32 %v4482, %v4632
      %v4665 = vmul.f32 %v4484, %v4633
      %v4666 = vmul.f32 %v4486, %v4634
      %v4667 = vmul.f32 %v4488, %v4635
      %v4668 = vmul.f32 %v4490, %v4636
      %v4669 = vmul.f32 %v4492, %v4637
      %v4670 = vmul.f32 %v4494, %v4638
      %v4671 = vmul.f32 %v4496, %v4639
      %v4672 = vmul.f32 %v4498, %v4640
      %v4673 = vmul.f32 %v4500, %v4641
      %v4674 = vmul.f32 %v4502, %v4642
      %v4675 = vmul.f32 %v4504, %v4643
      %v4676 = vmul.f32 %v4506, %v4644
      %v4677 = vmul.f32 %v4508, %v4645
      %v4678 = vmul.f32 %v4510, %v4646
      %v4679 = vmul.f32 %v4512, %v4647
      %v4680 = vmul.f32 %v4514, %v4648
      %v4681 = vmul.f32 %v4516, %v4649
      %v4682 = vmul.f32 %v4518, %v4650
      %v4683 = vmul.f32 %v4520, %v4651
      %v4684 = vmul.f32 %v4522, %v4652
      %v4685 = vmul.f32 %v4524, %v4653
      %v4686 = vmul.f32 %v4526, %v4654
      %v4687 = vpack.c.bf16 %v4656, %v4655
      %v4688 = vpack.c.bf16 %v4658, %v4657
      %v4689 = vpack.c.bf16 %v4660, %v4659
      %v4690 = vpack.c.bf16 %v4662, %v4661
      %v4691 = vpack.c.bf16 %v4664, %v4663
      %v4692 = vpack.c.bf16 %v4666, %v4665
      %v4693 = vpack.c.bf16 %v4668, %v4667
      %v4694 = vpack.c.bf16 %v4670, %v4669
      %v4695 = vpack.c.bf16 %v4672, %v4671
      %v4696 = vpack.c.bf16 %v4674, %v4673
      %v4697 = vpack.c.bf16 %v4676, %v4675
      %v4698 = vpack.c.bf16 %v4678, %v4677
      %v4699 = vpack.c.bf16 %v4680, %v4679
      %v4700 = vpack.c.bf16 %v4682, %v4681
      %v4701 = vpack.c.bf16 %v4684, %v4683
      %v4702 = vpack.c.bf16 %v4686, %v4685
      %4704 = vrot.lane.b32.xlu0 %v1398, 96
      %v4705 = vpop.permute.xlu0 %4704
      %v4708 = vsel %vm2414, %v4687, 0
      %4710 = vmatprep.subr.bf16.mxu0 0
      %4711 = vmatpush1.bf16.msra.mxu0 %v4705
      %4712 = vmatprep.subr.bf16.mxu0 0
      %4713 = vmatpush1.bf16.msra.mxu0 0
      %4714 = vmatprep.subr.bf16.mxu0 0
      %4715 = vmatpush1.bf16.msra.mxu0 0
      %4716 = vmatprep.subr.bf16.mxu0 0
      %4717 = vmatpush1.bf16.msra.mxu0 0
      %4718 = vmatprep.subr.bf16.mxu0 0
      %4719 = vmatpush1.bf16.msra.mxu0 0
      %4720 = vmatprep.subr.bf16.mxu0 0
      %4721 = vmatpush1.bf16.msra.mxu0 0
      %4722 = vmatprep.subr.bf16.mxu0 0
      %4723 = vmatpush1.bf16.msra.mxu0 0
      %4724 = vmatprep.subr.bf16.mxu0 0
      %4725 = vmatpush1.bf16.msra.mxu0 0
      %4726 = vmatprep.subr.bf16.mxu0 0
      %4727 = vmatpush1.bf16.msra.mxu0 0
      %4728 = vmatprep.subr.bf16.mxu0 0
      %4729 = vmatpush1.bf16.msra.mxu0 0
      %4730 = vmatprep.subr.bf16.mxu0 0
      %4731 = vmatpush1.bf16.msra.mxu0 0
      %4732 = vmatprep.subr.bf16.mxu0 0
      %4733 = vmatpush1.bf16.msra.mxu0 0
      %4734 = vmatprep.subr.bf16.mxu0 0
      %4735 = vmatpush1.bf16.msra.mxu0 0
      %4736 = vmatprep.subr.bf16.mxu0 0
      %4737 = vmatpush1.bf16.msra.mxu0 0
      %4738 = vmatprep.subr.bf16.mxu0 0
      %4739 = vmatpush1.bf16.msra.mxu0 0
      %4740 = vmatprep.subr.bf16.mxu0 0
      %4741 = vmatpush1.bf16.msra.mxu0 0
      %4742 = vmatprep.mubr.bf16.mxu0 0
      %4743 = vmatmul.mubr.bf16.gmra.mrb[0].mxu0 %v4708
      %v4744 = vpop.f32.mrb[0].mxu0
      %v4745 = vadd.f32 0.0, %v4744
      %v4746 = vpop.f32.mrb[0].mxu0
      %v4747 = vpop.f32.mrb[0].mxu0
      %v4748 = vadd.f32 0.0, %v4747
      %v4749 = vpop.f32.mrb[0].mxu0
      %4750 = vdwg.mxu0
      %4752 = vrot.lane.b32.xlu0 %v1399, 96
      %v4753 = vpop.permute.xlu0 %4752
      %v4756 = vsel %vm2414, %v4688, 0
      %4758 = vmatprep.subr.bf16.mxu0 0
      %4759 = vmatpush1.bf16.msra.mxu0 %v4753
      %4760 = vmatprep.subr.bf16.mxu0 0
      %4761 = vmatpush1.bf16.msra.mxu0 0
      %4762 = vmatprep.subr.bf16.mxu0 0
      %4763 = vmatpush1.bf16.msra.mxu0 0
      %4764 = vmatprep.subr.bf16.mxu0 0
      %4765 = vmatpush1.bf16.msra.mxu0 0
      %4766 = vmatprep.subr.bf16.mxu0 0
      %4767 = vmatpush1.bf16.msra.mxu0 0
      %4768 = vmatprep.subr.bf16.mxu0 0
      %4769 = vmatpush1.bf16.msra.mxu0 0
      %4770 = vmatprep.subr.bf16.mxu0 0
      %4771 = vmatpush1.bf16.msra.mxu0 0
      %4772 = vmatprep.subr.bf16.mxu0 0
      %4773 = vmatpush1.bf16.msra.mxu0 0
      %4774 = vmatprep.subr.bf16.mxu0 0
      %4775 = vmatpush1.bf16.msra.mxu0 0
      %4776 = vmatprep.subr.bf16.mxu0 0
      %4777 = vmatpush1.bf16.msra.mxu0 0
      %4778 = vmatprep.subr.bf16.mxu0 0
      %4779 = vmatpush1.bf16.msra.mxu0 0
      %4780 = vmatprep.subr.bf16.mxu0 0
      %4781 = vmatpush1.bf16.msra.mxu0 0
      %4782 = vmatprep.subr.bf16.mxu0 0
      %4783 = vmatpush1.bf16.msra.mxu0 0
      %4784 = vmatprep.subr.bf16.mxu0 0
      %4785 = vmatpush1.bf16.msra.mxu0 0
      %4786 = vmatprep.subr.bf16.mxu0 0
      %4787 = vmatpush1.bf16.msra.mxu0 0
      %4788 = vmatprep.subr.bf16.mxu0 0
      %4789 = vmatpush1.bf16.msra.mxu0 0
      %4790 = vmatprep.mubr.bf16.mxu0 0
      %4791 = vmatmul.mubr.bf16.gmra.mrb[0].mxu0 %v4756
      %v4792 = vpop.f32.mrb[0].mxu0
      %v4793 = vadd.f32 0.0, %v4792
      %v4794 = vpop.f32.mrb[0].mxu0
      %v4795 = vpop.f32.mrb[0].mxu0
      %v4796 = vadd.f32 0.0, %v4795
      %v4797 = vpop.f32.mrb[0].mxu0
      %4798 = vdwg.mxu0
      %4800 = vrot.lane.b32.xlu0 %v1400, 96
      %v4801 = vpop.permute.xlu0 %4800
      %v4804 = vsel %vm2414, %v4689, 0
      %4806 = vmatprep.subr.bf16.mxu0 0
      %4807 = vmatpush1.bf16.msra.mxu0 %v4801
      %4808 = vmatprep.subr.bf16.mxu0 0
      %4809 = vmatpush1.bf16.msra.mxu0 0
      %4810 = vmatprep.subr.bf16.mxu0 0
      %4811 = vmatpush1.bf16.msra.mxu0 0
      %4812 = vmatprep.subr.bf16.mxu0 0
      %4813 = vmatpush1.bf16.msra.mxu0 0
      %4814 = vmatprep.subr.bf16.mxu0 0
      %4815 = vmatpush1.bf16.msra.mxu0 0
      %4816 = vmatprep.subr.bf16.mxu0 0
      %4817 = vmatpush1.bf16.msra.mxu0 0
      %4818 = vmatprep.subr.bf16.mxu0 0
      %4819 = vmatpush1.bf16.msra.mxu0 0
      %4820 = vmatprep.subr.bf16.mxu0 0
      %4821 = vmatpush1.bf16.msra.mxu0 0
      %4822 = vmatprep.subr.bf16.mxu0 0
      %4823 = vmatpush1.bf16.msra.mxu0 0
      %4824 = vmatprep.subr.bf16.mxu0 0
      %4825 = vmatpush1.bf16.msra.mxu0 0
      %4826 = vmatprep.subr.bf16.mxu0 0
      %4827 = vmatpush1.bf16.msra.mxu0 0
      %4828 = vmatprep.subr.bf16.mxu0 0
      %4829 = vmatpush1.bf16.msra.mxu0 0
      %4830 = vmatprep.subr.bf16.mxu0 0
      %4831 = vmatpush1.bf16.msra.mxu0 0
      %4832 = vmatprep.subr.bf16.mxu0 0
      %4833 = vmatpush1.bf16.msra.mxu0 0
      %4834 = vmatprep.subr.bf16.mxu0 0
      %4835 = vmatpush1.bf16.msra.mxu0 0
      %4836 = vmatprep.subr.bf16.mxu0 0
      %4837 = vmatpush1.bf16.msra.mxu0 0
      %4838 = vmatprep.mubr.bf16.mxu0 0
      %4839 = vmatmul.mubr.bf16.gmra.mrb[0].mxu0 %v4804
      %v4840 = vpop.f32.mrb[0].mxu0
      %v4841 = vadd.f32 0.0, %v4840
      %v4842 = vpop.f32.mrb[0].mxu0
      %v4843 = vpop.f32.mrb[0].mxu0
      %v4844 = vadd.f32 0.0, %v4843
      %v4845 = vpop.f32.mrb[0].mxu0
      %4846 = vdwg.mxu0
      %4848 = vrot.lane.b32.xlu0 %v1401, 96
      %v4849 = vpop.permute.xlu0 %4848
      %v4852 = vsel %vm2414, %v4690, 0
      %4854 = vmatprep.subr.bf16.mxu0 0
      %4855 = vmatpush1.bf16.msra.mxu0 %v4849
      %4856 = vmatprep.subr.bf16.mxu0 0
      %4857 = vmatpush1.bf16.msra.mxu0 0
      %4858 = vmatprep.subr.bf16.mxu0 0
      %4859 = vmatpush1.bf16.msra.mxu0 0
      %4860 = vmatprep.subr.bf16.mxu0 0
      %4861 = vmatpush1.bf16.msra.mxu0 0
      %4862 = vmatprep.subr.bf16.mxu0 0
      %4863 = vmatpush1.bf16.msra.mxu0 0
      %4864 = vmatprep.subr.bf16.mxu0 0
      %4865 = vmatpush1.bf16.msra.mxu0 0
      %4866 = vmatprep.subr.bf16.mxu0 0
      %4867 = vmatpush1.bf16.msra.mxu0 0
      %4868 = vmatprep.subr.bf16.mxu0 0
      %4869 = vmatpush1.bf16.msra.mxu0 0
      %4870 = vmatprep.subr.bf16.mxu0 0
      %4871 = vmatpush1.bf16.msra.mxu0 0
      %4872 = vmatprep.subr.bf16.mxu0 0
      %4873 = vmatpush1.bf16.msra.mxu0 0
      %4874 = vmatprep.subr.bf16.mxu0 0
      %4875 = vmatpush1.bf16.msra.mxu0 0
      %4876 = vmatprep.subr.bf16.mxu0 0
      %4877 = vmatpush1.bf16.msra.mxu0 0
      %4878 = vmatprep.subr.bf16.mxu0 0
      %4879 = vmatpush1.bf16.msra.mxu0 0
      %4880 = vmatprep.subr.bf16.mxu0 0
      %4881 = vmatpush1.bf16.msra.mxu0 0
      %4882 = vmatprep.subr.bf16.mxu0 0
      %4883 = vmatpush1.bf16.msra.mxu0 0
      %4884 = vmatprep.subr.bf16.mxu0 0
      %4885 = vmatpush1.bf16.msra.mxu0 0
      %4886 = vmatprep.mubr.bf16.mxu0 0
      %4887 = vmatmul.mubr.bf16.gmra.mrb[0].mxu0 %v4852
      %v4888 = vpop.f32.mrb[0].mxu0
      %v4889 = vadd.f32 0.0, %v4888
      %v4890 = vpop.f32.mrb[0].mxu0
      %v4891 = vpop.f32.mrb[0].mxu0
      %v4892 = vadd.f32 0.0, %v4891
      %v4893 = vpop.f32.mrb[0].mxu0
      %4894 = vdwg.mxu0
      %4896 = vrot.lane.b32.xlu0 %v1402, 96
      %v4897 = vpop.permute.xlu0 %4896
      %v4900 = vsel %vm2414, %v4691, 0
      %4902 = vmatprep.subr.bf16.mxu0 0
      %4903 = vmatpush1.bf16.msra.mxu0 %v4897
      %4904 = vmatprep.subr.bf16.mxu0 0
      %4905 = vmatpush1.bf16.msra.mxu0 0
      %4906 = vmatprep.subr.bf16.mxu0 0
      %4907 = vmatpush1.bf16.msra.mxu0 0
      %4908 = vmatprep.subr.bf16.mxu0 0
      %4909 = vmatpush1.bf16.msra.mxu0 0
      %4910 = vmatprep.subr.bf16.mxu0 0
      %4911 = vmatpush1.bf16.msra.mxu0 0
      %4912 = vmatprep.subr.bf16.mxu0 0
      %4913 = vmatpush1.bf16.msra.mxu0 0
      %4914 = vmatprep.subr.bf16.mxu0 0
      %4915 = vmatpush1.bf16.msra.mxu0 0
      %4916 = vmatprep.subr.bf16.mxu0 0
      %4917 = vmatpush1.bf16.msra.mxu0 0
      %4918 = vmatprep.subr.bf16.mxu0 0
      %4919 = vmatpush1.bf16.msra.mxu0 0
      %4920 = vmatprep.subr.bf16.mxu0 0
      %4921 = vmatpush1.bf16.msra.mxu0 0
      %4922 = vmatprep.subr.bf16.mxu0 0
      %4923 = vmatpush1.bf16.msra.mxu0 0
      %4924 = vmatprep.subr.bf16.mxu0 0
      %4925 = vmatpush1.bf16.msra.mxu0 0
      %4926 = vmatprep.subr.bf16.mxu0 0
      %4927 = vmatpush1.bf16.msra.mxu0 0
      %4928 = vmatprep.subr.bf16.mxu0 0
      %4929 = vmatpush1.bf16.msra.mxu0 0
      %4930 = vmatprep.subr.bf16.mxu0 0
      %4931 = vmatpush1.bf16.msra.mxu0 0
      %4932 = vmatprep.subr.bf16.mxu0 0
      %4933 = vmatpush1.bf16.msra.mxu0 0
      %4934 = vmatprep.mubr.bf16.mxu0 0
      %4935 = vmatmul.mubr.bf16.gmra.mrb[0].mxu0 %v4900
      %v4936 = vpop.f32.mrb[0].mxu0
      %v4937 = vadd.f32 0.0, %v4936
      %v4938 = vpop.f32.mrb[0].mxu0
      %v4939 = vpop.f32.mrb[0].mxu0
      %v4940 = vadd.f32 0.0, %v4939
      %v4941 = vpop.f32.mrb[0].mxu0
      %4942 = vdwg.mxu0
      %4944 = vrot.lane.b32.xlu0 %v1403, 96
      %v4945 = vpop.permute.xlu0 %4944
      %v4948 = vsel %vm2414, %v4692, 0
      %4950 = vmatprep.subr.bf16.mxu0 0
      %4951 = vmatpush1.bf16.msra.mxu0 %v4945
      %4952 = vmatprep.subr.bf16.mxu0 0
      %4953 = vmatpush1.bf16.msra.mxu0 0
      %4954 = vmatprep.subr.bf16.mxu0 0
      %4955 = vmatpush1.bf16.msra.mxu0 0
      %4956 = vmatprep.subr.bf16.mxu0 0
      %4957 = vmatpush1.bf16.msra.mxu0 0
      %4958 = vmatprep.subr.bf16.mxu0 0
      %4959 = vmatpush1.bf16.msra.mxu0 0
      %4960 = vmatprep.subr.bf16.mxu0 0
      %4961 = vmatpush1.bf16.msra.mxu0 0
      %4962 = vmatprep.subr.bf16.mxu0 0
      %4963 = vmatpush1.bf16.msra.mxu0 0
      %4964 = vmatprep.subr.bf16.mxu0 0
      %4965 = vmatpush1.bf16.msra.mxu0 0
      %4966 = vmatprep.subr.bf16.mxu0 0
      %4967 = vmatpush1.bf16.msra.mxu0 0
      %4968 = vmatprep.subr.bf16.mxu0 0
      %4969 = vmatpush1.bf16.msra.mxu0 0
      %4970 = vmatprep.subr.bf16.mxu0 0
      %4971 = vmatpush1.bf16.msra.mxu0 0
      %4972 = vmatprep.subr.bf16.mxu0 0
      %4973 = vmatpush1.bf16.msra.mxu0 0
      %4974 = vmatprep.subr.bf16.mxu0 0
      %4975 = vmatpush1.bf16.msra.mxu0 0
      %4976 = vmatprep.subr.bf16.mxu0 0
      %4977 = vmatpush1.bf16.msra.mxu0 0
      %4978 = vmatprep.subr.bf16.mxu0 0
      %4979 = vmatpush1.bf16.msra.mxu0 0
      %4980 = vmatprep.subr.bf16.mxu0 0
      %4981 = vmatpush1.bf16.msra.mxu0 0
      %4982 = vmatprep.mubr.bf16.mxu0 0
      %4983 = vmatmul.mubr.bf16.gmra.mrb[0].mxu0 %v4948
      %v4984 = vpop.f32.mrb[0].mxu0
      %v4985 = vadd.f32 0.0, %v4984
      %v4986 = vpop.f32.mrb[0].mxu0
      %v4987 = vpop.f32.mrb[0].mxu0
      %v4988 = vadd.f32 0.0, %v4987
      %v4989 = vpop.f32.mrb[0].mxu0
      %4990 = vdwg.mxu0
      %4992 = vrot.lane.b32.xlu0 %v1404, 96
      %v4993 = vpop.permute.xlu0 %4992
      %v4996 = vsel %vm2414, %v4693, 0
      %4998 = vmatprep.subr.bf16.mxu0 0
      %4999 = vmatpush1.bf16.msra.mxu0 %v4993
      %5000 = vmatprep.subr.bf16.mxu0 0
      %5001 = vmatpush1.bf16.msra.mxu0 0
      %5002 = vmatprep.subr.bf16.mxu0 0
      %5003 = vmatpush1.bf16.msra.mxu0 0
      %5004 = vmatprep.subr.bf16.mxu0 0
      %5005 = vmatpush1.bf16.msra.mxu0 0
      %5006 = vmatprep.subr.bf16.mxu0 0
      %5007 = vmatpush1.bf16.msra.mxu0 0
      %5008 = vmatprep.subr.bf16.mxu0 0
      %5009 = vmatpush1.bf16.msra.mxu0 0
      %5010 = vmatprep.subr.bf16.mxu0 0
      %5011 = vmatpush1.bf16.msra.mxu0 0
      %5012 = vmatprep.subr.bf16.mxu0 0
      %5013 = vmatpush1.bf16.msra.mxu0 0
      %5014 = vmatprep.subr.bf16.mxu0 0
      %5015 = vmatpush1.bf16.msra.mxu0 0
      %5016 = vmatprep.subr.bf16.mxu0 0
      %5017 = vmatpush1.bf16.msra.mxu0 0
      %5018 = vmatprep.subr.bf16.mxu0 0
      %5019 = vmatpush1.bf16.msra.mxu0 0
      %5020 = vmatprep.subr.bf16.mxu0 0
      %5021 = vmatpush1.bf16.msra.mxu0 0
      %5022 = vmatprep.subr.bf16.mxu0 0
      %5023 = vmatpush1.bf16.msra.mxu0 0
      %5024 = vmatprep.subr.bf16.mxu0 0
      %5025 = vmatpush1.bf16.msra.mxu0 0
      %5026 = vmatprep.subr.bf16.mxu0 0
      %5027 = vmatpush1.bf16.msra.mxu0 0
      %5028 = vmatprep.subr.bf16.mxu0 0
      %5029 = vmatpush1.bf16.msra.mxu0 0
      %5030 = vmatprep.mubr.bf16.mxu0 0
      %5031 = vmatmul.mubr.bf16.gmra.mrb[0].mxu0 %v4996
      %v5032 = vpop.f32.mrb[0].mxu0
      %v5033 = vadd.f32 0.0, %v5032
      %v5034 = vpop.f32.mrb[0].mxu0
      %v5035 = vpop.f32.mrb[0].mxu0
      %v5036 = vadd.f32 0.0, %v5035
      %v5037 = vpop.f32.mrb[0].mxu0
      %5038 = vdwg.mxu0
      %5040 = vrot.lane.b32.xlu0 %v1405, 96
      %v5041 = vpop.permute.xlu0 %5040
      %v5044 = vsel %vm2414, %v4694, 0
      %5046 = vmatprep.subr.bf16.mxu0 0
      %5047 = vmatpush1.bf16.msra.mxu0 %v5041
      %5048 = vmatprep.subr.bf16.mxu0 0
      %5049 = vmatpush1.bf16.msra.mxu0 0
      %5050 = vmatprep.subr.bf16.mxu0 0
      %5051 = vmatpush1.bf16.msra.mxu0 0
      %5052 = vmatprep.subr.bf16.mxu0 0
      %5053 = vmatpush1.bf16.msra.mxu0 0
      %5054 = vmatprep.subr.bf16.mxu0 0
      %5055 = vmatpush1.bf16.msra.mxu0 0
      %5056 = vmatprep.subr.bf16.mxu0 0
      %5057 = vmatpush1.bf16.msra.mxu0 0
      %5058 = vmatprep.subr.bf16.mxu0 0
      %5059 = vmatpush1.bf16.msra.mxu0 0
      %5060 = vmatprep.subr.bf16.mxu0 0
      %5061 = vmatpush1.bf16.msra.mxu0 0
      %5062 = vmatprep.subr.bf16.mxu0 0
      %5063 = vmatpush1.bf16.msra.mxu0 0
      %5064 = vmatprep.subr.bf16.mxu0 0
      %5065 = vmatpush1.bf16.msra.mxu0 0
      %5066 = vmatprep.subr.bf16.mxu0 0
      %5067 = vmatpush1.bf16.msra.mxu0 0
      %5068 = vmatprep.subr.bf16.mxu0 0
      %5069 = vmatpush1.bf16.msra.mxu0 0
      %5070 = vmatprep.subr.bf16.mxu0 0
      %5071 = vmatpush1.bf16.msra.mxu0 0
      %5072 = vmatprep.subr.bf16.mxu0 0
      %5073 = vmatpush1.bf16.msra.mxu0 0
      %5074 = vmatprep.subr.bf16.mxu0 0
      %5075 = vmatpush1.bf16.msra.mxu0 0
      %5076 = vmatprep.subr.bf16.mxu0 0
      %5077 = vmatpush1.bf16.msra.mxu0 0
      %5078 = vmatprep.mubr.bf16.mxu0 0
      %5079 = vmatmul.mubr.bf16.gmra.mrb[0].mxu0 %v5044
      %v5080 = vpop.f32.mrb[0].mxu0
      %v5081 = vadd.f32 0.0, %v5080
      %v5082 = vpop.f32.mrb[0].mxu0
      %v5083 = vpop.f32.mrb[0].mxu0
      %v5084 = vadd.f32 0.0, %v5083
      %v5085 = vpop.f32.mrb[0].mxu0
      %5086 = vdwg.mxu0
      %5088 = vrot.lane.b32.xlu0 %v1406, 96
      %v5089 = vpop.permute.xlu0 %5088
      %v5092 = vsel %vm2414, %v4695, 0
      %5094 = vmatprep.subr.bf16.mxu0 0
      %5095 = vmatpush1.bf16.msra.mxu0 %v5089
      %5096 = vmatprep.subr.bf16.mxu0 0
      %5097 = vmatpush1.bf16.msra.mxu0 0
      %5098 = vmatprep.subr.bf16.mxu0 0
      %5099 = vmatpush1.bf16.msra.mxu0 0
      %5100 = vmatprep.subr.bf16.mxu0 0
      %5101 = vmatpush1.bf16.msra.mxu0 0
      %5102 = vmatprep.subr.bf16.mxu0 0
      %5103 = vmatpush1.bf16.msra.mxu0 0
      %5104 = vmatprep.subr.bf16.mxu0 0
      %5105 = vmatpush1.bf16.msra.mxu0 0
      %5106 = vmatprep.subr.bf16.mxu0 0
      %5107 = vmatpush1.bf16.msra.mxu0 0
      %5108 = vmatprep.subr.bf16.mxu0 0
      %5109 = vmatpush1.bf16.msra.mxu0 0
      %5110 = vmatprep.subr.bf16.mxu0 0
      %5111 = vmatpush1.bf16.msra.mxu0 0
      %5112 = vmatprep.subr.bf16.mxu0 0
      %5113 = vmatpush1.bf16.msra.mxu0 0
      %5114 = vmatprep.subr.bf16.mxu0 0
      %5115 = vmatpush1.bf16.msra.mxu0 0
      %5116 = vmatprep.subr.bf16.mxu0 0
      %5117 = vmatpush1.bf16.msra.mxu0 0
      %5118 = vmatprep.subr.bf16.mxu0 0
      %5119 = vmatpush1.bf16.msra.mxu0 0
      %5120 = vmatprep.subr.bf16.mxu0 0
      %5121 = vmatpush1.bf16.msra.mxu0 0
      %5122 = vmatprep.subr.bf16.mxu0 0
      %5123 = vmatpush1.bf16.msra.mxu0 0
      %5124 = vmatprep.subr.bf16.mxu0 0
      %5125 = vmatpush1.bf16.msra.mxu0 0
      %5126 = vmatprep.mubr.bf16.mxu0 0
      %5127 = vmatmul.mubr.bf16.gmra.mrb[0].mxu0 %v5092
      %v5128 = vpop.f32.mrb[0].mxu0
      %v5129 = vadd.f32 0.0, %v5128
      %v5130 = vpop.f32.mrb[0].mxu0
      %v5131 = vpop.f32.mrb[0].mxu0
      %v5132 = vadd.f32 0.0, %v5131
      %v5133 = vpop.f32.mrb[0].mxu0
      %5134 = vdwg.mxu0
      %5136 = vrot.lane.b32.xlu0 %v1407, 96
      %v5137 = vpop.permute.xlu0 %5136
      %v5140 = vsel %vm2414, %v4696, 0
      %5142 = vmatprep.subr.bf16.mxu0 0
      %5143 = vmatpush1.bf16.msra.mxu0 %v5137
      %5144 = vmatprep.subr.bf16.mxu0 0
      %5145 = vmatpush1.bf16.msra.mxu0 0
      %5146 = vmatprep.subr.bf16.mxu0 0
      %5147 = vmatpush1.bf16.msra.mxu0 0
      %5148 = vmatprep.subr.bf16.mxu0 0
      %5149 = vmatpush1.bf16.msra.mxu0 0
      %5150 = vmatprep.subr.bf16.mxu0 0
      %5151 = vmatpush1.bf16.msra.mxu0 0
      %5152 = vmatprep.subr.bf16.mxu0 0
      %5153 = vmatpush1.bf16.msra.mxu0 0
      %5154 = vmatprep.subr.bf16.mxu0 0
      %5155 = vmatpush1.bf16.msra.mxu0 0
      %5156 = vmatprep.subr.bf16.mxu0 0
      %5157 = vmatpush1.bf16.msra.mxu0 0
      %5158 = vmatprep.subr.bf16.mxu0 0
      %5159 = vmatpush1.bf16.msra.mxu0 0
      %5160 = vmatprep.subr.bf16.mxu0 0
      %5161 = vmatpush1.bf16.msra.mxu0 0
      %5162 = vmatprep.subr.bf16.mxu0 0
      %5163 = vmatpush1.bf16.msra.mxu0 0
      %5164 = vmatprep.subr.bf16.mxu0 0
      %5165 = vmatpush1.bf16.msra.mxu0 0
      %5166 = vmatprep.subr.bf16.mxu0 0
      %5167 = vmatpush1.bf16.msra.mxu0 0
      %5168 = vmatprep.subr.bf16.mxu0 0
      %5169 = vmatpush1.bf16.msra.mxu0 0
      %5170 = vmatprep.subr.bf16.mxu0 0
      %5171 = vmatpush1.bf16.msra.mxu0 0
      %5172 = vmatprep.subr.bf16.mxu0 0
      %5173 = vmatpush1.bf16.msra.mxu0 0
      %5174 = vmatprep.mubr.bf16.mxu0 0
      %5175 = vmatmul.mubr.bf16.gmra.mrb[0].mxu0 %v5140
      %v5176 = vpop.f32.mrb[0].mxu0
      %v5177 = vadd.f32 0.0, %v5176
      %v5178 = vpop.f32.mrb[0].mxu0
      %v5179 = vpop.f32.mrb[0].mxu0
      %v5180 = vadd.f32 0.0, %v5179
      %v5181 = vpop.f32.mrb[0].mxu0
      %5182 = vdwg.mxu0
      %5184 = vrot.lane.b32.xlu0 %v1408, 96
      %v5185 = vpop.permute.xlu0 %5184
      %v5188 = vsel %vm2414, %v4697, 0
      %5190 = vmatprep.subr.bf16.mxu0 0
      %5191 = vmatpush1.bf16.msra.mxu0 %v5185
      %5192 = vmatprep.subr.bf16.mxu0 0
      %5193 = vmatpush1.bf16.msra.mxu0 0
      %5194 = vmatprep.subr.bf16.mxu0 0
      %5195 = vmatpush1.bf16.msra.mxu0 0
      %5196 = vmatprep.subr.bf16.mxu0 0
      %5197 = vmatpush1.bf16.msra.mxu0 0
      %5198 = vmatprep.subr.bf16.mxu0 0
      %5199 = vmatpush1.bf16.msra.mxu0 0
      %5200 = vmatprep.subr.bf16.mxu0 0
      %5201 = vmatpush1.bf16.msra.mxu0 0
      %5202 = vmatprep.subr.bf16.mxu0 0
      %5203 = vmatpush1.bf16.msra.mxu0 0
      %5204 = vmatprep.subr.bf16.mxu0 0
      %5205 = vmatpush1.bf16.msra.mxu0 0
      %5206 = vmatprep.subr.bf16.mxu0 0
      %5207 = vmatpush1.bf16.msra.mxu0 0
      %5208 = vmatprep.subr.bf16.mxu0 0
      %5209 = vmatpush1.bf16.msra.mxu0 0
      %5210 = vmatprep.subr.bf16.mxu0 0
      %5211 = vmatpush1.bf16.msra.mxu0 0
      %5212 = vmatprep.subr.bf16.mxu0 0
      %5213 = vmatpush1.bf16.msra.mxu0 0
      %5214 = vmatprep.subr.bf16.mxu0 0
      %5215 = vmatpush1.bf16.msra.mxu0 0
      %5216 = vmatprep.subr.bf16.mxu0 0
      %5217 = vmatpush1.bf16.msra.mxu0 0
      %5218 = vmatprep.subr.bf16.mxu0 0
      %5219 = vmatpush1.bf16.msra.mxu0 0
      %5220 = vmatprep.subr.bf16.mxu0 0
      %5221 = vmatpush1.bf16.msra.mxu0 0
      %5222 = vmatprep.mubr.bf16.mxu0 0
      %5223 = vmatmul.mubr.bf16.gmra.mrb[0].mxu0 %v5188
      %v5224 = vpop.f32.mrb[0].mxu0
      %v5225 = vadd.f32 0.0, %v5224
      %v5226 = vpop.f32.mrb[0].mxu0
      %v5227 = vpop.f32.mrb[0].mxu0
      %v5228 = vadd.f32 0.0, %v5227
      %v5229 = vpop.f32.mrb[0].mxu0
      %5230 = vdwg.mxu0
      %5232 = vrot.lane.b32.xlu0 %v1409, 96
      %v5233 = vpop.permute.xlu0 %5232
      %v5236 = vsel %vm2414, %v4698, 0
      %5238 = vmatprep.subr.bf16.mxu0 0
      %5239 = vmatpush1.bf16.msra.mxu0 %v5233
      %5240 = vmatprep.subr.bf16.mxu0 0
      %5241 = vmatpush1.bf16.msra.mxu0 0
      %5242 = vmatprep.subr.bf16.mxu0 0
      %5243 = vmatpush1.bf16.msra.mxu0 0
      %5244 = vmatprep.subr.bf16.mxu0 0
      %5245 = vmatpush1.bf16.msra.mxu0 0
      %5246 = vmatprep.subr.bf16.mxu0 0
      %5247 = vmatpush1.bf16.msra.mxu0 0
      %5248 = vmatprep.subr.bf16.mxu0 0
      %5249 = vmatpush1.bf16.msra.mxu0 0
      %5250 = vmatprep.subr.bf16.mxu0 0
      %5251 = vmatpush1.bf16.msra.mxu0 0
      %5252 = vmatprep.subr.bf16.mxu0 0
      %5253 = vmatpush1.bf16.msra.mxu0 0
      %5254 = vmatprep.subr.bf16.mxu0 0
      %5255 = vmatpush1.bf16.msra.mxu0 0
      %5256 = vmatprep.subr.bf16.mxu0 0
      %5257 = vmatpush1.bf16.msra.mxu0 0
      %5258 = vmatprep.subr.bf16.mxu0 0
      %5259 = vmatpush1.bf16.msra.mxu0 0
      %5260 = vmatprep.subr.bf16.mxu0 0
      %5261 = vmatpush1.bf16.msra.mxu0 0
      %5262 = vmatprep.subr.bf16.mxu0 0
      %5263 = vmatpush1.bf16.msra.mxu0 0
      %5264 = vmatprep.subr.bf16.mxu0 0
      %5265 = vmatpush1.bf16.msra.mxu0 0
      %5266 = vmatprep.subr.bf16.mxu0 0
      %5267 = vmatpush1.bf16.msra.mxu0 0
      %5268 = vmatprep.subr.bf16.mxu0 0
      %5269 = vmatpush1.bf16.msra.mxu0 0
      %5270 = vmatprep.mubr.bf16.mxu0 0
      %5271 = vmatmul.mubr.bf16.gmra.mrb[0].mxu0 %v5236
      %v5272 = vpop.f32.mrb[0].mxu0
      %v5273 = vadd.f32 0.0, %v5272
      %v5274 = vpop.f32.mrb[0].mxu0
      %v5275 = vpop.f32.mrb[0].mxu0
      %v5276 = vadd.f32 0.0, %v5275
      %v5277 = vpop.f32.mrb[0].mxu0
      %5278 = vdwg.mxu0
      %5280 = vrot.lane.b32.xlu0 %v1410, 96
      %v5281 = vpop.permute.xlu0 %5280
      %v5284 = vsel %vm2414, %v4699, 0
      %5286 = vmatprep.subr.bf16.mxu0 0
      %5287 = vmatpush1.bf16.msra.mxu0 %v5281
      %5288 = vmatprep.subr.bf16.mxu0 0
      %5289 = vmatpush1.bf16.msra.mxu0 0
      %5290 = vmatprep.subr.bf16.mxu0 0
      %5291 = vmatpush1.bf16.msra.mxu0 0
      %5292 = vmatprep.subr.bf16.mxu0 0
      %5293 = vmatpush1.bf16.msra.mxu0 0
      %5294 = vmatprep.subr.bf16.mxu0 0
      %5295 = vmatpush1.bf16.msra.mxu0 0
      %5296 = vmatprep.subr.bf16.mxu0 0
      %5297 = vmatpush1.bf16.msra.mxu0 0
      %5298 = vmatprep.subr.bf16.mxu0 0
      %5299 = vmatpush1.bf16.msra.mxu0 0
      %5300 = vmatprep.subr.bf16.mxu0 0
      %5301 = vmatpush1.bf16.msra.mxu0 0
      %5302 = vmatprep.subr.bf16.mxu0 0
      %5303 = vmatpush1.bf16.msra.mxu0 0
      %5304 = vmatprep.subr.bf16.mxu0 0
      %5305 = vmatpush1.bf16.msra.mxu0 0
      %5306 = vmatprep.subr.bf16.mxu0 0
      %5307 = vmatpush1.bf16.msra.mxu0 0
      %5308 = vmatprep.subr.bf16.mxu0 0
      %5309 = vmatpush1.bf16.msra.mxu0 0
      %5310 = vmatprep.subr.bf16.mxu0 0
      %5311 = vmatpush1.bf16.msra.mxu0 0
      %5312 = vmatprep.subr.bf16.mxu0 0
      %5313 = vmatpush1.bf16.msra.mxu0 0
      %5314 = vmatprep.subr.bf16.mxu0 0
      %5315 = vmatpush1.bf16.msra.mxu0 0
      %5316 = vmatprep.subr.bf16.mxu0 0
      %5317 = vmatpush1.bf16.msra.mxu0 0
      %5318 = vmatprep.mubr.bf16.mxu0 0
      %5319 = vmatmul.mubr.bf16.gmra.mrb[0].mxu0 %v5284
      %v5320 = vpop.f32.mrb[0].mxu0
      %v5321 = vadd.f32 0.0, %v5320
      %v5322 = vpop.f32.mrb[0].mxu0
      %v5323 = vpop.f32.mrb[0].mxu0
      %v5324 = vadd.f32 0.0, %v5323
      %v5325 = vpop.f32.mrb[0].mxu0
      %5326 = vdwg.mxu0
      %5328 = vrot.lane.b32.xlu0 %v1411, 96
      %v5329 = vpop.permute.xlu0 %5328
      %v5332 = vsel %vm2414, %v4700, 0
      %5334 = vmatprep.subr.bf16.mxu0 0
      %5335 = vmatpush1.bf16.msra.mxu0 %v5329
      %5336 = vmatprep.subr.bf16.mxu0 0
      %5337 = vmatpush1.bf16.msra.mxu0 0
      %5338 = vmatprep.subr.bf16.mxu0 0
      %5339 = vmatpush1.bf16.msra.mxu0 0
      %5340 = vmatprep.subr.bf16.mxu0 0
      %5341 = vmatpush1.bf16.msra.mxu0 0
      %5342 = vmatprep.subr.bf16.mxu0 0
      %5343 = vmatpush1.bf16.msra.mxu0 0
      %5344 = vmatprep.subr.bf16.mxu0 0
      %5345 = vmatpush1.bf16.msra.mxu0 0
      %5346 = vmatprep.subr.bf16.mxu0 0
      %5347 = vmatpush1.bf16.msra.mxu0 0
      %5348 = vmatprep.subr.bf16.mxu0 0
      %5349 = vmatpush1.bf16.msra.mxu0 0
      %5350 = vmatprep.subr.bf16.mxu0 0
      %5351 = vmatpush1.bf16.msra.mxu0 0
      %5352 = vmatprep.subr.bf16.mxu0 0
      %5353 = vmatpush1.bf16.msra.mxu0 0
      %5354 = vmatprep.subr.bf16.mxu0 0
      %5355 = vmatpush1.bf16.msra.mxu0 0
      %5356 = vmatprep.subr.bf16.mxu0 0
      %5357 = vmatpush1.bf16.msra.mxu0 0
      %5358 = vmatprep.subr.bf16.mxu0 0
      %5359 = vmatpush1.bf16.msra.mxu0 0
      %5360 = vmatprep.subr.bf16.mxu0 0
      %5361 = vmatpush1.bf16.msra.mxu0 0
      %5362 = vmatprep.subr.bf16.mxu0 0
      %5363 = vmatpush1.bf16.msra.mxu0 0
      %5364 = vmatprep.subr.bf16.mxu0 0
      %5365 = vmatpush1.bf16.msra.mxu0 0
      %5366 = vmatprep.mubr.bf16.mxu0 0
      %5367 = vmatmul.mubr.bf16.gmra.mrb[0].mxu0 %v5332
      %v5368 = vpop.f32.mrb[0].mxu0
      %v5369 = vadd.f32 0.0, %v5368
      %v5370 = vpop.f32.mrb[0].mxu0
      %v5371 = vpop.f32.mrb[0].mxu0
      %v5372 = vadd.f32 0.0, %v5371
      %v5373 = vpop.f32.mrb[0].mxu0
      %5374 = vdwg.mxu0
      %5376 = vrot.lane.b32.xlu0 %v1412, 96
      %v5377 = vpop.permute.xlu0 %5376
      %v5380 = vsel %vm2414, %v4701, 0
      %5382 = vmatprep.subr.bf16.mxu0 0
      %5383 = vmatpush1.bf16.msra.mxu0 %v5377
      %5384 = vmatprep.subr.bf16.mxu0 0
      %5385 = vmatpush1.bf16.msra.mxu0 0
      %5386 = vmatprep.subr.bf16.mxu0 0
      %5387 = vmatpush1.bf16.msra.mxu0 0
      %5388 = vmatprep.subr.bf16.mxu0 0
      %5389 = vmatpush1.bf16.msra.mxu0 0
      %5390 = vmatprep.subr.bf16.mxu0 0
      %5391 = vmatpush1.bf16.msra.mxu0 0
      %5392 = vmatprep.subr.bf16.mxu0 0
      %5393 = vmatpush1.bf16.msra.mxu0 0
      %5394 = vmatprep.subr.bf16.mxu0 0
      %5395 = vmatpush1.bf16.msra.mxu0 0
      %5396 = vmatprep.subr.bf16.mxu0 0
      %5397 = vmatpush1.bf16.msra.mxu0 0
      %5398 = vmatprep.subr.bf16.mxu0 0
      %5399 = vmatpush1.bf16.msra.mxu0 0
      %5400 = vmatprep.subr.bf16.mxu0 0
      %5401 = vmatpush1.bf16.msra.mxu0 0
      %5402 = vmatprep.subr.bf16.mxu0 0
      %5403 = vmatpush1.bf16.msra.mxu0 0
      %5404 = vmatprep.subr.bf16.mxu0 0
      %5405 = vmatpush1.bf16.msra.mxu0 0
      %5406 = vmatprep.subr.bf16.mxu0 0
      %5407 = vmatpush1.bf16.msra.mxu0 0
      %5408 = vmatprep.subr.bf16.mxu0 0
      %5409 = vmatpush1.bf16.msra.mxu0 0
      %5410 = vmatprep.subr.bf16.mxu0 0
      %5411 = vmatpush1.bf16.msra.mxu0 0
      %5412 = vmatprep.subr.bf16.mxu0 0
      %5413 = vmatpush1.bf16.msra.mxu0 0
      %5414 = vmatprep.mubr.bf16.mxu0 0
      %5415 = vmatmul.mubr.bf16.gmra.mrb[0].mxu0 %v5380
      %v5416 = vpop.f32.mrb[0].mxu0
      %v5417 = vadd.f32 0.0, %v5416
      %v5418 = vpop.f32.mrb[0].mxu0
      %v5419 = vpop.f32.mrb[0].mxu0
      %v5420 = vadd.f32 0.0, %v5419
      %v5421 = vpop.f32.mrb[0].mxu0
      %5422 = vdwg.mxu0
      %5424 = vrot.lane.b32.xlu0 %v1413, 96
      %v5425 = vpop.permute.xlu0 %5424
      %v5428 = vsel %vm2414, %v4702, 0
      %5430 = vmatprep.subr.bf16.mxu0 0
      %5431 = vmatpush1.bf16.msra.mxu0 %v5425
      %5432 = vmatprep.subr.bf16.mxu0 0
      %5433 = vmatpush1.bf16.msra.mxu0 0
      %5434 = vmatprep.subr.bf16.mxu0 0
      %5435 = vmatpush1.bf16.msra.mxu0 0
      %5436 = vmatprep.subr.bf16.mxu0 0
      %5437 = vmatpush1.bf16.msra.mxu0 0
      %5438 = vmatprep.subr.bf16.mxu0 0
      %5439 = vmatpush1.bf16.msra.mxu0 0
      %5440 = vmatprep.subr.bf16.mxu0 0
      %5441 = vmatpush1.bf16.msra.mxu0 0
      %5442 = vmatprep.subr.bf16.mxu0 0
      %5443 = vmatpush1.bf16.msra.mxu0 0
      %5444 = vmatprep.subr.bf16.mxu0 0
      %5445 = vmatpush1.bf16.msra.mxu0 0
      %5446 = vmatprep.subr.bf16.mxu0 0
      %5447 = vmatpush1.bf16.msra.mxu0 0
      %5448 = vmatprep.subr.bf16.mxu0 0
      %5449 = vmatpush1.bf16.msra.mxu0 0
      %5450 = vmatprep.subr.bf16.mxu0 0
      %5451 = vmatpush1.bf16.msra.mxu0 0
      %5452 = vmatprep.subr.bf16.mxu0 0
      %5453 = vmatpush1.bf16.msra.mxu0 0
      %5454 = vmatprep.subr.bf16.mxu0 0
      %5455 = vmatpush1.bf16.msra.mxu0 0
      %5456 = vmatprep.subr.bf16.mxu0 0
      %5457 = vmatpush1.bf16.msra.mxu0 0
      %5458 = vmatprep.subr.bf16.mxu0 0
      %5459 = vmatpush1.bf16.msra.mxu0 0
      %5460 = vmatprep.subr.bf16.mxu0 0
      %5461 = vmatpush1.bf16.msra.mxu0 0
      %5462 = vmatprep.mubr.bf16.mxu0 0
      %5463 = vmatmul.mubr.bf16.gmra.mrb[0].mxu0 %v5428
      %v5464 = vpop.f32.mrb[0].mxu0
      %v5465 = vadd.f32 0.0, %v5464
      %v5466 = vpop.f32.mrb[0].mxu0
      %v5467 = vpop.f32.mrb[0].mxu0
      %v5468 = vadd.f32 0.0, %v5467
      %v5469 = vpop.f32.mrb[0].mxu0
      %5470 = vdwg.mxu0
      %5471 = vrot.lane.b32.xlu0 %v1366, 64
      %v5472 = vpop.permute.xlu0 %5471
      %5473 = vrot.lane.b32.xlu0 %v1382, 64
      %v5474 = vpop.permute.xlu0 %5473
      %v5476 = vsel %vm514, %v5472, 0
      %v5479 = vsel %vm514, %v5474, 0
      %5481 = vmatprep.subr.bf16.mxu0 0
      %5482 = vmatpush1.bf16.xpose.msra.mxu0 %v5479
      %5483 = vmatprep.subr.bf16.mxu0 0
      %5484 = vmatpush1.bf16.xpose.msra.mxu0 0
      %5485 = vmatprep.subr.bf16.mxu0 0
      %5486 = vmatpush1.bf16.xpose.msra.mxu0 0
      %5487 = vmatprep.subr.bf16.mxu0 0
      %5488 = vmatpush1.bf16.xpose.msra.mxu0 0
      %5489 = vmatprep.subr.bf16.mxu0 0
      %5490 = vmatpush1.bf16.xpose.msra.mxu0 0
      %5491 = vmatprep.subr.bf16.mxu0 0
      %5492 = vmatpush1.bf16.xpose.msra.mxu0 0
      %5493 = vmatprep.subr.bf16.mxu0 0
      %5494 = vmatpush1.bf16.xpose.msra.mxu0 0
      %5495 = vmatprep.subr.bf16.mxu0 0
      %5496 = vmatpush1.bf16.xpose.msra.mxu0 0
      %5497 = vmatprep.subr.bf16.mxu0 0
      %5498 = vmatpush1.bf16.xpose.msra.mxu0 0
      %5499 = vmatprep.subr.bf16.mxu0 0
      %5500 = vmatpush1.bf16.xpose.msra.mxu0 0
      %5501 = vmatprep.subr.bf16.mxu0 0
      %5502 = vmatpush1.bf16.xpose.msra.mxu0 0
      %5503 = vmatprep.subr.bf16.mxu0 0
      %5504 = vmatpush1.bf16.xpose.msra.mxu0 0
      %5505 = vmatprep.subr.bf16.mxu0 0
      %5506 = vmatpush1.bf16.xpose.msra.mxu0 0
      %5507 = vmatprep.subr.bf16.mxu0 0
      %5508 = vmatpush1.bf16.xpose.msra.mxu0 0
      %5509 = vmatprep.subr.bf16.mxu0 0
      %5510 = vmatpush1.bf16.xpose.msra.mxu0 0
      %5511 = vmatprep.subr.bf16.mxu0 0
      %5512 = vmatpush1.bf16.xpose.msra.mxu0 0
      %5513 = vmatprep.mubr.bf16.mxu0 0
      %5514 = vmatmul.mubr.bf16.gmra.mrb[0].mxu0 %v5476
      %v5515 = vpop.f32.mrb[0].mxu0
      %v5516 = vadd.f32 %v1538, %v5515
      %v5517 = vpop.f32.mrb[0].mxu0
      %v5518 = vpop.f32.mrb[0].mxu0
      %v5519 = vadd.f32 %v1539, %v5518
      %v5520 = vpop.f32.mrb[0].mxu0
      %5521 = vdwg.mxu0
      %5522 = vrot.lane.b32.xlu0 %v1367, 64
      %v5523 = vpop.permute.xlu0 %5522
      %5524 = vrot.lane.b32.xlu0 %v1383, 64
      %v5525 = vpop.permute.xlu0 %5524
      %v5527 = vsel %vm514, %v5523, 0
      %v5530 = vsel %vm514, %v5525, 0
      %5532 = vmatprep.subr.bf16.mxu0 0
      %5533 = vmatpush1.bf16.xpose.msra.mxu0 %v5530
      %5534 = vmatprep.subr.bf16.mxu0 0
      %5535 = vmatpush1.bf16.xpose.msra.mxu0 0
      %5536 = vmatprep.subr.bf16.mxu0 0
      %5537 = vmatpush1.bf16.xpose.msra.mxu0 0
      %5538 = vmatprep.subr.bf16.mxu0 0
      %5539 = vmatpush1.bf16.xpose.msra.mxu0 0
      %5540 = vmatprep.subr.bf16.mxu0 0
      %5541 = vmatpush1.bf16.xpose.msra.mxu0 0
      %5542 = vmatprep.subr.bf16.mxu0 0
      %5543 = vmatpush1.bf16.xpose.msra.mxu0 0
      %5544 = vmatprep.subr.bf16.mxu0 0
      %5545 = vmatpush1.bf16.xpose.msra.mxu0 0
      %5546 = vmatprep.subr.bf16.mxu0 0
      %5547 = vmatpush1.bf16.xpose.msra.mxu0 0
      %5548 = vmatprep.subr.bf16.mxu0 0
      %5549 = vmatpush1.bf16.xpose.msra.mxu0 0
      %5550 = vmatprep.subr.bf16.mxu0 0
      %5551 = vmatpush1.bf16.xpose.msra.mxu0 0
      %5552 = vmatprep.subr.bf16.mxu0 0
      %5553 = vmatpush1.bf16.xpose.msra.mxu0 0
      %5554 = vmatprep.subr.bf16.mxu0 0
      %5555 = vmatpush1.bf16.xpose.msra.mxu0 0
      %5556 = vmatprep.subr.bf16.mxu0 0
      %5557 = vmatpush1.bf16.xpose.msra.mxu0 0
      %5558 = vmatprep.subr.bf16.mxu0 0
      %5559 = vmatpush1.bf16.xpose.msra.mxu0 0
      %5560 = vmatprep.subr.bf16.mxu0 0
      %5561 = vmatpush1.bf16.xpose.msra.mxu0 0
      %5562 = vmatprep.subr.bf16.mxu0 0
      %5563 = vmatpush1.bf16.xpose.msra.mxu0 0
      %5564 = vmatprep.mubr.bf16.mxu0 0
      %5565 = vmatmul.mubr.bf16.gmra.mrb[0].mxu0 %v5527
      %v5566 = vpop.f32.mrb[0].mxu0
      %v5567 = vadd.f32 %v1546, %v5566
      %v5568 = vpop.f32.mrb[0].mxu0
      %v5569 = vpop.f32.mrb[0].mxu0
      %v5570 = vadd.f32 %v1547, %v5569
      %v5571 = vpop.f32.mrb[0].mxu0
      %5572 = vdwg.mxu0
      %5573 = vrot.lane.b32.xlu0 %v1368, 64
      %v5574 = vpop.permute.xlu0 %5573
      %5575 = vrot.lane.b32.xlu0 %v1384, 64
      %v5576 = vpop.permute.xlu0 %5575
      %v5578 = vsel %vm514, %v5574, 0
      %v5581 = vsel %vm514, %v5576, 0
      %5583 = vmatprep.subr.bf16.mxu0 0
      %5584 = vmatpush1.bf16.xpose.msra.mxu0 %v5581
      %5585 = vmatprep.subr.bf16.mxu0 0
      %5586 = vmatpush1.bf16.xpose.msra.mxu0 0
      %5587 = vmatprep.subr.bf16.mxu0 0
      %5588 = vmatpush1.bf16.xpose.msra.mxu0 0
      %5589 = vmatprep.subr.bf16.mxu0 0
      %5590 = vmatpush1.bf16.xpose.msra.mxu0 0
      %5591 = vmatprep.subr.bf16.mxu0 0
      %5592 = vmatpush1.bf16.xpose.msra.mxu0 0
      %5593 = vmatprep.subr.bf16.mxu0 0
      %5594 = vmatpush1.bf16.xpose.msra.mxu0 0
      %5595 = vmatprep.subr.bf16.mxu0 0
      %5596 = vmatpush1.bf16.xpose.msra.mxu0 0
      %5597 = vmatprep.subr.bf16.mxu0 0
      %5598 = vmatpush1.bf16.xpose.msra.mxu0 0
      %5599 = vmatprep.subr.bf16.mxu0 0
      %5600 = vmatpush1.bf16.xpose.msra.mxu0 0
      %5601 = vmatprep.subr.bf16.mxu0 0
      %5602 = vmatpush1.bf16.xpose.msra.mxu0 0
      %5603 = vmatprep.subr.bf16.mxu0 0
      %5604 = vmatpush1.bf16.xpose.msra.mxu0 0
      %5605 = vmatprep.subr.bf16.mxu0 0
      %5606 = vmatpush1.bf16.xpose.msra.mxu0 0
      %5607 = vmatprep.subr.bf16.mxu0 0
      %5608 = vmatpush1.bf16.xpose.msra.mxu0 0
      %5609 = vmatprep.subr.bf16.mxu0 0
      %5610 = vmatpush1.bf16.xpose.msra.mxu0 0
      %5611 = vmatprep.subr.bf16.mxu0 0
      %5612 = vmatpush1.bf16.xpose.msra.mxu0 0
      %5613 = vmatprep.subr.bf16.mxu0 0
      %5614 = vmatpush1.bf16.xpose.msra.mxu0 0
      %5615 = vmatprep.mubr.bf16.mxu0 0
      %5616 = vmatmul.mubr.bf16.gmra.mrb[0].mxu0 %v5578
      %v5617 = vpop.f32.mrb[0].mxu0
      %v5618 = vadd.f32 %v1554, %v5617
      %v5619 = vpop.f32.mrb[0].mxu0
      %v5620 = vpop.f32.mrb[0].mxu0
      %v5621 = vadd.f32 %v1555, %v5620
      %v5622 = vpop.f32.mrb[0].mxu0
      %5623 = vdwg.mxu0
      %5624 = vrot.lane.b32.xlu0 %v1369, 64
      %v5625 = vpop.permute.xlu0 %5624
      %5626 = vrot.lane.b32.xlu0 %v1385, 64
      %v5627 = vpop.permute.xlu0 %5626
      %v5629 = vsel %vm514, %v5625, 0
      %v5632 = vsel %vm514, %v5627, 0
      %5634 = vmatprep.subr.bf16.mxu0 0
      %5635 = vmatpush1.bf16.xpose.msra.mxu0 %v5632
      %5636 = vmatprep.subr.bf16.mxu0 0
      %5637 = vmatpush1.bf16.xpose.msra.mxu0 0
      %5638 = vmatprep.subr.bf16.mxu0 0
      %5639 = vmatpush1.bf16.xpose.msra.mxu0 0
      %5640 = vmatprep.subr.bf16.mxu0 0
      %5641 = vmatpush1.bf16.xpose.msra.mxu0 0
      %5642 = vmatprep.subr.bf16.mxu0 0
      %5643 = vmatpush1.bf16.xpose.msra.mxu0 0
      %5644 = vmatprep.subr.bf16.mxu0 0
      %5645 = vmatpush1.bf16.xpose.msra.mxu0 0
      %5646 = vmatprep.subr.bf16.mxu0 0
      %5647 = vmatpush1.bf16.xpose.msra.mxu0 0
      %5648 = vmatprep.subr.bf16.mxu0 0
      %5649 = vmatpush1.bf16.xpose.msra.mxu0 0
      %5650 = vmatprep.subr.bf16.mxu0 0
      %5651 = vmatpush1.bf16.xpose.msra.mxu0 0
      %5652 = vmatprep.subr.bf16.mxu0 0
      %5653 = vmatpush1.bf16.xpose.msra.mxu0 0
      %5654 = vmatprep.subr.bf16.mxu0 0
      %5655 = vmatpush1.bf16.xpose.msra.mxu0 0
      %5656 = vmatprep.subr.bf16.mxu0 0
      %5657 = vmatpush1.bf16.xpose.msra.mxu0 0
      %5658 = vmatprep.subr.bf16.mxu0 0
      %5659 = vmatpush1.bf16.xpose.msra.mxu0 0
      %5660 = vmatprep.subr.bf16.mxu0 0
      %5661 = vmatpush1.bf16.xpose.msra.mxu0 0
      %5662 = vmatprep.subr.bf16.mxu0 0
      %5663 = vmatpush1.bf16.xpose.msra.mxu0 0
      %5664 = vmatprep.subr.bf16.mxu0 0
      %5665 = vmatpush1.bf16.xpose.msra.mxu0 0
      %5666 = vmatprep.mubr.bf16.mxu0 0
      %5667 = vmatmul.mubr.bf16.gmra.mrb[0].mxu0 %v5629
      %v5668 = vpop.f32.mrb[0].mxu0
      %v5669 = vadd.f32 %v1562, %v5668
      %v5670 = vpop.f32.mrb[0].mxu0
      %v5671 = vpop.f32.mrb[0].mxu0
      %v5672 = vadd.f32 %v1563, %v5671
      %v5673 = vpop.f32.mrb[0].mxu0
      %5674 = vdwg.mxu0
      %5675 = vrot.lane.b32.xlu0 %v1370, 64
      %v5676 = vpop.permute.xlu0 %5675
      %5677 = vrot.lane.b32.xlu0 %v1386, 64
      %v5678 = vpop.permute.xlu0 %5677
      %v5680 = vsel %vm514, %v5676, 0
      %v5683 = vsel %vm514, %v5678, 0
      %5685 = vmatprep.subr.bf16.mxu0 0
      %5686 = vmatpush1.bf16.xpose.msra.mxu0 %v5683
      %5687 = vmatprep.subr.bf16.mxu0 0
      %5688 = vmatpush1.bf16.xpose.msra.mxu0 0
      %5689 = vmatprep.subr.bf16.mxu0 0
      %5690 = vmatpush1.bf16.xpose.msra.mxu0 0
      %5691 = vmatprep.subr.bf16.mxu0 0
      %5692 = vmatpush1.bf16.xpose.msra.mxu0 0
      %5693 = vmatprep.subr.bf16.mxu0 0
      %5694 = vmatpush1.bf16.xpose.msra.mxu0 0
      %5695 = vmatprep.subr.bf16.mxu0 0
      %5696 = vmatpush1.bf16.xpose.msra.mxu0 0
      %5697 = vmatprep.subr.bf16.mxu0 0
      %5698 = vmatpush1.bf16.xpose.msra.mxu0 0
      %5699 = vmatprep.subr.bf16.mxu0 0
      %5700 = vmatpush1.bf16.xpose.msra.mxu0 0
      %5701 = vmatprep.subr.bf16.mxu0 0
      %5702 = vmatpush1.bf16.xpose.msra.mxu0 0
      %5703 = vmatprep.subr.bf16.mxu0 0
      %5704 = vmatpush1.bf16.xpose.msra.mxu0 0
      %5705 = vmatprep.subr.bf16.mxu0 0
      %5706 = vmatpush1.bf16.xpose.msra.mxu0 0
      %5707 = vmatprep.subr.bf16.mxu0 0
      %5708 = vmatpush1.bf16.xpose.msra.mxu0 0
      %5709 = vmatprep.subr.bf16.mxu0 0
      %5710 = vmatpush1.bf16.xpose.msra.mxu0 0
      %5711 = vmatprep.subr.bf16.mxu0 0
      %5712 = vmatpush1.bf16.xpose.msra.mxu0 0
      %5713 = vmatprep.subr.bf16.mxu0 0
      %5714 = vmatpush1.bf16.xpose.msra.mxu0 0
      %5715 = vmatprep.subr.bf16.mxu0 0
      %5716 = vmatpush1.bf16.xpose.msra.mxu0 0
      %5717 = vmatprep.mubr.bf16.mxu0 0
      %5718 = vmatmul.mubr.bf16.gmra.mrb[0].mxu0 %v5680
      %v5719 = vpop.f32.mrb[0].mxu0
      %v5720 = vadd.f32 %v1570, %v5719
      %v5721 = vpop.f32.mrb[0].mxu0
      %v5722 = vpop.f32.mrb[0].mxu0
      %v5723 = vadd.f32 %v1571, %v5722
      %v5724 = vpop.f32.mrb[0].mxu0
      %5725 = vdwg.mxu0
      %5726 = vrot.lane.b32.xlu0 %v1371, 64
      %v5727 = vpop.permute.xlu0 %5726
      %5728 = vrot.lane.b32.xlu0 %v1387, 64
      %v5729 = vpop.permute.xlu0 %5728
      %v5731 = vsel %vm514, %v5727, 0
      %v5734 = vsel %vm514, %v5729, 0
      %5736 = vmatprep.subr.bf16.mxu0 0
      %5737 = vmatpush1.bf16.xpose.msra.mxu0 %v5734
      %5738 = vmatprep.subr.bf16.mxu0 0
      %5739 = vmatpush1.bf16.xpose.msra.mxu0 0
      %5740 = vmatprep.subr.bf16.mxu0 0
      %5741 = vmatpush1.bf16.xpose.msra.mxu0 0
      %5742 = vmatprep.subr.bf16.mxu0 0
      %5743 = vmatpush1.bf16.xpose.msra.mxu0 0
      %5744 = vmatprep.subr.bf16.mxu0 0
      %5745 = vmatpush1.bf16.xpose.msra.mxu0 0
      %5746 = vmatprep.subr.bf16.mxu0 0
      %5747 = vmatpush1.bf16.xpose.msra.mxu0 0
      %5748 = vmatprep.subr.bf16.mxu0 0
      %5749 = vmatpush1.bf16.xpose.msra.mxu0 0
      %5750 = vmatprep.subr.bf16.mxu0 0
      %5751 = vmatpush1.bf16.xpose.msra.mxu0 0
      %5752 = vmatprep.subr.bf16.mxu0 0
      %5753 = vmatpush1.bf16.xpose.msra.mxu0 0
      %5754 = vmatprep.subr.bf16.mxu0 0
      %5755 = vmatpush1.bf16.xpose.msra.mxu0 0
      %5756 = vmatprep.subr.bf16.mxu0 0
      %5757 = vmatpush1.bf16.xpose.msra.mxu0 0
      %5758 = vmatprep.subr.bf16.mxu0 0
      %5759 = vmatpush1.bf16.xpose.msra.mxu0 0
      %5760 = vmatprep.subr.bf16.mxu0 0
      %5761 = vmatpush1.bf16.xpose.msra.mxu0 0
      %5762 = vmatprep.subr.bf16.mxu0 0
      %5763 = vmatpush1.bf16.xpose.msra.mxu0 0
      %5764 = vmatprep.subr.bf16.mxu0 0
      %5765 = vmatpush1.bf16.xpose.msra.mxu0 0
      %5766 = vmatprep.subr.bf16.mxu0 0
      %5767 = vmatpush1.bf16.xpose.msra.mxu0 0
      %5768 = vmatprep.mubr.bf16.mxu0 0
      %5769 = vmatmul.mubr.bf16.gmra.mrb[0].mxu0 %v5731
      %v5770 = vpop.f32.mrb[0].mxu0
      %v5771 = vadd.f32 %v1578, %v5770
      %v5772 = vpop.f32.mrb[0].mxu0
      %v5773 = vpop.f32.mrb[0].mxu0
      %v5774 = vadd.f32 %v1579, %v5773
      %v5775 = vpop.f32.mrb[0].mxu0
      %5776 = vdwg.mxu0
      %5777 = vrot.lane.b32.xlu0 %v1372, 64
      %v5778 = vpop.permute.xlu0 %5777
      %5779 = vrot.lane.b32.xlu0 %v1388, 64
      %v5780 = vpop.permute.xlu0 %5779
      %v5782 = vsel %vm514, %v5778, 0
      %v5785 = vsel %vm514, %v5780, 0
      %5787 = vmatprep.subr.bf16.mxu0 0
      %5788 = vmatpush1.bf16.xpose.msra.mxu0 %v5785
      %5789 = vmatprep.subr.bf16.mxu0 0
      %5790 = vmatpush1.bf16.xpose.msra.mxu0 0
      %5791 = vmatprep.subr.bf16.mxu0 0
      %5792 = vmatpush1.bf16.xpose.msra.mxu0 0
      %5793 = vmatprep.subr.bf16.mxu0 0
      %5794 = vmatpush1.bf16.xpose.msra.mxu0 0
      %5795 = vmatprep.subr.bf16.mxu0 0
      %5796 = vmatpush1.bf16.xpose.msra.mxu0 0
      %5797 = vmatprep.subr.bf16.mxu0 0
      %5798 = vmatpush1.bf16.xpose.msra.mxu0 0
      %5799 = vmatprep.subr.bf16.mxu0 0
      %5800 = vmatpush1.bf16.xpose.msra.mxu0 0
      %5801 = vmatprep.subr.bf16.mxu0 0
      %5802 = vmatpush1.bf16.xpose.msra.mxu0 0
      %5803 = vmatprep.subr.bf16.mxu0 0
      %5804 = vmatpush1.bf16.xpose.msra.mxu0 0
      %5805 = vmatprep.subr.bf16.mxu0 0
      %5806 = vmatpush1.bf16.xpose.msra.mxu0 0
      %5807 = vmatprep.subr.bf16.mxu0 0
      %5808 = vmatpush1.bf16.xpose.msra.mxu0 0
      %5809 = vmatprep.subr.bf16.mxu0 0
      %5810 = vmatpush1.bf16.xpose.msra.mxu0 0
      %5811 = vmatprep.subr.bf16.mxu0 0
      %5812 = vmatpush1.bf16.xpose.msra.mxu0 0
      %5813 = vmatprep.subr.bf16.mxu0 0
      %5814 = vmatpush1.bf16.xpose.msra.mxu0 0
      %5815 = vmatprep.subr.bf16.mxu0 0
      %5816 = vmatpush1.bf16.xpose.msra.mxu0 0
      %5817 = vmatprep.subr.bf16.mxu0 0
      %5818 = vmatpush1.bf16.xpose.msra.mxu0 0
      %5819 = vmatprep.mubr.bf16.mxu0 0
      %5820 = vmatmul.mubr.bf16.gmra.mrb[0].mxu0 %v5782
      %v5821 = vpop.f32.mrb[0].mxu0
      %v5822 = vadd.f32 %v1586, %v5821
      %v5823 = vpop.f32.mrb[0].mxu0
      %v5824 = vpop.f32.mrb[0].mxu0
      %v5825 = vadd.f32 %v1587, %v5824
      %v5826 = vpop.f32.mrb[0].mxu0
      %5827 = vdwg.mxu0
      %5828 = vrot.lane.b32.xlu0 %v1373, 64
      %v5829 = vpop.permute.xlu0 %5828
      %5830 = vrot.lane.b32.xlu0 %v1389, 64
      %v5831 = vpop.permute.xlu0 %5830
      %v5833 = vsel %vm514, %v5829, 0
      %v5836 = vsel %vm514, %v5831, 0
      %5838 = vmatprep.subr.bf16.mxu0 0
      %5839 = vmatpush1.bf16.xpose.msra.mxu0 %v5836
      %5840 = vmatprep.subr.bf16.mxu0 0
      %5841 = vmatpush1.bf16.xpose.msra.mxu0 0
      %5842 = vmatprep.subr.bf16.mxu0 0
      %5843 = vmatpush1.bf16.xpose.msra.mxu0 0
      %5844 = vmatprep.subr.bf16.mxu0 0
      %5845 = vmatpush1.bf16.xpose.msra.mxu0 0
      %5846 = vmatprep.subr.bf16.mxu0 0
      %5847 = vmatpush1.bf16.xpose.msra.mxu0 0
      %5848 = vmatprep.subr.bf16.mxu0 0
      %5849 = vmatpush1.bf16.xpose.msra.mxu0 0
      %5850 = vmatprep.subr.bf16.mxu0 0
      %5851 = vmatpush1.bf16.xpose.msra.mxu0 0
      %5852 = vmatprep.subr.bf16.mxu0 0
      %5853 = vmatpush1.bf16.xpose.msra.mxu0 0
      %5854 = vmatprep.subr.bf16.mxu0 0
      %5855 = vmatpush1.bf16.xpose.msra.mxu0 0
      %5856 = vmatprep.subr.bf16.mxu0 0
      %5857 = vmatpush1.bf16.xpose.msra.mxu0 0
      %5858 = vmatprep.subr.bf16.mxu0 0
      %5859 = vmatpush1.bf16.xpose.msra.mxu0 0
      %5860 = vmatprep.subr.bf16.mxu0 0
      %5861 = vmatpush1.bf16.xpose.msra.mxu0 0
      %5862 = vmatprep.subr.bf16.mxu0 0
      %5863 = vmatpush1.bf16.xpose.msra.mxu0 0
      %5864 = vmatprep.subr.bf16.mxu0 0
      %5865 = vmatpush1.bf16.xpose.msra.mxu0 0
      %5866 = vmatprep.subr.bf16.mxu0 0
      %5867 = vmatpush1.bf16.xpose.msra.mxu0 0
      %5868 = vmatprep.subr.bf16.mxu0 0
      %5869 = vmatpush1.bf16.xpose.msra.mxu0 0
      %5870 = vmatprep.mubr.bf16.mxu0 0
      %5871 = vmatmul.mubr.bf16.gmra.mrb[0].mxu0 %v5833
      %v5872 = vpop.f32.mrb[0].mxu0
      %v5873 = vadd.f32 %v1594, %v5872
      %v5874 = vpop.f32.mrb[0].mxu0
      %v5875 = vpop.f32.mrb[0].mxu0
      %v5876 = vadd.f32 %v1595, %v5875
      %v5877 = vpop.f32.mrb[0].mxu0
      %5878 = vdwg.mxu0
      %5879 = vrot.lane.b32.xlu0 %v1374, 64
      %v5880 = vpop.permute.xlu0 %5879
      %5881 = vrot.lane.b32.xlu0 %v1390, 64
      %v5882 = vpop.permute.xlu0 %5881
      %v5884 = vsel %vm514, %v5880, 0
      %v5887 = vsel %vm514, %v5882, 0
      %5889 = vmatprep.subr.bf16.mxu0 0
      %5890 = vmatpush1.bf16.xpose.msra.mxu0 %v5887
      %5891 = vmatprep.subr.bf16.mxu0 0
      %5892 = vmatpush1.bf16.xpose.msra.mxu0 0
      %5893 = vmatprep.subr.bf16.mxu0 0
      %5894 = vmatpush1.bf16.xpose.msra.mxu0 0
      %5895 = vmatprep.subr.bf16.mxu0 0
      %5896 = vmatpush1.bf16.xpose.msra.mxu0 0
      %5897 = vmatprep.subr.bf16.mxu0 0
      %5898 = vmatpush1.bf16.xpose.msra.mxu0 0
      %5899 = vmatprep.subr.bf16.mxu0 0
      %5900 = vmatpush1.bf16.xpose.msra.mxu0 0
      %5901 = vmatprep.subr.bf16.mxu0 0
      %5902 = vmatpush1.bf16.xpose.msra.mxu0 0
      %5903 = vmatprep.subr.bf16.mxu0 0
      %5904 = vmatpush1.bf16.xpose.msra.mxu0 0
      %5905 = vmatprep.subr.bf16.mxu0 0
      %5906 = vmatpush1.bf16.xpose.msra.mxu0 0
      %5907 = vmatprep.subr.bf16.mxu0 0
      %5908 = vmatpush1.bf16.xpose.msra.mxu0 0
      %5909 = vmatprep.subr.bf16.mxu0 0
      %5910 = vmatpush1.bf16.xpose.msra.mxu0 0
      %5911 = vmatprep.subr.bf16.mxu0 0
      %5912 = vmatpush1.bf16.xpose.msra.mxu0 0
      %5913 = vmatprep.subr.bf16.mxu0 0
      %5914 = vmatpush1.bf16.xpose.msra.mxu0 0
      %5915 = vmatprep.subr.bf16.mxu0 0
      %5916 = vmatpush1.bf16.xpose.msra.mxu0 0
      %5917 = vmatprep.subr.bf16.mxu0 0
      %5918 = vmatpush1.bf16.xpose.msra.mxu0 0
      %5919 = vmatprep.subr.bf16.mxu0 0
      %5920 = vmatpush1.bf16.xpose.msra.mxu0 0
      %5921 = vmatprep.mubr.bf16.mxu0 0
      %5922 = vmatmul.mubr.bf16.gmra.mrb[0].mxu0 %v5884
      %v5923 = vpop.f32.mrb[0].mxu0
      %v5924 = vadd.f32 %v1602, %v5923
      %v5925 = vpop.f32.mrb[0].mxu0
      %v5926 = vpop.f32.mrb[0].mxu0
      %v5927 = vadd.f32 %v1603, %v5926
      %v5928 = vpop.f32.mrb[0].mxu0
      %5929 = vdwg.mxu0
      %5930 = vrot.lane.b32.xlu0 %v1375, 64
      %v5931 = vpop.permute.xlu0 %5930
      %5932 = vrot.lane.b32.xlu0 %v1391, 64
      %v5933 = vpop.permute.xlu0 %5932
      %v5935 = vsel %vm514, %v5931, 0
      %v5938 = vsel %vm514, %v5933, 0
      %5940 = vmatprep.subr.bf16.mxu0 0
      %5941 = vmatpush1.bf16.xpose.msra.mxu0 %v5938
      %5942 = vmatprep.subr.bf16.mxu0 0
      %5943 = vmatpush1.bf16.xpose.msra.mxu0 0
      %5944 = vmatprep.subr.bf16.mxu0 0
      %5945 = vmatpush1.bf16.xpose.msra.mxu0 0
      %5946 = vmatprep.subr.bf16.mxu0 0
      %5947 = vmatpush1.bf16.xpose.msra.mxu0 0
      %5948 = vmatprep.subr.bf16.mxu0 0
      %5949 = vmatpush1.bf16.xpose.msra.mxu0 0
      %5950 = vmatprep.subr.bf16.mxu0 0
      %5951 = vmatpush1.bf16.xpose.msra.mxu0 0
      %5952 = vmatprep.subr.bf16.mxu0 0
      %5953 = vmatpush1.bf16.xpose.msra.mxu0 0
      %5954 = vmatprep.subr.bf16.mxu0 0
      %5955 = vmatpush1.bf16.xpose.msra.mxu0 0
      %5956 = vmatprep.subr.bf16.mxu0 0
      %5957 = vmatpush1.bf16.xpose.msra.mxu0 0
      %5958 = vmatprep.subr.bf16.mxu0 0
      %5959 = vmatpush1.bf16.xpose.msra.mxu0 0
      %5960 = vmatprep.subr.bf16.mxu0 0
      %5961 = vmatpush1.bf16.xpose.msra.mxu0 0
      %5962 = vmatprep.subr.bf16.mxu0 0
      %5963 = vmatpush1.bf16.xpose.msra.mxu0 0
      %5964 = vmatprep.subr.bf16.mxu0 0
      %5965 = vmatpush1.bf16.xpose.msra.mxu0 0
      %5966 = vmatprep.subr.bf16.mxu0 0
      %5967 = vmatpush1.bf16.xpose.msra.mxu0 0
      %5968 = vmatprep.subr.bf16.mxu0 0
      %5969 = vmatpush1.bf16.xpose.msra.mxu0 0
      %5970 = vmatprep.subr.bf16.mxu0 0
      %5971 = vmatpush1.bf16.xpose.msra.mxu0 0
      %5972 = vmatprep.mubr.bf16.mxu0 0
      %5973 = vmatmul.mubr.bf16.gmra.mrb[0].mxu0 %v5935
      %v5974 = vpop.f32.mrb[0].mxu0
      %v5975 = vadd.f32 %v1610, %v5974
      %v5976 = vpop.f32.mrb[0].mxu0
      %v5977 = vpop.f32.mrb[0].mxu0
      %v5978 = vadd.f32 %v1611, %v5977
      %v5979 = vpop.f32.mrb[0].mxu0
      %5980 = vdwg.mxu0
      %5981 = vrot.lane.b32.xlu0 %v1376, 64
      %v5982 = vpop.permute.xlu0 %5981
      %5983 = vrot.lane.b32.xlu0 %v1392, 64
      %v5984 = vpop.permute.xlu0 %5983
      %v5986 = vsel %vm514, %v5982, 0
      %v5989 = vsel %vm514, %v5984, 0
      %5991 = vmatprep.subr.bf16.mxu0 0
      %5992 = vmatpush1.bf16.xpose.msra.mxu0 %v5989
      %5993 = vmatprep.subr.bf16.mxu0 0
      %5994 = vmatpush1.bf16.xpose.msra.mxu0 0
      %5995 = vmatprep.subr.bf16.mxu0 0
      %5996 = vmatpush1.bf16.xpose.msra.mxu0 0
      %5997 = vmatprep.subr.bf16.mxu0 0
      %5998 = vmatpush1.bf16.xpose.msra.mxu0 0
      %5999 = vmatprep.subr.bf16.mxu0 0
      %6000 = vmatpush1.bf16.xpose.msra.mxu0 0
      %6001 = vmatprep.subr.bf16.mxu0 0
      %6002 = vmatpush1.bf16.xpose.msra.mxu0 0
      %6003 = vmatprep.subr.bf16.mxu0 0
      %6004 = vmatpush1.bf16.xpose.msra.mxu0 0
      %6005 = vmatprep.subr.bf16.mxu0 0
      %6006 = vmatpush1.bf16.xpose.msra.mxu0 0
      %6007 = vmatprep.subr.bf16.mxu0 0
      %6008 = vmatpush1.bf16.xpose.msra.mxu0 0
      %6009 = vmatprep.subr.bf16.mxu0 0
      %6010 = vmatpush1.bf16.xpose.msra.mxu0 0
      %6011 = vmatprep.subr.bf16.mxu0 0
      %6012 = vmatpush1.bf16.xpose.msra.mxu0 0
      %6013 = vmatprep.subr.bf16.mxu0 0
      %6014 = vmatpush1.bf16.xpose.msra.mxu0 0
      %6015 = vmatprep.subr.bf16.mxu0 0
      %6016 = vmatpush1.bf16.xpose.msra.mxu0 0
      %6017 = vmatprep.subr.bf16.mxu0 0
      %6018 = vmatpush1.bf16.xpose.msra.mxu0 0
      %6019 = vmatprep.subr.bf16.mxu0 0
      %6020 = vmatpush1.bf16.xpose.msra.mxu0 0
      %6021 = vmatprep.subr.bf16.mxu0 0
      %6022 = vmatpush1.bf16.xpose.msra.mxu0 0
      %6023 = vmatprep.mubr.bf16.mxu0 0
      %6024 = vmatmul.mubr.bf16.gmra.mrb[0].mxu0 %v5986
      %v6025 = vpop.f32.mrb[0].mxu0
      %v6026 = vadd.f32 %v1618, %v6025
      %v6027 = vpop.f32.mrb[0].mxu0
      %v6028 = vpop.f32.mrb[0].mxu0
      %v6029 = vadd.f32 %v1619, %v6028
      %v6030 = vpop.f32.mrb[0].mxu0
      %6031 = vdwg.mxu0
      %6032 = vrot.lane.b32.xlu0 %v1377, 64
      %v6033 = vpop.permute.xlu0 %6032
      %6034 = vrot.lane.b32.xlu0 %v1393, 64
      %v6035 = vpop.permute.xlu0 %6034
      %v6037 = vsel %vm514, %v6033, 0
      %v6040 = vsel %vm514, %v6035, 0
      %6042 = vmatprep.subr.bf16.mxu0 0
      %6043 = vmatpush1.bf16.xpose.msra.mxu0 %v6040
      %6044 = vmatprep.subr.bf16.mxu0 0
      %6045 = vmatpush1.bf16.xpose.msra.mxu0 0
      %6046 = vmatprep.subr.bf16.mxu0 0
      %6047 = vmatpush1.bf16.xpose.msra.mxu0 0
      %6048 = vmatprep.subr.bf16.mxu0 0
      %6049 = vmatpush1.bf16.xpose.msra.mxu0 0
      %6050 = vmatprep.subr.bf16.mxu0 0
      %6051 = vmatpush1.bf16.xpose.msra.mxu0 0
      %6052 = vmatprep.subr.bf16.mxu0 0
      %6053 = vmatpush1.bf16.xpose.msra.mxu0 0
      %6054 = vmatprep.subr.bf16.mxu0 0
      %6055 = vmatpush1.bf16.xpose.msra.mxu0 0
      %6056 = vmatprep.subr.bf16.mxu0 0
      %6057 = vmatpush1.bf16.xpose.msra.mxu0 0
      %6058 = vmatprep.subr.bf16.mxu0 0
      %6059 = vmatpush1.bf16.xpose.msra.mxu0 0
      %6060 = vmatprep.subr.bf16.mxu0 0
      %6061 = vmatpush1.bf16.xpose.msra.mxu0 0
      %6062 = vmatprep.subr.bf16.mxu0 0
      %6063 = vmatpush1.bf16.xpose.msra.mxu0 0
      %6064 = vmatprep.subr.bf16.mxu0 0
      %6065 = vmatpush1.bf16.xpose.msra.mxu0 0
      %6066 = vmatprep.subr.bf16.mxu0 0
      %6067 = vmatpush1.bf16.xpose.msra.mxu0 0
      %6068 = vmatprep.subr.bf16.mxu0 0
      %6069 = vmatpush1.bf16.xpose.msra.mxu0 0
      %6070 = vmatprep.subr.bf16.mxu0 0
      %6071 = vmatpush1.bf16.xpose.msra.mxu0 0
      %6072 = vmatprep.subr.bf16.mxu0 0
      %6073 = vmatpush1.bf16.xpose.msra.mxu0 0
      %6074 = vmatprep.mubr.bf16.mxu0 0
      %6075 = vmatmul.mubr.bf16.gmra.mrb[0].mxu0 %v6037
      %v6076 = vpop.f32.mrb[0].mxu0
      %v6077 = vadd.f32 %v1626, %v6076
      %v6078 = vpop.f32.mrb[0].mxu0
      %v6079 = vpop.f32.mrb[0].mxu0
      %v6080 = vadd.f32 %v1627, %v6079
      %v6081 = vpop.f32.mrb[0].mxu0
      %6082 = vdwg.mxu0
      %6083 = vrot.lane.b32.xlu0 %v1378, 64
      %v6084 = vpop.permute.xlu0 %6083
      %6085 = vrot.lane.b32.xlu0 %v1394, 64
      %v6086 = vpop.permute.xlu0 %6085
      %v6088 = vsel %vm514, %v6084, 0
      %v6091 = vsel %vm514, %v6086, 0
      %6093 = vmatprep.subr.bf16.mxu0 0
      %6094 = vmatpush1.bf16.xpose.msra.mxu0 %v6091
      %6095 = vmatprep.subr.bf16.mxu0 0
      %6096 = vmatpush1.bf16.xpose.msra.mxu0 0
      %6097 = vmatprep.subr.bf16.mxu0 0
      %6098 = vmatpush1.bf16.xpose.msra.mxu0 0
      %6099 = vmatprep.subr.bf16.mxu0 0
      %6100 = vmatpush1.bf16.xpose.msra.mxu0 0
      %6101 = vmatprep.subr.bf16.mxu0 0
      %6102 = vmatpush1.bf16.xpose.msra.mxu0 0
      %6103 = vmatprep.subr.bf16.mxu0 0
      %6104 = vmatpush1.bf16.xpose.msra.mxu0 0
      %6105 = vmatprep.subr.bf16.mxu0 0
      %6106 = vmatpush1.bf16.xpose.msra.mxu0 0
      %6107 = vmatprep.subr.bf16.mxu0 0
      %6108 = vmatpush1.bf16.xpose.msra.mxu0 0
      %6109 = vmatprep.subr.bf16.mxu0 0
      %6110 = vmatpush1.bf16.xpose.msra.mxu0 0
      %6111 = vmatprep.subr.bf16.mxu0 0
      %6112 = vmatpush1.bf16.xpose.msra.mxu0 0
      %6113 = vmatprep.subr.bf16.mxu0 0
      %6114 = vmatpush1.bf16.xpose.msra.mxu0 0
      %6115 = vmatprep.subr.bf16.mxu0 0
      %6116 = vmatpush1.bf16.xpose.msra.mxu0 0
      %6117 = vmatprep.subr.bf16.mxu0 0
      %6118 = vmatpush1.bf16.xpose.msra.mxu0 0
      %6119 = vmatprep.subr.bf16.mxu0 0
      %6120 = vmatpush1.bf16.xpose.msra.mxu0 0
      %6121 = vmatprep.subr.bf16.mxu0 0
      %6122 = vmatpush1.bf16.xpose.msra.mxu0 0
      %6123 = vmatprep.subr.bf16.mxu0 0
      %6124 = vmatpush1.bf16.xpose.msra.mxu0 0
      %6125 = vmatprep.mubr.bf16.mxu0 0
      %6126 = vmatmul.mubr.bf16.gmra.mrb[0].mxu0 %v6088
      %v6127 = vpop.f32.mrb[0].mxu0
      %v6128 = vadd.f32 %v1634, %v6127
      %v6129 = vpop.f32.mrb[0].mxu0
      %v6130 = vpop.f32.mrb[0].mxu0
      %v6131 = vadd.f32 %v1635, %v6130
      %v6132 = vpop.f32.mrb[0].mxu0
      %6133 = vdwg.mxu0
      %6134 = vrot.lane.b32.xlu0 %v1379, 64
      %v6135 = vpop.permute.xlu0 %6134
      %6136 = vrot.lane.b32.xlu0 %v1395, 64
      %v6137 = vpop.permute.xlu0 %6136
      %v6139 = vsel %vm514, %v6135, 0
      %v6142 = vsel %vm514, %v6137, 0
      %6144 = vmatprep.subr.bf16.mxu0 0
      %6145 = vmatpush1.bf16.xpose.msra.mxu0 %v6142
      %6146 = vmatprep.subr.bf16.mxu0 0
      %6147 = vmatpush1.bf16.xpose.msra.mxu0 0
      %6148 = vmatprep.subr.bf16.mxu0 0
      %6149 = vmatpush1.bf16.xpose.msra.mxu0 0
      %6150 = vmatprep.subr.bf16.mxu0 0
      %6151 = vmatpush1.bf16.xpose.msra.mxu0 0
      %6152 = vmatprep.subr.bf16.mxu0 0
      %6153 = vmatpush1.bf16.xpose.msra.mxu0 0
      %6154 = vmatprep.subr.bf16.mxu0 0
      %6155 = vmatpush1.bf16.xpose.msra.mxu0 0
      %6156 = vmatprep.subr.bf16.mxu0 0
      %6157 = vmatpush1.bf16.xpose.msra.mxu0 0
      %6158 = vmatprep.subr.bf16.mxu0 0
      %6159 = vmatpush1.bf16.xpose.msra.mxu0 0
      %6160 = vmatprep.subr.bf16.mxu0 0
      %6161 = vmatpush1.bf16.xpose.msra.mxu0 0
      %6162 = vmatprep.subr.bf16.mxu0 0
      %6163 = vmatpush1.bf16.xpose.msra.mxu0 0
      %6164 = vmatprep.subr.bf16.mxu0 0
      %6165 = vmatpush1.bf16.xpose.msra.mxu0 0
      %6166 = vmatprep.subr.bf16.mxu0 0
      %6167 = vmatpush1.bf16.xpose.msra.mxu0 0
      %6168 = vmatprep.subr.bf16.mxu0 0
      %6169 = vmatpush1.bf16.xpose.msra.mxu0 0
      %6170 = vmatprep.subr.bf16.mxu0 0
      %6171 = vmatpush1.bf16.xpose.msra.mxu0 0
      %6172 = vmatprep.subr.bf16.mxu0 0
      %6173 = vmatpush1.bf16.xpose.msra.mxu0 0
      %6174 = vmatprep.subr.bf16.mxu0 0
      %6175 = vmatpush1.bf16.xpose.msra.mxu0 0
      %6176 = vmatprep.mubr.bf16.mxu0 0
      %6177 = vmatmul.mubr.bf16.gmra.mrb[0].mxu0 %v6139
      %v6178 = vpop.f32.mrb[0].mxu0
      %v6179 = vadd.f32 %v1642, %v6178
      %v6180 = vpop.f32.mrb[0].mxu0
      %v6181 = vpop.f32.mrb[0].mxu0
      %v6182 = vadd.f32 %v1643, %v6181
      %v6183 = vpop.f32.mrb[0].mxu0
      %6184 = vdwg.mxu0
      %6185 = vrot.lane.b32.xlu0 %v1380, 64
      %v6186 = vpop.permute.xlu0 %6185
      %6187 = vrot.lane.b32.xlu0 %v1396, 64
      %v6188 = vpop.permute.xlu0 %6187
      %v6190 = vsel %vm514, %v6186, 0
      %v6193 = vsel %vm514, %v6188, 0
      %6195 = vmatprep.subr.bf16.mxu0 0
      %6196 = vmatpush1.bf16.xpose.msra.mxu0 %v6193
      %6197 = vmatprep.subr.bf16.mxu0 0
      %6198 = vmatpush1.bf16.xpose.msra.mxu0 0
      %6199 = vmatprep.subr.bf16.mxu0 0
      %6200 = vmatpush1.bf16.xpose.msra.mxu0 0
      %6201 = vmatprep.subr.bf16.mxu0 0
      %6202 = vmatpush1.bf16.xpose.msra.mxu0 0
      %6203 = vmatprep.subr.bf16.mxu0 0
      %6204 = vmatpush1.bf16.xpose.msra.mxu0 0
      %6205 = vmatprep.subr.bf16.mxu0 0
      %6206 = vmatpush1.bf16.xpose.msra.mxu0 0
      %6207 = vmatprep.subr.bf16.mxu0 0
      %6208 = vmatpush1.bf16.xpose.msra.mxu0 0
      %6209 = vmatprep.subr.bf16.mxu0 0
      %6210 = vmatpush1.bf16.xpose.msra.mxu0 0
      %6211 = vmatprep.subr.bf16.mxu0 0
      %6212 = vmatpush1.bf16.xpose.msra.mxu0 0
      %6213 = vmatprep.subr.bf16.mxu0 0
      %6214 = vmatpush1.bf16.xpose.msra.mxu0 0
      %6215 = vmatprep.subr.bf16.mxu0 0
      %6216 = vmatpush1.bf16.xpose.msra.mxu0 0
      %6217 = vmatprep.subr.bf16.mxu0 0
      %6218 = vmatpush1.bf16.xpose.msra.mxu0 0
      %6219 = vmatprep.subr.bf16.mxu0 0
      %6220 = vmatpush1.bf16.xpose.msra.mxu0 0
      %6221 = vmatprep.subr.bf16.mxu0 0
      %6222 = vmatpush1.bf16.xpose.msra.mxu0 0
      %6223 = vmatprep.subr.bf16.mxu0 0
      %6224 = vmatpush1.bf16.xpose.msra.mxu0 0
      %6225 = vmatprep.subr.bf16.mxu0 0
      %6226 = vmatpush1.bf16.xpose.msra.mxu0 0
      %6227 = vmatprep.mubr.bf16.mxu0 0
      %6228 = vmatmul.mubr.bf16.gmra.mrb[0].mxu0 %v6190
      %v6229 = vpop.f32.mrb[0].mxu0
      %v6230 = vadd.f32 %v1650, %v6229
      %v6231 = vpop.f32.mrb[0].mxu0
      %v6232 = vpop.f32.mrb[0].mxu0
      %v6233 = vadd.f32 %v1651, %v6232
      %v6234 = vpop.f32.mrb[0].mxu0
      %6235 = vdwg.mxu0
      %6236 = vrot.lane.b32.xlu0 %v1381, 64
      %v6237 = vpop.permute.xlu0 %6236
      %6238 = vrot.lane.b32.xlu0 %v1397, 64
      %v6239 = vpop.permute.xlu0 %6238
      %v6241 = vsel %vm514, %v6237, 0
      %v6244 = vsel %vm514, %v6239, 0
      %6246 = vmatprep.subr.bf16.mxu0 0
      %6247 = vmatpush1.bf16.xpose.msra.mxu0 %v6244
      %6248 = vmatprep.subr.bf16.mxu0 0
      %6249 = vmatpush1.bf16.xpose.msra.mxu0 0
      %6250 = vmatprep.subr.bf16.mxu0 0
      %6251 = vmatpush1.bf16.xpose.msra.mxu0 0
      %6252 = vmatprep.subr.bf16.mxu0 0
      %6253 = vmatpush1.bf16.xpose.msra.mxu0 0
      %6254 = vmatprep.subr.bf16.mxu0 0
      %6255 = vmatpush1.bf16.xpose.msra.mxu0 0
      %6256 = vmatprep.subr.bf16.mxu0 0
      %6257 = vmatpush1.bf16.xpose.msra.mxu0 0
      %6258 = vmatprep.subr.bf16.mxu0 0
      %6259 = vmatpush1.bf16.xpose.msra.mxu0 0
      %6260 = vmatprep.subr.bf16.mxu0 0
      %6261 = vmatpush1.bf16.xpose.msra.mxu0 0
      %6262 = vmatprep.subr.bf16.mxu0 0
      %6263 = vmatpush1.bf16.xpose.msra.mxu0 0
      %6264 = vmatprep.subr.bf16.mxu0 0
      %6265 = vmatpush1.bf16.xpose.msra.mxu0 0
      %6266 = vmatprep.subr.bf16.mxu0 0
      %6267 = vmatpush1.bf16.xpose.msra.mxu0 0
      %6268 = vmatprep.subr.bf16.mxu0 0
      %6269 = vmatpush1.bf16.xpose.msra.mxu0 0
      %6270 = vmatprep.subr.bf16.mxu0 0
      %6271 = vmatpush1.bf16.xpose.msra.mxu0 0
      %6272 = vmatprep.subr.bf16.mxu0 0
      %6273 = vmatpush1.bf16.xpose.msra.mxu0 0
      %6274 = vmatprep.subr.bf16.mxu0 0
      %6275 = vmatpush1.bf16.xpose.msra.mxu0 0
      %6276 = vmatprep.subr.bf16.mxu0 0
      %6277 = vmatpush1.bf16.xpose.msra.mxu0 0
      %6278 = vmatprep.mubr.bf16.mxu0 0
      %6279 = vmatmul.mubr.bf16.gmra.mrb[0].mxu0 %v6241
      %v6280 = vpop.f32.mrb[0].mxu0
      %v6281 = vadd.f32 %v1658, %v6280
      %v6282 = vpop.f32.mrb[0].mxu0
      %v6283 = vpop.f32.mrb[0].mxu0
      %v6284 = vadd.f32 %v1659, %v6283
      %v6285 = vpop.f32.mrb[0].mxu0
      %6286 = vdwg.mxu0
      %v6287 = vsel %vm2414, %v5516, -inf
      %6288 = vmax.xlane.f32.xlu0 %v6287
      %v6289 = vpop.xlane.xlu0 %6288
      %v6290 = vsel %vm2414, %v5519, -inf
      %6291 = vmax.xlane.f32.xlu0 %v6290
      %v6292 = vpop.xlane.xlu0 %6291
      %v6293 = vsel %vm2414, %v5567, -inf
      %6294 = vmax.xlane.f32.xlu0 %v6293
      %v6295 = vpop.xlane.xlu0 %6294
      %v6296 = vsel %vm2414, %v5570, -inf
      %6297 = vmax.xlane.f32.xlu0 %v6296
      %v6298 = vpop.xlane.xlu0 %6297
      %v6299 = vsel %vm2414, %v5618, -inf
      %6300 = vmax.xlane.f32.xlu0 %v6299
      %v6301 = vpop.xlane.xlu0 %6300
      %v6302 = vsel %vm2414, %v5621, -inf
      %6303 = vmax.xlane.f32.xlu0 %v6302
      %v6304 = vpop.xlane.xlu0 %6303
      %v6305 = vsel %vm2414, %v5669, -inf
      %6306 = vmax.xlane.f32.xlu0 %v6305
      %v6307 = vpop.xlane.xlu0 %6306
      %v6308 = vsel %vm2414, %v5672, -inf
      %6309 = vmax.xlane.f32.xlu0 %v6308
      %v6310 = vpop.xlane.xlu0 %6309
      %v6311 = vsel %vm2414, %v5720, -inf
      %6312 = vmax.xlane.f32.xlu0 %v6311
      %v6313 = vpop.xlane.xlu0 %6312
      %v6314 = vsel %vm2414, %v5723, -inf
      %6315 = vmax.xlane.f32.xlu0 %v6314
      %v6316 = vpop.xlane.xlu0 %6315
      %v6317 = vsel %vm2414, %v5771, -inf
      %6318 = vmax.xlane.f32.xlu0 %v6317
      %v6319 = vpop.xlane.xlu0 %6318
      %v6320 = vsel %vm2414, %v5774, -inf
      %6321 = vmax.xlane.f32.xlu0 %v6320
      %v6322 = vpop.xlane.xlu0 %6321
      %v6323 = vsel %vm2414, %v5822, -inf
      %6324 = vmax.xlane.f32.xlu0 %v6323
      %v6325 = vpop.xlane.xlu0 %6324
      %v6326 = vsel %vm2414, %v5825, -inf
      %6327 = vmax.xlane.f32.xlu0 %v6326
      %v6328 = vpop.xlane.xlu0 %6327
      %v6329 = vsel %vm2414, %v5873, -inf
      %6330 = vmax.xlane.f32.xlu0 %v6329
      %v6331 = vpop.xlane.xlu0 %6330
      %v6332 = vsel %vm2414, %v5876, -inf
      %6333 = vmax.xlane.f32.xlu0 %v6332
      %v6334 = vpop.xlane.xlu0 %6333
      %v6335 = vsel %vm2414, %v5924, -inf
      %6336 = vmax.xlane.f32.xlu0 %v6335
      %v6337 = vpop.xlane.xlu0 %6336
      %v6338 = vsel %vm2414, %v5927, -inf
      %6339 = vmax.xlane.f32.xlu0 %v6338
      %v6340 = vpop.xlane.xlu0 %6339
      %v6341 = vsel %vm2414, %v5975, -inf
      %6342 = vmax.xlane.f32.xlu0 %v6341
      %v6343 = vpop.xlane.xlu0 %6342
      %v6344 = vsel %vm2414, %v5978, -inf
      %6345 = vmax.xlane.f32.xlu0 %v6344
      %v6346 = vpop.xlane.xlu0 %6345
      %v6347 = vsel %vm2414, %v6026, -inf
      %6348 = vmax.xlane.f32.xlu0 %v6347
      %v6349 = vpop.xlane.xlu0 %6348
      %v6350 = vsel %vm2414, %v6029, -inf
      %6351 = vmax.xlane.f32.xlu0 %v6350
      %v6352 = vpop.xlane.xlu0 %6351
      %v6353 = vsel %vm2414, %v6077, -inf
      %6354 = vmax.xlane.f32.xlu0 %v6353
      %v6355 = vpop.xlane.xlu0 %6354
      %v6356 = vsel %vm2414, %v6080, -inf
      %6357 = vmax.xlane.f32.xlu0 %v6356
      %v6358 = vpop.xlane.xlu0 %6357
      %v6359 = vsel %vm2414, %v6128, -inf
      %6360 = vmax.xlane.f32.xlu0 %v6359
      %v6361 = vpop.xlane.xlu0 %6360
      %v6362 = vsel %vm2414, %v6131, -inf
      %6363 = vmax.xlane.f32.xlu0 %v6362
      %v6364 = vpop.xlane.xlu0 %6363
      %v6365 = vsel %vm2414, %v6179, -inf
      %6366 = vmax.xlane.f32.xlu0 %v6365
      %v6367 = vpop.xlane.xlu0 %6366
      %v6368 = vsel %vm2414, %v6182, -inf
      %6369 = vmax.xlane.f32.xlu0 %v6368
      %v6370 = vpop.xlane.xlu0 %6369
      %v6371 = vsel %vm2414, %v6230, -inf
      %6372 = vmax.xlane.f32.xlu0 %v6371
      %v6373 = vpop.xlane.xlu0 %6372
      %v6374 = vsel %vm2414, %v6233, -inf
      %6375 = vmax.xlane.f32.xlu0 %v6374
      %v6376 = vpop.xlane.xlu0 %6375
      %v6377 = vsel %vm2414, %v6281, -inf
      %6378 = vmax.xlane.f32.xlu0 %v6377
      %v6379 = vpop.xlane.xlu0 %6378
      %v6380 = vsel %vm2414, %v6284, -inf
      %6381 = vmax.xlane.f32.xlu0 %v6380
      %v6382 = vpop.xlane.xlu0 %6381
      %v6383 = vsub.f32 %v5516, %v6289
      %v6384 = vsub.f32 %v5519, %v6292
      %v6385 = vsub.f32 %v5567, %v6295
      %v6386 = vsub.f32 %v5570, %v6298
      %v6387 = vsub.f32 %v5618, %v6301
      %v6388 = vsub.f32 %v5621, %v6304
      %v6389 = vsub.f32 %v5669, %v6307
      %v6390 = vsub.f32 %v5672, %v6310
      %v6391 = vsub.f32 %v5720, %v6313
      %v6392 = vsub.f32 %v5723, %v6316
      %v6393 = vsub.f32 %v5771, %v6319
      %v6394 = vsub.f32 %v5774, %v6322
      %v6395 = vsub.f32 %v5822, %v6325
      %v6396 = vsub.f32 %v5825, %v6328
      %v6397 = vsub.f32 %v5873, %v6331
      %v6398 = vsub.f32 %v5876, %v6334
      %v6399 = vsub.f32 %v5924, %v6337
      %v6400 = vsub.f32 %v5927, %v6340
      %v6401 = vsub.f32 %v5975, %v6343
      %v6402 = vsub.f32 %v5978, %v6346
      %v6403 = vsub.f32 %v6026, %v6349
      %v6404 = vsub.f32 %v6029, %v6352
      %v6405 = vsub.f32 %v6077, %v6355
      %v6406 = vsub.f32 %v6080, %v6358
      %v6407 = vsub.f32 %v6128, %v6361
      %v6408 = vsub.f32 %v6131, %v6364
      %v6409 = vsub.f32 %v6179, %v6367
      %v6410 = vsub.f32 %v6182, %v6370
      %v6411 = vsub.f32 %v6230, %v6373
      %v6412 = vsub.f32 %v6233, %v6376
      %v6413 = vsub.f32 %v6281, %v6379
      %v6414 = vsub.f32 %v6284, %v6382
      %v6415 = vmul.f32 %v6383, 1.442695
      %v6416 = vpow.pop %v6415
      %v6417 = vmul.f32 %v6384, 1.442695
      %v6418 = vpow.pop %v6417
      %v6419 = vmul.f32 %v6385, 1.442695
      %v6420 = vpow.pop %v6419
      %v6421 = vmul.f32 %v6386, 1.442695
      %v6422 = vpow.pop %v6421
      %v6423 = vmul.f32 %v6387, 1.442695
      %v6424 = vpow.pop %v6423
      %v6425 = vmul.f32 %v6388, 1.442695
      %v6426 = vpow.pop %v6425
      %v6427 = vmul.f32 %v6389, 1.442695
      %v6428 = vpow.pop %v6427
      %v6429 = vmul.f32 %v6390, 1.442695
      %v6430 = vpow.pop %v6429
      %v6431 = vmul.f32 %v6391, 1.442695
      %v6432 = vpow.pop %v6431
      %v6433 = vmul.f32 %v6392, 1.442695
      %v6434 = vpow.pop %v6433
      %v6435 = vmul.f32 %v6393, 1.442695
      %v6436 = vpow.pop %v6435
      %v6437 = vmul.f32 %v6394, 1.442695
      %v6438 = vpow.pop %v6437
      %v6439 = vmul.f32 %v6395, 1.442695
      %v6440 = vpow.pop %v6439
      %v6441 = vmul.f32 %v6396, 1.442695
      %v6442 = vpow.pop %v6441
      %v6443 = vmul.f32 %v6397, 1.442695
      %v6444 = vpow.pop %v6443
      %v6445 = vmul.f32 %v6398, 1.442695
      %v6446 = vpow.pop %v6445
      %v6447 = vmul.f32 %v6399, 1.442695
      %v6448 = vpow.pop %v6447
      %v6449 = vmul.f32 %v6400, 1.442695
      %v6450 = vpow.pop %v6449
      %v6451 = vmul.f32 %v6401, 1.442695
      %v6452 = vpow.pop %v6451
      %v6453 = vmul.f32 %v6402, 1.442695
      %v6454 = vpow.pop %v6453
      %v6455 = vmul.f32 %v6403, 1.442695
      %v6456 = vpow.pop %v6455
      %v6457 = vmul.f32 %v6404, 1.442695
      %v6458 = vpow.pop %v6457
      %v6459 = vmul.f32 %v6405, 1.442695
      %v6460 = vpow.pop %v6459
      %v6461 = vmul.f32 %v6406, 1.442695
      %v6462 = vpow.pop %v6461
      %v6463 = vmul.f32 %v6407, 1.442695
      %v6464 = vpow.pop %v6463
      %v6465 = vmul.f32 %v6408, 1.442695
      %v6466 = vpow.pop %v6465
      %v6467 = vmul.f32 %v6409, 1.442695
      %v6468 = vpow.pop %v6467
      %v6469 = vmul.f32 %v6410, 1.442695
      %v6470 = vpow.pop %v6469
      %v6471 = vmul.f32 %v6411, 1.442695
      %v6472 = vpow.pop %v6471
      %v6473 = vmul.f32 %v6412, 1.442695
      %v6474 = vpow.pop %v6473
      %v6475 = vmul.f32 %v6413, 1.442695
      %v6476 = vpow.pop %v6475
      %v6477 = vmul.f32 %v6414, 1.442695
      %v6478 = vpow.pop %v6477
      %v6479 = vsel %vm2414, %v6416, 0.0
      %6480 = vadd.xlane.f32.xlu0 %v6479
      %v6481 = vpop.xlane.xlu0 %6480
      %v6482 = vsel %vm2414, %v6418, 0.0
      %6483 = vadd.xlane.f32.xlu0 %v6482
      %v6484 = vpop.xlane.xlu0 %6483
      %v6485 = vsel %vm2414, %v6420, 0.0
      %6486 = vadd.xlane.f32.xlu0 %v6485
      %v6487 = vpop.xlane.xlu0 %6486
      %v6488 = vsel %vm2414, %v6422, 0.0
      %6489 = vadd.xlane.f32.xlu0 %v6488
      %v6490 = vpop.xlane.xlu0 %6489
      %v6491 = vsel %vm2414, %v6424, 0.0
      %6492 = vadd.xlane.f32.xlu0 %v6491
      %v6493 = vpop.xlane.xlu0 %6492
      %v6494 = vsel %vm2414, %v6426, 0.0
      %6495 = vadd.xlane.f32.xlu0 %v6494
      %v6496 = vpop.xlane.xlu0 %6495
      %v6497 = vsel %vm2414, %v6428, 0.0
      %6498 = vadd.xlane.f32.xlu0 %v6497
      %v6499 = vpop.xlane.xlu0 %6498
      %v6500 = vsel %vm2414, %v6430, 0.0
      %6501 = vadd.xlane.f32.xlu0 %v6500
      %v6502 = vpop.xlane.xlu0 %6501
      %v6503 = vsel %vm2414, %v6432, 0.0
      %6504 = vadd.xlane.f32.xlu0 %v6503
      %v6505 = vpop.xlane.xlu0 %6504
      %v6506 = vsel %vm2414, %v6434, 0.0
      %6507 = vadd.xlane.f32.xlu0 %v6506
      %v6508 = vpop.xlane.xlu0 %6507
      %v6509 = vsel %vm2414, %v6436, 0.0
      %6510 = vadd.xlane.f32.xlu0 %v6509
      %v6511 = vpop.xlane.xlu0 %6510
      %v6512 = vsel %vm2414, %v6438, 0.0
      %6513 = vadd.xlane.f32.xlu0 %v6512
      %v6514 = vpop.xlane.xlu0 %6513
      %v6515 = vsel %vm2414, %v6440, 0.0
      %6516 = vadd.xlane.f32.xlu0 %v6515
      %v6517 = vpop.xlane.xlu0 %6516
      %v6518 = vsel %vm2414, %v6442, 0.0
      %6519 = vadd.xlane.f32.xlu0 %v6518
      %v6520 = vpop.xlane.xlu0 %6519
      %v6521 = vsel %vm2414, %v6444, 0.0
      %6522 = vadd.xlane.f32.xlu0 %v6521
      %v6523 = vpop.xlane.xlu0 %6522
      %v6524 = vsel %vm2414, %v6446, 0.0
      %6525 = vadd.xlane.f32.xlu0 %v6524
      %v6526 = vpop.xlane.xlu0 %6525
      %v6527 = vsel %vm2414, %v6448, 0.0
      %6528 = vadd.xlane.f32.xlu0 %v6527
      %v6529 = vpop.xlane.xlu0 %6528
      %v6530 = vsel %vm2414, %v6450, 0.0
      %6531 = vadd.xlane.f32.xlu0 %v6530
      %v6532 = vpop.xlane.xlu0 %6531
      %v6533 = vsel %vm2414, %v6452, 0.0
      %6534 = vadd.xlane.f32.xlu0 %v6533
      %v6535 = vpop.xlane.xlu0 %6534
      %v6536 = vsel %vm2414, %v6454, 0.0
      %6537 = vadd.xlane.f32.xlu0 %v6536
      %v6538 = vpop.xlane.xlu0 %6537
      %v6539 = vsel %vm2414, %v6456, 0.0
      %6540 = vadd.xlane.f32.xlu0 %v6539
      %v6541 = vpop.xlane.xlu0 %6540
      %v6542 = vsel %vm2414, %v6458, 0.0
      %6543 = vadd.xlane.f32.xlu0 %v6542
      %v6544 = vpop.xlane.xlu0 %6543
      %v6545 = vsel %vm2414, %v6460, 0.0
      %6546 = vadd.xlane.f32.xlu0 %v6545
      %v6547 = vpop.xlane.xlu0 %6546
      %v6548 = vsel %vm2414, %v6462, 0.0
      %6549 = vadd.xlane.f32.xlu0 %v6548
      %v6550 = vpop.xlane.xlu0 %6549
      %v6551 = vsel %vm2414, %v6464, 0.0
      %6552 = vadd.xlane.f32.xlu0 %v6551
      %v6553 = vpop.xlane.xlu0 %6552
      %v6554 = vsel %vm2414, %v6466, 0.0
      %6555 = vadd.xlane.f32.xlu0 %v6554
      %v6556 = vpop.xlane.xlu0 %6555
      %v6557 = vsel %vm2414, %v6468, 0.0
      %6558 = vadd.xlane.f32.xlu0 %v6557
      %v6559 = vpop.xlane.xlu0 %6558
      %v6560 = vsel %vm2414, %v6470, 0.0
      %6561 = vadd.xlane.f32.xlu0 %v6560
      %v6562 = vpop.xlane.xlu0 %6561
      %v6563 = vsel %vm2414, %v6472, 0.0
      %6564 = vadd.xlane.f32.xlu0 %v6563
      %v6565 = vpop.xlane.xlu0 %6564
      %v6566 = vsel %vm2414, %v6474, 0.0
      %6567 = vadd.xlane.f32.xlu0 %v6566
      %v6568 = vpop.xlane.xlu0 %6567
      %v6569 = vsel %vm2414, %v6476, 0.0
      %6570 = vadd.xlane.f32.xlu0 %v6569
      %v6571 = vpop.xlane.xlu0 %6570
      %v6572 = vsel %vm2414, %v6478, 0.0
      %6573 = vadd.xlane.f32.xlu0 %v6572
      %v6574 = vpop.xlane.xlu0 %6573
      %v6575 = vrcp.pop %v6481
      %v6576 = vrcp.pop %v6484
      %v6577 = vrcp.pop %v6487
      %v6578 = vrcp.pop %v6490
      %v6579 = vrcp.pop %v6493
      %v6580 = vrcp.pop %v6496
      %v6581 = vrcp.pop %v6499
      %v6582 = vrcp.pop %v6502
      %v6583 = vrcp.pop %v6505
      %v6584 = vrcp.pop %v6508
      %v6585 = vrcp.pop %v6511
      %v6586 = vrcp.pop %v6514
      %v6587 = vrcp.pop %v6517
      %v6588 = vrcp.pop %v6520
      %v6589 = vrcp.pop %v6523
      %v6590 = vrcp.pop %v6526
      %v6591 = vrcp.pop %v6529
      %v6592 = vrcp.pop %v6532
      %v6593 = vrcp.pop %v6535
      %v6594 = vrcp.pop %v6538
      %v6595 = vrcp.pop %v6541
      %v6596 = vrcp.pop %v6544
      %v6597 = vrcp.pop %v6547
      %v6598 = vrcp.pop %v6550
      %v6599 = vrcp.pop %v6553
      %v6600 = vrcp.pop %v6556
      %v6601 = vrcp.pop %v6559
      %v6602 = vrcp.pop %v6562
      %v6603 = vrcp.pop %v6565
      %v6604 = vrcp.pop %v6568
      %v6605 = vrcp.pop %v6571
      %v6606 = vrcp.pop %v6574
      %v6607 = vmul.f32 %v6416, %v6575
      %v6608 = vmul.f32 %v6418, %v6576
      %v6609 = vmul.f32 %v6420, %v6577
      %v6610 = vmul.f32 %v6422, %v6578
      %v6611 = vmul.f32 %v6424, %v6579
      %v6612 = vmul.f32 %v6426, %v6580
      %v6613 = vmul.f32 %v6428, %v6581
      %v6614 = vmul.f32 %v6430, %v6582
      %v6615 = vmul.f32 %v6432, %v6583
      %v6616 = vmul.f32 %v6434, %v6584
      %v6617 = vmul.f32 %v6436, %v6585
      %v6618 = vmul.f32 %v6438, %v6586
      %v6619 = vmul.f32 %v6440, %v6587
      %v6620 = vmul.f32 %v6442, %v6588
      %v6621 = vmul.f32 %v6444, %v6589
      %v6622 = vmul.f32 %v6446, %v6590
      %v6623 = vmul.f32 %v6448, %v6591
      %v6624 = vmul.f32 %v6450, %v6592
      %v6625 = vmul.f32 %v6452, %v6593
      %v6626 = vmul.f32 %v6454, %v6594
      %v6627 = vmul.f32 %v6456, %v6595
      %v6628 = vmul.f32 %v6458, %v6596
      %v6629 = vmul.f32 %v6460, %v6597
      %v6630 = vmul.f32 %v6462, %v6598
      %v6631 = vmul.f32 %v6464, %v6599
      %v6632 = vmul.f32 %v6466, %v6600
      %v6633 = vmul.f32 %v6468, %v6601
      %v6634 = vmul.f32 %v6470, %v6602
      %v6635 = vmul.f32 %v6472, %v6603
      %v6636 = vmul.f32 %v6474, %v6604
      %v6637 = vmul.f32 %v6476, %v6605
      %v6638 = vmul.f32 %v6478, %v6606
      %v6639 = vpack.c.bf16 %v6608, %v6607
      %v6640 = vpack.c.bf16 %v6610, %v6609
      %v6641 = vpack.c.bf16 %v6612, %v6611
      %v6642 = vpack.c.bf16 %v6614, %v6613
      %v6643 = vpack.c.bf16 %v6616, %v6615
      %v6644 = vpack.c.bf16 %v6618, %v6617
      %v6645 = vpack.c.bf16 %v6620, %v6619
      %v6646 = vpack.c.bf16 %v6622, %v6621
      %v6647 = vpack.c.bf16 %v6624, %v6623
      %v6648 = vpack.c.bf16 %v6626, %v6625
      %v6649 = vpack.c.bf16 %v6628, %v6627
      %v6650 = vpack.c.bf16 %v6630, %v6629
      %v6651 = vpack.c.bf16 %v6632, %v6631
      %v6652 = vpack.c.bf16 %v6634, %v6633
      %v6653 = vpack.c.bf16 %v6636, %v6635
      %v6654 = vpack.c.bf16 %v6638, %v6637
      %6655 = vrot.lane.b32.xlu0 %v1398, 64
      %v6656 = vpop.permute.xlu0 %6655
      %v6659 = vsel %vm2414, %v6639, 0
      %6661 = vmatprep.subr.bf16.mxu0 0
      %6662 = vmatpush1.bf16.msra.mxu0 %v6656
      %6663 = vmatprep.subr.bf16.mxu0 0
      %6664 = vmatpush1.bf16.msra.mxu0 0
      %6665 = vmatprep.subr.bf16.mxu0 0
      %6666 = vmatpush1.bf16.msra.mxu0 0
      %6667 = vmatprep.subr.bf16.mxu0 0
      %6668 = vmatpush1.bf16.msra.mxu0 0
      %6669 = vmatprep.subr.bf16.mxu0 0
      %6670 = vmatpush1.bf16.msra.mxu0 0
      %6671 = vmatprep.subr.bf16.mxu0 0
      %6672 = vmatpush1.bf16.msra.mxu0 0
      %6673 = vmatprep.subr.bf16.mxu0 0
      %6674 = vmatpush1.bf16.msra.mxu0 0
      %6675 = vmatprep.subr.bf16.mxu0 0
      %6676 = vmatpush1.bf16.msra.mxu0 0
      %6677 = vmatprep.subr.bf16.mxu0 0
      %6678 = vmatpush1.bf16.msra.mxu0 0
      %6679 = vmatprep.subr.bf16.mxu0 0
      %6680 = vmatpush1.bf16.msra.mxu0 0
      %6681 = vmatprep.subr.bf16.mxu0 0
      %6682 = vmatpush1.bf16.msra.mxu0 0
      %6683 = vmatprep.subr.bf16.mxu0 0
      %6684 = vmatpush1.bf16.msra.mxu0 0
      %6685 = vmatprep.subr.bf16.mxu0 0
      %6686 = vmatpush1.bf16.msra.mxu0 0
      %6687 = vmatprep.subr.bf16.mxu0 0
      %6688 = vmatpush1.bf16.msra.mxu0 0
      %6689 = vmatprep.subr.bf16.mxu0 0
      %6690 = vmatpush1.bf16.msra.mxu0 0
      %6691 = vmatprep.subr.bf16.mxu0 0
      %6692 = vmatpush1.bf16.msra.mxu0 0
      %6693 = vmatprep.mubr.bf16.mxu0 0
      %6694 = vmatmul.mubr.bf16.gmra.mrb[0].mxu0 %v6659
      %v6695 = vpop.f32.mrb[0].mxu0
      %v6696 = vadd.f32 0.0, %v6695
      %v6697 = vpop.f32.mrb[0].mxu0
      %v6698 = vpop.f32.mrb[0].mxu0
      %v6699 = vadd.f32 0.0, %v6698
      %v6700 = vpop.f32.mrb[0].mxu0
      %6701 = vdwg.mxu0
      %6702 = vrot.lane.b32.xlu0 %v1399, 64
      %v6703 = vpop.permute.xlu0 %6702
      %v6706 = vsel %vm2414, %v6640, 0
      %6708 = vmatprep.subr.bf16.mxu0 0
      %6709 = vmatpush1.bf16.msra.mxu0 %v6703
      %6710 = vmatprep.subr.bf16.mxu0 0
      %6711 = vmatpush1.bf16.msra.mxu0 0
      %6712 = vmatprep.subr.bf16.mxu0 0
      %6713 = vmatpush1.bf16.msra.mxu0 0
      %6714 = vmatprep.subr.bf16.mxu0 0
      %6715 = vmatpush1.bf16.msra.mxu0 0
      %6716 = vmatprep.subr.bf16.mxu0 0
      %6717 = vmatpush1.bf16.msra.mxu0 0
      %6718 = vmatprep.subr.bf16.mxu0 0
      %6719 = vmatpush1.bf16.msra.mxu0 0
      %6720 = vmatprep.subr.bf16.mxu0 0
      %6721 = vmatpush1.bf16.msra.mxu0 0
      %6722 = vmatprep.subr.bf16.mxu0 0
      %6723 = vmatpush1.bf16.msra.mxu0 0
      %6724 = vmatprep.subr.bf16.mxu0 0
      %6725 = vmatpush1.bf16.msra.mxu0 0
      %6726 = vmatprep.subr.bf16.mxu0 0
      %6727 = vmatpush1.bf16.msra.mxu0 0
      %6728 = vmatprep.subr.bf16.mxu0 0
      %6729 = vmatpush1.bf16.msra.mxu0 0
      %6730 = vmatprep.subr.bf16.mxu0 0
      %6731 = vmatpush1.bf16.msra.mxu0 0
      %6732 = vmatprep.subr.bf16.mxu0 0
      %6733 = vmatpush1.bf16.msra.mxu0 0
      %6734 = vmatprep.subr.bf16.mxu0 0
      %6735 = vmatpush1.bf16.msra.mxu0 0
      %6736 = vmatprep.subr.bf16.mxu0 0
      %6737 = vmatpush1.bf16.msra.mxu0 0
      %6738 = vmatprep.subr.bf16.mxu0 0
      %6739 = vmatpush1.bf16.msra.mxu0 0
      %6740 = vmatprep.mubr.bf16.mxu0 0
      %6741 = vmatmul.mubr.bf16.gmra.mrb[0].mxu0 %v6706
      %v6742 = vpop.f32.mrb[0].mxu0
      %v6743 = vadd.f32 0.0, %v6742
      %v6744 = vpop.f32.mrb[0].mxu0
      %v6745 = vpop.f32.mrb[0].mxu0
      %v6746 = vadd.f32 0.0, %v6745
      %v6747 = vpop.f32.mrb[0].mxu0
      %6748 = vdwg.mxu0
      %6749 = vrot.lane.b32.xlu0 %v1400, 64
      %v6750 = vpop.permute.xlu0 %6749
      %v6753 = vsel %vm2414, %v6641, 0
      %6755 = vmatprep.subr.bf16.mxu0 0
      %6756 = vmatpush1.bf16.msra.mxu0 %v6750
      %6757 = vmatprep.subr.bf16.mxu0 0
      %6758 = vmatpush1.bf16.msra.mxu0 0
      %6759 = vmatprep.subr.bf16.mxu0 0
      %6760 = vmatpush1.bf16.msra.mxu0 0
      %6761 = vmatprep.subr.bf16.mxu0 0
      %6762 = vmatpush1.bf16.msra.mxu0 0
      %6763 = vmatprep.subr.bf16.mxu0 0
      %6764 = vmatpush1.bf16.msra.mxu0 0
      %6765 = vmatprep.subr.bf16.mxu0 0
      %6766 = vmatpush1.bf16.msra.mxu0 0
      %6767 = vmatprep.subr.bf16.mxu0 0
      %6768 = vmatpush1.bf16.msra.mxu0 0
      %6769 = vmatprep.subr.bf16.mxu0 0
      %6770 = vmatpush1.bf16.msra.mxu0 0
      %6771 = vmatprep.subr.bf16.mxu0 0
      %6772 = vmatpush1.bf16.msra.mxu0 0
      %6773 = vmatprep.subr.bf16.mxu0 0
      %6774 = vmatpush1.bf16.msra.mxu0 0
      %6775 = vmatprep.subr.bf16.mxu0 0
      %6776 = vmatpush1.bf16.msra.mxu0 0
      %6777 = vmatprep.subr.bf16.mxu0 0
      %6778 = vmatpush1.bf16.msra.mxu0 0
      %6779 = vmatprep.subr.bf16.mxu0 0
      %6780 = vmatpush1.bf16.msra.mxu0 0
      %6781 = vmatprep.subr.bf16.mxu0 0
      %6782 = vmatpush1.bf16.msra.mxu0 0
      %6783 = vmatprep.subr.bf16.mxu0 0
      %6784 = vmatpush1.bf16.msra.mxu0 0
      %6785 = vmatprep.subr.bf16.mxu0 0
      %6786 = vmatpush1.bf16.msra.mxu0 0
      %6787 = vmatprep.mubr.bf16.mxu0 0
      %6788 = vmatmul.mubr.bf16.gmra.mrb[0].mxu0 %v6753
      %v6789 = vpop.f32.mrb[0].mxu0
      %v6790 = vadd.f32 0.0, %v6789
      %v6791 = vpop.f32.mrb[0].mxu0
      %v6792 = vpop.f32.mrb[0].mxu0
      %v6793 = vadd.f32 0.0, %v6792
      %v6794 = vpop.f32.mrb[0].mxu0
      %6795 = vdwg.mxu0
      %6796 = vrot.lane.b32.xlu0 %v1401, 64
      %v6797 = vpop.permute.xlu0 %6796
      %v6800 = vsel %vm2414, %v6642, 0
      %6802 = vmatprep.subr.bf16.mxu0 0
      %6803 = vmatpush1.bf16.msra.mxu0 %v6797
      %6804 = vmatprep.subr.bf16.mxu0 0
      %6805 = vmatpush1.bf16.msra.mxu0 0
      %6806 = vmatprep.subr.bf16.mxu0 0
      %6807 = vmatpush1.bf16.msra.mxu0 0
      %6808 = vmatprep.subr.bf16.mxu0 0
      %6809 = vmatpush1.bf16.msra.mxu0 0
      %6810 = vmatprep.subr.bf16.mxu0 0
      %6811 = vmatpush1.bf16.msra.mxu0 0
      %6812 = vmatprep.subr.bf16.mxu0 0
      %6813 = vmatpush1.bf16.msra.mxu0 0
      %6814 = vmatprep.subr.bf16.mxu0 0
      %6815 = vmatpush1.bf16.msra.mxu0 0
      %6816 = vmatprep.subr.bf16.mxu0 0
      %6817 = vmatpush1.bf16.msra.mxu0 0
      %6818 = vmatprep.subr.bf16.mxu0 0
      %6819 = vmatpush1.bf16.msra.mxu0 0
      %6820 = vmatprep.subr.bf16.mxu0 0
      %6821 = vmatpush1.bf16.msra.mxu0 0
      %6822 = vmatprep.subr.bf16.mxu0 0
      %6823 = vmatpush1.bf16.msra.mxu0 0
      %6824 = vmatprep.subr.bf16.mxu0 0
      %6825 = vmatpush1.bf16.msra.mxu0 0
      %6826 = vmatprep.subr.bf16.mxu0 0
      %6827 = vmatpush1.bf16.msra.mxu0 0
      %6828 = vmatprep.subr.bf16.mxu0 0
      %6829 = vmatpush1.bf16.msra.mxu0 0
      %6830 = vmatprep.subr.bf16.mxu0 0
      %6831 = vmatpush1.bf16.msra.mxu0 0
      %6832 = vmatprep.subr.bf16.mxu0 0
      %6833 = vmatpush1.bf16.msra.mxu0 0
      %6834 = vmatprep.mubr.bf16.mxu0 0
      %6835 = vmatmul.mubr.bf16.gmra.mrb[0].mxu0 %v6800
      %v6836 = vpop.f32.mrb[0].mxu0
      %v6837 = vadd.f32 0.0, %v6836
      %v6838 = vpop.f32.mrb[0].mxu0
      %v6839 = vpop.f32.mrb[0].mxu0
      %v6840 = vadd.f32 0.0, %v6839
      %v6841 = vpop.f32.mrb[0].mxu0
      %6842 = vdwg.mxu0
      %6843 = vrot.lane.b32.xlu0 %v1402, 64
      %v6844 = vpop.permute.xlu0 %6843
      %v6847 = vsel %vm2414, %v6643, 0
      %6849 = vmatprep.subr.bf16.mxu0 0
      %6850 = vmatpush1.bf16.msra.mxu0 %v6844
      %6851 = vmatprep.subr.bf16.mxu0 0
      %6852 = vmatpush1.bf16.msra.mxu0 0
      %6853 = vmatprep.subr.bf16.mxu0 0
      %6854 = vmatpush1.bf16.msra.mxu0 0
      %6855 = vmatprep.subr.bf16.mxu0 0
      %6856 = vmatpush1.bf16.msra.mxu0 0
      %6857 = vmatprep.subr.bf16.mxu0 0
      %6858 = vmatpush1.bf16.msra.mxu0 0
      %6859 = vmatprep.subr.bf16.mxu0 0
      %6860 = vmatpush1.bf16.msra.mxu0 0
      %6861 = vmatprep.subr.bf16.mxu0 0
      %6862 = vmatpush1.bf16.msra.mxu0 0
      %6863 = vmatprep.subr.bf16.mxu0 0
      %6864 = vmatpush1.bf16.msra.mxu0 0
      %6865 = vmatprep.subr.bf16.mxu0 0
      %6866 = vmatpush1.bf16.msra.mxu0 0
      %6867 = vmatprep.subr.bf16.mxu0 0
      %6868 = vmatpush1.bf16.msra.mxu0 0
      %6869 = vmatprep.subr.bf16.mxu0 0
      %6870 = vmatpush1.bf16.msra.mxu0 0
      %6871 = vmatprep.subr.bf16.mxu0 0
      %6872 = vmatpush1.bf16.msra.mxu0 0
      %6873 = vmatprep.subr.bf16.mxu0 0
      %6874 = vmatpush1.bf16.msra.mxu0 0
      %6875 = vmatprep.subr.bf16.mxu0 0
      %6876 = vmatpush1.bf16.msra.mxu0 0
      %6877 = vmatprep.subr.bf16.mxu0 0
      %6878 = vmatpush1.bf16.msra.mxu0 0
      %6879 = vmatprep.subr.bf16.mxu0 0
      %6880 = vmatpush1.bf16.msra.mxu0 0
      %6881 = vmatprep.mubr.bf16.mxu0 0
      %6882 = vmatmul.mubr.bf16.gmra.mrb[0].mxu0 %v6847
      %v6883 = vpop.f32.mrb[0].mxu0
      %v6884 = vadd.f32 0.0, %v6883
      %v6885 = vpop.f32.mrb[0].mxu0
      %v6886 = vpop.f32.mrb[0].mxu0
      %v6887 = vadd.f32 0.0, %v6886
      %v6888 = vpop.f32.mrb[0].mxu0
      %6889 = vdwg.mxu0
      %6890 = vrot.lane.b32.xlu0 %v1403, 64
      %v6891 = vpop.permute.xlu0 %6890
      %v6894 = vsel %vm2414, %v6644, 0
      %6896 = vmatprep.subr.bf16.mxu0 0
      %6897 = vmatpush1.bf16.msra.mxu0 %v6891
      %6898 = vmatprep.subr.bf16.mxu0 0
      %6899 = vmatpush1.bf16.msra.mxu0 0
      %6900 = vmatprep.subr.bf16.mxu0 0
      %6901 = vmatpush1.bf16.msra.mxu0 0
      %6902 = vmatprep.subr.bf16.mxu0 0
      %6903 = vmatpush1.bf16.msra.mxu0 0
      %6904 = vmatprep.subr.bf16.mxu0 0
      %6905 = vmatpush1.bf16.msra.mxu0 0
      %6906 = vmatprep.subr.bf16.mxu0 0
      %6907 = vmatpush1.bf16.msra.mxu0 0
      %6908 = vmatprep.subr.bf16.mxu0 0
      %6909 = vmatpush1.bf16.msra.mxu0 0
      %6910 = vmatprep.subr.bf16.mxu0 0
      %6911 = vmatpush1.bf16.msra.mxu0 0
      %6912 = vmatprep.subr.bf16.mxu0 0
      %6913 = vmatpush1.bf16.msra.mxu0 0
      %6914 = vmatprep.subr.bf16.mxu0 0
      %6915 = vmatpush1.bf16.msra.mxu0 0
      %6916 = vmatprep.subr.bf16.mxu0 0
      %6917 = vmatpush1.bf16.msra.mxu0 0
      %6918 = vmatprep.subr.bf16.mxu0 0
      %6919 = vmatpush1.bf16.msra.mxu0 0
      %6920 = vmatprep.subr.bf16.mxu0 0
      %6921 = vmatpush1.bf16.msra.mxu0 0
      %6922 = vmatprep.subr.bf16.mxu0 0
      %6923 = vmatpush1.bf16.msra.mxu0 0
      %6924 = vmatprep.subr.bf16.mxu0 0
      %6925 = vmatpush1.bf16.msra.mxu0 0
      %6926 = vmatprep.subr.bf16.mxu0 0
      %6927 = vmatpush1.bf16.msra.mxu0 0
      %6928 = vmatprep.mubr.bf16.mxu0 0
      %6929 = vmatmul.mubr.bf16.gmra.mrb[0].mxu0 %v6894
      %v6930 = vpop.f32.mrb[0].mxu0
      %v6931 = vadd.f32 0.0, %v6930
      %v6932 = vpop.f32.mrb[0].mxu0
      %v6933 = vpop.f32.mrb[0].mxu0
      %v6934 = vadd.f32 0.0, %v6933
      %v6935 = vpop.f32.mrb[0].mxu0
      %6936 = vdwg.mxu0
      %6937 = vrot.lane.b32.xlu0 %v1404, 64
      %v6938 = vpop.permute.xlu0 %6937
      %v6941 = vsel %vm2414, %v6645, 0
      %6943 = vmatprep.subr.bf16.mxu0 0
      %6944 = vmatpush1.bf16.msra.mxu0 %v6938
      %6945 = vmatprep.subr.bf16.mxu0 0
      %6946 = vmatpush1.bf16.msra.mxu0 0
      %6947 = vmatprep.subr.bf16.mxu0 0
      %6948 = vmatpush1.bf16.msra.mxu0 0
      %6949 = vmatprep.subr.bf16.mxu0 0
      %6950 = vmatpush1.bf16.msra.mxu0 0
      %6951 = vmatprep.subr.bf16.mxu0 0
      %6952 = vmatpush1.bf16.msra.mxu0 0
      %6953 = vmatprep.subr.bf16.mxu0 0
      %6954 = vmatpush1.bf16.msra.mxu0 0
      %6955 = vmatprep.subr.bf16.mxu0 0
      %6956 = vmatpush1.bf16.msra.mxu0 0
      %6957 = vmatprep.subr.bf16.mxu0 0
      %6958 = vmatpush1.bf16.msra.mxu0 0
      %6959 = vmatprep.subr.bf16.mxu0 0
      %6960 = vmatpush1.bf16.msra.mxu0 0
      %6961 = vmatprep.subr.bf16.mxu0 0
      %6962 = vmatpush1.bf16.msra.mxu0 0
      %6963 = vmatprep.subr.bf16.mxu0 0
      %6964 = vmatpush1.bf16.msra.mxu0 0
      %6965 = vmatprep.subr.bf16.mxu0 0
      %6966 = vmatpush1.bf16.msra.mxu0 0
      %6967 = vmatprep.subr.bf16.mxu0 0
      %6968 = vmatpush1.bf16.msra.mxu0 0
      %6969 = vmatprep.subr.bf16.mxu0 0
      %6970 = vmatpush1.bf16.msra.mxu0 0
      %6971 = vmatprep.subr.bf16.mxu0 0
      %6972 = vmatpush1.bf16.msra.mxu0 0
      %6973 = vmatprep.subr.bf16.mxu0 0
      %6974 = vmatpush1.bf16.msra.mxu0 0
      %6975 = vmatprep.mubr.bf16.mxu0 0
      %6976 = vmatmul.mubr.bf16.gmra.mrb[0].mxu0 %v6941
      %v6977 = vpop.f32.mrb[0].mxu0
      %v6978 = vadd.f32 0.0, %v6977
      %v6979 = vpop.f32.mrb[0].mxu0
      %v6980 = vpop.f32.mrb[0].mxu0
      %v6981 = vadd.f32 0.0, %v6980
      %v6982 = vpop.f32.mrb[0].mxu0
      %6983 = vdwg.mxu0
      %6984 = vrot.lane.b32.xlu0 %v1405, 64
      %v6985 = vpop.permute.xlu0 %6984
      %v6988 = vsel %vm2414, %v6646, 0
      %6990 = vmatprep.subr.bf16.mxu0 0
      %6991 = vmatpush1.bf16.msra.mxu0 %v6985
      %6992 = vmatprep.subr.bf16.mxu0 0
      %6993 = vmatpush1.bf16.msra.mxu0 0
      %6994 = vmatprep.subr.bf16.mxu0 0
      %6995 = vmatpush1.bf16.msra.mxu0 0
      %6996 = vmatprep.subr.bf16.mxu0 0
      %6997 = vmatpush1.bf16.msra.mxu0 0
      %6998 = vmatprep.subr.bf16.mxu0 0
      %6999 = vmatpush1.bf16.msra.mxu0 0
      %7000 = vmatprep.subr.bf16.mxu0 0
      %7001 = vmatpush1.bf16.msra.mxu0 0
      %7002 = vmatprep.subr.bf16.mxu0 0
      %7003 = vmatpush1.bf16.msra.mxu0 0
      %7004 = vmatprep.subr.bf16.mxu0 0
      %7005 = vmatpush1.bf16.msra.mxu0 0
      %7006 = vmatprep.subr.bf16.mxu0 0
      %7007 = vmatpush1.bf16.msra.mxu0 0
      %7008 = vmatprep.subr.bf16.mxu0 0
      %7009 = vmatpush1.bf16.msra.mxu0 0
      %7010 = vmatprep.subr.bf16.mxu0 0
      %7011 = vmatpush1.bf16.msra.mxu0 0
      %7012 = vmatprep.subr.bf16.mxu0 0
      %7013 = vmatpush1.bf16.msra.mxu0 0
      %7014 = vmatprep.subr.bf16.mxu0 0
      %7015 = vmatpush1.bf16.msra.mxu0 0
      %7016 = vmatprep.subr.bf16.mxu0 0
      %7017 = vmatpush1.bf16.msra.mxu0 0
      %7018 = vmatprep.subr.bf16.mxu0 0
      %7019 = vmatpush1.bf16.msra.mxu0 0
      %7020 = vmatprep.subr.bf16.mxu0 0
      %7021 = vmatpush1.bf16.msra.mxu0 0
      %7022 = vmatprep.mubr.bf16.mxu0 0
      %7023 = vmatmul.mubr.bf16.gmra.mrb[0].mxu0 %v6988
      %v7024 = vpop.f32.mrb[0].mxu0
      %v7025 = vadd.f32 0.0, %v7024
      %v7026 = vpop.f32.mrb[0].mxu0
      %v7027 = vpop.f32.mrb[0].mxu0
      %v7028 = vadd.f32 0.0, %v7027
      %v7029 = vpop.f32.mrb[0].mxu0
      %7030 = vdwg.mxu0
      %7031 = vrot.lane.b32.xlu0 %v1406, 64
      %v7032 = vpop.permute.xlu0 %7031
      %v7035 = vsel %vm2414, %v6647, 0
      %7037 = vmatprep.subr.bf16.mxu0 0
      %7038 = vmatpush1.bf16.msra.mxu0 %v7032
      %7039 = vmatprep.subr.bf16.mxu0 0
      %7040 = vmatpush1.bf16.msra.mxu0 0
      %7041 = vmatprep.subr.bf16.mxu0 0
      %7042 = vmatpush1.bf16.msra.mxu0 0
      %7043 = vmatprep.subr.bf16.mxu0 0
      %7044 = vmatpush1.bf16.msra.mxu0 0
      %7045 = vmatprep.subr.bf16.mxu0 0
      %7046 = vmatpush1.bf16.msra.mxu0 0
      %7047 = vmatprep.subr.bf16.mxu0 0
      %7048 = vmatpush1.bf16.msra.mxu0 0
      %7049 = vmatprep.subr.bf16.mxu0 0
      %7050 = vmatpush1.bf16.msra.mxu0 0
      %7051 = vmatprep.subr.bf16.mxu0 0
      %7052 = vmatpush1.bf16.msra.mxu0 0
      %7053 = vmatprep.subr.bf16.mxu0 0
      %7054 = vmatpush1.bf16.msra.mxu0 0
      %7055 = vmatprep.subr.bf16.mxu0 0
      %7056 = vmatpush1.bf16.msra.mxu0 0
      %7057 = vmatprep.subr.bf16.mxu0 0
      %7058 = vmatpush1.bf16.msra.mxu0 0
      %7059 = vmatprep.subr.bf16.mxu0 0
      %7060 = vmatpush1.bf16.msra.mxu0 0
      %7061 = vmatprep.subr.bf16.mxu0 0
      %7062 = vmatpush1.bf16.msra.mxu0 0
      %7063 = vmatprep.subr.bf16.mxu0 0
      %7064 = vmatpush1.bf16.msra.mxu0 0
      %7065 = vmatprep.subr.bf16.mxu0 0
      %7066 = vmatpush1.bf16.msra.mxu0 0
      %7067 = vmatprep.subr.bf16.mxu0 0
      %7068 = vmatpush1.bf16.msra.mxu0 0
      %7069 = vmatprep.mubr.bf16.mxu0 0
      %7070 = vmatmul.mubr.bf16.gmra.mrb[0].mxu0 %v7035
      %v7071 = vpop.f32.mrb[0].mxu0
      %v7072 = vadd.f32 0.0, %v7071
      %v7073 = vpop.f32.mrb[0].mxu0
      %v7074 = vpop.f32.mrb[0].mxu0
      %v7075 = vadd.f32 0.0, %v7074
      %v7076 = vpop.f32.mrb[0].mxu0
      %7077 = vdwg.mxu0
      %7078 = vrot.lane.b32.xlu0 %v1407, 64
      %v7079 = vpop.permute.xlu0 %7078
      %v7082 = vsel %vm2414, %v6648, 0
      %7084 = vmatprep.subr.bf16.mxu0 0
      %7085 = vmatpush1.bf16.msra.mxu0 %v7079
      %7086 = vmatprep.subr.bf16.mxu0 0
      %7087 = vmatpush1.bf16.msra.mxu0 0
      %7088 = vmatprep.subr.bf16.mxu0 0
      %7089 = vmatpush1.bf16.msra.mxu0 0
      %7090 = vmatprep.subr.bf16.mxu0 0
      %7091 = vmatpush1.bf16.msra.mxu0 0
      %7092 = vmatprep.subr.bf16.mxu0 0
      %7093 = vmatpush1.bf16.msra.mxu0 0
      %7094 = vmatprep.subr.bf16.mxu0 0
      %7095 = vmatpush1.bf16.msra.mxu0 0
      %7096 = vmatprep.subr.bf16.mxu0 0
      %7097 = vmatpush1.bf16.msra.mxu0 0
      %7098 = vmatprep.subr.bf16.mxu0 0
      %7099 = vmatpush1.bf16.msra.mxu0 0
      %7100 = vmatprep.subr.bf16.mxu0 0
      %7101 = vmatpush1.bf16.msra.mxu0 0
      %7102 = vmatprep.subr.bf16.mxu0 0
      %7103 = vmatpush1.bf16.msra.mxu0 0
      %7104 = vmatprep.subr.bf16.mxu0 0
      %7105 = vmatpush1.bf16.msra.mxu0 0
      %7106 = vmatprep.subr.bf16.mxu0 0
      %7107 = vmatpush1.bf16.msra.mxu0 0
      %7108 = vmatprep.subr.bf16.mxu0 0
      %7109 = vmatpush1.bf16.msra.mxu0 0
      %7110 = vmatprep.subr.bf16.mxu0 0
      %7111 = vmatpush1.bf16.msra.mxu0 0
      %7112 = vmatprep.subr.bf16.mxu0 0
      %7113 = vmatpush1.bf16.msra.mxu0 0
      %7114 = vmatprep.subr.bf16.mxu0 0
      %7115 = vmatpush1.bf16.msra.mxu0 0
      %7116 = vmatprep.mubr.bf16.mxu0 0
      %7117 = vmatmul.mubr.bf16.gmra.mrb[0].mxu0 %v7082
      %v7118 = vpop.f32.mrb[0].mxu0
      %v7119 = vadd.f32 0.0, %v7118
      %v7120 = vpop.f32.mrb[0].mxu0
      %v7121 = vpop.f32.mrb[0].mxu0
      %v7122 = vadd.f32 0.0, %v7121
      %v7123 = vpop.f32.mrb[0].mxu0
      %7124 = vdwg.mxu0
      %7125 = vrot.lane.b32.xlu0 %v1408, 64
      %v7126 = vpop.permute.xlu0 %7125
      %v7129 = vsel %vm2414, %v6649, 0
      %7131 = vmatprep.subr.bf16.mxu0 0
      %7132 = vmatpush1.bf16.msra.mxu0 %v7126
      %7133 = vmatprep.subr.bf16.mxu0 0
      %7134 = vmatpush1.bf16.msra.mxu0 0
      %7135 = vmatprep.subr.bf16.mxu0 0
      %7136 = vmatpush1.bf16.msra.mxu0 0
      %7137 = vmatprep.subr.bf16.mxu0 0
      %7138 = vmatpush1.bf16.msra.mxu0 0
      %7139 = vmatprep.subr.bf16.mxu0 0
      %7140 = vmatpush1.bf16.msra.mxu0 0
      %7141 = vmatprep.subr.bf16.mxu0 0
      %7142 = vmatpush1.bf16.msra.mxu0 0
      %7143 = vmatprep.subr.bf16.mxu0 0
      %7144 = vmatpush1.bf16.msra.mxu0 0
      %7145 = vmatprep.subr.bf16.mxu0 0
      %7146 = vmatpush1.bf16.msra.mxu0 0
      %7147 = vmatprep.subr.bf16.mxu0 0
      %7148 = vmatpush1.bf16.msra.mxu0 0
      %7149 = vmatprep.subr.bf16.mxu0 0
      %7150 = vmatpush1.bf16.msra.mxu0 0
      %7151 = vmatprep.subr.bf16.mxu0 0
      %7152 = vmatpush1.bf16.msra.mxu0 0
      %7153 = vmatprep.subr.bf16.mxu0 0
      %7154 = vmatpush1.bf16.msra.mxu0 0
      %7155 = vmatprep.subr.bf16.mxu0 0
      %7156 = vmatpush1.bf16.msra.mxu0 0
      %7157 = vmatprep.subr.bf16.mxu0 0
      %7158 = vmatpush1.bf16.msra.mxu0 0
      %7159 = vmatprep.subr.bf16.mxu0 0
      %7160 = vmatpush1.bf16.msra.mxu0 0
      %7161 = vmatprep.subr.bf16.mxu0 0
      %7162 = vmatpush1.bf16.msra.mxu0 0
      %7163 = vmatprep.mubr.bf16.mxu0 0
      %7164 = vmatmul.mubr.bf16.gmra.mrb[0].mxu0 %v7129
      %v7165 = vpop.f32.mrb[0].mxu0
      %v7166 = vadd.f32 0.0, %v7165
      %v7167 = vpop.f32.mrb[0].mxu0
      %v7168 = vpop.f32.mrb[0].mxu0
      %v7169 = vadd.f32 0.0, %v7168
      %v7170 = vpop.f32.mrb[0].mxu0
      %7171 = vdwg.mxu0
      %7172 = vrot.lane.b32.xlu0 %v1409, 64
      %v7173 = vpop.permute.xlu0 %7172
      %v7176 = vsel %vm2414, %v6650, 0
      %7178 = vmatprep.subr.bf16.mxu0 0
      %7179 = vmatpush1.bf16.msra.mxu0 %v7173
      %7180 = vmatprep.subr.bf16.mxu0 0
      %7181 = vmatpush1.bf16.msra.mxu0 0
      %7182 = vmatprep.subr.bf16.mxu0 0
      %7183 = vmatpush1.bf16.msra.mxu0 0
      %7184 = vmatprep.subr.bf16.mxu0 0
      %7185 = vmatpush1.bf16.msra.mxu0 0
      %7186 = vmatprep.subr.bf16.mxu0 0
      %7187 = vmatpush1.bf16.msra.mxu0 0
      %7188 = vmatprep.subr.bf16.mxu0 0
      %7189 = vmatpush1.bf16.msra.mxu0 0
      %7190 = vmatprep.subr.bf16.mxu0 0
      %7191 = vmatpush1.bf16.msra.mxu0 0
      %7192 = vmatprep.subr.bf16.mxu0 0
      %7193 = vmatpush1.bf16.msra.mxu0 0
      %7194 = vmatprep.subr.bf16.mxu0 0
      %7195 = vmatpush1.bf16.msra.mxu0 0
      %7196 = vmatprep.subr.bf16.mxu0 0
      %7197 = vmatpush1.bf16.msra.mxu0 0
      %7198 = vmatprep.subr.bf16.mxu0 0
      %7199 = vmatpush1.bf16.msra.mxu0 0
      %7200 = vmatprep.subr.bf16.mxu0 0
      %7201 = vmatpush1.bf16.msra.mxu0 0
      %7202 = vmatprep.subr.bf16.mxu0 0
      %7203 = vmatpush1.bf16.msra.mxu0 0
      %7204 = vmatprep.subr.bf16.mxu0 0
      %7205 = vmatpush1.bf16.msra.mxu0 0
      %7206 = vmatprep.subr.bf16.mxu0 0
      %7207 = vmatpush1.bf16.msra.mxu0 0
      %7208 = vmatprep.subr.bf16.mxu0 0
      %7209 = vmatpush1.bf16.msra.mxu0 0
      %7210 = vmatprep.mubr.bf16.mxu0 0
      %7211 = vmatmul.mubr.bf16.gmra.mrb[0].mxu0 %v7176
      %v7212 = vpop.f32.mrb[0].mxu0
      %v7213 = vadd.f32 0.0, %v7212
      %v7214 = vpop.f32.mrb[0].mxu0
      %v7215 = vpop.f32.mrb[0].mxu0
      %v7216 = vadd.f32 0.0, %v7215
      %v7217 = vpop.f32.mrb[0].mxu0
      %7218 = vdwg.mxu0
      %7219 = vrot.lane.b32.xlu0 %v1410, 64
      %v7220 = vpop.permute.xlu0 %7219
      %v7223 = vsel %vm2414, %v6651, 0
      %7225 = vmatprep.subr.bf16.mxu0 0
      %7226 = vmatpush1.bf16.msra.mxu0 %v7220
      %7227 = vmatprep.subr.bf16.mxu0 0
      %7228 = vmatpush1.bf16.msra.mxu0 0
      %7229 = vmatprep.subr.bf16.mxu0 0
      %7230 = vmatpush1.bf16.msra.mxu0 0
      %7231 = vmatprep.subr.bf16.mxu0 0
      %7232 = vmatpush1.bf16.msra.mxu0 0
      %7233 = vmatprep.subr.bf16.mxu0 0
      %7234 = vmatpush1.bf16.msra.mxu0 0
      %7235 = vmatprep.subr.bf16.mxu0 0
      %7236 = vmatpush1.bf16.msra.mxu0 0
      %7237 = vmatprep.subr.bf16.mxu0 0
      %7238 = vmatpush1.bf16.msra.mxu0 0
      %7239 = vmatprep.subr.bf16.mxu0 0
      %7240 = vmatpush1.bf16.msra.mxu0 0
      %7241 = vmatprep.subr.bf16.mxu0 0
      %7242 = vmatpush1.bf16.msra.mxu0 0
      %7243 = vmatprep.subr.bf16.mxu0 0
      %7244 = vmatpush1.bf16.msra.mxu0 0
      %7245 = vmatprep.subr.bf16.mxu0 0
      %7246 = vmatpush1.bf16.msra.mxu0 0
      %7247 = vmatprep.subr.bf16.mxu0 0
      %7248 = vmatpush1.bf16.msra.mxu0 0
      %7249 = vmatprep.subr.bf16.mxu0 0
      %7250 = vmatpush1.bf16.msra.mxu0 0
      %7251 = vmatprep.subr.bf16.mxu0 0
      %7252 = vmatpush1.bf16.msra.mxu0 0
      %7253 = vmatprep.subr.bf16.mxu0 0
      %7254 = vmatpush1.bf16.msra.mxu0 0
      %7255 = vmatprep.subr.bf16.mxu0 0
      %7256 = vmatpush1.bf16.msra.mxu0 0
      %7257 = vmatprep.mubr.bf16.mxu0 0
      %7258 = vmatmul.mubr.bf16.gmra.mrb[0].mxu0 %v7223
      %v7259 = vpop.f32.mrb[0].mxu0
      %v7260 = vadd.f32 0.0, %v7259
      %v7261 = vpop.f32.mrb[0].mxu0
      %v7262 = vpop.f32.mrb[0].mxu0
      %v7263 = vadd.f32 0.0, %v7262
      %v7264 = vpop.f32.mrb[0].mxu0
      %7265 = vdwg.mxu0
      %7266 = vrot.lane.b32.xlu0 %v1411, 64
      %v7267 = vpop.permute.xlu0 %7266
      %v7270 = vsel %vm2414, %v6652, 0
      %7272 = vmatprep.subr.bf16.mxu0 0
      %7273 = vmatpush1.bf16.msra.mxu0 %v7267
      %7274 = vmatprep.subr.bf16.mxu0 0
      %7275 = vmatpush1.bf16.msra.mxu0 0
      %7276 = vmatprep.subr.bf16.mxu0 0
      %7277 = vmatpush1.bf16.msra.mxu0 0
      %7278 = vmatprep.subr.bf16.mxu0 0
      %7279 = vmatpush1.bf16.msra.mxu0 0
      %7280 = vmatprep.subr.bf16.mxu0 0
      %7281 = vmatpush1.bf16.msra.mxu0 0
      %7282 = vmatprep.subr.bf16.mxu0 0
      %7283 = vmatpush1.bf16.msra.mxu0 0
      %7284 = vmatprep.subr.bf16.mxu0 0
      %7285 = vmatpush1.bf16.msra.mxu0 0
      %7286 = vmatprep.subr.bf16.mxu0 0
      %7287 = vmatpush1.bf16.msra.mxu0 0
      %7288 = vmatprep.subr.bf16.mxu0 0
      %7289 = vmatpush1.bf16.msra.mxu0 0
      %7290 = vmatprep.subr.bf16.mxu0 0
      %7291 = vmatpush1.bf16.msra.mxu0 0
      %7292 = vmatprep.subr.bf16.mxu0 0
      %7293 = vmatpush1.bf16.msra.mxu0 0
      %7294 = vmatprep.subr.bf16.mxu0 0
      %7295 = vmatpush1.bf16.msra.mxu0 0
      %7296 = vmatprep.subr.bf16.mxu0 0
      %7297 = vmatpush1.bf16.msra.mxu0 0
      %7298 = vmatprep.subr.bf16.mxu0 0
      %7299 = vmatpush1.bf16.msra.mxu0 0
      %7300 = vmatprep.subr.bf16.mxu0 0
      %7301 = vmatpush1.bf16.msra.mxu0 0
      %7302 = vmatprep.subr.bf16.mxu0 0
      %7303 = vmatpush1.bf16.msra.mxu0 0
      %7304 = vmatprep.mubr.bf16.mxu0 0
      %7305 = vmatmul.mubr.bf16.gmra.mrb[0].mxu0 %v7270
      %v7306 = vpop.f32.mrb[0].mxu0
      %v7307 = vadd.f32 0.0, %v7306
      %v7308 = vpop.f32.mrb[0].mxu0
      %v7309 = vpop.f32.mrb[0].mxu0
      %v7310 = vadd.f32 0.0, %v7309
      %v7311 = vpop.f32.mrb[0].mxu0
      %7312 = vdwg.mxu0
      %7313 = vrot.lane.b32.xlu0 %v1412, 64
      %v7314 = vpop.permute.xlu0 %7313
      %v7317 = vsel %vm2414, %v6653, 0
      %7319 = vmatprep.subr.bf16.mxu0 0
      %7320 = vmatpush1.bf16.msra.mxu0 %v7314
      %7321 = vmatprep.subr.bf16.mxu0 0
      %7322 = vmatpush1.bf16.msra.mxu0 0
      %7323 = vmatprep.subr.bf16.mxu0 0
      %7324 = vmatpush1.bf16.msra.mxu0 0
      %7325 = vmatprep.subr.bf16.mxu0 0
      %7326 = vmatpush1.bf16.msra.mxu0 0
      %7327 = vmatprep.subr.bf16.mxu0 0
      %7328 = vmatpush1.bf16.msra.mxu0 0
      %7329 = vmatprep.subr.bf16.mxu0 0
      %7330 = vmatpush1.bf16.msra.mxu0 0
      %7331 = vmatprep.subr.bf16.mxu0 0
      %7332 = vmatpush1.bf16.msra.mxu0 0
      %7333 = vmatprep.subr.bf16.mxu0 0
      %7334 = vmatpush1.bf16.msra.mxu0 0
      %7335 = vmatprep.subr.bf16.mxu0 0
      %7336 = vmatpush1.bf16.msra.mxu0 0
      %7337 = vmatprep.subr.bf16.mxu0 0
      %7338 = vmatpush1.bf16.msra.mxu0 0
      %7339 = vmatprep.subr.bf16.mxu0 0
      %7340 = vmatpush1.bf16.msra.mxu0 0
      %7341 = vmatprep.subr.bf16.mxu0 0
      %7342 = vmatpush1.bf16.msra.mxu0 0
      %7343 = vmatprep.subr.bf16.mxu0 0
      %7344 = vmatpush1.bf16.msra.mxu0 0
      %7345 = vmatprep.subr.bf16.mxu0 0
      %7346 = vmatpush1.bf16.msra.mxu0 0
      %7347 = vmatprep.subr.bf16.mxu0 0
      %7348 = vmatpush1.bf16.msra.mxu0 0
      %7349 = vmatprep.subr.bf16.mxu0 0
      %7350 = vmatpush1.bf16.msra.mxu0 0
      %7351 = vmatprep.mubr.bf16.mxu0 0
      %7352 = vmatmul.mubr.bf16.gmra.mrb[0].mxu0 %v7317
      %v7353 = vpop.f32.mrb[0].mxu0
      %v7354 = vadd.f32 0.0, %v7353
      %v7355 = vpop.f32.mrb[0].mxu0
      %v7356 = vpop.f32.mrb[0].mxu0
      %v7357 = vadd.f32 0.0, %v7356
      %v7358 = vpop.f32.mrb[0].mxu0
      %7359 = vdwg.mxu0
      %7360 = vrot.lane.b32.xlu0 %v1413, 64
      %v7361 = vpop.permute.xlu0 %7360
      %v7364 = vsel %vm2414, %v6654, 0
      %7366 = vmatprep.subr.bf16.mxu0 0
      %7367 = vmatpush1.bf16.msra.mxu0 %v7361
      %7368 = vmatprep.subr.bf16.mxu0 0
      %7369 = vmatpush1.bf16.msra.mxu0 0
      %7370 = vmatprep.subr.bf16.mxu0 0
      %7371 = vmatpush1.bf16.msra.mxu0 0
      %7372 = vmatprep.subr.bf16.mxu0 0
      %7373 = vmatpush1.bf16.msra.mxu0 0
      %7374 = vmatprep.subr.bf16.mxu0 0
      %7375 = vmatpush1.bf16.msra.mxu0 0
      %7376 = vmatprep.subr.bf16.mxu0 0
      %7377 = vmatpush1.bf16.msra.mxu0 0
      %7378 = vmatprep.subr.bf16.mxu0 0
      %7379 = vmatpush1.bf16.msra.mxu0 0
      %7380 = vmatprep.subr.bf16.mxu0 0
      %7381 = vmatpush1.bf16.msra.mxu0 0
      %7382 = vmatprep.subr.bf16.mxu0 0
      %7383 = vmatpush1.bf16.msra.mxu0 0
      %7384 = vmatprep.subr.bf16.mxu0 0
      %7385 = vmatpush1.bf16.msra.mxu0 0
      %7386 = vmatprep.subr.bf16.mxu0 0
      %7387 = vmatpush1.bf16.msra.mxu0 0
      %7388 = vmatprep.subr.bf16.mxu0 0
      %7389 = vmatpush1.bf16.msra.mxu0 0
      %7390 = vmatprep.subr.bf16.mxu0 0
      %7391 = vmatpush1.bf16.msra.mxu0 0
      %7392 = vmatprep.subr.bf16.mxu0 0
      %7393 = vmatpush1.bf16.msra.mxu0 0
      %7394 = vmatprep.subr.bf16.mxu0 0
      %7395 = vmatpush1.bf16.msra.mxu0 0
      %7396 = vmatprep.subr.bf16.mxu0 0
      %7397 = vmatpush1.bf16.msra.mxu0 0
      %7398 = vmatprep.mubr.bf16.mxu0 0
      %7399 = vmatmul.mubr.bf16.gmra.mrb[0].mxu0 %v7364
      %v7400 = vpop.f32.mrb[0].mxu0
      %v7401 = vadd.f32 0.0, %v7400
      %v7402 = vpop.f32.mrb[0].mxu0
      %v7403 = vpop.f32.mrb[0].mxu0
      %v7404 = vadd.f32 0.0, %v7403
      %v7405 = vpop.f32.mrb[0].mxu0
      %7406 = vdwg.mxu0
      %7407 = vrot.lane.b32.xlu0 %v1366, 32
      %v7408 = vpop.permute.xlu0 %7407
      %7409 = vrot.lane.b32.xlu0 %v1382, 32
      %v7410 = vpop.permute.xlu0 %7409
      %v7412 = vsel %vm514, %v7408, 0
      %v7415 = vsel %vm514, %v7410, 0
      %7417 = vmatprep.subr.bf16.mxu0 0
      %7418 = vmatpush1.bf16.xpose.msra.mxu0 %v7415
      %7419 = vmatprep.subr.bf16.mxu0 0
      %7420 = vmatpush1.bf16.xpose.msra.mxu0 0
      %7421 = vmatprep.subr.bf16.mxu0 0
      %7422 = vmatpush1.bf16.xpose.msra.mxu0 0
      %7423 = vmatprep.subr.bf16.mxu0 0
      %7424 = vmatpush1.bf16.xpose.msra.mxu0 0
      %7425 = vmatprep.subr.bf16.mxu0 0
      %7426 = vmatpush1.bf16.xpose.msra.mxu0 0
      %7427 = vmatprep.subr.bf16.mxu0 0
      %7428 = vmatpush1.bf16.xpose.msra.mxu0 0
      %7429 = vmatprep.subr.bf16.mxu0 0
      %7430 = vmatpush1.bf16.xpose.msra.mxu0 0
      %7431 = vmatprep.subr.bf16.mxu0 0
      %7432 = vmatpush1.bf16.xpose.msra.mxu0 0
      %7433 = vmatprep.subr.bf16.mxu0 0
      %7434 = vmatpush1.bf16.xpose.msra.mxu0 0
      %7435 = vmatprep.subr.bf16.mxu0 0
      %7436 = vmatpush1.bf16.xpose.msra.mxu0 0
      %7437 = vmatprep.subr.bf16.mxu0 0
      %7438 = vmatpush1.bf16.xpose.msra.mxu0 0
      %7439 = vmatprep.subr.bf16.mxu0 0
      %7440 = vmatpush1.bf16.xpose.msra.mxu0 0
      %7441 = vmatprep.subr.bf16.mxu0 0
      %7442 = vmatpush1.bf16.xpose.msra.mxu0 0
      %7443 = vmatprep.subr.bf16.mxu0 0
      %7444 = vmatpush1.bf16.xpose.msra.mxu0 0
      %7445 = vmatprep.subr.bf16.mxu0 0
      %7446 = vmatpush1.bf16.xpose.msra.mxu0 0
      %7447 = vmatprep.subr.bf16.mxu0 0
      %7448 = vmatpush1.bf16.xpose.msra.mxu0 0
      %7449 = vmatprep.mubr.bf16.mxu0 0
      %7450 = vmatmul.mubr.bf16.gmra.mrb[0].mxu0 %v7412
      %v7451 = vpop.f32.mrb[0].mxu0
      %v7452 = vadd.f32 %v1540, %v7451
      %v7453 = vpop.f32.mrb[0].mxu0
      %v7454 = vpop.f32.mrb[0].mxu0
      %v7455 = vadd.f32 %v1541, %v7454
      %v7456 = vpop.f32.mrb[0].mxu0
      %7457 = vdwg.mxu0
      %7458 = vrot.lane.b32.xlu0 %v1367, 32
      %v7459 = vpop.permute.xlu0 %7458
      %7460 = vrot.lane.b32.xlu0 %v1383, 32
      %v7461 = vpop.permute.xlu0 %7460
      %v7463 = vsel %vm514, %v7459, 0
      %v7466 = vsel %vm514, %v7461, 0
      %7468 = vmatprep.subr.bf16.mxu0 0
      %7469 = vmatpush1.bf16.xpose.msra.mxu0 %v7466
      %7470 = vmatprep.subr.bf16.mxu0 0
      %7471 = vmatpush1.bf16.xpose.msra.mxu0 0
      %7472 = vmatprep.subr.bf16.mxu0 0
      %7473 = vmatpush1.bf16.xpose.msra.mxu0 0
      %7474 = vmatprep.subr.bf16.mxu0 0
      %7475 = vmatpush1.bf16.xpose.msra.mxu0 0
      %7476 = vmatprep.subr.bf16.mxu0 0
      %7477 = vmatpush1.bf16.xpose.msra.mxu0 0
      %7478 = vmatprep.subr.bf16.mxu0 0
      %7479 = vmatpush1.bf16.xpose.msra.mxu0 0
      %7480 = vmatprep.subr.bf16.mxu0 0
      %7481 = vmatpush1.bf16.xpose.msra.mxu0 0
      %7482 = vmatprep.subr.bf16.mxu0 0
      %7483 = vmatpush1.bf16.xpose.msra.mxu0 0
      %7484 = vmatprep.subr.bf16.mxu0 0
      %7485 = vmatpush1.bf16.xpose.msra.mxu0 0
      %7486 = vmatprep.subr.bf16.mxu0 0
      %7487 = vmatpush1.bf16.xpose.msra.mxu0 0
      %7488 = vmatprep.subr.bf16.mxu0 0
      %7489 = vmatpush1.bf16.xpose.msra.mxu0 0
      %7490 = vmatprep.subr.bf16.mxu0 0
      %7491 = vmatpush1.bf16.xpose.msra.mxu0 0
      %7492 = vmatprep.subr.bf16.mxu0 0
      %7493 = vmatpush1.bf16.xpose.msra.mxu0 0
      %7494 = vmatprep.subr.bf16.mxu0 0
      %7495 = vmatpush1.bf16.xpose.msra.mxu0 0
      %7496 = vmatprep.subr.bf16.mxu0 0
      %7497 = vmatpush1.bf16.xpose.msra.mxu0 0
      %7498 = vmatprep.subr.bf16.mxu0 0
      %7499 = vmatpush1.bf16.xpose.msra.mxu0 0
      %7500 = vmatprep.mubr.bf16.mxu0 0
      %7501 = vmatmul.mubr.bf16.gmra.mrb[0].mxu0 %v7463
      %v7502 = vpop.f32.mrb[0].mxu0
      %v7503 = vadd.f32 %v1548, %v7502
      %v7504 = vpop.f32.mrb[0].mxu0
      %v7505 = vpop.f32.mrb[0].mxu0
      %v7506 = vadd.f32 %v1549, %v7505
      %v7507 = vpop.f32.mrb[0].mxu0
      %7508 = vdwg.mxu0
      %7509 = vrot.lane.b32.xlu0 %v1368, 32
      %v7510 = vpop.permute.xlu0 %7509
      %7511 = vrot.lane.b32.xlu0 %v1384, 32
      %v7512 = vpop.permute.xlu0 %7511
      %v7514 = vsel %vm514, %v7510, 0
      %v7517 = vsel %vm514, %v7512, 0
      %7519 = vmatprep.subr.bf16.mxu0 0
      %7520 = vmatpush1.bf16.xpose.msra.mxu0 %v7517
      %7521 = vmatprep.subr.bf16.mxu0 0
      %7522 = vmatpush1.bf16.xpose.msra.mxu0 0
      %7523 = vmatprep.subr.bf16.mxu0 0
      %7524 = vmatpush1.bf16.xpose.msra.mxu0 0
      %7525 = vmatprep.subr.bf16.mxu0 0
      %7526 = vmatpush1.bf16.xpose.msra.mxu0 0
      %7527 = vmatprep.subr.bf16.mxu0 0
      %7528 = vmatpush1.bf16.xpose.msra.mxu0 0
      %7529 = vmatprep.subr.bf16.mxu0 0
      %7530 = vmatpush1.bf16.xpose.msra.mxu0 0
      %7531 = vmatprep.subr.bf16.mxu0 0
      %7532 = vmatpush1.bf16.xpose.msra.mxu0 0
      %7533 = vmatprep.subr.bf16.mxu0 0
      %7534 = vmatpush1.bf16.xpose.msra.mxu0 0
      %7535 = vmatprep.subr.bf16.mxu0 0
      %7536 = vmatpush1.bf16.xpose.msra.mxu0 0
      %7537 = vmatprep.subr.bf16.mxu0 0
      %7538 = vmatpush1.bf16.xpose.msra.mxu0 0
      %7539 = vmatprep.subr.bf16.mxu0 0
      %7540 = vmatpush1.bf16.xpose.msra.mxu0 0
      %7541 = vmatprep.subr.bf16.mxu0 0
      %7542 = vmatpush1.bf16.xpose.msra.mxu0 0
      %7543 = vmatprep.subr.bf16.mxu0 0
      %7544 = vmatpush1.bf16.xpose.msra.mxu0 0
      %7545 = vmatprep.subr.bf16.mxu0 0
      %7546 = vmatpush1.bf16.xpose.msra.mxu0 0
      %7547 = vmatprep.subr.bf16.mxu0 0
      %7548 = vmatpush1.bf16.xpose.msra.mxu0 0
      %7549 = vmatprep.subr.bf16.mxu0 0
      %7550 = vmatpush1.bf16.xpose.msra.mxu0 0
      %7551 = vmatprep.mubr.bf16.mxu0 0
      %7552 = vmatmul.mubr.bf16.gmra.mrb[0].mxu0 %v7514
      %v7553 = vpop.f32.mrb[0].mxu0
      %v7554 = vadd.f32 %v1556, %v7553
      %v7555 = vpop.f32.mrb[0].mxu0
      %v7556 = vpop.f32.mrb[0].mxu0
      %v7557 = vadd.f32 %v1557, %v7556
      %v7558 = vpop.f32.mrb[0].mxu0
      %7559 = vdwg.mxu0
      %7560 = vrot.lane.b32.xlu0 %v1369, 32
      %v7561 = vpop.permute.xlu0 %7560
      %7562 = vrot.lane.b32.xlu0 %v1385, 32
      %v7563 = vpop.permute.xlu0 %7562
      %v7565 = vsel %vm514, %v7561, 0
      %v7568 = vsel %vm514, %v7563, 0
      %7570 = vmatprep.subr.bf16.mxu0 0
      %7571 = vmatpush1.bf16.xpose.msra.mxu0 %v7568
      %7572 = vmatprep.subr.bf16.mxu0 0
      %7573 = vmatpush1.bf16.xpose.msra.mxu0 0
      %7574 = vmatprep.subr.bf16.mxu0 0
      %7575 = vmatpush1.bf16.xpose.msra.mxu0 0
      %7576 = vmatprep.subr.bf16.mxu0 0
      %7577 = vmatpush1.bf16.xpose.msra.mxu0 0
      %7578 = vmatprep.subr.bf16.mxu0 0
      %7579 = vmatpush1.bf16.xpose.msra.mxu0 0
      %7580 = vmatprep.subr.bf16.mxu0 0
      %7581 = vmatpush1.bf16.xpose.msra.mxu0 0
      %7582 = vmatprep.subr.bf16.mxu0 0
      %7583 = vmatpush1.bf16.xpose.msra.mxu0 0
      %7584 = vmatprep.subr.bf16.mxu0 0
      %7585 = vmatpush1.bf16.xpose.msra.mxu0 0
      %7586 = vmatprep.subr.bf16.mxu0 0
      %7587 = vmatpush1.bf16.xpose.msra.mxu0 0
      %7588 = vmatprep.subr.bf16.mxu0 0
      %7589 = vmatpush1.bf16.xpose.msra.mxu0 0
      %7590 = vmatprep.subr.bf16.mxu0 0
      %7591 = vmatpush1.bf16.xpose.msra.mxu0 0
      %7592 = vmatprep.subr.bf16.mxu0 0
      %7593 = vmatpush1.bf16.xpose.msra.mxu0 0
      %7594 = vmatprep.subr.bf16.mxu0 0
      %7595 = vmatpush1.bf16.xpose.msra.mxu0 0
      %7596 = vmatprep.subr.bf16.mxu0 0
      %7597 = vmatpush1.bf16.xpose.msra.mxu0 0
      %7598 = vmatprep.subr.bf16.mxu0 0
      %7599 = vmatpush1.bf16.xpose.msra.mxu0 0
      %7600 = vmatprep.subr.bf16.mxu0 0
      %7601 = vmatpush1.bf16.xpose.msra.mxu0 0
      %7602 = vmatprep.mubr.bf16.mxu0 0
      %7603 = vmatmul.mubr.bf16.gmra.mrb[0].mxu0 %v7565
      %v7604 = vpop.f32.mrb[0].mxu0
      %v7605 = vadd.f32 %v1564, %v7604
      %v7606 = vpop.f32.mrb[0].mxu0
      %v7607 = vpop.f32.mrb[0].mxu0
      %v7608 = vadd.f32 %v1565, %v7607
      %v7609 = vpop.f32.mrb[0].mxu0
      %7610 = vdwg.mxu0
      %7611 = vrot.lane.b32.xlu0 %v1370, 32
      %v7612 = vpop.permute.xlu0 %7611
      %7613 = vrot.lane.b32.xlu0 %v1386, 32
      %v7614 = vpop.permute.xlu0 %7613
      %v7616 = vsel %vm514, %v7612, 0
      %v7619 = vsel %vm514, %v7614, 0
      %7621 = vmatprep.subr.bf16.mxu0 0
      %7622 = vmatpush1.bf16.xpose.msra.mxu0 %v7619
      %7623 = vmatprep.subr.bf16.mxu0 0
      %7624 = vmatpush1.bf16.xpose.msra.mxu0 0
      %7625 = vmatprep.subr.bf16.mxu0 0
      %7626 = vmatpush1.bf16.xpose.msra.mxu0 0
      %7627 = vmatprep.subr.bf16.mxu0 0
      %7628 = vmatpush1.bf16.xpose.msra.mxu0 0
      %7629 = vmatprep.subr.bf16.mxu0 0
      %7630 = vmatpush1.bf16.xpose.msra.mxu0 0
      %7631 = vmatprep.subr.bf16.mxu0 0
      %7632 = vmatpush1.bf16.xpose.msra.mxu0 0
      %7633 = vmatprep.subr.bf16.mxu0 0
      %7634 = vmatpush1.bf16.xpose.msra.mxu0 0
      %7635 = vmatprep.subr.bf16.mxu0 0
      %7636 = vmatpush1.bf16.xpose.msra.mxu0 0
      %7637 = vmatprep.subr.bf16.mxu0 0
      %7638 = vmatpush1.bf16.xpose.msra.mxu0 0
      %7639 = vmatprep.subr.bf16.mxu0 0
      %7640 = vmatpush1.bf16.xpose.msra.mxu0 0
      %7641 = vmatprep.subr.bf16.mxu0 0
      %7642 = vmatpush1.bf16.xpose.msra.mxu0 0
      %7643 = vmatprep.subr.bf16.mxu0 0
      %7644 = vmatpush1.bf16.xpose.msra.mxu0 0
      %7645 = vmatprep.subr.bf16.mxu0 0
      %7646 = vmatpush1.bf16.xpose.msra.mxu0 0
      %7647 = vmatprep.subr.bf16.mxu0 0
      %7648 = vmatpush1.bf16.xpose.msra.mxu0 0
      %7649 = vmatprep.subr.bf16.mxu0 0
      %7650 = vmatpush1.bf16.xpose.msra.mxu0 0
      %7651 = vmatprep.subr.bf16.mxu0 0
      %7652 = vmatpush1.bf16.xpose.msra.mxu0 0
      %7653 = vmatprep.mubr.bf16.mxu0 0
      %7654 = vmatmul.mubr.bf16.gmra.mrb[0].mxu0 %v7616
      %v7655 = vpop.f32.mrb[0].mxu0
      %v7656 = vadd.f32 %v1572, %v7655
      %v7657 = vpop.f32.mrb[0].mxu0
      %v7658 = vpop.f32.mrb[0].mxu0
      %v7659 = vadd.f32 %v1573, %v7658
      %v7660 = vpop.f32.mrb[0].mxu0
      %7661 = vdwg.mxu0
      %7662 = vrot.lane.b32.xlu0 %v1371, 32
      %v7663 = vpop.permute.xlu0 %7662
      %7664 = vrot.lane.b32.xlu0 %v1387, 32
      %v7665 = vpop.permute.xlu0 %7664
      %v7667 = vsel %vm514, %v7663, 0
      %v7670 = vsel %vm514, %v7665, 0
      %7672 = vmatprep.subr.bf16.mxu0 0
      %7673 = vmatpush1.bf16.xpose.msra.mxu0 %v7670
      %7674 = vmatprep.subr.bf16.mxu0 0
      %7675 = vmatpush1.bf16.xpose.msra.mxu0 0
      %7676 = vmatprep.subr.bf16.mxu0 0
      %7677 = vmatpush1.bf16.xpose.msra.mxu0 0
      %7678 = vmatprep.subr.bf16.mxu0 0
      %7679 = vmatpush1.bf16.xpose.msra.mxu0 0
      %7680 = vmatprep.subr.bf16.mxu0 0
      %7681 = vmatpush1.bf16.xpose.msra.mxu0 0
      %7682 = vmatprep.subr.bf16.mxu0 0
      %7683 = vmatpush1.bf16.xpose.msra.mxu0 0
      %7684 = vmatprep.subr.bf16.mxu0 0
      %7685 = vmatpush1.bf16.xpose.msra.mxu0 0
      %7686 = vmatprep.subr.bf16.mxu0 0
      %7687 = vmatpush1.bf16.xpose.msra.mxu0 0
      %7688 = vmatprep.subr.bf16.mxu0 0
      %7689 = vmatpush1.bf16.xpose.msra.mxu0 0
      %7690 = vmatprep.subr.bf16.mxu0 0
      %7691 = vmatpush1.bf16.xpose.msra.mxu0 0
      %7692 = vmatprep.subr.bf16.mxu0 0
      %7693 = vmatpush1.bf16.xpose.msra.mxu0 0
      %7694 = vmatprep.subr.bf16.mxu0 0
      %7695 = vmatpush1.bf16.xpose.msra.mxu0 0
      %7696 = vmatprep.subr.bf16.mxu0 0
      %7697 = vmatpush1.bf16.xpose.msra.mxu0 0
      %7698 = vmatprep.subr.bf16.mxu0 0
      %7699 = vmatpush1.bf16.xpose.msra.mxu0 0
      %7700 = vmatprep.subr.bf16.mxu0 0
      %7701 = vmatpush1.bf16.xpose.msra.mxu0 0
      %7702 = vmatprep.subr.bf16.mxu0 0
      %7703 = vmatpush1.bf16.xpose.msra.mxu0 0
      %7704 = vmatprep.mubr.bf16.mxu0 0
      %7705 = vmatmul.mubr.bf16.gmra.mrb[0].mxu0 %v7667
      %v7706 = vpop.f32.mrb[0].mxu0
      %v7707 = vadd.f32 %v1580, %v7706
      %v7708 = vpop.f32.mrb[0].mxu0
      %v7709 = vpop.f32.mrb[0].mxu0
      %v7710 = vadd.f32 %v1581, %v7709
      %v7711 = vpop.f32.mrb[0].mxu0
      %7712 = vdwg.mxu0
      %7713 = vrot.lane.b32.xlu0 %v1372, 32
      %v7714 = vpop.permute.xlu0 %7713
      %7715 = vrot.lane.b32.xlu0 %v1388, 32
      %v7716 = vpop.permute.xlu0 %7715
      %v7718 = vsel %vm514, %v7714, 0
      %v7721 = vsel %vm514, %v7716, 0
      %7723 = vmatprep.subr.bf16.mxu0 0
      %7724 = vmatpush1.bf16.xpose.msra.mxu0 %v7721
      %7725 = vmatprep.subr.bf16.mxu0 0
      %7726 = vmatpush1.bf16.xpose.msra.mxu0 0
      %7727 = vmatprep.subr.bf16.mxu0 0
      %7728 = vmatpush1.bf16.xpose.msra.mxu0 0
      %7729 = vmatprep.subr.bf16.mxu0 0
      %7730 = vmatpush1.bf16.xpose.msra.mxu0 0
      %7731 = vmatprep.subr.bf16.mxu0 0
      %7732 = vmatpush1.bf16.xpose.msra.mxu0 0
      %7733 = vmatprep.subr.bf16.mxu0 0
      %7734 = vmatpush1.bf16.xpose.msra.mxu0 0
      %7735 = vmatprep.subr.bf16.mxu0 0
      %7736 = vmatpush1.bf16.xpose.msra.mxu0 0
      %7737 = vmatprep.subr.bf16.mxu0 0
      %7738 = vmatpush1.bf16.xpose.msra.mxu0 0
      %7739 = vmatprep.subr.bf16.mxu0 0
      %7740 = vmatpush1.bf16.xpose.msra.mxu0 0
      %7741 = vmatprep.subr.bf16.mxu0 0
      %7742 = vmatpush1.bf16.xpose.msra.mxu0 0
      %7743 = vmatprep.subr.bf16.mxu0 0
      %7744 = vmatpush1.bf16.xpose.msra.mxu0 0
      %7745 = vmatprep.subr.bf16.mxu0 0
      %7746 = vmatpush1.bf16.xpose.msra.mxu0 0
      %7747 = vmatprep.subr.bf16.mxu0 0
      %7748 = vmatpush1.bf16.xpose.msra.mxu0 0
      %7749 = vmatprep.subr.bf16.mxu0 0
      %7750 = vmatpush1.bf16.xpose.msra.mxu0 0
      %7751 = vmatprep.subr.bf16.mxu0 0
      %7752 = vmatpush1.bf16.xpose.msra.mxu0 0
      %7753 = vmatprep.subr.bf16.mxu0 0
      %7754 = vmatpush1.bf16.xpose.msra.mxu0 0
      %7755 = vmatprep.mubr.bf16.mxu0 0
      %7756 = vmatmul.mubr.bf16.gmra.mrb[0].mxu0 %v7718
      %v7757 = vpop.f32.mrb[0].mxu0
      %v7758 = vadd.f32 %v1588, %v7757
      %v7759 = vpop.f32.mrb[0].mxu0
      %v7760 = vpop.f32.mrb[0].mxu0
      %v7761 = vadd.f32 %v1589, %v7760
      %v7762 = vpop.f32.mrb[0].mxu0
      %7763 = vdwg.mxu0
      %7764 = vrot.lane.b32.xlu0 %v1373, 32
      %v7765 = vpop.permute.xlu0 %7764
      %7766 = vrot.lane.b32.xlu0 %v1389, 32
      %v7767 = vpop.permute.xlu0 %7766
      %v7769 = vsel %vm514, %v7765, 0
      %v7772 = vsel %vm514, %v7767, 0
      %7774 = vmatprep.subr.bf16.mxu0 0
      %7775 = vmatpush1.bf16.xpose.msra.mxu0 %v7772
      %7776 = vmatprep.subr.bf16.mxu0 0
      %7777 = vmatpush1.bf16.xpose.msra.mxu0 0
      %7778 = vmatprep.subr.bf16.mxu0 0
      %7779 = vmatpush1.bf16.xpose.msra.mxu0 0
      %7780 = vmatprep.subr.bf16.mxu0 0
      %7781 = vmatpush1.bf16.xpose.msra.mxu0 0
      %7782 = vmatprep.subr.bf16.mxu0 0
      %7783 = vmatpush1.bf16.xpose.msra.mxu0 0
      %7784 = vmatprep.subr.bf16.mxu0 0
      %7785 = vmatpush1.bf16.xpose.msra.mxu0 0
      %7786 = vmatprep.subr.bf16.mxu0 0
      %7787 = vmatpush1.bf16.xpose.msra.mxu0 0
      %7788 = vmatprep.subr.bf16.mxu0 0
      %7789 = vmatpush1.bf16.xpose.msra.mxu0 0
      %7790 = vmatprep.subr.bf16.mxu0 0
      %7791 = vmatpush1.bf16.xpose.msra.mxu0 0
      %7792 = vmatprep.subr.bf16.mxu0 0
      %7793 = vmatpush1.bf16.xpose.msra.mxu0 0
      %7794 = vmatprep.subr.bf16.mxu0 0
      %7795 = vmatpush1.bf16.xpose.msra.mxu0 0
      %7796 = vmatprep.subr.bf16.mxu0 0
      %7797 = vmatpush1.bf16.xpose.msra.mxu0 0
      %7798 = vmatprep.subr.bf16.mxu0 0
      %7799 = vmatpush1.bf16.xpose.msra.mxu0 0
      %7800 = vmatprep.subr.bf16.mxu0 0
      %7801 = vmatpush1.bf16.xpose.msra.mxu0 0
      %7802 = vmatprep.subr.bf16.mxu0 0
      %7803 = vmatpush1.bf16.xpose.msra.mxu0 0
      %7804 = vmatprep.subr.bf16.mxu0 0
      %7805 = vmatpush1.bf16.xpose.msra.mxu0 0
      %7806 = vmatprep.mubr.bf16.mxu0 0
      %7807 = vmatmul.mubr.bf16.gmra.mrb[0].mxu0 %v7769
      %v7808 = vpop.f32.mrb[0].mxu0
      %v7809 = vadd.f32 %v1596, %v7808
      %v7810 = vpop.f32.mrb[0].mxu0
      %v7811 = vpop.f32.mrb[0].mxu0
      %v7812 = vadd.f32 %v1597, %v7811
      %v7813 = vpop.f32.mrb[0].mxu0
      %7814 = vdwg.mxu0
      %7815 = vrot.lane.b32.xlu0 %v1374, 32
      %v7816 = vpop.permute.xlu0 %7815
      %7817 = vrot.lane.b32.xlu0 %v1390, 32
      %v7818 = vpop.permute.xlu0 %7817
      %v7820 = vsel %vm514, %v7816, 0
      %v7823 = vsel %vm514, %v7818, 0
      %7825 = vmatprep.subr.bf16.mxu0 0
      %7826 = vmatpush1.bf16.xpose.msra.mxu0 %v7823
      %7827 = vmatprep.subr.bf16.mxu0 0
      %7828 = vmatpush1.bf16.xpose.msra.mxu0 0
      %7829 = vmatprep.subr.bf16.mxu0 0
      %7830 = vmatpush1.bf16.xpose.msra.mxu0 0
      %7831 = vmatprep.subr.bf16.mxu0 0
      %7832 = vmatpush1.bf16.xpose.msra.mxu0 0
      %7833 = vmatprep.subr.bf16.mxu0 0
      %7834 = vmatpush1.bf16.xpose.msra.mxu0 0
      %7835 = vmatprep.subr.bf16.mxu0 0
      %7836 = vmatpush1.bf16.xpose.msra.mxu0 0
      %7837 = vmatprep.subr.bf16.mxu0 0
      %7838 = vmatpush1.bf16.xpose.msra.mxu0 0
      %7839 = vmatprep.subr.bf16.mxu0 0
      %7840 = vmatpush1.bf16.xpose.msra.mxu0 0
      %7841 = vmatprep.subr.bf16.mxu0 0
      %7842 = vmatpush1.bf16.xpose.msra.mxu0 0
      %7843 = vmatprep.subr.bf16.mxu0 0
      %7844 = vmatpush1.bf16.xpose.msra.mxu0 0
      %7845 = vmatprep.subr.bf16.mxu0 0
      %7846 = vmatpush1.bf16.xpose.msra.mxu0 0
      %7847 = vmatprep.subr.bf16.mxu0 0
      %7848 = vmatpush1.bf16.xpose.msra.mxu0 0
      %7849 = vmatprep.subr.bf16.mxu0 0
      %7850 = vmatpush1.bf16.xpose.msra.mxu0 0
      %7851 = vmatprep.subr.bf16.mxu0 0
      %7852 = vmatpush1.bf16.xpose.msra.mxu0 0
      %7853 = vmatprep.subr.bf16.mxu0 0
      %7854 = vmatpush1.bf16.xpose.msra.mxu0 0
      %7855 = vmatprep.subr.bf16.mxu0 0
      %7856 = vmatpush1.bf16.xpose.msra.mxu0 0
      %7857 = vmatprep.mubr.bf16.mxu0 0
      %7858 = vmatmul.mubr.bf16.gmra.mrb[0].mxu0 %v7820
      %v7859 = vpop.f32.mrb[0].mxu0
      %v7860 = vadd.f32 %v1604, %v7859
      %v7861 = vpop.f32.mrb[0].mxu0
      %v7862 = vpop.f32.mrb[0].mxu0
      %v7863 = vadd.f32 %v1605, %v7862
      %v7864 = vpop.f32.mrb[0].mxu0
      %7865 = vdwg.mxu0
      %7866 = vrot.lane.b32.xlu0 %v1375, 32
      %v7867 = vpop.permute.xlu0 %7866
      %7868 = vrot.lane.b32.xlu0 %v1391, 32
      %v7869 = vpop.permute.xlu0 %7868
      %v7871 = vsel %vm514, %v7867, 0
      %v7874 = vsel %vm514, %v7869, 0
      %7876 = vmatprep.subr.bf16.mxu0 0
      %7877 = vmatpush1.bf16.xpose.msra.mxu0 %v7874
      %7878 = vmatprep.subr.bf16.mxu0 0
      %7879 = vmatpush1.bf16.xpose.msra.mxu0 0
      %7880 = vmatprep.subr.bf16.mxu0 0
      %7881 = vmatpush1.bf16.xpose.msra.mxu0 0
      %7882 = vmatprep.subr.bf16.mxu0 0
      %7883 = vmatpush1.bf16.xpose.msra.mxu0 0
      %7884 = vmatprep.subr.bf16.mxu0 0
      %7885 = vmatpush1.bf16.xpose.msra.mxu0 0
      %7886 = vmatprep.subr.bf16.mxu0 0
      %7887 = vmatpush1.bf16.xpose.msra.mxu0 0
      %7888 = vmatprep.subr.bf16.mxu0 0
      %7889 = vmatpush1.bf16.xpose.msra.mxu0 0
      %7890 = vmatprep.subr.bf16.mxu0 0
      %7891 = vmatpush1.bf16.xpose.msra.mxu0 0
      %7892 = vmatprep.subr.bf16.mxu0 0
      %7893 = vmatpush1.bf16.xpose.msra.mxu0 0
      %7894 = vmatprep.subr.bf16.mxu0 0
      %7895 = vmatpush1.bf16.xpose.msra.mxu0 0
      %7896 = vmatprep.subr.bf16.mxu0 0
      %7897 = vmatpush1.bf16.xpose.msra.mxu0 0
      %7898 = vmatprep.subr.bf16.mxu0 0
      %7899 = vmatpush1.bf16.xpose.msra.mxu0 0
      %7900 = vmatprep.subr.bf16.mxu0 0
      %7901 = vmatpush1.bf16.xpose.msra.mxu0 0
      %7902 = vmatprep.subr.bf16.mxu0 0
      %7903 = vmatpush1.bf16.xpose.msra.mxu0 0
      %7904 = vmatprep.subr.bf16.mxu0 0
      %7905 = vmatpush1.bf16.xpose.msra.mxu0 0
      %7906 = vmatprep.subr.bf16.mxu0 0
      %7907 = vmatpush1.bf16.xpose.msra.mxu0 0
      %7908 = vmatprep.mubr.bf16.mxu0 0
      %7909 = vmatmul.mubr.bf16.gmra.mrb[0].mxu0 %v7871
      %v7910 = vpop.f32.mrb[0].mxu0
      %v7911 = vadd.f32 %v1612, %v7910
      %v7912 = vpop.f32.mrb[0].mxu0
      %v7913 = vpop.f32.mrb[0].mxu0
      %v7914 = vadd.f32 %v1613, %v7913
      %v7915 = vpop.f32.mrb[0].mxu0
      %7916 = vdwg.mxu0
      %7917 = vrot.lane.b32.xlu0 %v1376, 32
      %v7918 = vpop.permute.xlu0 %7917
      %7919 = vrot.lane.b32.xlu0 %v1392, 32
      %v7920 = vpop.permute.xlu0 %7919
      %v7922 = vsel %vm514, %v7918, 0
      %v7925 = vsel %vm514, %v7920, 0
      %7927 = vmatprep.subr.bf16.mxu0 0
      %7928 = vmatpush1.bf16.xpose.msra.mxu0 %v7925
      %7929 = vmatprep.subr.bf16.mxu0 0
      %7930 = vmatpush1.bf16.xpose.msra.mxu0 0
      %7931 = vmatprep.subr.bf16.mxu0 0
      %7932 = vmatpush1.bf16.xpose.msra.mxu0 0
      %7933 = vmatprep.subr.bf16.mxu0 0
      %7934 = vmatpush1.bf16.xpose.msra.mxu0 0
      %7935 = vmatprep.subr.bf16.mxu0 0
      %7936 = vmatpush1.bf16.xpose.msra.mxu0 0
      %7937 = vmatprep.subr.bf16.mxu0 0
      %7938 = vmatpush1.bf16.xpose.msra.mxu0 0
      %7939 = vmatprep.subr.bf16.mxu0 0
      %7940 = vmatpush1.bf16.xpose.msra.mxu0 0
      %7941 = vmatprep.subr.bf16.mxu0 0
      %7942 = vmatpush1.bf16.xpose.msra.mxu0 0
      %7943 = vmatprep.subr.bf16.mxu0 0
      %7944 = vmatpush1.bf16.xpose.msra.mxu0 0
      %7945 = vmatprep.subr.bf16.mxu0 0
      %7946 = vmatpush1.bf16.xpose.msra.mxu0 0
      %7947 = vmatprep.subr.bf16.mxu0 0
      %7948 = vmatpush1.bf16.xpose.msra.mxu0 0
      %7949 = vmatprep.subr.bf16.mxu0 0
      %7950 = vmatpush1.bf16.xpose.msra.mxu0 0
      %7951 = vmatprep.subr.bf16.mxu0 0
      %7952 = vmatpush1.bf16.xpose.msra.mxu0 0
      %7953 = vmatprep.subr.bf16.mxu0 0
      %7954 = vmatpush1.bf16.xpose.msra.mxu0 0
      %7955 = vmatprep.subr.bf16.mxu0 0
      %7956 = vmatpush1.bf16.xpose.msra.mxu0 0
      %7957 = vmatprep.subr.bf16.mxu0 0
      %7958 = vmatpush1.bf16.xpose.msra.mxu0 0
      %7959 = vmatprep.mubr.bf16.mxu0 0
      %7960 = vmatmul.mubr.bf16.gmra.mrb[0].mxu0 %v7922
      %v7961 = vpop.f32.mrb[0].mxu0
      %v7962 = vadd.f32 %v1620, %v7961
      %v7963 = vpop.f32.mrb[0].mxu0
      %v7964 = vpop.f32.mrb[0].mxu0
      %v7965 = vadd.f32 %v1621, %v7964
      %v7966 = vpop.f32.mrb[0].mxu0
      %7967 = vdwg.mxu0
      %7968 = vrot.lane.b32.xlu0 %v1377, 32
      %v7969 = vpop.permute.xlu0 %7968
      %7970 = vrot.lane.b32.xlu0 %v1393, 32
      %v7971 = vpop.permute.xlu0 %7970
      %v7973 = vsel %vm514, %v7969, 0
      %v7976 = vsel %vm514, %v7971, 0
      %7978 = vmatprep.subr.bf16.mxu0 0
      %7979 = vmatpush1.bf16.xpose.msra.mxu0 %v7976
      %7980 = vmatprep.subr.bf16.mxu0 0
      %7981 = vmatpush1.bf16.xpose.msra.mxu0 0
      %7982 = vmatprep.subr.bf16.mxu0 0
      %7983 = vmatpush1.bf16.xpose.msra.mxu0 0
      %7984 = vmatprep.subr.bf16.mxu0 0
      %7985 = vmatpush1.bf16.xpose.msra.mxu0 0
      %7986 = vmatprep.subr.bf16.mxu0 0
      %7987 = vmatpush1.bf16.xpose.msra.mxu0 0
      %7988 = vmatprep.subr.bf16.mxu0 0
      %7989 = vmatpush1.bf16.xpose.msra.mxu0 0
      %7990 = vmatprep.subr.bf16.mxu0 0
      %7991 = vmatpush1.bf16.xpose.msra.mxu0 0
      %7992 = vmatprep.subr.bf16.mxu0 0
      %7993 = vmatpush1.bf16.xpose.msra.mxu0 0
      %7994 = vmatprep.subr.bf16.mxu0 0
      %7995 = vmatpush1.bf16.xpose.msra.mxu0 0
      %7996 = vmatprep.subr.bf16.mxu0 0
      %7997 = vmatpush1.bf16.xpose.msra.mxu0 0
      %7998 = vmatprep.subr.bf16.mxu0 0
      %7999 = vmatpush1.bf16.xpose.msra.mxu0 0
      %8000 = vmatprep.subr.bf16.mxu0 0
      %8001 = vmatpush1.bf16.xpose.msra.mxu0 0
      %8002 = vmatprep.subr.bf16.mxu0 0
      %8003 = vmatpush1.bf16.xpose.msra.mxu0 0
      %8004 = vmatprep.subr.bf16.mxu0 0
      %8005 = vmatpush1.bf16.xpose.msra.mxu0 0
      %8006 = vmatprep.subr.bf16.mxu0 0
      %8007 = vmatpush1.bf16.xpose.msra.mxu0 0
      %8008 = vmatprep.subr.bf16.mxu0 0
      %8009 = vmatpush1.bf16.xpose.msra.mxu0 0
      %8010 = vmatprep.mubr.bf16.mxu0 0
      %8011 = vmatmul.mubr.bf16.gmra.mrb[0].mxu0 %v7973
      %v8012 = vpop.f32.mrb[0].mxu0
      %v8013 = vadd.f32 %v1628, %v8012
      %v8014 = vpop.f32.mrb[0].mxu0
      %v8015 = vpop.f32.mrb[0].mxu0
      %v8016 = vadd.f32 %v1629, %v8015
      %v8017 = vpop.f32.mrb[0].mxu0
      %8018 = vdwg.mxu0
      %8019 = vrot.lane.b32.xlu0 %v1378, 32
      %v8020 = vpop.permute.xlu0 %8019
      %8021 = vrot.lane.b32.xlu0 %v1394, 32
      %v8022 = vpop.permute.xlu0 %8021
      %v8024 = vsel %vm514, %v8020, 0
      %v8027 = vsel %vm514, %v8022, 0
      %8029 = vmatprep.subr.bf16.mxu0 0
      %8030 = vmatpush1.bf16.xpose.msra.mxu0 %v8027
      %8031 = vmatprep.subr.bf16.mxu0 0
      %8032 = vmatpush1.bf16.xpose.msra.mxu0 0
      %8033 = vmatprep.subr.bf16.mxu0 0
      %8034 = vmatpush1.bf16.xpose.msra.mxu0 0
      %8035 = vmatprep.subr.bf16.mxu0 0
      %8036 = vmatpush1.bf16.xpose.msra.mxu0 0
      %8037 = vmatprep.subr.bf16.mxu0 0
      %8038 = vmatpush1.bf16.xpose.msra.mxu0 0
      %8039 = vmatprep.subr.bf16.mxu0 0
      %8040 = vmatpush1.bf16.xpose.msra.mxu0 0
      %8041 = vmatprep.subr.bf16.mxu0 0
      %8042 = vmatpush1.bf16.xpose.msra.mxu0 0
      %8043 = vmatprep.subr.bf16.mxu0 0
      %8044 = vmatpush1.bf16.xpose.msra.mxu0 0
      %8045 = vmatprep.subr.bf16.mxu0 0
      %8046 = vmatpush1.bf16.xpose.msra.mxu0 0
      %8047 = vmatprep.subr.bf16.mxu0 0
      %8048 = vmatpush1.bf16.xpose.msra.mxu0 0
      %8049 = vmatprep.subr.bf16.mxu0 0
      %8050 = vmatpush1.bf16.xpose.msra.mxu0 0
      %8051 = vmatprep.subr.bf16.mxu0 0
      %8052 = vmatpush1.bf16.xpose.msra.mxu0 0
      %8053 = vmatprep.subr.bf16.mxu0 0
      %8054 = vmatpush1.bf16.xpose.msra.mxu0 0
      %8055 = vmatprep.subr.bf16.mxu0 0
      %8056 = vmatpush1.bf16.xpose.msra.mxu0 0
      %8057 = vmatprep.subr.bf16.mxu0 0
      %8058 = vmatpush1.bf16.xpose.msra.mxu0 0
      %8059 = vmatprep.subr.bf16.mxu0 0
      %8060 = vmatpush1.bf16.xpose.msra.mxu0 0
      %8061 = vmatprep.mubr.bf16.mxu0 0
      %8062 = vmatmul.mubr.bf16.gmra.mrb[0].mxu0 %v8024
      %v8063 = vpop.f32.mrb[0].mxu0
      %v8064 = vadd.f32 %v1636, %v8063
      %v8065 = vpop.f32.mrb[0].mxu0
      %v8066 = vpop.f32.mrb[0].mxu0
      %v8067 = vadd.f32 %v1637, %v8066
      %v8068 = vpop.f32.mrb[0].mxu0
      %8069 = vdwg.mxu0
      %8070 = vrot.lane.b32.xlu0 %v1379, 32
      %v8071 = vpop.permute.xlu0 %8070
      %8072 = vrot.lane.b32.xlu0 %v1395, 32
      %v8073 = vpop.permute.xlu0 %8072
      %v8075 = vsel %vm514, %v8071, 0
      %v8078 = vsel %vm514, %v8073, 0
      %8080 = vmatprep.subr.bf16.mxu0 0
      %8081 = vmatpush1.bf16.xpose.msra.mxu0 %v8078
      %8082 = vmatprep.subr.bf16.mxu0 0
      %8083 = vmatpush1.bf16.xpose.msra.mxu0 0
      %8084 = vmatprep.subr.bf16.mxu0 0
      %8085 = vmatpush1.bf16.xpose.msra.mxu0 0
      %8086 = vmatprep.subr.bf16.mxu0 0
      %8087 = vmatpush1.bf16.xpose.msra.mxu0 0
      %8088 = vmatprep.subr.bf16.mxu0 0
      %8089 = vmatpush1.bf16.xpose.msra.mxu0 0
      %8090 = vmatprep.subr.bf16.mxu0 0
      %8091 = vmatpush1.bf16.xpose.msra.mxu0 0
      %8092 = vmatprep.subr.bf16.mxu0 0
      %8093 = vmatpush1.bf16.xpose.msra.mxu0 0
      %8094 = vmatprep.subr.bf16.mxu0 0
      %8095 = vmatpush1.bf16.xpose.msra.mxu0 0
      %8096 = vmatprep.subr.bf16.mxu0 0
      %8097 = vmatpush1.bf16.xpose.msra.mxu0 0
      %8098 = vmatprep.subr.bf16.mxu0 0
      %8099 = vmatpush1.bf16.xpose.msra.mxu0 0
      %8100 = vmatprep.subr.bf16.mxu0 0
      %8101 = vmatpush1.bf16.xpose.msra.mxu0 0
      %8102 = vmatprep.subr.bf16.mxu0 0
      %8103 = vmatpush1.bf16.xpose.msra.mxu0 0
      %8104 = vmatprep.subr.bf16.mxu0 0
      %8105 = vmatpush1.bf16.xpose.msra.mxu0 0
      %8106 = vmatprep.subr.bf16.mxu0 0
      %8107 = vmatpush1.bf16.xpose.msra.mxu0 0
      %8108 = vmatprep.subr.bf16.mxu0 0
      %8109 = vmatpush1.bf16.xpose.msra.mxu0 0
      %8110 = vmatprep.subr.bf16.mxu0 0
      %8111 = vmatpush1.bf16.xpose.msra.mxu0 0
      %8112 = vmatprep.mubr.bf16.mxu0 0
      %8113 = vmatmul.mubr.bf16.gmra.mrb[0].mxu0 %v8075
      %v8114 = vpop.f32.mrb[0].mxu0
      %v8115 = vadd.f32 %v1644, %v8114
      %v8116 = vpop.f32.mrb[0].mxu0
      %v8117 = vpop.f32.mrb[0].mxu0
      %v8118 = vadd.f32 %v1645, %v8117
      %v8119 = vpop.f32.mrb[0].mxu0
      %8120 = vdwg.mxu0
      %8121 = vrot.lane.b32.xlu0 %v1380, 32
      %v8122 = vpop.permute.xlu0 %8121
      %8123 = vrot.lane.b32.xlu0 %v1396, 32
      %v8124 = vpop.permute.xlu0 %8123
      %v8126 = vsel %vm514, %v8122, 0
      %v8129 = vsel %vm514, %v8124, 0
      %8131 = vmatprep.subr.bf16.mxu0 0
      %8132 = vmatpush1.bf16.xpose.msra.mxu0 %v8129
      %8133 = vmatprep.subr.bf16.mxu0 0
      %8134 = vmatpush1.bf16.xpose.msra.mxu0 0
      %8135 = vmatprep.subr.bf16.mxu0 0
      %8136 = vmatpush1.bf16.xpose.msra.mxu0 0
      %8137 = vmatprep.subr.bf16.mxu0 0
      %8138 = vmatpush1.bf16.xpose.msra.mxu0 0
      %8139 = vmatprep.subr.bf16.mxu0 0
      %8140 = vmatpush1.bf16.xpose.msra.mxu0 0
      %8141 = vmatprep.subr.bf16.mxu0 0
      %8142 = vmatpush1.bf16.xpose.msra.mxu0 0
      %8143 = vmatprep.subr.bf16.mxu0 0
      %8144 = vmatpush1.bf16.xpose.msra.mxu0 0
      %8145 = vmatprep.subr.bf16.mxu0 0
      %8146 = vmatpush1.bf16.xpose.msra.mxu0 0
      %8147 = vmatprep.subr.bf16.mxu0 0
      %8148 = vmatpush1.bf16.xpose.msra.mxu0 0
      %8149 = vmatprep.subr.bf16.mxu0 0
      %8150 = vmatpush1.bf16.xpose.msra.mxu0 0
      %8151 = vmatprep.subr.bf16.mxu0 0
      %8152 = vmatpush1.bf16.xpose.msra.mxu0 0
      %8153 = vmatprep.subr.bf16.mxu0 0
      %8154 = vmatpush1.bf16.xpose.msra.mxu0 0
      %8155 = vmatprep.subr.bf16.mxu0 0
      %8156 = vmatpush1.bf16.xpose.msra.mxu0 0
      %8157 = vmatprep.subr.bf16.mxu0 0
      %8158 = vmatpush1.bf16.xpose.msra.mxu0 0
      %8159 = vmatprep.subr.bf16.mxu0 0
      %8160 = vmatpush1.bf16.xpose.msra.mxu0 0
      %8161 = vmatprep.subr.bf16.mxu0 0
      %8162 = vmatpush1.bf16.xpose.msra.mxu0 0
      %8163 = vmatprep.mubr.bf16.mxu0 0
      %8164 = vmatmul.mubr.bf16.gmra.mrb[0].mxu0 %v8126
      %v8165 = vpop.f32.mrb[0].mxu0
      %v8166 = vadd.f32 %v1652, %v8165
      %v8167 = vpop.f32.mrb[0].mxu0
      %v8168 = vpop.f32.mrb[0].mxu0
      %v8169 = vadd.f32 %v1653, %v8168
      %v8170 = vpop.f32.mrb[0].mxu0
      %8171 = vdwg.mxu0
      %8172 = vrot.lane.b32.xlu0 %v1381, 32
      %v8173 = vpop.permute.xlu0 %8172
      %8174 = vrot.lane.b32.xlu0 %v1397, 32
      %v8175 = vpop.permute.xlu0 %8174
      %v8177 = vsel %vm514, %v8173, 0
      %v8180 = vsel %vm514, %v8175, 0
      %8182 = vmatprep.subr.bf16.mxu0 0
      %8183 = vmatpush1.bf16.xpose.msra.mxu0 %v8180
      %8184 = vmatprep.subr.bf16.mxu0 0
      %8185 = vmatpush1.bf16.xpose.msra.mxu0 0
      %8186 = vmatprep.subr.bf16.mxu0 0
      %8187 = vmatpush1.bf16.xpose.msra.mxu0 0
      %8188 = vmatprep.subr.bf16.mxu0 0
      %8189 = vmatpush1.bf16.xpose.msra.mxu0 0
      %8190 = vmatprep.subr.bf16.mxu0 0
      %8191 = vmatpush1.bf16.xpose.msra.mxu0 0
      %8192 = vmatprep.subr.bf16.mxu0 0
      %8193 = vmatpush1.bf16.xpose.msra.mxu0 0
      %8194 = vmatprep.subr.bf16.mxu0 0
      %8195 = vmatpush1.bf16.xpose.msra.mxu0 0
      %8196 = vmatprep.subr.bf16.mxu0 0
      %8197 = vmatpush1.bf16.xpose.msra.mxu0 0
      %8198 = vmatprep.subr.bf16.mxu0 0
      %8199 = vmatpush1.bf16.xpose.msra.mxu0 0
      %8200 = vmatprep.subr.bf16.mxu0 0
      %8201 = vmatpush1.bf16.xpose.msra.mxu0 0
      %8202 = vmatprep.subr.bf16.mxu0 0
      %8203 = vmatpush1.bf16.xpose.msra.mxu0 0
      %8204 = vmatprep.subr.bf16.mxu0 0
      %8205 = vmatpush1.bf16.xpose.msra.mxu0 0
      %8206 = vmatprep.subr.bf16.mxu0 0
      %8207 = vmatpush1.bf16.xpose.msra.mxu0 0
      %8208 = vmatprep.subr.bf16.mxu0 0
      %8209 = vmatpush1.bf16.xpose.msra.mxu0 0
      %8210 = vmatprep.subr.bf16.mxu0 0
      %8211 = vmatpush1.bf16.xpose.msra.mxu0 0
      %8212 = vmatprep.subr.bf16.mxu0 0
      %8213 = vmatpush1.bf16.xpose.msra.mxu0 0
      %8214 = vmatprep.mubr.bf16.mxu0 0
      %8215 = vmatmul.mubr.bf16.gmra.mrb[0].mxu0 %v8177
      %v8216 = vpop.f32.mrb[0].mxu0
      %v8217 = vadd.f32 %v1660, %v8216
      %v8218 = vpop.f32.mrb[0].mxu0
      %v8219 = vpop.f32.mrb[0].mxu0
      %v8220 = vadd.f32 %v1661, %v8219
      %v8221 = vpop.f32.mrb[0].mxu0
      %8222 = vdwg.mxu0
      %v8223 = vsel %vm2414, %v7452, -inf
      %8224 = vmax.xlane.f32.xlu0 %v8223
      %v8225 = vpop.xlane.xlu0 %8224
      %v8226 = vsel %vm2414, %v7455, -inf
      %8227 = vmax.xlane.f32.xlu0 %v8226
      %v8228 = vpop.xlane.xlu0 %8227
      %v8229 = vsel %vm2414, %v7503, -inf
      %8230 = vmax.xlane.f32.xlu0 %v8229
      %v8231 = vpop.xlane.xlu0 %8230
      %v8232 = vsel %vm2414, %v7506, -inf
      %8233 = vmax.xlane.f32.xlu0 %v8232
      %v8234 = vpop.xlane.xlu0 %8233
      %v8235 = vsel %vm2414, %v7554, -inf
      %8236 = vmax.xlane.f32.xlu0 %v8235
      %v8237 = vpop.xlane.xlu0 %8236
      %v8238 = vsel %vm2414, %v7557, -inf
      %8239 = vmax.xlane.f32.xlu0 %v8238
      %v8240 = vpop.xlane.xlu0 %8239
      %v8241 = vsel %vm2414, %v7605, -inf
      %8242 = vmax.xlane.f32.xlu0 %v8241
      %v8243 = vpop.xlane.xlu0 %8242
      %v8244 = vsel %vm2414, %v7608, -inf
      %8245 = vmax.xlane.f32.xlu0 %v8244
      %v8246 = vpop.xlane.xlu0 %8245
      %v8247 = vsel %vm2414, %v7656, -inf
      %8248 = vmax.xlane.f32.xlu0 %v8247
      %v8249 = vpop.xlane.xlu0 %8248
      %v8250 = vsel %vm2414, %v7659, -inf
      %8251 = vmax.xlane.f32.xlu0 %v8250
      %v8252 = vpop.xlane.xlu0 %8251
      %v8253 = vsel %vm2414, %v7707, -inf
      %8254 = vmax.xlane.f32.xlu0 %v8253
      %v8255 = vpop.xlane.xlu0 %8254
      %v8256 = vsel %vm2414, %v7710, -inf
      %8257 = vmax.xlane.f32.xlu0 %v8256
      %v8258 = vpop.xlane.xlu0 %8257
      %v8259 = vsel %vm2414, %v7758, -inf
      %8260 = vmax.xlane.f32.xlu0 %v8259
      %v8261 = vpop.xlane.xlu0 %8260
      %v8262 = vsel %vm2414, %v7761, -inf
      %8263 = vmax.xlane.f32.xlu0 %v8262
      %v8264 = vpop.xlane.xlu0 %8263
      %v8265 = vsel %vm2414, %v7809, -inf
      %8266 = vmax.xlane.f32.xlu0 %v8265
      %v8267 = vpop.xlane.xlu0 %8266
      %v8268 = vsel %vm2414, %v7812, -inf
      %8269 = vmax.xlane.f32.xlu0 %v8268
      %v8270 = vpop.xlane.xlu0 %8269
      %v8271 = vsel %vm2414, %v7860, -inf
      %8272 = vmax.xlane.f32.xlu0 %v8271
      %v8273 = vpop.xlane.xlu0 %8272
      %v8274 = vsel %vm2414, %v7863, -inf
      %8275 = vmax.xlane.f32.xlu0 %v8274
      %v8276 = vpop.xlane.xlu0 %8275
      %v8277 = vsel %vm2414, %v7911, -inf
      %8278 = vmax.xlane.f32.xlu0 %v8277
      %v8279 = vpop.xlane.xlu0 %8278
      %v8280 = vsel %vm2414, %v7914, -inf
      %8281 = vmax.xlane.f32.xlu0 %v8280
      %v8282 = vpop.xlane.xlu0 %8281
      %v8283 = vsel %vm2414, %v7962, -inf
      %8284 = vmax.xlane.f32.xlu0 %v8283
      %v8285 = vpop.xlane.xlu0 %8284
      %v8286 = vsel %vm2414, %v7965, -inf
      %8287 = vmax.xlane.f32.xlu0 %v8286
      %v8288 = vpop.xlane.xlu0 %8287
      %v8289 = vsel %vm2414, %v8013, -inf
      %8290 = vmax.xlane.f32.xlu0 %v8289
      %v8291 = vpop.xlane.xlu0 %8290
      %v8292 = vsel %vm2414, %v8016, -inf
      %8293 = vmax.xlane.f32.xlu0 %v8292
      %v8294 = vpop.xlane.xlu0 %8293
      %v8295 = vsel %vm2414, %v8064, -inf
      %8296 = vmax.xlane.f32.xlu0 %v8295
      %v8297 = vpop.xlane.xlu0 %8296
      %v8298 = vsel %vm2414, %v8067, -inf
      %8299 = vmax.xlane.f32.xlu0 %v8298
      %v8300 = vpop.xlane.xlu0 %8299
      %v8301 = vsel %vm2414, %v8115, -inf
      %8302 = vmax.xlane.f32.xlu0 %v8301
      %v8303 = vpop.xlane.xlu0 %8302
      %v8304 = vsel %vm2414, %v8118, -inf
      %8305 = vmax.xlane.f32.xlu0 %v8304
      %v8306 = vpop.xlane.xlu0 %8305
      %v8307 = vsel %vm2414, %v8166, -inf
      %8308 = vmax.xlane.f32.xlu0 %v8307
      %v8309 = vpop.xlane.xlu0 %8308
      %v8310 = vsel %vm2414, %v8169, -inf
      %8311 = vmax.xlane.f32.xlu0 %v8310
      %v8312 = vpop.xlane.xlu0 %8311
      %v8313 = vsel %vm2414, %v8217, -inf
      %8314 = vmax.xlane.f32.xlu0 %v8313
      %v8315 = vpop.xlane.xlu0 %8314
      %v8316 = vsel %vm2414, %v8220, -inf
      %8317 = vmax.xlane.f32.xlu0 %v8316
      %v8318 = vpop.xlane.xlu0 %8317
      %v8319 = vsub.f32 %v7452, %v8225
      %v8320 = vsub.f32 %v7455, %v8228
      %v8321 = vsub.f32 %v7503, %v8231
      %v8322 = vsub.f32 %v7506, %v8234
      %v8323 = vsub.f32 %v7554, %v8237
      %v8324 = vsub.f32 %v7557, %v8240
      %v8325 = vsub.f32 %v7605, %v8243
      %v8326 = vsub.f32 %v7608, %v8246
      %v8327 = vsub.f32 %v7656, %v8249
      %v8328 = vsub.f32 %v7659, %v8252
      %v8329 = vsub.f32 %v7707, %v8255
      %v8330 = vsub.f32 %v7710, %v8258
      %v8331 = vsub.f32 %v7758, %v8261
      %v8332 = vsub.f32 %v7761, %v8264
      %v8333 = vsub.f32 %v7809, %v8267
      %v8334 = vsub.f32 %v7812, %v8270
      %v8335 = vsub.f32 %v7860, %v8273
      %v8336 = vsub.f32 %v7863, %v8276
      %v8337 = vsub.f32 %v7911, %v8279
      %v8338 = vsub.f32 %v7914, %v8282
      %v8339 = vsub.f32 %v7962, %v8285
      %v8340 = vsub.f32 %v7965, %v8288
      %v8341 = vsub.f32 %v8013, %v8291
      %v8342 = vsub.f32 %v8016, %v8294
      %v8343 = vsub.f32 %v8064, %v8297
      %v8344 = vsub.f32 %v8067, %v8300
      %v8345 = vsub.f32 %v8115, %v8303
      %v8346 = vsub.f32 %v8118, %v8306
      %v8347 = vsub.f32 %v8166, %v8309
      %v8348 = vsub.f32 %v8169, %v8312
      %v8349 = vsub.f32 %v8217, %v8315
      %v8350 = vsub.f32 %v8220, %v8318
      %v8351 = vmul.f32 %v8319, 1.442695
      %v8352 = vpow.pop %v8351
      %v8353 = vmul.f32 %v8320, 1.442695
      %v8354 = vpow.pop %v8353
      %v8355 = vmul.f32 %v8321, 1.442695
      %v8356 = vpow.pop %v8355
      %v8357 = vmul.f32 %v8322, 1.442695
      %v8358 = vpow.pop %v8357
      %v8359 = vmul.f32 %v8323, 1.442695
      %v8360 = vpow.pop %v8359
      %v8361 = vmul.f32 %v8324, 1.442695
      %v8362 = vpow.pop %v8361
      %v8363 = vmul.f32 %v8325, 1.442695
      %v8364 = vpow.pop %v8363
      %v8365 = vmul.f32 %v8326, 1.442695
      %v8366 = vpow.pop %v8365
      %v8367 = vmul.f32 %v8327, 1.442695
      %v8368 = vpow.pop %v8367
      %v8369 = vmul.f32 %v8328, 1.442695
      %v8370 = vpow.pop %v8369
      %v8371 = vmul.f32 %v8329, 1.442695
      %v8372 = vpow.pop %v8371
      %v8373 = vmul.f32 %v8330, 1.442695
      %v8374 = vpow.pop %v8373
      %v8375 = vmul.f32 %v8331, 1.442695
      %v8376 = vpow.pop %v8375
      %v8377 = vmul.f32 %v8332, 1.442695
      %v8378 = vpow.pop %v8377
      %v8379 = vmul.f32 %v8333, 1.442695
      %v8380 = vpow.pop %v8379
      %v8381 = vmul.f32 %v8334, 1.442695
      %v8382 = vpow.pop %v8381
      %v8383 = vmul.f32 %v8335, 1.442695
      %v8384 = vpow.pop %v8383
      %v8385 = vmul.f32 %v8336, 1.442695
      %v8386 = vpow.pop %v8385
      %v8387 = vmul.f32 %v8337, 1.442695
      %v8388 = vpow.pop %v8387
      %v8389 = vmul.f32 %v8338, 1.442695
      %v8390 = vpow.pop %v8389
      %v8391 = vmul.f32 %v8339, 1.442695
      %v8392 = vpow.pop %v8391
      %v8393 = vmul.f32 %v8340, 1.442695
      %v8394 = vpow.pop %v8393
      %v8395 = vmul.f32 %v8341, 1.442695
      %v8396 = vpow.pop %v8395
      %v8397 = vmul.f32 %v8342, 1.442695
      %v8398 = vpow.pop %v8397
      %v8399 = vmul.f32 %v8343, 1.442695
      %v8400 = vpow.pop %v8399
      %v8401 = vmul.f32 %v8344, 1.442695
      %v8402 = vpow.pop %v8401
      %v8403 = vmul.f32 %v8345, 1.442695
      %v8404 = vpow.pop %v8403
      %v8405 = vmul.f32 %v8346, 1.442695
      %v8406 = vpow.pop %v8405
      %v8407 = vmul.f32 %v8347, 1.442695
      %v8408 = vpow.pop %v8407
      %v8409 = vmul.f32 %v8348, 1.442695
      %v8410 = vpow.pop %v8409
      %v8411 = vmul.f32 %v8349, 1.442695
      %v8412 = vpow.pop %v8411
      %v8413 = vmul.f32 %v8350, 1.442695
      %v8414 = vpow.pop %v8413
      %v8415 = vsel %vm2414, %v8352, 0.0
      %8416 = vadd.xlane.f32.xlu0 %v8415
      %v8417 = vpop.xlane.xlu0 %8416
      %v8418 = vsel %vm2414, %v8354, 0.0
      %8419 = vadd.xlane.f32.xlu0 %v8418
      %v8420 = vpop.xlane.xlu0 %8419
      %v8421 = vsel %vm2414, %v8356, 0.0
      %8422 = vadd.xlane.f32.xlu0 %v8421
      %v8423 = vpop.xlane.xlu0 %8422
      %v8424 = vsel %vm2414, %v8358, 0.0
      %8425 = vadd.xlane.f32.xlu0 %v8424
      %v8426 = vpop.xlane.xlu0 %8425
      %v8427 = vsel %vm2414, %v8360, 0.0
      %8428 = vadd.xlane.f32.xlu0 %v8427
      %v8429 = vpop.xlane.xlu0 %8428
      %v8430 = vsel %vm2414, %v8362, 0.0
      %8431 = vadd.xlane.f32.xlu0 %v8430
      %v8432 = vpop.xlane.xlu0 %8431
      %v8433 = vsel %vm2414, %v8364, 0.0
      %8434 = vadd.xlane.f32.xlu0 %v8433
      %v8435 = vpop.xlane.xlu0 %8434
      %v8436 = vsel %vm2414, %v8366, 0.0
      %8437 = vadd.xlane.f32.xlu0 %v8436
      %v8438 = vpop.xlane.xlu0 %8437
      %v8439 = vsel %vm2414, %v8368, 0.0
      %8440 = vadd.xlane.f32.xlu0 %v8439
      %v8441 = vpop.xlane.xlu0 %8440
      %v8442 = vsel %vm2414, %v8370, 0.0
      %8443 = vadd.xlane.f32.xlu0 %v8442
      %v8444 = vpop.xlane.xlu0 %8443
      %v8445 = vsel %vm2414, %v8372, 0.0
      %8446 = vadd.xlane.f32.xlu0 %v8445
      %v8447 = vpop.xlane.xlu0 %8446
      %v8448 = vsel %vm2414, %v8374, 0.0
      %8449 = vadd.xlane.f32.xlu0 %v8448
      %v8450 = vpop.xlane.xlu0 %8449
      %v8451 = vsel %vm2414, %v8376, 0.0
      %8452 = vadd.xlane.f32.xlu0 %v8451
      %v8453 = vpop.xlane.xlu0 %8452
      %v8454 = vsel %vm2414, %v8378, 0.0
      %8455 = vadd.xlane.f32.xlu0 %v8454
      %v8456 = vpop.xlane.xlu0 %8455
      %v8457 = vsel %vm2414, %v8380, 0.0
      %8458 = vadd.xlane.f32.xlu0 %v8457
      %v8459 = vpop.xlane.xlu0 %8458
      %v8460 = vsel %vm2414, %v8382, 0.0
      %8461 = vadd.xlane.f32.xlu0 %v8460
      %v8462 = vpop.xlane.xlu0 %8461
      %v8463 = vsel %vm2414, %v8384, 0.0
      %8464 = vadd.xlane.f32.xlu0 %v8463
      %v8465 = vpop.xlane.xlu0 %8464
      %v8466 = vsel %vm2414, %v8386, 0.0
      %8467 = vadd.xlane.f32.xlu0 %v8466
      %v8468 = vpop.xlane.xlu0 %8467
      %v8469 = vsel %vm2414, %v8388, 0.0
      %8470 = vadd.xlane.f32.xlu0 %v8469
      %v8471 = vpop.xlane.xlu0 %8470
      %v8472 = vsel %vm2414, %v8390, 0.0
      %8473 = vadd.xlane.f32.xlu0 %v8472
      %v8474 = vpop.xlane.xlu0 %8473
      %v8475 = vsel %vm2414, %v8392, 0.0
      %8476 = vadd.xlane.f32.xlu0 %v8475
      %v8477 = vpop.xlane.xlu0 %8476
      %v8478 = vsel %vm2414, %v8394, 0.0
      %8479 = vadd.xlane.f32.xlu0 %v8478
      %v8480 = vpop.xlane.xlu0 %8479
      %v8481 = vsel %vm2414, %v8396, 0.0
      %8482 = vadd.xlane.f32.xlu0 %v8481
      %v8483 = vpop.xlane.xlu0 %8482
      %v8484 = vsel %vm2414, %v8398, 0.0
      %8485 = vadd.xlane.f32.xlu0 %v8484
      %v8486 = vpop.xlane.xlu0 %8485
      %v8487 = vsel %vm2414, %v8400, 0.0
      %8488 = vadd.xlane.f32.xlu0 %v8487
      %v8489 = vpop.xlane.xlu0 %8488
      %v8490 = vsel %vm2414, %v8402, 0.0
      %8491 = vadd.xlane.f32.xlu0 %v8490
      %v8492 = vpop.xlane.xlu0 %8491
      %v8493 = vsel %vm2414, %v8404, 0.0
      %8494 = vadd.xlane.f32.xlu0 %v8493
      %v8495 = vpop.xlane.xlu0 %8494
      %v8496 = vsel %vm2414, %v8406, 0.0
      %8497 = vadd.xlane.f32.xlu0 %v8496
      %v8498 = vpop.xlane.xlu0 %8497
      %v8499 = vsel %vm2414, %v8408, 0.0
      %8500 = vadd.xlane.f32.xlu0 %v8499
      %v8501 = vpop.xlane.xlu0 %8500
      %v8502 = vsel %vm2414, %v8410, 0.0
      %8503 = vadd.xlane.f32.xlu0 %v8502
      %v8504 = vpop.xlane.xlu0 %8503
      %v8505 = vsel %vm2414, %v8412, 0.0
      %8506 = vadd.xlane.f32.xlu0 %v8505
      %v8507 = vpop.xlane.xlu0 %8506
      %v8508 = vsel %vm2414, %v8414, 0.0
      %8509 = vadd.xlane.f32.xlu0 %v8508
      %v8510 = vpop.xlane.xlu0 %8509
      %v8511 = vrcp.pop %v8417
      %v8512 = vrcp.pop %v8420
      %v8513 = vrcp.pop %v8423
      %v8514 = vrcp.pop %v8426
      %v8515 = vrcp.pop %v8429
      %v8516 = vrcp.pop %v8432
      %v8517 = vrcp.pop %v8435
      %v8518 = vrcp.pop %v8438
      %v8519 = vrcp.pop %v8441
      %v8520 = vrcp.pop %v8444
      %v8521 = vrcp.pop %v8447
      %v8522 = vrcp.pop %v8450
      %v8523 = vrcp.pop %v8453
      %v8524 = vrcp.pop %v8456
      %v8525 = vrcp.pop %v8459
      %v8526 = vrcp.pop %v8462
      %v8527 = vrcp.pop %v8465
      %v8528 = vrcp.pop %v8468
      %v8529 = vrcp.pop %v8471
      %v8530 = vrcp.pop %v8474
      %v8531 = vrcp.pop %v8477
      %v8532 = vrcp.pop %v8480
      %v8533 = vrcp.pop %v8483
      %v8534 = vrcp.pop %v8486
      %v8535 = vrcp.pop %v8489
      %v8536 = vrcp.pop %v8492
      %v8537 = vrcp.pop %v8495
      %v8538 = vrcp.pop %v8498
      %v8539 = vrcp.pop %v8501
      %v8540 = vrcp.pop %v8504
      %v8541 = vrcp.pop %v8507
      %v8542 = vrcp.pop %v8510
      %v8543 = vmul.f32 %v8352, %v8511
      %v8544 = vmul.f32 %v8354, %v8512
      %v8545 = vmul.f32 %v8356, %v8513
      %v8546 = vmul.f32 %v8358, %v8514
      %v8547 = vmul.f32 %v8360, %v8515
      %v8548 = vmul.f32 %v8362, %v8516
      %v8549 = vmul.f32 %v8364, %v8517
      %v8550 = vmul.f32 %v8366, %v8518
      %v8551 = vmul.f32 %v8368, %v8519
      %v8552 = vmul.f32 %v8370, %v8520
      %v8553 = vmul.f32 %v8372, %v8521
      %v8554 = vmul.f32 %v8374, %v8522
      %v8555 = vmul.f32 %v8376, %v8523
      %v8556 = vmul.f32 %v8378, %v8524
      %v8557 = vmul.f32 %v8380, %v8525
      %v8558 = vmul.f32 %v8382, %v8526
      %v8559 = vmul.f32 %v8384, %v8527
      %v8560 = vmul.f32 %v8386, %v8528
      %v8561 = vmul.f32 %v8388, %v8529
      %v8562 = vmul.f32 %v8390, %v8530
      %v8563 = vmul.f32 %v8392, %v8531
      %v8564 = vmul.f32 %v8394, %v8532
      %v8565 = vmul.f32 %v8396, %v8533
      %v8566 = vmul.f32 %v8398, %v8534
      %v8567 = vmul.f32 %v8400, %v8535
      %v8568 = vmul.f32 %v8402, %v8536
      %v8569 = vmul.f32 %v8404, %v8537
      %v8570 = vmul.f32 %v8406, %v8538
      %v8571 = vmul.f32 %v8408, %v8539
      %v8572 = vmul.f32 %v8410, %v8540
      %v8573 = vmul.f32 %v8412, %v8541
      %v8574 = vmul.f32 %v8414, %v8542
      %v8575 = vpack.c.bf16 %v8544, %v8543
      %v8576 = vpack.c.bf16 %v8546, %v8545
      %v8577 = vpack.c.bf16 %v8548, %v8547
      %v8578 = vpack.c.bf16 %v8550, %v8549
      %v8579 = vpack.c.bf16 %v8552, %v8551
      %v8580 = vpack.c.bf16 %v8554, %v8553
      %v8581 = vpack.c.bf16 %v8556, %v8555
      %v8582 = vpack.c.bf16 %v8558, %v8557
      %v8583 = vpack.c.bf16 %v8560, %v8559
      %v8584 = vpack.c.bf16 %v8562, %v8561
      %v8585 = vpack.c.bf16 %v8564, %v8563
      %v8586 = vpack.c.bf16 %v8566, %v8565
      %v8587 = vpack.c.bf16 %v8568, %v8567
      %v8588 = vpack.c.bf16 %v8570, %v8569
      %v8589 = vpack.c.bf16 %v8572, %v8571
      %v8590 = vpack.c.bf16 %v8574, %v8573
      %8591 = vrot.lane.b32.xlu0 %v1398, 32
      %v8592 = vpop.permute.xlu0 %8591
      %v8595 = vsel %vm2414, %v8575, 0
      %8597 = vmatprep.subr.bf16.mxu0 0
      %8598 = vmatpush1.bf16.msra.mxu0 %v8592
      %8599 = vmatprep.subr.bf16.mxu0 0
      %8600 = vmatpush1.bf16.msra.mxu0 0
      %8601 = vmatprep.subr.bf16.mxu0 0
      %8602 = vmatpush1.bf16.msra.mxu0 0
      %8603 = vmatprep.subr.bf16.mxu0 0
      %8604 = vmatpush1.bf16.msra.mxu0 0
      %8605 = vmatprep.subr.bf16.mxu0 0
      %8606 = vmatpush1.bf16.msra.mxu0 0
      %8607 = vmatprep.subr.bf16.mxu0 0
      %8608 = vmatpush1.bf16.msra.mxu0 0
      %8609 = vmatprep.subr.bf16.mxu0 0
      %8610 = vmatpush1.bf16.msra.mxu0 0
      %8611 = vmatprep.subr.bf16.mxu0 0
      %8612 = vmatpush1.bf16.msra.mxu0 0
      %8613 = vmatprep.subr.bf16.mxu0 0
      %8614 = vmatpush1.bf16.msra.mxu0 0
      %8615 = vmatprep.subr.bf16.mxu0 0
      %8616 = vmatpush1.bf16.msra.mxu0 0
      %8617 = vmatprep.subr.bf16.mxu0 0
      %8618 = vmatpush1.bf16.msra.mxu0 0
      %8619 = vmatprep.subr.bf16.mxu0 0
      %8620 = vmatpush1.bf16.msra.mxu0 0
      %8621 = vmatprep.subr.bf16.mxu0 0
      %8622 = vmatpush1.bf16.msra.mxu0 0
      %8623 = vmatprep.subr.bf16.mxu0 0
      %8624 = vmatpush1.bf16.msra.mxu0 0
      %8625 = vmatprep.subr.bf16.mxu0 0
      %8626 = vmatpush1.bf16.msra.mxu0 0
      %8627 = vmatprep.subr.bf16.mxu0 0
      %8628 = vmatpush1.bf16.msra.mxu0 0
      %8629 = vmatprep.mubr.bf16.mxu0 0
      %8630 = vmatmul.mubr.bf16.gmra.mrb[0].mxu0 %v8595
      %v8631 = vpop.f32.mrb[0].mxu0
      %v8632 = vadd.f32 0.0, %v8631
      %v8633 = vpop.f32.mrb[0].mxu0
      %v8634 = vpop.f32.mrb[0].mxu0
      %v8635 = vadd.f32 0.0, %v8634
      %v8636 = vpop.f32.mrb[0].mxu0
      %8637 = vdwg.mxu0
      %8638 = vrot.lane.b32.xlu0 %v1399, 32
      %v8639 = vpop.permute.xlu0 %8638
      %v8642 = vsel %vm2414, %v8576, 0
      %8644 = vmatprep.subr.bf16.mxu0 0
      %8645 = vmatpush1.bf16.msra.mxu0 %v8639
      %8646 = vmatprep.subr.bf16.mxu0 0
      %8647 = vmatpush1.bf16.msra.mxu0 0
      %8648 = vmatprep.subr.bf16.mxu0 0
      %8649 = vmatpush1.bf16.msra.mxu0 0
      %8650 = vmatprep.subr.bf16.mxu0 0
      %8651 = vmatpush1.bf16.msra.mxu0 0
      %8652 = vmatprep.subr.bf16.mxu0 0
      %8653 = vmatpush1.bf16.msra.mxu0 0
      %8654 = vmatprep.subr.bf16.mxu0 0
      %8655 = vmatpush1.bf16.msra.mxu0 0
      %8656 = vmatprep.subr.bf16.mxu0 0
      %8657 = vmatpush1.bf16.msra.mxu0 0
      %8658 = vmatprep.subr.bf16.mxu0 0
      %8659 = vmatpush1.bf16.msra.mxu0 0
      %8660 = vmatprep.subr.bf16.mxu0 0
      %8661 = vmatpush1.bf16.msra.mxu0 0
      %8662 = vmatprep.subr.bf16.mxu0 0
      %8663 = vmatpush1.bf16.msra.mxu0 0
      %8664 = vmatprep.subr.bf16.mxu0 0
      %8665 = vmatpush1.bf16.msra.mxu0 0
      %8666 = vmatprep.subr.bf16.mxu0 0
      %8667 = vmatpush1.bf16.msra.mxu0 0
      %8668 = vmatprep.subr.bf16.mxu0 0
      %8669 = vmatpush1.bf16.msra.mxu0 0
      %8670 = vmatprep.subr.bf16.mxu0 0
      %8671 = vmatpush1.bf16.msra.mxu0 0
      %8672 = vmatprep.subr.bf16.mxu0 0
      %8673 = vmatpush1.bf16.msra.mxu0 0
      %8674 = vmatprep.subr.bf16.mxu0 0
      %8675 = vmatpush1.bf16.msra.mxu0 0
      %8676 = vmatprep.mubr.bf16.mxu0 0
      %8677 = vmatmul.mubr.bf16.gmra.mrb[0].mxu0 %v8642
      %v8678 = vpop.f32.mrb[0].mxu0
      %v8679 = vadd.f32 0.0, %v8678
      %v8680 = vpop.f32.mrb[0].mxu0
      %v8681 = vpop.f32.mrb[0].mxu0
      %v8682 = vadd.f32 0.0, %v8681
      %v8683 = vpop.f32.mrb[0].mxu0
      %8684 = vdwg.mxu0
      %8685 = vrot.lane.b32.xlu0 %v1400, 32
      %v8686 = vpop.permute.xlu0 %8685
      %v8689 = vsel %vm2414, %v8577, 0
      %8691 = vmatprep.subr.bf16.mxu0 0
      %8692 = vmatpush1.bf16.msra.mxu0 %v8686
      %8693 = vmatprep.subr.bf16.mxu0 0
      %8694 = vmatpush1.bf16.msra.mxu0 0
      %8695 = vmatprep.subr.bf16.mxu0 0
      %8696 = vmatpush1.bf16.msra.mxu0 0
      %8697 = vmatprep.subr.bf16.mxu0 0
      %8698 = vmatpush1.bf16.msra.mxu0 0
      %8699 = vmatprep.subr.bf16.mxu0 0
      %8700 = vmatpush1.bf16.msra.mxu0 0
      %8701 = vmatprep.subr.bf16.mxu0 0
      %8702 = vmatpush1.bf16.msra.mxu0 0
      %8703 = vmatprep.subr.bf16.mxu0 0
      %8704 = vmatpush1.bf16.msra.mxu0 0
      %8705 = vmatprep.subr.bf16.mxu0 0
      %8706 = vmatpush1.bf16.msra.mxu0 0
      %8707 = vmatprep.subr.bf16.mxu0 0
      %8708 = vmatpush1.bf16.msra.mxu0 0
      %8709 = vmatprep.subr.bf16.mxu0 0
      %8710 = vmatpush1.bf16.msra.mxu0 0
      %8711 = vmatprep.subr.bf16.mxu0 0
      %8712 = vmatpush1.bf16.msra.mxu0 0
      %8713 = vmatprep.subr.bf16.mxu0 0
      %8714 = vmatpush1.bf16.msra.mxu0 0
      %8715 = vmatprep.subr.bf16.mxu0 0
      %8716 = vmatpush1.bf16.msra.mxu0 0
      %8717 = vmatprep.subr.bf16.mxu0 0
      %8718 = vmatpush1.bf16.msra.mxu0 0
      %8719 = vmatprep.subr.bf16.mxu0 0
      %8720 = vmatpush1.bf16.msra.mxu0 0
      %8721 = vmatprep.subr.bf16.mxu0 0
      %8722 = vmatpush1.bf16.msra.mxu0 0
      %8723 = vmatprep.mubr.bf16.mxu0 0
      %8724 = vmatmul.mubr.bf16.gmra.mrb[0].mxu0 %v8689
      %v8725 = vpop.f32.mrb[0].mxu0
      %v8726 = vadd.f32 0.0, %v8725
      %v8727 = vpop.f32.mrb[0].mxu0
      %v8728 = vpop.f32.mrb[0].mxu0
      %v8729 = vadd.f32 0.0, %v8728
      %v8730 = vpop.f32.mrb[0].mxu0
      %8731 = vdwg.mxu0
      %8732 = vrot.lane.b32.xlu0 %v1401, 32
      %v8733 = vpop.permute.xlu0 %8732
      %v8736 = vsel %vm2414, %v8578, 0
      %8738 = vmatprep.subr.bf16.mxu0 0
      %8739 = vmatpush1.bf16.msra.mxu0 %v8733
      %8740 = vmatprep.subr.bf16.mxu0 0
      %8741 = vmatpush1.bf16.msra.mxu0 0
      %8742 = vmatprep.subr.bf16.mxu0 0
      %8743 = vmatpush1.bf16.msra.mxu0 0
      %8744 = vmatprep.subr.bf16.mxu0 0
      %8745 = vmatpush1.bf16.msra.mxu0 0
      %8746 = vmatprep.subr.bf16.mxu0 0
      %8747 = vmatpush1.bf16.msra.mxu0 0
      %8748 = vmatprep.subr.bf16.mxu0 0
      %8749 = vmatpush1.bf16.msra.mxu0 0
      %8750 = vmatprep.subr.bf16.mxu0 0
      %8751 = vmatpush1.bf16.msra.mxu0 0
      %8752 = vmatprep.subr.bf16.mxu0 0
      %8753 = vmatpush1.bf16.msra.mxu0 0
      %8754 = vmatprep.subr.bf16.mxu0 0
      %8755 = vmatpush1.bf16.msra.mxu0 0
      %8756 = vmatprep.subr.bf16.mxu0 0
      %8757 = vmatpush1.bf16.msra.mxu0 0
      %8758 = vmatprep.subr.bf16.mxu0 0
      %8759 = vmatpush1.bf16.msra.mxu0 0
      %8760 = vmatprep.subr.bf16.mxu0 0
      %8761 = vmatpush1.bf16.msra.mxu0 0
      %8762 = vmatprep.subr.bf16.mxu0 0
      %8763 = vmatpush1.bf16.msra.mxu0 0
      %8764 = vmatprep.subr.bf16.mxu0 0
      %8765 = vmatpush1.bf16.msra.mxu0 0
      %8766 = vmatprep.subr.bf16.mxu0 0
      %8767 = vmatpush1.bf16.msra.mxu0 0
      %8768 = vmatprep.subr.bf16.mxu0 0
      %8769 = vmatpush1.bf16.msra.mxu0 0
      %8770 = vmatprep.mubr.bf16.mxu0 0
      %8771 = vmatmul.mubr.bf16.gmra.mrb[0].mxu0 %v8736
      %v8772 = vpop.f32.mrb[0].mxu0
      %v8773 = vadd.f32 0.0, %v8772
      %v8774 = vpop.f32.mrb[0].mxu0
      %v8775 = vpop.f32.mrb[0].mxu0
      %v8776 = vadd.f32 0.0, %v8775
      %v8777 = vpop.f32.mrb[0].mxu0
      %8778 = vdwg.mxu0
      %8779 = vrot.lane.b32.xlu0 %v1402, 32
      %v8780 = vpop.permute.xlu0 %8779
      %v8783 = vsel %vm2414, %v8579, 0
      %8785 = vmatprep.subr.bf16.mxu0 0
      %8786 = vmatpush1.bf16.msra.mxu0 %v8780
      %8787 = vmatprep.subr.bf16.mxu0 0
      %8788 = vmatpush1.bf16.msra.mxu0 0
      %8789 = vmatprep.subr.bf16.mxu0 0
      %8790 = vmatpush1.bf16.msra.mxu0 0
      %8791 = vmatprep.subr.bf16.mxu0 0
      %8792 = vmatpush1.bf16.msra.mxu0 0
      %8793 = vmatprep.subr.bf16.mxu0 0
      %8794 = vmatpush1.bf16.msra.mxu0 0
      %8795 = vmatprep.subr.bf16.mxu0 0
      %8796 = vmatpush1.bf16.msra.mxu0 0
      %8797 = vmatprep.subr.bf16.mxu0 0
      %8798 = vmatpush1.bf16.msra.mxu0 0
      %8799 = vmatprep.subr.bf16.mxu0 0
      %8800 = vmatpush1.bf16.msra.mxu0 0
      %8801 = vmatprep.subr.bf16.mxu0 0
      %8802 = vmatpush1.bf16.msra.mxu0 0
      %8803 = vmatprep.subr.bf16.mxu0 0
      %8804 = vmatpush1.bf16.msra.mxu0 0
      %8805 = vmatprep.subr.bf16.mxu0 0
      %8806 = vmatpush1.bf16.msra.mxu0 0
      %8807 = vmatprep.subr.bf16.mxu0 0
      %8808 = vmatpush1.bf16.msra.mxu0 0
      %8809 = vmatprep.subr.bf16.mxu0 0
      %8810 = vmatpush1.bf16.msra.mxu0 0
      %8811 = vmatprep.subr.bf16.mxu0 0
      %8812 = vmatpush1.bf16.msra.mxu0 0
      %8813 = vmatprep.subr.bf16.mxu0 0
      %8814 = vmatpush1.bf16.msra.mxu0 0
      %8815 = vmatprep.subr.bf16.mxu0 0
      %8816 = vmatpush1.bf16.msra.mxu0 0
      %8817 = vmatprep.mubr.bf16.mxu0 0
      %8818 = vmatmul.mubr.bf16.gmra.mrb[0].mxu0 %v8783
      %v8819 = vpop.f32.mrb[0].mxu0
      %v8820 = vadd.f32 0.0, %v8819
      %v8821 = vpop.f32.mrb[0].mxu0
      %v8822 = vpop.f32.mrb[0].mxu0
      %v8823 = vadd.f32 0.0, %v8822
      %v8824 = vpop.f32.mrb[0].mxu0
      %8825 = vdwg.mxu0
      %8826 = vrot.lane.b32.xlu0 %v1403, 32
      %v8827 = vpop.permute.xlu0 %8826
      %v8830 = vsel %vm2414, %v8580, 0
      %8832 = vmatprep.subr.bf16.mxu0 0
      %8833 = vmatpush1.bf16.msra.mxu0 %v8827
      %8834 = vmatprep.subr.bf16.mxu0 0
      %8835 = vmatpush1.bf16.msra.mxu0 0
      %8836 = vmatprep.subr.bf16.mxu0 0
      %8837 = vmatpush1.bf16.msra.mxu0 0
      %8838 = vmatprep.subr.bf16.mxu0 0
      %8839 = vmatpush1.bf16.msra.mxu0 0
      %8840 = vmatprep.subr.bf16.mxu0 0
      %8841 = vmatpush1.bf16.msra.mxu0 0
      %8842 = vmatprep.subr.bf16.mxu0 0
      %8843 = vmatpush1.bf16.msra.mxu0 0
      %8844 = vmatprep.subr.bf16.mxu0 0
      %8845 = vmatpush1.bf16.msra.mxu0 0
      %8846 = vmatprep.subr.bf16.mxu0 0
      %8847 = vmatpush1.bf16.msra.mxu0 0
      %8848 = vmatprep.subr.bf16.mxu0 0
      %8849 = vmatpush1.bf16.msra.mxu0 0
      %8850 = vmatprep.subr.bf16.mxu0 0
      %8851 = vmatpush1.bf16.msra.mxu0 0
      %8852 = vmatprep.subr.bf16.mxu0 0
      %8853 = vmatpush1.bf16.msra.mxu0 0
      %8854 = vmatprep.subr.bf16.mxu0 0
      %8855 = vmatpush1.bf16.msra.mxu0 0
      %8856 = vmatprep.subr.bf16.mxu0 0
      %8857 = vmatpush1.bf16.msra.mxu0 0
      %8858 = vmatprep.subr.bf16.mxu0 0
      %8859 = vmatpush1.bf16.msra.mxu0 0
      %8860 = vmatprep.subr.bf16.mxu0 0
      %8861 = vmatpush1.bf16.msra.mxu0 0
      %8862 = vmatprep.subr.bf16.mxu0 0
      %8863 = vmatpush1.bf16.msra.mxu0 0
      %8864 = vmatprep.mubr.bf16.mxu0 0
      %8865 = vmatmul.mubr.bf16.gmra.mrb[0].mxu0 %v8830
      %v8866 = vpop.f32.mrb[0].mxu0
      %v8867 = vadd.f32 0.0, %v8866
      %v8868 = vpop.f32.mrb[0].mxu0
      %v8869 = vpop.f32.mrb[0].mxu0
      %v8870 = vadd.f32 0.0, %v8869
      %v8871 = vpop.f32.mrb[0].mxu0
      %8872 = vdwg.mxu0
      %8873 = vrot.lane.b32.xlu0 %v1404, 32
      %v8874 = vpop.permute.xlu0 %8873
      %v8877 = vsel %vm2414, %v8581, 0
      %8879 = vmatprep.subr.bf16.mxu0 0
      %8880 = vmatpush1.bf16.msra.mxu0 %v8874
      %8881 = vmatprep.subr.bf16.mxu0 0
      %8882 = vmatpush1.bf16.msra.mxu0 0
      %8883 = vmatprep.subr.bf16.mxu0 0
      %8884 = vmatpush1.bf16.msra.mxu0 0
      %8885 = vmatprep.subr.bf16.mxu0 0
      %8886 = vmatpush1.bf16.msra.mxu0 0
      %8887 = vmatprep.subr.bf16.mxu0 0
      %8888 = vmatpush1.bf16.msra.mxu0 0
      %8889 = vmatprep.subr.bf16.mxu0 0
      %8890 = vmatpush1.bf16.msra.mxu0 0
      %8891 = vmatprep.subr.bf16.mxu0 0
      %8892 = vmatpush1.bf16.msra.mxu0 0
      %8893 = vmatprep.subr.bf16.mxu0 0
      %8894 = vmatpush1.bf16.msra.mxu0 0
      %8895 = vmatprep.subr.bf16.mxu0 0
      %8896 = vmatpush1.bf16.msra.mxu0 0
      %8897 = vmatprep.subr.bf16.mxu0 0
      %8898 = vmatpush1.bf16.msra.mxu0 0
      %8899 = vmatprep.subr.bf16.mxu0 0
      %8900 = vmatpush1.bf16.msra.mxu0 0
      %8901 = vmatprep.subr.bf16.mxu0 0
      %8902 = vmatpush1.bf16.msra.mxu0 0
      %8903 = vmatprep.subr.bf16.mxu0 0
      %8904 = vmatpush1.bf16.msra.mxu0 0
      %8905 = vmatprep.subr.bf16.mxu0 0
      %8906 = vmatpush1.bf16.msra.mxu0 0
      %8907 = vmatprep.subr.bf16.mxu0 0
      %8908 = vmatpush1.bf16.msra.mxu0 0
      %8909 = vmatprep.subr.bf16.mxu0 0
      %8910 = vmatpush1.bf16.msra.mxu0 0
      %8911 = vmatprep.mubr.bf16.mxu0 0
      %8912 = vmatmul.mubr.bf16.gmra.mrb[0].mxu0 %v8877
      %v8913 = vpop.f32.mrb[0].mxu0
      %v8914 = vadd.f32 0.0, %v8913
      %v8915 = vpop.f32.mrb[0].mxu0
      %v8916 = vpop.f32.mrb[0].mxu0
      %v8917 = vadd.f32 0.0, %v8916
      %v8918 = vpop.f32.mrb[0].mxu0
      %8919 = vdwg.mxu0
      %8920 = vrot.lane.b32.xlu0 %v1405, 32
      %v8921 = vpop.permute.xlu0 %8920
      %v8924 = vsel %vm2414, %v8582, 0
      %8926 = vmatprep.subr.bf16.mxu0 0
      %8927 = vmatpush1.bf16.msra.mxu0 %v8921
      %8928 = vmatprep.subr.bf16.mxu0 0
      %8929 = vmatpush1.bf16.msra.mxu0 0
      %8930 = vmatprep.subr.bf16.mxu0 0
      %8931 = vmatpush1.bf16.msra.mxu0 0
      %8932 = vmatprep.subr.bf16.mxu0 0
      %8933 = vmatpush1.bf16.msra.mxu0 0
      %8934 = vmatprep.subr.bf16.mxu0 0
      %8935 = vmatpush1.bf16.msra.mxu0 0
      %8936 = vmatprep.subr.bf16.mxu0 0
      %8937 = vmatpush1.bf16.msra.mxu0 0
      %8938 = vmatprep.subr.bf16.mxu0 0
      %8939 = vmatpush1.bf16.msra.mxu0 0
      %8940 = vmatprep.subr.bf16.mxu0 0
      %8941 = vmatpush1.bf16.msra.mxu0 0
      %8942 = vmatprep.subr.bf16.mxu0 0
      %8943 = vmatpush1.bf16.msra.mxu0 0
      %8944 = vmatprep.subr.bf16.mxu0 0
      %8945 = vmatpush1.bf16.msra.mxu0 0
      %8946 = vmatprep.subr.bf16.mxu0 0
      %8947 = vmatpush1.bf16.msra.mxu0 0
      %8948 = vmatprep.subr.bf16.mxu0 0
      %8949 = vmatpush1.bf16.msra.mxu0 0
      %8950 = vmatprep.subr.bf16.mxu0 0
      %8951 = vmatpush1.bf16.msra.mxu0 0
      %8952 = vmatprep.subr.bf16.mxu0 0
      %8953 = vmatpush1.bf16.msra.mxu0 0
      %8954 = vmatprep.subr.bf16.mxu0 0
      %8955 = vmatpush1.bf16.msra.mxu0 0
      %8956 = vmatprep.subr.bf16.mxu0 0
      %8957 = vmatpush1.bf16.msra.mxu0 0
      %8958 = vmatprep.mubr.bf16.mxu0 0
      %8959 = vmatmul.mubr.bf16.gmra.mrb[0].mxu0 %v8924
      %v8960 = vpop.f32.mrb[0].mxu0
      %v8961 = vadd.f32 0.0, %v8960
      %v8962 = vpop.f32.mrb[0].mxu0
      %v8963 = vpop.f32.mrb[0].mxu0
      %v8964 = vadd.f32 0.0, %v8963
      %v8965 = vpop.f32.mrb[0].mxu0
      %8966 = vdwg.mxu0
      %8967 = vrot.lane.b32.xlu0 %v1406, 32
      %v8968 = vpop.permute.xlu0 %8967
      %v8971 = vsel %vm2414, %v8583, 0
      %8973 = vmatprep.subr.bf16.mxu0 0
      %8974 = vmatpush1.bf16.msra.mxu0 %v8968
      %8975 = vmatprep.subr.bf16.mxu0 0
      %8976 = vmatpush1.bf16.msra.mxu0 0
      %8977 = vmatprep.subr.bf16.mxu0 0
      %8978 = vmatpush1.bf16.msra.mxu0 0
      %8979 = vmatprep.subr.bf16.mxu0 0
      %8980 = vmatpush1.bf16.msra.mxu0 0
      %8981 = vmatprep.subr.bf16.mxu0 0
      %8982 = vmatpush1.bf16.msra.mxu0 0
      %8983 = vmatprep.subr.bf16.mxu0 0
      %8984 = vmatpush1.bf16.msra.mxu0 0
      %8985 = vmatprep.subr.bf16.mxu0 0
      %8986 = vmatpush1.bf16.msra.mxu0 0
      %8987 = vmatprep.subr.bf16.mxu0 0
      %8988 = vmatpush1.bf16.msra.mxu0 0
      %8989 = vmatprep.subr.bf16.mxu0 0
      %8990 = vmatpush1.bf16.msra.mxu0 0
      %8991 = vmatprep.subr.bf16.mxu0 0
      %8992 = vmatpush1.bf16.msra.mxu0 0
      %8993 = vmatprep.subr.bf16.mxu0 0
      %8994 = vmatpush1.bf16.msra.mxu0 0
      %8995 = vmatprep.subr.bf16.mxu0 0
      %8996 = vmatpush1.bf16.msra.mxu0 0
      %8997 = vmatprep.subr.bf16.mxu0 0
      %8998 = vmatpush1.bf16.msra.mxu0 0
      %8999 = vmatprep.subr.bf16.mxu0 0
      %9000 = vmatpush1.bf16.msra.mxu0 0
      %9001 = vmatprep.subr.bf16.mxu0 0
      %9002 = vmatpush1.bf16.msra.mxu0 0
      %9003 = vmatprep.subr.bf16.mxu0 0
      %9004 = vmatpush1.bf16.msra.mxu0 0
      %9005 = vmatprep.mubr.bf16.mxu0 0
      %9006 = vmatmul.mubr.bf16.gmra.mrb[0].mxu0 %v8971
      %v9007 = vpop.f32.mrb[0].mxu0
      %v9008 = vadd.f32 0.0, %v9007
      %v9009 = vpop.f32.mrb[0].mxu0
      %v9010 = vpop.f32.mrb[0].mxu0
      %v9011 = vadd.f32 0.0, %v9010
      %v9012 = vpop.f32.mrb[0].mxu0
      %9013 = vdwg.mxu0
      %9014 = vrot.lane.b32.xlu0 %v1407, 32
      %v9015 = vpop.permute.xlu0 %9014
      %v9018 = vsel %vm2414, %v8584, 0
      %9020 = vmatprep.subr.bf16.mxu0 0
      %9021 = vmatpush1.bf16.msra.mxu0 %v9015
      %9022 = vmatprep.subr.bf16.mxu0 0
      %9023 = vmatpush1.bf16.msra.mxu0 0
      %9024 = vmatprep.subr.bf16.mxu0 0
      %9025 = vmatpush1.bf16.msra.mxu0 0
      %9026 = vmatprep.subr.bf16.mxu0 0
      %9027 = vmatpush1.bf16.msra.mxu0 0
      %9028 = vmatprep.subr.bf16.mxu0 0
      %9029 = vmatpush1.bf16.msra.mxu0 0
      %9030 = vmatprep.subr.bf16.mxu0 0
      %9031 = vmatpush1.bf16.msra.mxu0 0
      %9032 = vmatprep.subr.bf16.mxu0 0
      %9033 = vmatpush1.bf16.msra.mxu0 0
      %9034 = vmatprep.subr.bf16.mxu0 0
      %9035 = vmatpush1.bf16.msra.mxu0 0
      %9036 = vmatprep.subr.bf16.mxu0 0
      %9037 = vmatpush1.bf16.msra.mxu0 0
      %9038 = vmatprep.subr.bf16.mxu0 0
      %9039 = vmatpush1.bf16.msra.mxu0 0
      %9040 = vmatprep.subr.bf16.mxu0 0
      %9041 = vmatpush1.bf16.msra.mxu0 0
      %9042 = vmatprep.subr.bf16.mxu0 0
      %9043 = vmatpush1.bf16.msra.mxu0 0
      %9044 = vmatprep.subr.bf16.mxu0 0
      %9045 = vmatpush1.bf16.msra.mxu0 0
      %9046 = vmatprep.subr.bf16.mxu0 0
      %9047 = vmatpush1.bf16.msra.mxu0 0
      %9048 = vmatprep.subr.bf16.mxu0 0
      %9049 = vmatpush1.bf16.msra.mxu0 0
      %9050 = vmatprep.subr.bf16.mxu0 0
      %9051 = vmatpush1.bf16.msra.mxu0 0
      %9052 = vmatprep.mubr.bf16.mxu0 0
      %9053 = vmatmul.mubr.bf16.gmra.mrb[0].mxu0 %v9018
      %v9054 = vpop.f32.mrb[0].mxu0
      %v9055 = vadd.f32 0.0, %v9054
      %v9056 = vpop.f32.mrb[0].mxu0
      %v9057 = vpop.f32.mrb[0].mxu0
      %v9058 = vadd.f32 0.0, %v9057
      %v9059 = vpop.f32.mrb[0].mxu0
      %9060 = vdwg.mxu0
      %9061 = vrot.lane.b32.xlu0 %v1408, 32
      %v9062 = vpop.permute.xlu0 %9061
      %v9065 = vsel %vm2414, %v8585, 0
      %9067 = vmatprep.subr.bf16.mxu0 0
      %9068 = vmatpush1.bf16.msra.mxu0 %v9062
      %9069 = vmatprep.subr.bf16.mxu0 0
      %9070 = vmatpush1.bf16.msra.mxu0 0
      %9071 = vmatprep.subr.bf16.mxu0 0
      %9072 = vmatpush1.bf16.msra.mxu0 0
      %9073 = vmatprep.subr.bf16.mxu0 0
      %9074 = vmatpush1.bf16.msra.mxu0 0
      %9075 = vmatprep.subr.bf16.mxu0 0
      %9076 = vmatpush1.bf16.msra.mxu0 0
      %9077 = vmatprep.subr.bf16.mxu0 0
      %9078 = vmatpush1.bf16.msra.mxu0 0
      %9079 = vmatprep.subr.bf16.mxu0 0
      %9080 = vmatpush1.bf16.msra.mxu0 0
      %9081 = vmatprep.subr.bf16.mxu0 0
      %9082 = vmatpush1.bf16.msra.mxu0 0
      %9083 = vmatprep.subr.bf16.mxu0 0
      %9084 = vmatpush1.bf16.msra.mxu0 0
      %9085 = vmatprep.subr.bf16.mxu0 0
      %9086 = vmatpush1.bf16.msra.mxu0 0
      %9087 = vmatprep.subr.bf16.mxu0 0
      %9088 = vmatpush1.bf16.msra.mxu0 0
      %9089 = vmatprep.subr.bf16.mxu0 0
      %9090 = vmatpush1.bf16.msra.mxu0 0
      %9091 = vmatprep.subr.bf16.mxu0 0
      %9092 = vmatpush1.bf16.msra.mxu0 0
      %9093 = vmatprep.subr.bf16.mxu0 0
      %9094 = vmatpush1.bf16.msra.mxu0 0
      %9095 = vmatprep.subr.bf16.mxu0 0
      %9096 = vmatpush1.bf16.msra.mxu0 0
      %9097 = vmatprep.subr.bf16.mxu0 0
      %9098 = vmatpush1.bf16.msra.mxu0 0
      %9099 = vmatprep.mubr.bf16.mxu0 0
      %9100 = vmatmul.mubr.bf16.gmra.mrb[0].mxu0 %v9065
      %v9101 = vpop.f32.mrb[0].mxu0
      %v9102 = vadd.f32 0.0, %v9101
      %v9103 = vpop.f32.mrb[0].mxu0
      %v9104 = vpop.f32.mrb[0].mxu0
      %v9105 = vadd.f32 0.0, %v9104
      %v9106 = vpop.f32.mrb[0].mxu0
      %9107 = vdwg.mxu0
      %9108 = vrot.lane.b32.xlu0 %v1409, 32
      %v9109 = vpop.permute.xlu0 %9108
      %v9112 = vsel %vm2414, %v8586, 0
      %9114 = vmatprep.subr.bf16.mxu0 0
      %9115 = vmatpush1.bf16.msra.mxu0 %v9109
      %9116 = vmatprep.subr.bf16.mxu0 0
      %9117 = vmatpush1.bf16.msra.mxu0 0
      %9118 = vmatprep.subr.bf16.mxu0 0
      %9119 = vmatpush1.bf16.msra.mxu0 0
      %9120 = vmatprep.subr.bf16.mxu0 0
      %9121 = vmatpush1.bf16.msra.mxu0 0
      %9122 = vmatprep.subr.bf16.mxu0 0
      %9123 = vmatpush1.bf16.msra.mxu0 0
      %9124 = vmatprep.subr.bf16.mxu0 0
      %9125 = vmatpush1.bf16.msra.mxu0 0
      %9126 = vmatprep.subr.bf16.mxu0 0
      %9127 = vmatpush1.bf16.msra.mxu0 0
      %9128 = vmatprep.subr.bf16.mxu0 0
      %9129 = vmatpush1.bf16.msra.mxu0 0
      %9130 = vmatprep.subr.bf16.mxu0 0
      %9131 = vmatpush1.bf16.msra.mxu0 0
      %9132 = vmatprep.subr.bf16.mxu0 0
      %9133 = vmatpush1.bf16.msra.mxu0 0
      %9134 = vmatprep.subr.bf16.mxu0 0
      %9135 = vmatpush1.bf16.msra.mxu0 0
      %9136 = vmatprep.subr.bf16.mxu0 0
      %9137 = vmatpush1.bf16.msra.mxu0 0
      %9138 = vmatprep.subr.bf16.mxu0 0
      %9139 = vmatpush1.bf16.msra.mxu0 0
      %9140 = vmatprep.subr.bf16.mxu0 0
      %9141 = vmatpush1.bf16.msra.mxu0 0
      %9142 = vmatprep.subr.bf16.mxu0 0
      %9143 = vmatpush1.bf16.msra.mxu0 0
      %9144 = vmatprep.subr.bf16.mxu0 0
      %9145 = vmatpush1.bf16.msra.mxu0 0
      %9146 = vmatprep.mubr.bf16.mxu0 0
      %9147 = vmatmul.mubr.bf16.gmra.mrb[0].mxu0 %v9112
      %v9148 = vpop.f32.mrb[0].mxu0
      %v9149 = vadd.f32 0.0, %v9148
      %v9150 = vpop.f32.mrb[0].mxu0
      %v9151 = vpop.f32.mrb[0].mxu0
      %v9152 = vadd.f32 0.0, %v9151
      %v9153 = vpop.f32.mrb[0].mxu0
      %9154 = vdwg.mxu0
      %9155 = vrot.lane.b32.xlu0 %v1410, 32
      %v9156 = vpop.permute.xlu0 %9155
      %v9159 = vsel %vm2414, %v8587, 0
      %9161 = vmatprep.subr.bf16.mxu0 0
      %9162 = vmatpush1.bf16.msra.mxu0 %v9156
      %9163 = vmatprep.subr.bf16.mxu0 0
      %9164 = vmatpush1.bf16.msra.mxu0 0
      %9165 = vmatprep.subr.bf16.mxu0 0
      %9166 = vmatpush1.bf16.msra.mxu0 0
      %9167 = vmatprep.subr.bf16.mxu0 0
      %9168 = vmatpush1.bf16.msra.mxu0 0
      %9169 = vmatprep.subr.bf16.mxu0 0
      %9170 = vmatpush1.bf16.msra.mxu0 0
      %9171 = vmatprep.subr.bf16.mxu0 0
      %9172 = vmatpush1.bf16.msra.mxu0 0
      %9173 = vmatprep.subr.bf16.mxu0 0
      %9174 = vmatpush1.bf16.msra.mxu0 0
      %9175 = vmatprep.subr.bf16.mxu0 0
      %9176 = vmatpush1.bf16.msra.mxu0 0
      %9177 = vmatprep.subr.bf16.mxu0 0
      %9178 = vmatpush1.bf16.msra.mxu0 0
      %9179 = vmatprep.subr.bf16.mxu0 0
      %9180 = vmatpush1.bf16.msra.mxu0 0
      %9181 = vmatprep.subr.bf16.mxu0 0
      %9182 = vmatpush1.bf16.msra.mxu0 0
      %9183 = vmatprep.subr.bf16.mxu0 0
      %9184 = vmatpush1.bf16.msra.mxu0 0
      %9185 = vmatprep.subr.bf16.mxu0 0
      %9186 = vmatpush1.bf16.msra.mxu0 0
      %9187 = vmatprep.subr.bf16.mxu0 0
      %9188 = vmatpush1.bf16.msra.mxu0 0
      %9189 = vmatprep.subr.bf16.mxu0 0
      %9190 = vmatpush1.bf16.msra.mxu0 0
      %9191 = vmatprep.subr.bf16.mxu0 0
      %9192 = vmatpush1.bf16.msra.mxu0 0
      %9193 = vmatprep.mubr.bf16.mxu0 0
      %9194 = vmatmul.mubr.bf16.gmra.mrb[0].mxu0 %v9159
      %v9195 = vpop.f32.mrb[0].mxu0
      %v9196 = vadd.f32 0.0, %v9195
      %v9197 = vpop.f32.mrb[0].mxu0
      %v9198 = vpop.f32.mrb[0].mxu0
      %v9199 = vadd.f32 0.0, %v9198
      %v9200 = vpop.f32.mrb[0].mxu0
      %9201 = vdwg.mxu0
      %9202 = vrot.lane.b32.xlu0 %v1411, 32
      %v9203 = vpop.permute.xlu0 %9202
      %v9206 = vsel %vm2414, %v8588, 0
      %9208 = vmatprep.subr.bf16.mxu0 0
      %9209 = vmatpush1.bf16.msra.mxu0 %v9203
      %9210 = vmatprep.subr.bf16.mxu0 0
      %9211 = vmatpush1.bf16.msra.mxu0 0
      %9212 = vmatprep.subr.bf16.mxu0 0
      %9213 = vmatpush1.bf16.msra.mxu0 0
      %9214 = vmatprep.subr.bf16.mxu0 0
      %9215 = vmatpush1.bf16.msra.mxu0 0
      %9216 = vmatprep.subr.bf16.mxu0 0
      %9217 = vmatpush1.bf16.msra.mxu0 0
      %9218 = vmatprep.subr.bf16.mxu0 0
      %9219 = vmatpush1.bf16.msra.mxu0 0
      %9220 = vmatprep.subr.bf16.mxu0 0
      %9221 = vmatpush1.bf16.msra.mxu0 0
      %9222 = vmatprep.subr.bf16.mxu0 0
      %9223 = vmatpush1.bf16.msra.mxu0 0
      %9224 = vmatprep.subr.bf16.mxu0 0
      %9225 = vmatpush1.bf16.msra.mxu0 0
      %9226 = vmatprep.subr.bf16.mxu0 0
      %9227 = vmatpush1.bf16.msra.mxu0 0
      %9228 = vmatprep.subr.bf16.mxu0 0
      %9229 = vmatpush1.bf16.msra.mxu0 0
      %9230 = vmatprep.subr.bf16.mxu0 0
      %9231 = vmatpush1.bf16.msra.mxu0 0
      %9232 = vmatprep.subr.bf16.mxu0 0
      %9233 = vmatpush1.bf16.msra.mxu0 0
      %9234 = vmatprep.subr.bf16.mxu0 0
      %9235 = vmatpush1.bf16.msra.mxu0 0
      %9236 = vmatprep.subr.bf16.mxu0 0
      %9237 = vmatpush1.bf16.msra.mxu0 0
      %9238 = vmatprep.subr.bf16.mxu0 0
      %9239 = vmatpush1.bf16.msra.mxu0 0
      %9240 = vmatprep.mubr.bf16.mxu0 0
      %9241 = vmatmul.mubr.bf16.gmra.mrb[0].mxu0 %v9206
      %v9242 = vpop.f32.mrb[0].mxu0
      %v9243 = vadd.f32 0.0, %v9242
      %v9244 = vpop.f32.mrb[0].mxu0
      %v9245 = vpop.f32.mrb[0].mxu0
      %v9246 = vadd.f32 0.0, %v9245
      %v9247 = vpop.f32.mrb[0].mxu0
      %9248 = vdwg.mxu0
      %9249 = vrot.lane.b32.xlu0 %v1412, 32
      %v9250 = vpop.permute.xlu0 %9249
      %v9253 = vsel %vm2414, %v8589, 0
      %9255 = vmatprep.subr.bf16.mxu0 0
      %9256 = vmatpush1.bf16.msra.mxu0 %v9250
      %9257 = vmatprep.subr.bf16.mxu0 0
      %9258 = vmatpush1.bf16.msra.mxu0 0
      %9259 = vmatprep.subr.bf16.mxu0 0
      %9260 = vmatpush1.bf16.msra.mxu0 0
      %9261 = vmatprep.subr.bf16.mxu0 0
      %9262 = vmatpush1.bf16.msra.mxu0 0
      %9263 = vmatprep.subr.bf16.mxu0 0
      %9264 = vmatpush1.bf16.msra.mxu0 0
      %9265 = vmatprep.subr.bf16.mxu0 0
      %9266 = vmatpush1.bf16.msra.mxu0 0
      %9267 = vmatprep.subr.bf16.mxu0 0
      %9268 = vmatpush1.bf16.msra.mxu0 0
      %9269 = vmatprep.subr.bf16.mxu0 0
      %9270 = vmatpush1.bf16.msra.mxu0 0
      %9271 = vmatprep.subr.bf16.mxu0 0
      %9272 = vmatpush1.bf16.msra.mxu0 0
      %9273 = vmatprep.subr.bf16.mxu0 0
      %9274 = vmatpush1.bf16.msra.mxu0 0
      %9275 = vmatprep.subr.bf16.mxu0 0
      %9276 = vmatpush1.bf16.msra.mxu0 0
      %9277 = vmatprep.subr.bf16.mxu0 0
      %9278 = vmatpush1.bf16.msra.mxu0 0
      %9279 = vmatprep.subr.bf16.mxu0 0
      %9280 = vmatpush1.bf16.msra.mxu0 0
      %9281 = vmatprep.subr.bf16.mxu0 0
      %9282 = vmatpush1.bf16.msra.mxu0 0
      %9283 = vmatprep.subr.bf16.mxu0 0
      %9284 = vmatpush1.bf16.msra.mxu0 0
      %9285 = vmatprep.subr.bf16.mxu0 0
      %9286 = vmatpush1.bf16.msra.mxu0 0
      %9287 = vmatprep.mubr.bf16.mxu0 0
      %9288 = vmatmul.mubr.bf16.gmra.mrb[0].mxu0 %v9253
      %v9289 = vpop.f32.mrb[0].mxu0
      %v9290 = vadd.f32 0.0, %v9289
      %v9291 = vpop.f32.mrb[0].mxu0
      %v9292 = vpop.f32.mrb[0].mxu0
      %v9293 = vadd.f32 0.0, %v9292
      %v9294 = vpop.f32.mrb[0].mxu0
      %9295 = vdwg.mxu0
      %9296 = vrot.lane.b32.xlu0 %v1413, 32
      %v9297 = vpop.permute.xlu0 %9296
      %v9300 = vsel %vm2414, %v8590, 0
      %9302 = vmatprep.subr.bf16.mxu0 0
      %9303 = vmatpush1.bf16.msra.mxu0 %v9297
      %9304 = vmatprep.subr.bf16.mxu0 0
      %9305 = vmatpush1.bf16.msra.mxu0 0
      %9306 = vmatprep.subr.bf16.mxu0 0
      %9307 = vmatpush1.bf16.msra.mxu0 0
      %9308 = vmatprep.subr.bf16.mxu0 0
      %9309 = vmatpush1.bf16.msra.mxu0 0
      %9310 = vmatprep.subr.bf16.mxu0 0
      %9311 = vmatpush1.bf16.msra.mxu0 0
      %9312 = vmatprep.subr.bf16.mxu0 0
      %9313 = vmatpush1.bf16.msra.mxu0 0
      %9314 = vmatprep.subr.bf16.mxu0 0
      %9315 = vmatpush1.bf16.msra.mxu0 0
      %9316 = vmatprep.subr.bf16.mxu0 0
      %9317 = vmatpush1.bf16.msra.mxu0 0
      %9318 = vmatprep.subr.bf16.mxu0 0
      %9319 = vmatpush1.bf16.msra.mxu0 0
      %9320 = vmatprep.subr.bf16.mxu0 0
      %9321 = vmatpush1.bf16.msra.mxu0 0
      %9322 = vmatprep.subr.bf16.mxu0 0
      %9323 = vmatpush1.bf16.msra.mxu0 0
      %9324 = vmatprep.subr.bf16.mxu0 0
      %9325 = vmatpush1.bf16.msra.mxu0 0
      %9326 = vmatprep.subr.bf16.mxu0 0
      %9327 = vmatpush1.bf16.msra.mxu0 0
      %9328 = vmatprep.subr.bf16.mxu0 0
      %9329 = vmatpush1.bf16.msra.mxu0 0
      %9330 = vmatprep.subr.bf16.mxu0 0
      %9331 = vmatpush1.bf16.msra.mxu0 0
      %9332 = vmatprep.subr.bf16.mxu0 0
      %9333 = vmatpush1.bf16.msra.mxu0 0
      %9334 = vmatprep.mubr.bf16.mxu0 0
      %9335 = vmatmul.mubr.bf16.gmra.mrb[0].mxu0 %v9300
      %v9336 = vpop.f32.mrb[0].mxu0
      %v9337 = vadd.f32 0.0, %v9336
      %v9338 = vpop.f32.mrb[0].mxu0
      %v9339 = vpop.f32.mrb[0].mxu0
      %v9340 = vadd.f32 0.0, %v9339
      %v9341 = vpop.f32.mrb[0].mxu0
      %9342 = vdwg.mxu0
      %9375 = vrot.lane.b32.xlu0 %v4745, 32
      %v9376 = vpop.permute.xlu0 %9375
      %9377 = vrot.lane.b32.xlu0 %v4748, 32
      %v9378 = vpop.permute.xlu0 %9377
      %9379 = vrot.lane.b32.xlu0 %v4793, 32
      %v9380 = vpop.permute.xlu0 %9379
      %9381 = vrot.lane.b32.xlu0 %v4796, 32
      %v9382 = vpop.permute.xlu0 %9381
      %9383 = vrot.lane.b32.xlu0 %v4841, 32
      %v9384 = vpop.permute.xlu0 %9383
      %9385 = vrot.lane.b32.xlu0 %v4844, 32
      %v9386 = vpop.permute.xlu0 %9385
      %9387 = vrot.lane.b32.xlu0 %v4889, 32
      %v9388 = vpop.permute.xlu0 %9387
      %9389 = vrot.lane.b32.xlu0 %v4892, 32
      %v9390 = vpop.permute.xlu0 %9389
      %9391 = vrot.lane.b32.xlu0 %v4937, 32
      %v9392 = vpop.permute.xlu0 %9391
      %9393 = vrot.lane.b32.xlu0 %v4940, 32
      %v9394 = vpop.permute.xlu0 %9393
      %9395 = vrot.lane.b32.xlu0 %v4985, 32
      %v9396 = vpop.permute.xlu0 %9395
      %9397 = vrot.lane.b32.xlu0 %v4988, 32
      %v9398 = vpop.permute.xlu0 %9397
      %9399 = vrot.lane.b32.xlu0 %v5033, 32
      %v9400 = vpop.permute.xlu0 %9399
      %9401 = vrot.lane.b32.xlu0 %v5036, 32
      %v9402 = vpop.permute.xlu0 %9401
      %9403 = vrot.lane.b32.xlu0 %v5081, 32
      %v9404 = vpop.permute.xlu0 %9403
      %9405 = vrot.lane.b32.xlu0 %v5084, 32
      %v9406 = vpop.permute.xlu0 %9405
      %9407 = vrot.lane.b32.xlu0 %v5129, 32
      %v9408 = vpop.permute.xlu0 %9407
      %9409 = vrot.lane.b32.xlu0 %v5132, 32
      %v9410 = vpop.permute.xlu0 %9409
      %9411 = vrot.lane.b32.xlu0 %v5177, 32
      %v9412 = vpop.permute.xlu0 %9411
      %9413 = vrot.lane.b32.xlu0 %v5180, 32
      %v9414 = vpop.permute.xlu0 %9413
      %9415 = vrot.lane.b32.xlu0 %v5225, 32
      %v9416 = vpop.permute.xlu0 %9415
      %9417 = vrot.lane.b32.xlu0 %v5228, 32
      %v9418 = vpop.permute.xlu0 %9417
      %9419 = vrot.lane.b32.xlu0 %v5273, 32
      %v9420 = vpop.permute.xlu0 %9419
      %9421 = vrot.lane.b32.xlu0 %v5276, 32
      %v9422 = vpop.permute.xlu0 %9421
      %9423 = vrot.lane.b32.xlu0 %v5321, 32
      %v9424 = vpop.permute.xlu0 %9423
      %9425 = vrot.lane.b32.xlu0 %v5324, 32
      %v9426 = vpop.permute.xlu0 %9425
      %9427 = vrot.lane.b32.xlu0 %v5369, 32
      %v9428 = vpop.permute.xlu0 %9427
      %9429 = vrot.lane.b32.xlu0 %v5372, 32
      %v9430 = vpop.permute.xlu0 %9429
      %9431 = vrot.lane.b32.xlu0 %v5417, 32
      %v9432 = vpop.permute.xlu0 %9431
      %9433 = vrot.lane.b32.xlu0 %v5420, 32
      %v9434 = vpop.permute.xlu0 %9433
      %9435 = vrot.lane.b32.xlu0 %v5465, 32
      %v9436 = vpop.permute.xlu0 %9435
      %9437 = vrot.lane.b32.xlu0 %v5468, 32
      %v9438 = vpop.permute.xlu0 %9437
      %9503 = vrot.lane.b32.xlu0 %v6696, 64
      %v9504 = vpop.permute.xlu0 %9503
      %9505 = vrot.lane.b32.xlu0 %v6699, 64
      %v9506 = vpop.permute.xlu0 %9505
      %9507 = vrot.lane.b32.xlu0 %v6743, 64
      %v9508 = vpop.permute.xlu0 %9507
      %9509 = vrot.lane.b32.xlu0 %v6746, 64
      %v9510 = vpop.permute.xlu0 %9509
      %9511 = vrot.lane.b32.xlu0 %v6790, 64
      %v9512 = vpop.permute.xlu0 %9511
      %9513 = vrot.lane.b32.xlu0 %v6793, 64
      %v9514 = vpop.permute.xlu0 %9513
      %9515 = vrot.lane.b32.xlu0 %v6837, 64
      %v9516 = vpop.permute.xlu0 %9515
      %9517 = vrot.lane.b32.xlu0 %v6840, 64
      %v9518 = vpop.permute.xlu0 %9517
      %9519 = vrot.lane.b32.xlu0 %v6884, 64
      %v9520 = vpop.permute.xlu0 %9519
      %9521 = vrot.lane.b32.xlu0 %v6887, 64
      %v9522 = vpop.permute.xlu0 %9521
      %9523 = vrot.lane.b32.xlu0 %v6931, 64
      %v9524 = vpop.permute.xlu0 %9523
      %9525 = vrot.lane.b32.xlu0 %v6934, 64
      %v9526 = vpop.permute.xlu0 %9525
      %9527 = vrot.lane.b32.xlu0 %v6978, 64
      %v9528 = vpop.permute.xlu0 %9527
      %9529 = vrot.lane.b32.xlu0 %v6981, 64
      %v9530 = vpop.permute.xlu0 %9529
      %9531 = vrot.lane.b32.xlu0 %v7025, 64
      %v9532 = vpop.permute.xlu0 %9531
      %9533 = vrot.lane.b32.xlu0 %v7028, 64
      %v9534 = vpop.permute.xlu0 %9533
      %9535 = vrot.lane.b32.xlu0 %v7072, 64
      %v9536 = vpop.permute.xlu0 %9535
      %9537 = vrot.lane.b32.xlu0 %v7075, 64
      %v9538 = vpop.permute.xlu0 %9537
      %9539 = vrot.lane.b32.xlu0 %v7119, 64
      %v9540 = vpop.permute.xlu0 %9539
      %9541 = vrot.lane.b32.xlu0 %v7122, 64
      %v9542 = vpop.permute.xlu0 %9541
      %9543 = vrot.lane.b32.xlu0 %v7166, 64
      %v9544 = vpop.permute.xlu0 %9543
      %9545 = vrot.lane.b32.xlu0 %v7169, 64
      %v9546 = vpop.permute.xlu0 %9545
      %9547 = vrot.lane.b32.xlu0 %v7213, 64
      %v9548 = vpop.permute.xlu0 %9547
      %9549 = vrot.lane.b32.xlu0 %v7216, 64
      %v9550 = vpop.permute.xlu0 %9549
      %9551 = vrot.lane.b32.xlu0 %v7260, 64
      %v9552 = vpop.permute.xlu0 %9551
      %9553 = vrot.lane.b32.xlu0 %v7263, 64
      %v9554 = vpop.permute.xlu0 %9553
      %9555 = vrot.lane.b32.xlu0 %v7307, 64
      %v9556 = vpop.permute.xlu0 %9555
      %9557 = vrot.lane.b32.xlu0 %v7310, 64
      %v9558 = vpop.permute.xlu0 %9557
      %9559 = vrot.lane.b32.xlu0 %v7354, 64
      %v9560 = vpop.permute.xlu0 %9559
      %9561 = vrot.lane.b32.xlu0 %v7357, 64
      %v9562 = vpop.permute.xlu0 %9561
      %9563 = vrot.lane.b32.xlu0 %v7401, 64
      %v9564 = vpop.permute.xlu0 %9563
      %9565 = vrot.lane.b32.xlu0 %v7404, 64
      %v9566 = vpop.permute.xlu0 %9565
      %9631 = vrot.lane.b32.xlu0 %v8632, 96
      %v9632 = vpop.permute.xlu0 %9631
      %9633 = vrot.lane.b32.xlu0 %v8635, 96
      %v9634 = vpop.permute.xlu0 %9633
      %9635 = vrot.lane.b32.xlu0 %v8679, 96
      %v9636 = vpop.permute.xlu0 %9635
      %9637 = vrot.lane.b32.xlu0 %v8682, 96
      %v9638 = vpop.permute.xlu0 %9637
      %9639 = vrot.lane.b32.xlu0 %v8726, 96
      %v9640 = vpop.permute.xlu0 %9639
      %9641 = vrot.lane.b32.xlu0 %v8729, 96
      %v9642 = vpop.permute.xlu0 %9641
      %9643 = vrot.lane.b32.xlu0 %v8773, 96
      %v9644 = vpop.permute.xlu0 %9643
      %9645 = vrot.lane.b32.xlu0 %v8776, 96
      %v9646 = vpop.permute.xlu0 %9645
      %9647 = vrot.lane.b32.xlu0 %v8820, 96
      %v9648 = vpop.permute.xlu0 %9647
      %9649 = vrot.lane.b32.xlu0 %v8823, 96
      %v9650 = vpop.permute.xlu0 %9649
      %9651 = vrot.lane.b32.xlu0 %v8867, 96
      %v9652 = vpop.permute.xlu0 %9651
      %9653 = vrot.lane.b32.xlu0 %v8870, 96
      %v9654 = vpop.permute.xlu0 %9653
      %9655 = vrot.lane.b32.xlu0 %v8914, 96
      %v9656 = vpop.permute.xlu0 %9655
      %9657 = vrot.lane.b32.xlu0 %v8917, 96
      %v9658 = vpop.permute.xlu0 %9657
      %9659 = vrot.lane.b32.xlu0 %v8961, 96
      %v9660 = vpop.permute.xlu0 %9659
      %9661 = vrot.lane.b32.xlu0 %v8964, 96
      %v9662 = vpop.permute.xlu0 %9661
      %9663 = vrot.lane.b32.xlu0 %v9008, 96
      %v9664 = vpop.permute.xlu0 %9663
      %9665 = vrot.lane.b32.xlu0 %v9011, 96
      %v9666 = vpop.permute.xlu0 %9665
      %9667 = vrot.lane.b32.xlu0 %v9055, 96
      %v9668 = vpop.permute.xlu0 %9667
      %9669 = vrot.lane.b32.xlu0 %v9058, 96
      %v9670 = vpop.permute.xlu0 %9669
      %9671 = vrot.lane.b32.xlu0 %v9102, 96
      %v9672 = vpop.permute.xlu0 %9671
      %9673 = vrot.lane.b32.xlu0 %v9105, 96
      %v9674 = vpop.permute.xlu0 %9673
      %9675 = vrot.lane.b32.xlu0 %v9149, 96
      %v9676 = vpop.permute.xlu0 %9675
      %9677 = vrot.lane.b32.xlu0 %v9152, 96
      %v9678 = vpop.permute.xlu0 %9677
      %9679 = vrot.lane.b32.xlu0 %v9196, 96
      %v9680 = vpop.permute.xlu0 %9679
      %9681 = vrot.lane.b32.xlu0 %v9199, 96
      %v9682 = vpop.permute.xlu0 %9681
      %9683 = vrot.lane.b32.xlu0 %v9243, 96
      %v9684 = vpop.permute.xlu0 %9683
      %9685 = vrot.lane.b32.xlu0 %v9246, 96
      %v9686 = vpop.permute.xlu0 %9685
      %9687 = vrot.lane.b32.xlu0 %v9290, 96
      %v9688 = vpop.permute.xlu0 %9687
      %9689 = vrot.lane.b32.xlu0 %v9293, 96
      %v9690 = vpop.permute.xlu0 %9689
      %9691 = vrot.lane.b32.xlu0 %v9337, 96
      %v9692 = vpop.permute.xlu0 %9691
      %9693 = vrot.lane.b32.xlu0 %v9340, 96
      %v9694 = vpop.permute.xlu0 %9693
      %v9727 = vsel %vm514, %v2821, %v9376
      %v9728 = vsel %vm514, %v2824, %v9378
      %v9729 = vsel %vm514, %v2865, %v9380
      %v9730 = vsel %vm514, %v2868, %v9382
      %v9731 = vsel %vm514, %v2909, %v9384
      %v9732 = vsel %vm514, %v2912, %v9386
      %v9733 = vsel %vm514, %v2953, %v9388
      %v9734 = vsel %vm514, %v2956, %v9390
      %v9735 = vsel %vm514, %v2997, %v9392
      %v9736 = vsel %vm514, %v3000, %v9394
      %v9737 = vsel %vm514, %v3041, %v9396
      %v9738 = vsel %vm514, %v3044, %v9398
      %v9739 = vsel %vm514, %v3085, %v9400
      %v9740 = vsel %vm514, %v3088, %v9402
      %v9741 = vsel %vm514, %v3129, %v9404
      %v9742 = vsel %vm514, %v3132, %v9406
      %v9743 = vsel %vm514, %v3173, %v9408
      %v9744 = vsel %vm514, %v3176, %v9410
      %v9745 = vsel %vm514, %v3217, %v9412
      %v9746 = vsel %vm514, %v3220, %v9414
      %v9747 = vsel %vm514, %v3261, %v9416
      %v9748 = vsel %vm514, %v3264, %v9418
      %v9749 = vsel %vm514, %v3305, %v9420
      %v9750 = vsel %vm514, %v3308, %v9422
      %v9751 = vsel %vm514, %v3349, %v9424
      %v9752 = vsel %vm514, %v3352, %v9426
      %v9753 = vsel %vm514, %v3393, %v9428
      %v9754 = vsel %vm514, %v3396, %v9430
      %v9755 = vsel %vm514, %v3437, %v9432
      %v9756 = vsel %vm514, %v3440, %v9434
      %v9757 = vsel %vm514, %v3481, %v9436
      %v9758 = vsel %vm514, %v3484, %v9438
      %vm9759 = vcmask 523264
      %v9760 = vsel %vm9759, %v9727, %v9504
      %v9761 = vsel %vm9759, %v9728, %v9506
      %v9762 = vsel %vm9759, %v9729, %v9508
      %v9763 = vsel %vm9759, %v9730, %v9510
      %v9764 = vsel %vm9759, %v9731, %v9512
      %v9765 = vsel %vm9759, %v9732, %v9514
      %v9766 = vsel %vm9759, %v9733, %v9516
      %v9767 = vsel %vm9759, %v9734, %v9518
      %v9768 = vsel %vm9759, %v9735, %v9520
      %v9769 = vsel %vm9759, %v9736, %v9522
      %v9770 = vsel %vm9759, %v9737, %v9524
      %v9771 = vsel %vm9759, %v9738, %v9526
      %v9772 = vsel %vm9759, %v9739, %v9528
      %v9773 = vsel %vm9759, %v9740, %v9530
      %v9774 = vsel %vm9759, %v9741, %v9532
      %v9775 = vsel %vm9759, %v9742, %v9534
      %v9776 = vsel %vm9759, %v9743, %v9536
      %v9777 = vsel %vm9759, %v9744, %v9538
      %v9778 = vsel %vm9759, %v9745, %v9540
      %v9779 = vsel %vm9759, %v9746, %v9542
      %v9780 = vsel %vm9759, %v9747, %v9544
      %v9781 = vsel %vm9759, %v9748, %v9546
      %v9782 = vsel %vm9759, %v9749, %v9548
      %v9783 = vsel %vm9759, %v9750, %v9550
      %v9784 = vsel %vm9759, %v9751, %v9552
      %v9785 = vsel %vm9759, %v9752, %v9554
      %v9786 = vsel %vm9759, %v9753, %v9556
      %v9787 = vsel %vm9759, %v9754, %v9558
      %v9788 = vsel %vm9759, %v9755, %v9560
      %v9789 = vsel %vm9759, %v9756, %v9562
      %v9790 = vsel %vm9759, %v9757, %v9564
      %v9791 = vsel %vm9759, %v9758, %v9566
      %vm9792 = vcmask 785408
      %v9793 = vsel %vm9792, %v9760, %v9632
      %v9794 = vsel %vm9792, %v9761, %v9634
      %v9795 = vsel %vm9792, %v9762, %v9636
      %v9796 = vsel %vm9792, %v9763, %v9638
      %v9797 = vsel %vm9792, %v9764, %v9640
      %v9798 = vsel %vm9792, %v9765, %v9642
      %v9799 = vsel %vm9792, %v9766, %v9644
      %v9800 = vsel %vm9792, %v9767, %v9646
      %v9801 = vsel %vm9792, %v9768, %v9648
      %v9802 = vsel %vm9792, %v9769, %v9650
      %v9803 = vsel %vm9792, %v9770, %v9652
      %v9804 = vsel %vm9792, %v9771, %v9654
      %v9805 = vsel %vm9792, %v9772, %v9656
      %v9806 = vsel %vm9792, %v9773, %v9658
      %v9807 = vsel %vm9792, %v9774, %v9660
      %v9808 = vsel %vm9792, %v9775, %v9662
      %v9809 = vsel %vm9792, %v9776, %v9664
      %v9810 = vsel %vm9792, %v9777, %v9666
      %v9811 = vsel %vm9792, %v9778, %v9668
      %v9812 = vsel %vm9792, %v9779, %v9670
      %v9813 = vsel %vm9792, %v9780, %v9672
      %v9814 = vsel %vm9792, %v9781, %v9674
      %v9815 = vsel %vm9792, %v9782, %v9676
      %v9816 = vsel %vm9792, %v9783, %v9678
      %v9817 = vsel %vm9792, %v9784, %v9680
      %v9818 = vsel %vm9792, %v9785, %v9682
      %v9819 = vsel %vm9792, %v9786, %v9684
      %v9820 = vsel %vm9792, %v9787, %v9686
      %v9821 = vsel %vm9792, %v9788, %v9688
      %v9822 = vsel %vm9792, %v9789, %v9690
      %v9823 = vsel %vm9792, %v9790, %v9692
      %v9824 = vsel %vm9792, %v9791, %v9694
      %v9825 = vmul.f32 %v9793, %v1303
      %v9826 = vmul.f32 %v9794, %v1305
      %v9827 = vmul.f32 %v9795, %v1307
      %v9828 = vmul.f32 %v9796, %v1309
      %v9829 = vmul.f32 %v9797, %v1311
      %v9830 = vmul.f32 %v9798, %v1313
      %v9831 = vmul.f32 %v9799, %v1315
      %v9832 = vmul.f32 %v9800, %v1317
      %v9833 = vmul.f32 %v9801, %v1319
      %v9834 = vmul.f32 %v9802, %v1321
      %v9835 = vmul.f32 %v9803, %v1323
      %v9836 = vmul.f32 %v9804, %v1325
      %v9837 = vmul.f32 %v9805, %v1327
      %v9838 = vmul.f32 %v9806, %v1329
      %v9839 = vmul.f32 %v9807, %v1331
      %v9840 = vmul.f32 %v9808, %v1333
      %v9841 = vmul.f32 %v9809, %v1335
      %v9842 = vmul.f32 %v9810, %v1337
      %v9843 = vmul.f32 %v9811, %v1339
      %v9844 = vmul.f32 %v9812, %v1341
      %v9845 = vmul.f32 %v9813, %v1343
      %v9846 = vmul.f32 %v9814, %v1345
      %v9847 = vmul.f32 %v9815, %v1347
      %v9848 = vmul.f32 %v9816, %v1349
      %v9849 = vmul.f32 %v9817, %v1351
      %v9850 = vmul.f32 %v9818, %v1353
      %v9851 = vmul.f32 %v9819, %v1355
      %v9852 = vmul.f32 %v9820, %v1357
      %v9853 = vmul.f32 %v9821, %v1359
      %v9854 = vmul.f32 %v9822, %v1361
      %v9855 = vmul.f32 %v9823, %v1363
      %v9856 = vmul.f32 %v9824, %v1365
      %v9857 = vpack.c.bf16 %v9826, %v9825
      %v9858 = vpack.c.bf16 %v9828, %v9827
      %v9859 = vpack.c.bf16 %v9830, %v9829
      %v9860 = vpack.c.bf16 %v9832, %v9831
      %v9861 = vpack.c.bf16 %v9834, %v9833
      %v9862 = vpack.c.bf16 %v9836, %v9835
      %v9863 = vpack.c.bf16 %v9838, %v9837
      %v9864 = vpack.c.bf16 %v9840, %v9839
      %v9865 = vpack.c.bf16 %v9842, %v9841
      %v9866 = vpack.c.bf16 %v9844, %v9843
      %v9867 = vpack.c.bf16 %v9846, %v9845
      %v9868 = vpack.c.bf16 %v9848, %v9847
      %v9869 = vpack.c.bf16 %v9850, %v9849
      %v9870 = vpack.c.bf16 %v9852, %v9851
      %v9871 = vpack.c.bf16 %v9854, %v9853
      %v9872 = vpack.c.bf16 %v9856, %v9855
      %v9873 = vld [vmem:[%s7] sm:$0xf]
      %v9874 = vld [vmem:[%s7 + $0x4] sm:$0xf]
      %v9875 = vld [vmem:[%s7 + $0x8] sm:$0xf]
      %v9876 = vld [vmem:[%s7 + $0xc] sm:$0xf]
      %v9877 = vld [vmem:[%s7 + $0x10] sm:$0xf]
      %v9878 = vld [vmem:[%s7 + $0x14] sm:$0xf]
      %v9879 = vld [vmem:[%s7 + $0x18] sm:$0xf]
      %v9880 = vld [vmem:[%s7 + $0x1c] sm:$0xf]
      %v9881 = vld [vmem:[%s7 + $0x20] sm:$0xf]
      %v9882 = vld [vmem:[%s7 + $0x24] sm:$0xf]
      %v9883 = vld [vmem:[%s7 + $0x28] sm:$0xf]
      %v9884 = vld [vmem:[%s7 + $0x2c] sm:$0xf]
      %v9885 = vld [vmem:[%s7 + $0x30] sm:$0xf]
      %v9886 = vld [vmem:[%s7 + $0x34] sm:$0xf]
      %v9887 = vld [vmem:[%s7 + $0x38] sm:$0xf]
      %v9888 = vld [vmem:[%s7 + $0x3c] sm:$0xf]
      %v9889 = vld [vmem:[%s8] sm:$0x1]
      %v9891 = vlaneseq
      %v9892 = vshrl.u32 %v9891, 7
      %v9893 = vsub.s32 0, %v9892
      %v9894 = vrot.slane %v9889, %v9893
      %v9912 = vunpack.c.l.b16 %v9873
      %v9913 = vunpack.c.l.b16 %v9874
      %v9914 = vunpack.c.l.b16 %v9875
      %v9915 = vunpack.c.l.b16 %v9876
      %v9916 = vunpack.c.l.b16 %v9877
      %v9917 = vunpack.c.l.b16 %v9878
      %v9918 = vunpack.c.l.b16 %v9879
      %v9919 = vunpack.c.l.b16 %v9880
      %v9920 = vunpack.c.l.b16 %v9881
      %v9921 = vunpack.c.l.b16 %v9882
      %v9922 = vunpack.c.l.b16 %v9883
      %v9923 = vunpack.c.l.b16 %v9884
      %v9924 = vunpack.c.l.b16 %v9885
      %v9925 = vunpack.c.l.b16 %v9886
      %v9926 = vunpack.c.l.b16 %v9887
      %v9927 = vunpack.c.l.b16 %v9888
      %v9928 = vpack.c.b16 %v9913, %v9912
      %v9929 = vpack.c.b16 %v9915, %v9914
      %v9930 = vpack.c.b16 %v9917, %v9916
      %v9931 = vpack.c.b16 %v9919, %v9918
      %v9932 = vpack.c.b16 %v9921, %v9920
      %v9933 = vpack.c.b16 %v9923, %v9922
      %v9934 = vpack.c.b16 %v9925, %v9924
      %v9935 = vpack.c.b16 %v9927, %v9926
      %9944 = vmatprep.subr.bf16.mxu0 0
      %9945 = vmatpush1.bf16.msra.mxu0 %v9928
      %9946 = vmatprep.subr.bf16.mxu0 0
      %9947 = vmatpush1.bf16.msra.mxu0 %v9929
      %9948 = vmatprep.subr.bf16.mxu0 0
      %9949 = vmatpush1.bf16.msra.mxu0 %v9930
      %9950 = vmatprep.subr.bf16.mxu0 0
      %9951 = vmatpush1.bf16.msra.mxu0 %v9931
      %9952 = vmatprep.subr.bf16.mxu0 0
      %9953 = vmatpush1.bf16.msra.mxu0 %v9932
      %9954 = vmatprep.subr.bf16.mxu0 0
      %9955 = vmatpush1.bf16.msra.mxu0 %v9933
      %9956 = vmatprep.subr.bf16.mxu0 0
      %9957 = vmatpush1.bf16.msra.mxu0 %v9934
      %9958 = vmatprep.subr.bf16.mxu0 0
      %9959 = vmatpush1.bf16.msra.mxu0 %v9935
      %9960 = vmatprep.subr.bf16.mxu0 0
      %9961 = vmatpush1.bf16.msra.mxu0 0
      %9962 = vmatprep.subr.bf16.mxu0 0
      %9963 = vmatpush1.bf16.msra.mxu0 0
      %9964 = vmatprep.subr.bf16.mxu0 0
      %9965 = vmatpush1.bf16.msra.mxu0 0
      %9966 = vmatprep.subr.bf16.mxu0 0
      %9967 = vmatpush1.bf16.msra.mxu0 0
      %9968 = vmatprep.subr.bf16.mxu0 0
      %9969 = vmatpush1.bf16.msra.mxu0 0
      %9970 = vmatprep.subr.bf16.mxu0 0
      %9971 = vmatpush1.bf16.msra.mxu0 0
      %9972 = vmatprep.subr.bf16.mxu0 0
      %9973 = vmatpush1.bf16.msra.mxu0 0
      %9974 = vmatprep.subr.bf16.mxu0 0
      %9975 = vmatpush1.bf16.msra.mxu0 0
      %9976 = vmatprep.mubr.bf16.mxu0 0
      %9977 = vmatmul.mubr.bf16.gmra.mrb[0].mxu0 %v9857
      %v9978 = vpop.f32.mrb[0].mxu0
      %v9979 = vadd.f32 %v9894, %v9978
      %v9980 = vpop.f32.mrb[0].mxu0
      %v9981 = vpop.f32.mrb[0].mxu0
      %v9982 = vadd.f32 %v9894, %v9981
      %v9983 = vpop.f32.mrb[0].mxu0
      %9984 = vmatprep.mubr.bf16.mxu0 0
      %9985 = vmatmul.mubr.bf16.gmra.mrb[0].mxu0 %v9858
      %v9986 = vpop.f32.mrb[0].mxu0
      %v9987 = vadd.f32 %v9894, %v9986
      %v9988 = vpop.f32.mrb[0].mxu0
      %v9989 = vpop.f32.mrb[0].mxu0
      %v9990 = vadd.f32 %v9894, %v9989
      %v9991 = vpop.f32.mrb[0].mxu0
      %9992 = vmatprep.mubr.bf16.mxu0 0
      %9993 = vmatmul.mubr.bf16.gmra.mrb[0].mxu0 %v9859
      %v9994 = vpop.f32.mrb[0].mxu0
      %v9995 = vadd.f32 %v9894, %v9994
      %v9996 = vpop.f32.mrb[0].mxu0
      %v9997 = vpop.f32.mrb[0].mxu0
      %v9998 = vadd.f32 %v9894, %v9997
      %v9999 = vpop.f32.mrb[0].mxu0
      %10000 = vmatprep.mubr.bf16.mxu0 0
      %10001 = vmatmul.mubr.bf16.gmra.mrb[0].mxu0 %v9860
      %v10002 = vpop.f32.mrb[0].mxu0
      %v10003 = vadd.f32 %v9894, %v10002
      %v10004 = vpop.f32.mrb[0].mxu0
      %v10005 = vpop.f32.mrb[0].mxu0
      %v10006 = vadd.f32 %v9894, %v10005
      %v10007 = vpop.f32.mrb[0].mxu0
      %10008 = vmatprep.mubr.bf16.mxu0 0
      %10009 = vmatmul.mubr.bf16.gmra.mrb[0].mxu0 %v9861
      %v10010 = vpop.f32.mrb[0].mxu0
      %v10011 = vadd.f32 %v9894, %v10010
      %v10012 = vpop.f32.mrb[0].mxu0
      %v10013 = vpop.f32.mrb[0].mxu0
      %v10014 = vadd.f32 %v9894, %v10013
      %v10015 = vpop.f32.mrb[0].mxu0
      %10016 = vmatprep.mubr.bf16.mxu0 0
      %10017 = vmatmul.mubr.bf16.gmra.mrb[0].mxu0 %v9862
      %v10018 = vpop.f32.mrb[0].mxu0
      %v10019 = vadd.f32 %v9894, %v10018
      %v10020 = vpop.f32.mrb[0].mxu0
      %v10021 = vpop.f32.mrb[0].mxu0
      %v10022 = vadd.f32 %v9894, %v10021
      %v10023 = vpop.f32.mrb[0].mxu0
      %10024 = vmatprep.mubr.bf16.mxu0 0
      %10025 = vmatmul.mubr.bf16.gmra.mrb[0].mxu0 %v9863
      %v10026 = vpop.f32.mrb[0].mxu0
      %v10027 = vadd.f32 %v9894, %v10026
      %v10028 = vpop.f32.mrb[0].mxu0
      %v10029 = vpop.f32.mrb[0].mxu0
      %v10030 = vadd.f32 %v9894, %v10029
      %v10031 = vpop.f32.mrb[0].mxu0
      %10032 = vmatprep.mubr.bf16.mxu0 0
      %10033 = vmatmul.mubr.bf16.gmra.mrb[0].mxu0 %v9864
      %v10034 = vpop.f32.mrb[0].mxu0
      %v10035 = vadd.f32 %v9894, %v10034
      %v10036 = vpop.f32.mrb[0].mxu0
      %v10037 = vpop.f32.mrb[0].mxu0
      %v10038 = vadd.f32 %v9894, %v10037
      %v10039 = vpop.f32.mrb[0].mxu0
      %10040 = vmatprep.mubr.bf16.mxu0 0
      %10041 = vmatmul.mubr.bf16.gmra.mrb[0].mxu0 %v9865
      %v10042 = vpop.f32.mrb[0].mxu0
      %v10043 = vadd.f32 %v9894, %v10042
      %v10044 = vpop.f32.mrb[0].mxu0
      %v10045 = vpop.f32.mrb[0].mxu0
      %v10046 = vadd.f32 %v9894, %v10045
      %v10047 = vpop.f32.mrb[0].mxu0
      %10048 = vmatprep.mubr.bf16.mxu0 0
      %10049 = vmatmul.mubr.bf16.gmra.mrb[0].mxu0 %v9866
      %v10050 = vpop.f32.mrb[0].mxu0
      %v10051 = vadd.f32 %v9894, %v10050
      %v10052 = vpop.f32.mrb[0].mxu0
      %v10053 = vpop.f32.mrb[0].mxu0
      %v10054 = vadd.f32 %v9894, %v10053
      %v10055 = vpop.f32.mrb[0].mxu0
      %10056 = vmatprep.mubr.bf16.mxu0 0
      %10057 = vmatmul.mubr.bf16.gmra.mrb[0].mxu0 %v9867
      %v10058 = vpop.f32.mrb[0].mxu0
      %v10059 = vadd.f32 %v9894, %v10058
      %v10060 = vpop.f32.mrb[0].mxu0
      %v10061 = vpop.f32.mrb[0].mxu0
      %v10062 = vadd.f32 %v9894, %v10061
      %v10063 = vpop.f32.mrb[0].mxu0
      %10064 = vmatprep.mubr.bf16.mxu0 0
      %10065 = vmatmul.mubr.bf16.gmra.mrb[0].mxu0 %v9868
      %v10066 = vpop.f32.mrb[0].mxu0
      %v10067 = vadd.f32 %v9894, %v10066
      %v10068 = vpop.f32.mrb[0].mxu0
      %v10069 = vpop.f32.mrb[0].mxu0
      %v10070 = vadd.f32 %v9894, %v10069
      %v10071 = vpop.f32.mrb[0].mxu0
      %10072 = vmatprep.mubr.bf16.mxu0 0
      %10073 = vmatmul.mubr.bf16.gmra.mrb[0].mxu0 %v9869
      %v10074 = vpop.f32.mrb[0].mxu0
      %v10075 = vadd.f32 %v9894, %v10074
      %v10076 = vpop.f32.mrb[0].mxu0
      %v10077 = vpop.f32.mrb[0].mxu0
      %v10078 = vadd.f32 %v9894, %v10077
      %v10079 = vpop.f32.mrb[0].mxu0
      %10080 = vmatprep.mubr.bf16.mxu0 0
      %10081 = vmatmul.mubr.bf16.gmra.mrb[0].mxu0 %v9870
      %v10082 = vpop.f32.mrb[0].mxu0
      %v10083 = vadd.f32 %v9894, %v10082
      %v10084 = vpop.f32.mrb[0].mxu0
      %v10085 = vpop.f32.mrb[0].mxu0
      %v10086 = vadd.f32 %v9894, %v10085
      %v10087 = vpop.f32.mrb[0].mxu0
      %10088 = vmatprep.mubr.bf16.mxu0 0
      %10089 = vmatmul.mubr.bf16.gmra.mrb[0].mxu0 %v9871
      %v10090 = vpop.f32.mrb[0].mxu0
      %v10091 = vadd.f32 %v9894, %v10090
      %v10092 = vpop.f32.mrb[0].mxu0
      %v10093 = vpop.f32.mrb[0].mxu0
      %v10094 = vadd.f32 %v9894, %v10093
      %v10095 = vpop.f32.mrb[0].mxu0
      %10096 = vmatprep.mubr.bf16.mxu0 0
      %10097 = vmatmul.mubr.bf16.gmra.mrb[0].mxu0 %v9872
      %v10098 = vpop.f32.mrb[0].mxu0
      %v10099 = vadd.f32 %v9894, %v10098
      %v10100 = vpop.f32.mrb[0].mxu0
      %v10101 = vpop.f32.mrb[0].mxu0
      %v10102 = vadd.f32 %v9894, %v10101
      %v10103 = vpop.f32.mrb[0].mxu0
      %10104 = vdwg.mxu0
      %10105 = vst.msk [vmem:[%s375] sm:$0xff] %vm514, %v9979
      %10106 = vst.msk [vmem:[%s375 + $0x8] sm:$0xff] %vm514, %v9982
      %10107 = vst.msk [vmem:[%s375 + $0x10] sm:$0xff] %vm514, %v9987
      %10108 = vst.msk [vmem:[%s375 + $0x18] sm:$0xff] %vm514, %v9990
      %10109 = vst.msk [vmem:[%s375 + $0x20] sm:$0xff] %vm514, %v9995
      %10110 = vst.msk [vmem:[%s375 + $0x28] sm:$0xff] %vm514, %v9998
      %10111 = vst.msk [vmem:[%s375 + $0x30] sm:$0xff] %vm514, %v10003
      %10112 = vst.msk [vmem:[%s375 + $0x38] sm:$0xff] %vm514, %v10006
      %10113 = vst.msk [vmem:[%s375 + $0x40] sm:$0xff] %vm514, %v10011
      %10114 = vst.msk [vmem:[%s375 + $0x48] sm:$0xff] %vm514, %v10014
      %10115 = vst.msk [vmem:[%s375 + $0x50] sm:$0xff] %vm514, %v10019
      %10116 = vst.msk [vmem:[%s375 + $0x58] sm:$0xff] %vm514, %v10022
      %10117 = vst.msk [vmem:[%s375 + $0x60] sm:$0xff] %vm514, %v10027
      %10118 = vst.msk [vmem:[%s375 + $0x68] sm:$0xff] %vm514, %v10030
      %10119 = vst.msk [vmem:[%s375 + $0x70] sm:$0xff] %vm514, %v10035
      %10120 = vst.msk [vmem:[%s375 + $0x78] sm:$0xff] %vm514, %v10038
      %10121 = vst.msk [vmem:[%s375 + $0x80] sm:$0xff] %vm514, %v10043
      %10122 = vst.msk [vmem:[%s375 + $0x88] sm:$0xff] %vm514, %v10046
      %10123 = vst.msk [vmem:[%s375 + $0x90] sm:$0xff] %vm514, %v10051
      %10124 = vst.msk [vmem:[%s375 + $0x98] sm:$0xff] %vm514, %v10054
      %10125 = vst.msk [vmem:[%s375 + $0xa0] sm:$0xff] %vm514, %v10059
      %10126 = vst.msk [vmem:[%s375 + $0xa8] sm:$0xff] %vm514, %v10062
      %10127 = vst.msk [vmem:[%s375 + $0xb0] sm:$0xff] %vm514, %v10067
      %10128 = vst.msk [vmem:[%s375 + $0xb8] sm:$0xff] %vm514, %v10070
      %10129 = vst.msk [vmem:[%s375 + $0xc0] sm:$0xff] %vm514, %v10075
      %10130 = vst.msk [vmem:[%s375 + $0xc8] sm:$0xff] %vm514, %v10078
      %10131 = vst.msk [vmem:[%s375 + $0xd0] sm:$0xff] %vm514, %v10083
      %10132 = vst.msk [vmem:[%s375 + $0xd8] sm:$0xff] %vm514, %v10086
      %10133 = vst.msk [vmem:[%s375 + $0xe0] sm:$0xff] %vm514, %v10091
      %10134 = vst.msk [vmem:[%s375 + $0xe8] sm:$0xff] %vm514, %v10094
      %10135 = vst.msk [vmem:[%s375 + $0xf0] sm:$0xff] %vm514, %v10099
      %10136 = vst.msk [vmem:[%s375 + $0xf8] sm:$0xff] %vm514, %v10102
      %s10137 = smul.u32 32, %s20
      %p10138 = scmp.lt.s32.totalorder %s10137, 63
      %s10139 = scalar_select %p10138, %s10137, 63
      %s10140 = smul.addr %s10139, 8
      %s10141 = scalar_lea.vmem %s9, %s10140
      // Predicated region
      $region57: #{tpu_custom_call.1} parent=55 // pred_check
        %p10142 = pneg %p242
      $region58: #{tpu_custom_call.1} parent=55 // pred_check_branch
        %10144 = sbr.rel (%p10142) target = $region60
      $region59: #{tpu_custom_call.1} parent=55 // pred_region
        %s10145 = smul.u32 32, %s20
      $region60: #{tpu_custom_call.1} parent=55 // pred_fallthru
        _
    $region56: #{tpu_custom_call.1} parent=5 // pred_fallthru
      _
    %p10146 = scmp.le.s32.totalorder 2, %s15
    // Predicated region
    $region61: #{tpu_custom_call.1} parent=5 // pred_check
      %p10147 = pneg %p10146
    $region62: #{tpu_custom_call.1} parent=5 // pred_check_branch
      %10149 = sbr.rel (%p10147) target = $region64
    $region63: #{tpu_custom_call.1} parent=5 // pred_region
      %s10150 = ssub.s32 %s15, 2
      // Predicated region
      $region65: #{tpu_custom_call.1} parent=63 // pred_check
        %p10151 = pneg %p248
      $region66: #{tpu_custom_call.1} parent=63 // pred_check_branch
        %10153 = sbr.rel (%p10151) target = $region68
      $region67: #{tpu_custom_call.1} parent=63 // pred_region
        %s10154 = smul.u32 32, %s21
        %p10155 = scmp.lt.s32.totalorder %s10154, 63
        %s10156 = scalar_select %p10155, %s10154, 63
        %s10157 = smul.addr %s10156, 8
        %s10158 = scalar_lea.vmem %s9, %s10157
      $region68: #{tpu_custom_call.1} parent=63 // pred_fallthru
        _
    $region64: #{tpu_custom_call.1} parent=5 // pred_fallthru
      _
  $region6: #{tpu_custom_call.1} parent=0 // loop_footer
    %s19 = sadd.s32 1, %s15
  $region7: #{tpu_custom_call.1} parent=0 // loop_footer_branch
    %14 = sbr.rel target = $region3
  $region8: #{tpu_custom_call.1} parent=0 // loop_exit
    _

</llo_original>
